<compile_context>
chip_gen: v7x
topology: tpu7x:2x2x1
jax: 0.10.0
libtpu: 0.0.40
codegen_flags: <defaults>
</compile_context>

<pallas_src>
import jax
import jax.numpy as jnp
from jax.experimental import pallas as pl
from jax.experimental.pallas import tpu as pltpu

BN_EPS = 1e-5
CPAD = 128                       # lane width: matmul N dim / canvas lane padding

# (cin, cout, kernel, pad, stride) -- static hyper-parameters of the module.
LAYER_SPECS = (
    (3, 16, 7, 3, 2),
    (16, 32, 5, 2, 2),
    (32, 64, 3, 1, 2),
)
KPACK_CIN = (8, 16, 32)          # per-layer channel padding in the kw-packed K layout
W_OFFSETS = (0, 7, 12)           # kh-tap offsets into the stacked weight tensor
N_KH_TOTAL = 7 + 5 + 3           # 15 packed (128,128) weight blocks


def _geometry(H, W, C):
    """Static (Python-int) geometry of the fused a-trous formulation."""
    assert H % 8 == 0 and W % 8 == 0 and H >= 8 and W >= 8, (H, W)
    assert C <= KPACK_CIN[0], C
    wp = W + 8                    # canvas width for all three canvases (mult of 8)
    return dict(
        H=H, W=W, wp=wp,
        p1=(H + 6) * wp,          # kw-packed layer-1 canvas rows (22*24 = 528)
        rows2=(H + 5) * wp,       # canvas2 rows (incl. the bottom padding row)
        rows3=(H + 1) * wp,       # canvas3 rows (last written slab ends here)
        o2h=H // 4, o2w=W // 4,   # true layer-2 output size
        o3h=H // 8, o3w=W // 8,   # true layer-3 output size
    )


# ------------------------------- fused kernel --------------------------------
def _make_fused_kernel(g):
    H, W, wp = g["H"], g["W"], g["wp"]
    L1_TR = 4                                 # full-resolution rows per layer-1 tile
    t1_rows = L1_TR * wp                      # flat canvas rows per tile (96)
    n1_tiles = H // L1_TR
    c2_top, c2_bot, rows2 = 4 * wp, (H + 4) * wp, g["rows2"]
    c3_top, rows3 = 4 * wp, g["rows3"]
    o2h, o3h, o3w = g["o2h"], g["o3h"], g["o3w"]

    def kernel(a1_ref, w_ref, s_ref, b_ref, out_ref, c2_ref, c3_ref):
        f32 = jnp.float32

        def bn_relu(acc, li):
            # folded eval-mode BN + ReLU; one (1,128) broadcast per tile
            return jnp.maximum(acc * s_ref[li:li + 1, :] + b_ref[li:li + 1, :], 0.0)

        # Zero only the canvas border rows that the conv taps read as padding.
        c2_ref[0:c2_top, :] = jnp.zeros((c2_top, CPAD), c2_ref.dtype)
        c2_ref[c2_bot:rows2, :] = jnp.zeros((rows2 - c2_bot, CPAD), c2_ref.dtype)
        c3_ref[0:c3_top, :] = jnp.zeros((c3_top, CPAD), c3_ref.dtype)

        zpad4 = jnp.zeros((4, CPAD), f32)

        # ---- layer 1: 7x7/s2.  kw taps pre-packed into A1 lanes (K = 7*8 = 56);
        # ---- 7 kh taps register-accumulated per 4-row tile, one scatter per row.
        for t in range(n1_tiles):
            base = t * t1_rows
            acc = jnp.zeros((t1_rows, CPAD), f32)
            for kh in range(7):
                lhs = a1_ref[base + kh * wp: base + kh * wp + t1_rows, :]
                acc = acc + jnp.dot(lhs, w_ref[W_OFFSETS[0] + kh],
                                    preferred_element_type=f32)
            act = bn_relu(acc, 0)
            for r in range(L1_TR):            # aligned full-width slab stores
                h = t * L1_TR + r
                slab = jnp.concatenate(
                    [zpad4, act[r * wp: r * wp + W, :], zpad4], axis=0)
                c2_ref[(h + 4) * wp: (h + 5) * wp, :] = slab.astype(c2_ref.dtype)

        # ---- layer 2: 5x5/s2 (dilation 2 in canvas coords), computed only at the
        # ---- rows layer 3 consumes; kw taps packed in-register (K = 5*16 = 80).
        zlane2 = jnp.zeros((W, CPAD - 5 * 16), jnp.bfloat16)
        for oi in range(o2h):
            i = 4 * oi
            acc = jnp.zeros((W, CPAD), f32)
            for kh in range(5):
                row0 = (i + 2 * kh) * wp
                chunks = [c2_ref[row0 + 2 * kw: row0 + 2 * kw + W, :][:, 0:16]
                          for kw in range(5)]
                lhs = jnp.concatenate(chunks + [zlane2], axis=1)      # (W,128)
                acc = acc + jnp.dot(lhs, w_ref[W_OFFSETS[1] + kh],
                                    preferred_element_type=f32)
            act = bn_relu(acc, 1)
            slab = jnp.concatenate([zpad4, act, zpad4], axis=0)       # (wp,128)
            c3_ref[(i + 4) * wp: (i + 5) * wp, :] = slab.astype(c3_ref.dtype)

        # ---- layer 3: 3x3/s2 (dilation 4), computed only at the sampled output
        # ---- rows; kw taps packed in-register (K = 3*32 = 96); lane-dense store.
        zlane3 = jnp.zeros((W, CPAD - 3 * 32), jnp.bfloat16)
        out_rows = []
        for oi in range(o3h):
            i = 8 * oi
            acc = jnp.zeros((W, CPAD), f32)
            for kh in range(3):
                row0 = (i + 4 * kh) * wp
                chunks = [c3_ref[row0 + 4 * kw: row0 + 4 * kw + W, :][:, 0:32]
                          for kw in range(3)]
                lhs = jnp.concatenate(chunks + [zlane3], axis=1)      # (W,128)
                acc = acc + jnp.dot(lhs, w_ref[W_OFFSETS[2] + kh],
                                    preferred_element_type=f32)
            act = bn_relu(acc, 2)
            for oj in range(o3w):
                out_rows.append(act[8 * oj: 8 * oj + 1, :])
        out_ref[...] = jnp.concatenate(out_rows, axis=0)

    return kernel


def _fused_forward(x_nchw, packed):
    N, C, H, W = x_nchw.shape
    g = _geometry(H, W, C)
    wp, p1 = g["wp"], g["p1"]
    cout_last = LAYER_SPECS[-1][1]
    out_rows = g["o3h"] * g["o3w"]

    # kw-packed layer-1 canvas: NCHW -> NHWC, spatial zero-pad to the (H+6, W+8)
    # canvas, channels padded 3->8, then the 7 horizontal taps concatenated along
    # lanes (lane = kw*8 + c).  This is layout plumbing only; all matmuls / BN /
    # ReLU run inside the kernel.
    x = jnp.transpose(x_nchw, (0, 2, 3, 1)).astype(jnp.float32)
    x = jnp.pad(x, ((0, 0), (3, 3), (3, wp - W - 3), (0, KPACK_CIN[0] - C)))
    xf = x.reshape(N, (H + 6) * wp, KPACK_CIN[0])
    xf = jnp.pad(xf, ((0, 0), (0, 8), (0, 0)))           # slack for the kw shifts
    a1 = jnp.concatenate([xf[:, kw:kw + p1, :] for kw in range(7)], axis=-1)
    a1 = jnp.pad(a1, ((0, 0), (0, 0), (0, CPAD - 7 * KPACK_CIN[0])))
    a1 = a1.astype(jnp.bfloat16)

    kernel = _make_fused_kernel(g)
    out = pl.pallas_call(
        kernel,
        out_shape=jax.ShapeDtypeStruct((N, out_rows, CPAD), jnp.float32),
        grid=(N,),
        in_specs=[
            pl.BlockSpec((None, p1, CPAD), lambda n: (n, 0, 0)),          # packed canvas
            pl.BlockSpec((N_KH_TOTAL, CPAD, CPAD), lambda n: (0, 0, 0)),  # packed weights
            pl.BlockSpec((len(LAYER_SPECS), CPAD), lambda n: (0, 0)),     # BN scale
            pl.BlockSpec((len(LAYER_SPECS), CPAD), lambda n: (0, 0)),     # BN bias
        ],
        out_specs=pl.BlockSpec((None, out_rows, CPAD), lambda n: (n, 0, 0)),
        scratch_shapes=[
            pltpu.VMEM((g["rows2"], CPAD), jnp.bfloat16),   # canvas2 (layer-1 acts)
            pltpu.VMEM((g["rows3"], CPAD), jnp.bfloat16),   # canvas3 (layer-2 acts)
        ],
        compiler_params=pltpu.CompilerParams(
            dimension_semantics=("parallel",),   # v7x: both TensorCores split images
        ),
    )(a1, packed["w"], packed["scale"], packed["bias"])

    out = out[:, :, :cout_last]                            # drop channel padding
    out = out.reshape(N, g["o3h"], g["o3w"], cout_last)
    return jnp.transpose(out, (0, 3, 1, 2))                # NHWC -> NCHW


# --------------------------- parameters / packing ----------------------------
def make_params(key):
    """Synthetic conv + BN parameters (arrays only; hyperparams stay static)."""
    params = []
    for (cin, cout, k, pad, stride) in LAYER_SPECS:
        key, kw_, kb_, kg_, kbe, km_, kv_ = jax.random.split(key, 7)
        params.append(dict(
            w=jax.random.normal(kw_, (k, k, cin, cout), jnp.float32) * 0.05,
            conv_b=jax.random.normal(kb_, (cout,), jnp.float32) * 0.01,
            gamma=1.0 + 0.1 * jax.random.normal(kg_, (cout,), jnp.float32),
            beta=0.1 * jax.random.normal(kbe, (cout,), jnp.float32),
            mean=0.1 * jax.random.normal(km_, (cout,), jnp.float32),
            var=jnp.abs(1.0 + 0.1 * jax.random.normal(kv_, (cout,), jnp.float32)),
        ))
    return params


def pack_params(params):
    """Fold eval-mode BN (+ conv bias) into a per-channel affine, and repack each
    conv's weights into per-kh blocks whose K rows are (kw*cin_pad + c), padded
    to (128,128) -- matching the kw-packed LHS layout used inside the kernel."""
    w_blocks, scales, biases = [], [], []
    for p, (cin, cout, k, pad, stride), cpk in zip(params, LAYER_SPECS, KPACK_CIN):
        scale = p["gamma"] / jnp.sqrt(p["var"] + BN_EPS)
        bias = (p["conv_b"] - p["mean"]) * scale + p["beta"]
        w = jnp.pad(p["w"], ((0, 0), (0, 0), (0, cpk - cin), (0, 0)))  # (k,k,cpk,cout)
        w = w.reshape(k, k * cpk, cout)                                # row = kw*cpk+c
        w = jnp.pad(w, ((0, 0), (0, CPAD - k * cpk), (0, CPAD - cout)))
        w_blocks.append(w)
        scales.append(jnp.pad(scale, (0, CPAD - cout), constant_values=1.0))
        biases.append(jnp.pad(bias, (0, CPAD - cout)))
    return dict(
        w=jnp.concatenate(w_blocks, axis=0).astype(jnp.bfloat16),
        scale=jnp.stack(scales).astype(jnp.float32),
        bias=jnp.stack(biases).astype(jnp.float32),
    )


@jax.jit
def rt_head_large_kernel(x_nchw, params):
    packed = pack_params(params)
    return _fused_forward(x_nchw, packed)


# ------------------------------ pure-JAX reference ---------------------------
def reference_forward(x_nchw, params):
    x = jnp.transpose(x_nchw, (0, 2, 3, 1))
    for p, (cin, cout, k, pad, stride) in zip(params, LAYER_SPECS):
        scale = p["gamma"] / jnp.sqrt(p["var"] + BN_EPS)
        bias = (p["conv_b"] - p["mean"]) * scale + p["beta"]
        y = jax.lax.conv_general_dilated(
            x, p["w"],
            window_strides=(stride, stride),
            padding=[(pad, pad), (pad, pad)],
            dimension_numbers=("NHWC", "HWIO", "NHWC"))
        x = jnp.maximum(y * scale + bias, 0.0)
    return jnp.transpose(x, (0, 3, 1, 2))


if __name__ == "__main__":
    key = jax.random.PRNGKey(0)
    k_in, k_par = jax.random.split(key)

    # Input matching nn.Conv2d(3, ...) in NCHW: (N=2, C=3, H=16, W=16)
    x = jax.random.normal(k_in, (2, 3, 16, 16), jnp.float32)
    params = make_params(k_par)

    out = jax.block_until_ready(rt_head_large_kernel(x, params))
    assert out.shape == (2, 64, 2, 2), out.shape

    ref = jax.block_until_ready(reference_forward(x, params))
    # bf16 matmul operands / bf16 inter-layer canvases (f32 accumulation + BN)
    # vs the all-f32 lax.conv reference -> slightly loosened tolerance.
    err = float(jnp.max(jnp.abs(out - ref)))
    assert jnp.allclose(out, ref, atol=3e-2, rtol=3e-2), err

    print("KERNEL_OK")
</pallas_src>

<mosaic_0001>
module attributes {stable_mosaic.version = 11 : i64} {
  func.func @kernel(%arg0: i32, %arg1: memref<1x528x128xbf16, #tpu.memory_space<vmem>>, %arg2: memref<15x128x128xbf16, #tpu.memory_space<vmem>>, %arg3: memref<3x128xf32, #tpu.memory_space<vmem>>, %arg4: memref<3x128xf32, #tpu.memory_space<vmem>>, %arg5: memref<1x4x128xf32, #tpu.memory_space<vmem>>, %arg6: memref<504x128xbf16, #tpu.memory_space<vmem>>, %arg7: memref<408x128xbf16, #tpu.memory_space<vmem>>) attributes {dimension_semantics = [#tpu.dimension_semantics<parallel>], iteration_bounds = array<i64: 2>, scalar_prefetch = 0 : i64, scratch_operands = 2 : i64, tpu.core_type = #tpu.core_type<tc>, window_params = [{transform_indices = @transform_0, window_bounds = array<i64: 1, 528, 128>}, {pipeline_mode = #tpu.pipeline_mode<synchronous>, transform_indices = @transform_1, window_bounds = array<i64: 15, 128, 128>}, {pipeline_mode = #tpu.pipeline_mode<synchronous>, transform_indices = @transform_2, window_bounds = array<i64: 3, 128>}, {pipeline_mode = #tpu.pipeline_mode<synchronous>, transform_indices = @transform_3, window_bounds = array<i64: 3, 128>}, {transform_indices = @transform_4, window_bounds = array<i64: 1, 4, 128>}]} {
    %cst = arith.constant 0.000000e+00 : bf16
    %0 = vector.broadcast %cst : bf16 to vector<96x128xbf16>
    %c0 = arith.constant 0 : index
    %c0_0 = arith.constant 0 : index
    %1 = vector.load %arg6[%c0, %c0_0] : memref<504x128xbf16, #tpu.memory_space<vmem>>, vector<96x128xbf16>
    tpu.vector_store %arg6[%c0, %c0_0], %0 {strides = array<i32>} : memref<504x128xbf16, #tpu.memory_space<vmem>>, vector<96x128xbf16>,
    %cst_1 = arith.constant 0.000000e+00 : bf16
    %2 = vector.broadcast %cst_1 : bf16 to vector<24x128xbf16>
    %c480 = arith.constant 480 : index
    %c0_2 = arith.constant 0 : index
    %3 = vector.load %arg6[%c480, %c0_2] : memref<504x128xbf16, #tpu.memory_space<vmem>>, vector<24x128xbf16>
    tpu.vector_store %arg6[%c480, %c0_2], %2 {strides = array<i32>} : memref<504x128xbf16, #tpu.memory_space<vmem>>, vector<24x128xbf16>,
    %cst_3 = arith.constant 0.000000e+00 : bf16
    %4 = vector.broadcast %cst_3 : bf16 to vector<96x128xbf16>
    %c0_4 = arith.constant 0 : index
    %c0_5 = arith.constant 0 : index
    %5 = vector.load %arg7[%c0_4, %c0_5] : memref<408x128xbf16, #tpu.memory_space<vmem>>, vector<96x128xbf16>
    tpu.vector_store %arg7[%c0_4, %c0_5], %4 {strides = array<i32>} : memref<408x128xbf16, #tpu.memory_space<vmem>>, vector<96x128xbf16>,
    %cst_6 = arith.constant 0.000000e+00 : f32
    %6 = vector.broadcast %cst_6 : f32 to vector<4x128xf32>
    %cst_7 = arith.constant 0.000000e+00 : f32
    %7 = vector.broadcast %cst_7 : f32 to vector<96x128xf32>
    %c0_8 = arith.constant 0 : index
    %c0_9 = arith.constant 0 : index
    %c0_10 = arith.constant 0 : index
    %8 = vector.load %arg1[%c0_8, %c0_9, %c0_10] : memref<1x528x128xbf16, #tpu.memory_space<vmem>>, vector<1x96x128xbf16>
    %9 = vector.shape_cast %8 : vector<1x96x128xbf16> to vector<96x128xbf16>
    %c0_11 = arith.constant 0 : index
    %c0_12 = arith.constant 0 : index
    %c0_13 = arith.constant 0 : index
    %10 = vector.load %arg2[%c0_11, %c0_12, %c0_13] : memref<15x128x128xbf16, #tpu.memory_space<vmem>>, vector<1x128x128xbf16>
    %11 = vector.shape_cast %10 : vector<1x128x128xbf16> to vector<128x128xbf16>
    %cst_14 = arith.constant dense<0.000000e+00> : vector<96x128xf32>
    %12 = tpu.matmul %9, %11, %cst_14 {dimension_numbers = #tpu.dot_dimension_numbers<[1], [0], [0], [1], [0, 0, 1, 1], [], []>} : vector<96x128xbf16>, vector<128x128xbf16>, vector<96x128xf32> -> vector<96x128xf32>
    %13 = arith.addf %7, %12 : vector<96x128xf32>
    %c0_15 = arith.constant 0 : index
    %c24 = arith.constant 24 : index
    %c0_16 = arith.constant 0 : index
    %14 = vector.load %arg1[%c0_15, %c24, %c0_16] : memref<1x528x128xbf16, #tpu.memory_space<vmem>>, vector<1x96x128xbf16>
    %15 = vector.shape_cast %14 : vector<1x96x128xbf16> to vector<96x128xbf16>
    %c1 = arith.constant 1 : index
    %c0_17 = arith.constant 0 : index
    %c0_18 = arith.constant 0 : index
    %16 = vector.load %arg2[%c1, %c0_17, %c0_18] : memref<15x128x128xbf16, #tpu.memory_space<vmem>>, vector<1x128x128xbf16>
    %17 = vector.shape_cast %16 : vector<1x128x128xbf16> to vector<128x128xbf16>
    %cst_19 = arith.constant dense<0.000000e+00> : vector<96x128xf32>
    %18 = tpu.matmul %15, %17, %cst_19 {dimension_numbers = #tpu.dot_dimension_numbers<[1], [0], [0], [1], [0, 0, 1, 1], [], []>} : vector<96x128xbf16>, vector<128x128xbf16>, vector<96x128xf32> -> vector<96x128xf32>
    %19 = arith.addf %13, %18 : vector<96x128xf32>
    %c0_20 = arith.constant 0 : index
    %c48 = arith.constant 48 : index
    %c0_21 = arith.constant 0 : index
    %20 = vector.load %arg1[%c0_20, %c48, %c0_21] : memref<1x528x128xbf16, #tpu.memory_space<vmem>>, vector<1x96x128xbf16>
    %21 = vector.shape_cast %20 : vector<1x96x128xbf16> to vector<96x128xbf16>
    %c2 = arith.constant 2 : index
    %c0_22 = arith.constant 0 : index
    %c0_23 = arith.constant 0 : index
    %22 = vector.load %arg2[%c2, %c0_22, %c0_23] : memref<15x128x128xbf16, #tpu.memory_space<vmem>>, vector<1x128x128xbf16>
    %23 = vector.shape_cast %22 : vector<1x128x128xbf16> to vector<128x128xbf16>
    %cst_24 = arith.constant dense<0.000000e+00> : vector<96x128xf32>
    %24 = tpu.matmul %21, %23, %cst_24 {dimension_numbers = #tpu.dot_dimension_numbers<[1], [0], [0], [1], [0, 0, 1, 1], [], []>} : vector<96x128xbf16>, vector<128x128xbf16>, vector<96x128xf32> -> vector<96x128xf32>
    %25 = arith.addf %19, %24 : vector<96x128xf32>
    %c0_25 = arith.constant 0 : index
    %c72 = arith.constant 72 : index
    %c0_26 = arith.constant 0 : index
    %26 = vector.load %arg1[%c0_25, %c72, %c0_26] : memref<1x528x128xbf16, #tpu.memory_space<vmem>>, vector<1x96x128xbf16>
    %27 = vector.shape_cast %26 : vector<1x96x128xbf16> to vector<96x128xbf16>
    %c3 = arith.constant 3 : index
    %c0_27 = arith.constant 0 : index
    %c0_28 = arith.constant 0 : index
    %28 = vector.load %arg2[%c3, %c0_27, %c0_28] : memref<15x128x128xbf16, #tpu.memory_space<vmem>>, vector<1x128x128xbf16>
    %29 = vector.shape_cast %28 : vector<1x128x128xbf16> to vector<128x128xbf16>
    %cst_29 = arith.constant dense<0.000000e+00> : vector<96x128xf32>
    %30 = tpu.matmul %27, %29, %cst_29 {dimension_numbers = #tpu.dot_dimension_numbers<[1], [0], [0], [1], [0, 0, 1, 1], [], []>} : vector<96x128xbf16>, vector<128x128xbf16>, vector<96x128xf32> -> vector<96x128xf32>
    %31 = arith.addf %25, %30 : vector<96x128xf32>
    %c0_30 = arith.constant 0 : index
    %c96 = arith.constant 96 : index
    %c0_31 = arith.constant 0 : index
    %32 = vector.load %arg1[%c0_30, %c96, %c0_31] : memref<1x528x128xbf16, #tpu.memory_space<vmem>>, vector<1x96x128xbf16>
    %33 = vector.shape_cast %32 : vector<1x96x128xbf16> to vector<96x128xbf16>
    %c4 = arith.constant 4 : index
    %c0_32 = arith.constant 0 : index
    %c0_33 = arith.constant 0 : index
    %34 = vector.load %arg2[%c4, %c0_32, %c0_33] : memref<15x128x128xbf16, #tpu.memory_space<vmem>>, vector<1x128x128xbf16>
    %35 = vector.shape_cast %34 : vector<1x128x128xbf16> to vector<128x128xbf16>
    %cst_34 = arith.constant dense<0.000000e+00> : vector<96x128xf32>
    %36 = tpu.matmul %33, %35, %cst_34 {dimension_numbers = #tpu.dot_dimension_numbers<[1], [0], [0], [1], [0, 0, 1, 1], [], []>} : vector<96x128xbf16>, vector<128x128xbf16>, vector<96x128xf32> -> vector<96x128xf32>
    %37 = arith.addf %31, %36 : vector<96x128xf32>
    %c0_35 = arith.constant 0 : index
    %c120 = arith.constant 120 : index
    %c0_36 = arith.constant 0 : index
    %38 = vector.load %arg1[%c0_35, %c120, %c0_36] : memref<1x528x128xbf16, #tpu.memory_space<vmem>>, vector<1x96x128xbf16>
    %39 = vector.shape_cast %38 : vector<1x96x128xbf16> to vector<96x128xbf16>
    %c5 = arith.constant 5 : index
    %c0_37 = arith.constant 0 : index
    %c0_38 = arith.constant 0 : index
    %40 = vector.load %arg2[%c5, %c0_37, %c0_38] : memref<15x128x128xbf16, #tpu.memory_space<vmem>>, vector<1x128x128xbf16>
    %41 = vector.shape_cast %40 : vector<1x128x128xbf16> to vector<128x128xbf16>
    %cst_39 = arith.constant dense<0.000000e+00> : vector<96x128xf32>
    %42 = tpu.matmul %39, %41, %cst_39 {dimension_numbers = #tpu.dot_dimension_numbers<[1], [0], [0], [1], [0, 0, 1, 1], [], []>} : vector<96x128xbf16>, vector<128x128xbf16>, vector<96x128xf32> -> vector<96x128xf32>
    %43 = arith.addf %37, %42 : vector<96x128xf32>
    %c0_40 = arith.constant 0 : index
    %c144 = arith.constant 144 : index
    %c0_41 = arith.constant 0 : index
    %44 = vector.load %arg1[%c0_40, %c144, %c0_41] : memref<1x528x128xbf16, #tpu.memory_space<vmem>>, vector<1x96x128xbf16>
    %45 = vector.shape_cast %44 : vector<1x96x128xbf16> to vector<96x128xbf16>
    %c6 = arith.constant 6 : index
    %c0_42 = arith.constant 0 : index
    %c0_43 = arith.constant 0 : index
    %46 = vector.load %arg2[%c6, %c0_42, %c0_43] : memref<15x128x128xbf16, #tpu.memory_space<vmem>>, vector<1x128x128xbf16>
    %47 = vector.shape_cast %46 : vector<1x128x128xbf16> to vector<128x128xbf16>
    %cst_44 = arith.constant dense<0.000000e+00> : vector<96x128xf32>
    %48 = tpu.matmul %45, %47, %cst_44 {dimension_numbers = #tpu.dot_dimension_numbers<[1], [0], [0], [1], [0, 0, 1, 1], [], []>} : vector<96x128xbf16>, vector<128x128xbf16>, vector<96x128xf32> -> vector<96x128xf32>
    %49 = arith.addf %43, %48 : vector<96x128xf32>
    %c0_45 = arith.constant 0 : index
    %c0_46 = arith.constant 0 : index
    %50 = vector.load %arg3[%c0_45, %c0_46] : memref<3x128xf32, #tpu.memory_space<vmem>>, vector<1x128xf32>
    %51 = vector.broadcast %50 : vector<1x128xf32> to vector<96x128xf32>
    %52 = arith.mulf %49, %51 : vector<96x128xf32>
    %c0_47 = arith.constant 0 : index
    %c0_48 = arith.constant 0 : index
    %53 = vector.load %arg4[%c0_47, %c0_48] : memref<3x128xf32, #tpu.memory_space<vmem>>, vector<1x128xf32>
    %54 = vector.broadcast %53 : vector<1x128xf32> to vector<96x128xf32>
    %55 = arith.addf %52, %54 : vector<96x128xf32>
    %cst_49 = arith.constant 0.000000e+00 : f32
    %56 = vector.broadcast %cst_49 : f32 to vector<96x128xf32>
    %57 = arith.maximumf %55, %56 : vector<96x128xf32>
    %58 = vector.extract_strided_slice %57 {offsets = [0, 0], sizes = [16, 128], strides = [1, 1]} : vector<96x128xf32> to vector<16x128xf32>
    %59 = tpu.concatenate %6, %58, %6 in 0 : vector<4x128xf32>, vector<16x128xf32>, vector<4x128xf32> -> vector<24x128xf32>
    %60 = arith.truncf %59 : vector<24x128xf32> to vector<24x128xbf16>
    %c96_50 = arith.constant 96 : index
    %c0_51 = arith.constant 0 : index
    %61 = vector.load %arg6[%c96_50, %c0_51] : memref<504x128xbf16, #tpu.memory_space<vmem>>, vector<24x128xbf16>
    tpu.vector_store %arg6[%c96_50, %c0_51], %60 {strides = array<i32>} : memref<504x128xbf16, #tpu.memory_space<vmem>>, vector<24x128xbf16>,
    %62 = vector.extract_strided_slice %57 {offsets = [24, 0], sizes = [16, 128], strides = [1, 1]} : vector<96x128xf32> to vector<16x128xf32>
    %63 = tpu.concatenate %6, %62, %6 in 0 : vector<4x128xf32>, vector<16x128xf32>, vector<4x128xf32> -> vector<24x128xf32>
    %64 = arith.truncf %63 : vector<24x128xf32> to vector<24x128xbf16>
    %c120_52 = arith.constant 120 : index
    %c0_53 = arith.constant 0 : index
    %65 = vector.load %arg6[%c120_52, %c0_53] : memref<504x128xbf16, #tpu.memory_space<vmem>>, vector<24x128xbf16>
    tpu.vector_store %arg6[%c120_52, %c0_53], %64 {strides = array<i32>} : memref<504x128xbf16, #tpu.memory_space<vmem>>, vector<24x128xbf16>,
    %66 = vector.extract_strided_slice %57 {offsets = [48, 0], sizes = [16, 128], strides = [1, 1]} : vector<96x128xf32> to vector<16x128xf32>
    %67 = tpu.concatenate %6, %66, %6 in 0 : vector<4x128xf32>, vector<16x128xf32>, vector<4x128xf32> -> vector<24x128xf32>
    %68 = arith.truncf %67 : vector<24x128xf32> to vector<24x128xbf16>
    %c144_54 = arith.constant 144 : index
    %c0_55 = arith.constant 0 : index
    %69 = vector.load %arg6[%c144_54, %c0_55] : memref<504x128xbf16, #tpu.memory_space<vmem>>, vector<24x128xbf16>
    tpu.vector_store %arg6[%c144_54, %c0_55], %68 {strides = array<i32>} : memref<504x128xbf16, #tpu.memory_space<vmem>>, vector<24x128xbf16>,
    %70 = vector.extract_strided_slice %57 {offsets = [72, 0], sizes = [16, 128], strides = [1, 1]} : vector<96x128xf32> to vector<16x128xf32>
    %71 = tpu.concatenate %6, %70, %6 in 0 : vector<4x128xf32>, vector<16x128xf32>, vector<4x128xf32> -> vector<24x128xf32>
    %72 = arith.truncf %71 : vector<24x128xf32> to vector<24x128xbf16>
    %c168 = arith.constant 168 : index
    %c0_56 = arith.constant 0 : index
    %73 = vector.load %arg6[%c168, %c0_56] : memref<504x128xbf16, #tpu.memory_space<vmem>>, vector<24x128xbf16>
    tpu.vector_store %arg6[%c168, %c0_56], %72 {strides = array<i32>} : memref<504x128xbf16, #tpu.memory_space<vmem>>, vector<24x128xbf16>,
    %cst_57 = arith.constant 0.000000e+00 : f32
    %74 = vector.broadcast %cst_57 : f32 to vector<96x128xf32>
    %c0_58 = arith.constant 0 : index
    %c96_59 = arith.constant 96 : index
    %c0_60 = arith.constant 0 : index
    %75 = vector.load %arg1[%c0_58, %c96_59, %c0_60] : memref<1x528x128xbf16, #tpu.memory_space<vmem>>, vector<1x96x128xbf16>
    %76 = vector.shape_cast %75 : vector<1x96x128xbf16> to vector<96x128xbf16>
    %c0_61 = arith.constant 0 : index
    %c0_62 = arith.constant 0 : index
    %c0_63 = arith.constant 0 : index
    %77 = vector.load %arg2[%c0_61, %c0_62, %c0_63] : memref<15x128x128xbf16, #tpu.memory_space<vmem>>, vector<1x128x128xbf16>
    %78 = vector.shape_cast %77 : vector<1x128x128xbf16> to vector<128x128xbf16>
    %cst_64 = arith.constant dense<0.000000e+00> : vector<96x128xf32>
    %79 = tpu.matmul %76, %78, %cst_64 {dimension_numbers = #tpu.dot_dimension_numbers<[1], [0], [0], [1], [0, 0, 1, 1], [], []>} : vector<96x128xbf16>, vector<128x128xbf16>, vector<96x128xf32> -> vector<96x128xf32>
    %80 = arith.addf %74, %79 : vector<96x128xf32>
    %c0_65 = arith.constant 0 : index
    %c120_66 = arith.constant 120 : index
    %c0_67 = arith.constant 0 : index
    %81 = vector.load %arg1[%c0_65, %c120_66, %c0_67] : memref<1x528x128xbf16, #tpu.memory_space<vmem>>, vector<1x96x128xbf16>
    %82 = vector.shape_cast %81 : vector<1x96x128xbf16> to vector<96x128xbf16>
    %c1_68 = arith.constant 1 : index
    %c0_69 = arith.constant 0 : index
    %c0_70 = arith.constant 0 : index
    %83 = vector.load %arg2[%c1_68, %c0_69, %c0_70] : memref<15x128x128xbf16, #tpu.memory_space<vmem>>, vector<1x128x128xbf16>
    %84 = vector.shape_cast %83 : vector<1x128x128xbf16> to vector<128x128xbf16>
    %cst_71 = arith.constant dense<0.000000e+00> : vector<96x128xf32>
    %85 = tpu.matmul %82, %84, %cst_71 {dimension_numbers = #tpu.dot_dimension_numbers<[1], [0], [0], [1], [0, 0, 1, 1], [], []>} : vector<96x128xbf16>, vector<128x128xbf16>, vector<96x128xf32> -> vector<96x128xf32>
    %86 = arith.addf %80, %85 : vector<96x128xf32>
    %c0_72 = arith.constant 0 : index
    %c144_73 = arith.constant 144 : index
    %c0_74 = arith.constant 0 : index
    %87 = vector.load %arg1[%c0_72, %c144_73, %c0_74] : memref<1x528x128xbf16, #tpu.memory_space<vmem>>, vector<1x96x128xbf16>
    %88 = vector.shape_cast %87 : vector<1x96x128xbf16> to vector<96x128xbf16>
    %c2_75 = arith.constant 2 : index
    %c0_76 = arith.constant 0 : index
    %c0_77 = arith.constant 0 : index
    %89 = vector.load %arg2[%c2_75, %c0_76, %c0_77] : memref<15x128x128xbf16, #tpu.memory_space<vmem>>, vector<1x128x128xbf16>
    %90 = vector.shape_cast %89 : vector<1x128x128xbf16> to vector<128x128xbf16>
    %cst_78 = arith.constant dense<0.000000e+00> : vector<96x128xf32>
    %91 = tpu.matmul %88, %90, %cst_78 {dimension_numbers = #tpu.dot_dimension_numbers<[1], [0], [0], [1], [0, 0, 1, 1], [], []>} : vector<96x128xbf16>, vector<128x128xbf16>, vector<96x128xf32> -> vector<96x128xf32>
    %92 = arith.addf %86, %91 : vector<96x128xf32>
    %c0_79 = arith.constant 0 : index
    %c168_80 = arith.constant 168 : index
    %c0_81 = arith.constant 0 : index
    %93 = vector.load %arg1[%c0_79, %c168_80, %c0_81] : memref<1x528x128xbf16, #tpu.memory_space<vmem>>, vector<1x96x128xbf16>
    %94 = vector.shape_cast %93 : vector<1x96x128xbf16> to vector<96x128xbf16>
    %c3_82 = arith.constant 3 : index
    %c0_83 = arith.constant 0 : index
    %c0_84 = arith.constant 0 : index
    %95 = vector.load %arg2[%c3_82, %c0_83, %c0_84] : memref<15x128x128xbf16, #tpu.memory_space<vmem>>, vector<1x128x128xbf16>
    %96 = vector.shape_cast %95 : vector<1x128x128xbf16> to vector<128x128xbf16>
    %cst_85 = arith.constant dense<0.000000e+00> : vector<96x128xf32>
    %97 = tpu.matmul %94, %96, %cst_85 {dimension_numbers = #tpu.dot_dimension_numbers<[1], [0], [0], [1], [0, 0, 1, 1], [], []>} : vector<96x128xbf16>, vector<128x128xbf16>, vector<96x128xf32> -> vector<96x128xf32>
    %98 = arith.addf %92, %97 : vector<96x128xf32>
    %c0_86 = arith.constant 0 : index
    %c192 = arith.constant 192 : index
    %c0_87 = arith.constant 0 : index
    %99 = vector.load %arg1[%c0_86, %c192, %c0_87] : memref<1x528x128xbf16, #tpu.memory_space<vmem>>, vector<1x96x128xbf16>
    %100 = vector.shape_cast %99 : vector<1x96x128xbf16> to vector<96x128xbf16>
    %c4_88 = arith.constant 4 : index
    %c0_89 = arith.constant 0 : index
    %c0_90 = arith.constant 0 : index
    %101 = vector.load %arg2[%c4_88, %c0_89, %c0_90] : memref<15x128x128xbf16, #tpu.memory_space<vmem>>, vector<1x128x128xbf16>
    %102 = vector.shape_cast %101 : vector<1x128x128xbf16> to vector<128x128xbf16>
    %cst_91 = arith.constant dense<0.000000e+00> : vector<96x128xf32>
    %103 = tpu.matmul %100, %102, %cst_91 {dimension_numbers = #tpu.dot_dimension_numbers<[1], [0], [0], [1], [0, 0, 1, 1], [], []>} : vector<96x128xbf16>, vector<128x128xbf16>, vector<96x128xf32> -> vector<96x128xf32>
    %104 = arith.addf %98, %103 : vector<96x128xf32>
    %c0_92 = arith.constant 0 : index
    %c216 = arith.constant 216 : index
    %c0_93 = arith.constant 0 : index
    %105 = vector.load %arg1[%c0_92, %c216, %c0_93] : memref<1x528x128xbf16, #tpu.memory_space<vmem>>, vector<1x96x128xbf16>
    %106 = vector.shape_cast %105 : vector<1x96x128xbf16> to vector<96x128xbf16>
    %c5_94 = arith.constant 5 : index
    %c0_95 = arith.constant 0 : index
    %c0_96 = arith.constant 0 : index
    %107 = vector.load %arg2[%c5_94, %c0_95, %c0_96] : memref<15x128x128xbf16, #tpu.memory_space<vmem>>, vector<1x128x128xbf16>
    %108 = vector.shape_cast %107 : vector<1x128x128xbf16> to vector<128x128xbf16>
    %cst_97 = arith.constant dense<0.000000e+00> : vector<96x128xf32>
    %109 = tpu.matmul %106, %108, %cst_97 {dimension_numbers = #tpu.dot_dimension_numbers<[1], [0], [0], [1], [0, 0, 1, 1], [], []>} : vector<96x128xbf16>, vector<128x128xbf16>, vector<96x128xf32> -> vector<96x128xf32>
    %110 = arith.addf %104, %109 : vector<96x128xf32>
    %c0_98 = arith.constant 0 : index
    %c240 = arith.constant 240 : index
    %c0_99 = arith.constant 0 : index
    %111 = vector.load %arg1[%c0_98, %c240, %c0_99] : memref<1x528x128xbf16, #tpu.memory_space<vmem>>, vector<1x96x128xbf16>
    %112 = vector.shape_cast %111 : vector<1x96x128xbf16> to vector<96x128xbf16>
    %c6_100 = arith.constant 6 : index
    %c0_101 = arith.constant 0 : index
    %c0_102 = arith.constant 0 : index
    %113 = vector.load %arg2[%c6_100, %c0_101, %c0_102] : memref<15x128x128xbf16, #tpu.memory_space<vmem>>, vector<1x128x128xbf16>
    %114 = vector.shape_cast %113 : vector<1x128x128xbf16> to vector<128x128xbf16>
    %cst_103 = arith.constant dense<0.000000e+00> : vector<96x128xf32>
    %115 = tpu.matmul %112, %114, %cst_103 {dimension_numbers = #tpu.dot_dimension_numbers<[1], [0], [0], [1], [0, 0, 1, 1], [], []>} : vector<96x128xbf16>, vector<128x128xbf16>, vector<96x128xf32> -> vector<96x128xf32>
    %116 = arith.addf %110, %115 : vector<96x128xf32>
    %c0_104 = arith.constant 0 : index
    %c0_105 = arith.constant 0 : index
    %117 = vector.load %arg3[%c0_104, %c0_105] : memref<3x128xf32, #tpu.memory_space<vmem>>, vector<1x128xf32>
    %118 = vector.broadcast %117 : vector<1x128xf32> to vector<96x128xf32>
    %119 = arith.mulf %116, %118 : vector<96x128xf32>
    %c0_106 = arith.constant 0 : index
    %c0_107 = arith.constant 0 : index
    %120 = vector.load %arg4[%c0_106, %c0_107] : memref<3x128xf32, #tpu.memory_space<vmem>>, vector<1x128xf32>
    %121 = vector.broadcast %120 : vector<1x128xf32> to vector<96x128xf32>
    %122 = arith.addf %119, %121 : vector<96x128xf32>
    %cst_108 = arith.constant 0.000000e+00 : f32
    %123 = vector.broadcast %cst_108 : f32 to vector<96x128xf32>
    %124 = arith.maximumf %122, %123 : vector<96x128xf32>
    %125 = vector.extract_strided_slice %124 {offsets = [0, 0], sizes = [16, 128], strides = [1, 1]} : vector<96x128xf32> to vector<16x128xf32>
    %126 = tpu.concatenate %6, %125, %6 in 0 : vector<4x128xf32>, vector<16x128xf32>, vector<4x128xf32> -> vector<24x128xf32>
    %127 = arith.truncf %126 : vector<24x128xf32> to vector<24x128xbf16>
    %c192_109 = arith.constant 192 : index
    %c0_110 = arith.constant 0 : index
    %128 = vector.load %arg6[%c192_109, %c0_110] : memref<504x128xbf16, #tpu.memory_space<vmem>>, vector<24x128xbf16>
    tpu.vector_store %arg6[%c192_109, %c0_110], %127 {strides = array<i32>} : memref<504x128xbf16, #tpu.memory_space<vmem>>, vector<24x128xbf16>,
    %129 = vector.extract_strided_slice %124 {offsets = [24, 0], sizes = [16, 128], strides = [1, 1]} : vector<96x128xf32> to vector<16x128xf32>
    %130 = tpu.concatenate %6, %129, %6 in 0 : vector<4x128xf32>, vector<16x128xf32>, vector<4x128xf32> -> vector<24x128xf32>
    %131 = arith.truncf %130 : vector<24x128xf32> to vector<24x128xbf16>
    %c216_111 = arith.constant 216 : index
    %c0_112 = arith.constant 0 : index
    %132 = vector.load %arg6[%c216_111, %c0_112] : memref<504x128xbf16, #tpu.memory_space<vmem>>, vector<24x128xbf16>
    tpu.vector_store %arg6[%c216_111, %c0_112], %131 {strides = array<i32>} : memref<504x128xbf16, #tpu.memory_space<vmem>>, vector<24x128xbf16>,
    %133 = vector.extract_strided_slice %124 {offsets = [48, 0], sizes = [16, 128], strides = [1, 1]} : vector<96x128xf32> to vector<16x128xf32>
    %134 = tpu.concatenate %6, %133, %6 in 0 : vector<4x128xf32>, vector<16x128xf32>, vector<4x128xf32> -> vector<24x128xf32>
    %135 = arith.truncf %134 : vector<24x128xf32> to vector<24x128xbf16>
    %c240_113 = arith.constant 240 : index
    %c0_114 = arith.constant 0 : index
    %136 = vector.load %arg6[%c240_113, %c0_114] : memref<504x128xbf16, #tpu.memory_space<vmem>>, vector<24x128xbf16>
    tpu.vector_store %arg6[%c240_113, %c0_114], %135 {strides = array<i32>} : memref<504x128xbf16, #tpu.memory_space<vmem>>, vector<24x128xbf16>,
    %137 = vector.extract_strided_slice %124 {offsets = [72, 0], sizes = [16, 128], strides = [1, 1]} : vector<96x128xf32> to vector<16x128xf32>
    %138 = tpu.concatenate %6, %137, %6 in 0 : vector<4x128xf32>, vector<16x128xf32>, vector<4x128xf32> -> vector<24x128xf32>
    %139 = arith.truncf %138 : vector<24x128xf32> to vector<24x128xbf16>
    %c264 = arith.constant 264 : index
    %c0_115 = arith.constant 0 : index
    %140 = vector.load %arg6[%c264, %c0_115] : memref<504x128xbf16, #tpu.memory_space<vmem>>, vector<24x128xbf16>
    tpu.vector_store %arg6[%c264, %c0_115], %139 {strides = array<i32>} : memref<504x128xbf16, #tpu.memory_space<vmem>>, vector<24x128xbf16>,
    %cst_116 = arith.constant 0.000000e+00 : f32
    %141 = vector.broadcast %cst_116 : f32 to vector<96x128xf32>
    %c0_117 = arith.constant 0 : index
    %c192_118 = arith.constant 192 : index
    %c0_119 = arith.constant 0 : index
    %142 = vector.load %arg1[%c0_117, %c192_118, %c0_119] : memref<1x528x128xbf16, #tpu.memory_space<vmem>>, vector<1x96x128xbf16>
    %143 = vector.shape_cast %142 : vector<1x96x128xbf16> to vector<96x128xbf16>
    %c0_120 = arith.constant 0 : index
    %c0_121 = arith.constant 0 : index
    %c0_122 = arith.constant 0 : index
    %144 = vector.load %arg2[%c0_120, %c0_121, %c0_122] : memref<15x128x128xbf16, #tpu.memory_space<vmem>>, vector<1x128x128xbf16>
    %145 = vector.shape_cast %144 : vector<1x128x128xbf16> to vector<128x128xbf16>
    %cst_123 = arith.constant dense<0.000000e+00> : vector<96x128xf32>
    %146 = tpu.matmul %143, %145, %cst_123 {dimension_numbers = #tpu.dot_dimension_numbers<[1], [0], [0], [1], [0, 0, 1, 1], [], []>} : vector<96x128xbf16>, vector<128x128xbf16>, vector<96x128xf32> -> vector<96x128xf32>
    %147 = arith.addf %141, %146 : vector<96x128xf32>
    %c0_124 = arith.constant 0 : index
    %c216_125 = arith.constant 216 : index
    %c0_126 = arith.constant 0 : index
    %148 = vector.load %arg1[%c0_124, %c216_125, %c0_126] : memref<1x528x128xbf16, #tpu.memory_space<vmem>>, vector<1x96x128xbf16>
    %149 = vector.shape_cast %148 : vector<1x96x128xbf16> to vector<96x128xbf16>
    %c1_127 = arith.constant 1 : index
    %c0_128 = arith.constant 0 : index
    %c0_129 = arith.constant 0 : index
    %150 = vector.load %arg2[%c1_127, %c0_128, %c0_129] : memref<15x128x128xbf16, #tpu.memory_space<vmem>>, vector<1x128x128xbf16>
    %151 = vector.shape_cast %150 : vector<1x128x128xbf16> to vector<128x128xbf16>
    %cst_130 = arith.constant dense<0.000000e+00> : vector<96x128xf32>
    %152 = tpu.matmul %149, %151, %cst_130 {dimension_numbers = #tpu.dot_dimension_numbers<[1], [0], [0], [1], [0, 0, 1, 1], [], []>} : vector<96x128xbf16>, vector<128x128xbf16>, vector<96x128xf32> -> vector<96x128xf32>
    %153 = arith.addf %147, %152 : vector<96x128xf32>
    %c0_131 = arith.constant 0 : index
    %c240_132 = arith.constant 240 : index
    %c0_133 = arith.constant 0 : index
    %154 = vector.load %arg1[%c0_131, %c240_132, %c0_133] : memref<1x528x128xbf16, #tpu.memory_space<vmem>>, vector<1x96x128xbf16>
    %155 = vector.shape_cast %154 : vector<1x96x128xbf16> to vector<96x128xbf16>
    %c2_134 = arith.constant 2 : index
    %c0_135 = arith.constant 0 : index
    %c0_136 = arith.constant 0 : index
    %156 = vector.load %arg2[%c2_134, %c0_135, %c0_136] : memref<15x128x128xbf16, #tpu.memory_space<vmem>>, vector<1x128x128xbf16>
    %157 = vector.shape_cast %156 : vector<1x128x128xbf16> to vector<128x128xbf16>
    %cst_137 = arith.constant dense<0.000000e+00> : vector<96x128xf32>
    %158 = tpu.matmul %155, %157, %cst_137 {dimension_numbers = #tpu.dot_dimension_numbers<[1], [0], [0], [1], [0, 0, 1, 1], [], []>} : vector<96x128xbf16>, vector<128x128xbf16>, vector<96x128xf32> -> vector<96x128xf32>
    %159 = arith.addf %153, %158 : vector<96x128xf32>
    %c0_138 = arith.constant 0 : index
    %c264_139 = arith.constant 264 : index
    %c0_140 = arith.constant 0 : index
    %160 = vector.load %arg1[%c0_138, %c264_139, %c0_140] : memref<1x528x128xbf16, #tpu.memory_space<vmem>>, vector<1x96x128xbf16>
    %161 = vector.shape_cast %160 : vector<1x96x128xbf16> to vector<96x128xbf16>
    %c3_141 = arith.constant 3 : index
    %c0_142 = arith.constant 0 : index
    %c0_143 = arith.constant 0 : index
    %162 = vector.load %arg2[%c3_141, %c0_142, %c0_143] : memref<15x128x128xbf16, #tpu.memory_space<vmem>>, vector<1x128x128xbf16>
    %163 = vector.shape_cast %162 : vector<1x128x128xbf16> to vector<128x128xbf16>
    %cst_144 = arith.constant dense<0.000000e+00> : vector<96x128xf32>
    %164 = tpu.matmul %161, %163, %cst_144 {dimension_numbers = #tpu.dot_dimension_numbers<[1], [0], [0], [1], [0, 0, 1, 1], [], []>} : vector<96x128xbf16>, vector<128x128xbf16>, vector<96x128xf32> -> vector<96x128xf32>
    %165 = arith.addf %159, %164 : vector<96x128xf32>
    %c0_145 = arith.constant 0 : index
    %c288 = arith.constant 288 : index
    %c0_146 = arith.constant 0 : index
    %166 = vector.load %arg1[%c0_145, %c288, %c0_146] : memref<1x528x128xbf16, #tpu.memory_space<vmem>>, vector<1x96x128xbf16>
    %167 = vector.shape_cast %166 : vector<1x96x128xbf16> to vector<96x128xbf16>
    %c4_147 = arith.constant 4 : index
    %c0_148 = arith.constant 0 : index
    %c0_149 = arith.constant 0 : index
    %168 = vector.load %arg2[%c4_147, %c0_148, %c0_149] : memref<15x128x128xbf16, #tpu.memory_space<vmem>>, vector<1x128x128xbf16>
    %169 = vector.shape_cast %168 : vector<1x128x128xbf16> to vector<128x128xbf16>
    %cst_150 = arith.constant dense<0.000000e+00> : vector<96x128xf32>
    %170 = tpu.matmul %167, %169, %cst_150 {dimension_numbers = #tpu.dot_dimension_numbers<[1], [0], [0], [1], [0, 0, 1, 1], [], []>} : vector<96x128xbf16>, vector<128x128xbf16>, vector<96x128xf32> -> vector<96x128xf32>
    %171 = arith.addf %165, %170 : vector<96x128xf32>
    %c0_151 = arith.constant 0 : index
    %c312 = arith.constant 312 : index
    %c0_152 = arith.constant 0 : index
    %172 = vector.load %arg1[%c0_151, %c312, %c0_152] : memref<1x528x128xbf16, #tpu.memory_space<vmem>>, vector<1x96x128xbf16>
    %173 = vector.shape_cast %172 : vector<1x96x128xbf16> to vector<96x128xbf16>
    %c5_153 = arith.constant 5 : index
    %c0_154 = arith.constant 0 : index
    %c0_155 = arith.constant 0 : index
    %174 = vector.load %arg2[%c5_153, %c0_154, %c0_155] : memref<15x128x128xbf16, #tpu.memory_space<vmem>>, vector<1x128x128xbf16>
    %175 = vector.shape_cast %174 : vector<1x128x128xbf16> to vector<128x128xbf16>
    %cst_156 = arith.constant dense<0.000000e+00> : vector<96x128xf32>
    %176 = tpu.matmul %173, %175, %cst_156 {dimension_numbers = #tpu.dot_dimension_numbers<[1], [0], [0], [1], [0, 0, 1, 1], [], []>} : vector<96x128xbf16>, vector<128x128xbf16>, vector<96x128xf32> -> vector<96x128xf32>
    %177 = arith.addf %171, %176 : vector<96x128xf32>
    %c0_157 = arith.constant 0 : index
    %c336 = arith.constant 336 : index
    %c0_158 = arith.constant 0 : index
    %178 = vector.load %arg1[%c0_157, %c336, %c0_158] : memref<1x528x128xbf16, #tpu.memory_space<vmem>>, vector<1x96x128xbf16>
    %179 = vector.shape_cast %178 : vector<1x96x128xbf16> to vector<96x128xbf16>
    %c6_159 = arith.constant 6 : index
    %c0_160 = arith.constant 0 : index
    %c0_161 = arith.constant 0 : index
    %180 = vector.load %arg2[%c6_159, %c0_160, %c0_161] : memref<15x128x128xbf16, #tpu.memory_space<vmem>>, vector<1x128x128xbf16>
    %181 = vector.shape_cast %180 : vector<1x128x128xbf16> to vector<128x128xbf16>
    %cst_162 = arith.constant dense<0.000000e+00> : vector<96x128xf32>
    %182 = tpu.matmul %179, %181, %cst_162 {dimension_numbers = #tpu.dot_dimension_numbers<[1], [0], [0], [1], [0, 0, 1, 1], [], []>} : vector<96x128xbf16>, vector<128x128xbf16>, vector<96x128xf32> -> vector<96x128xf32>
    %183 = arith.addf %177, %182 : vector<96x128xf32>
    %c0_163 = arith.constant 0 : index
    %c0_164 = arith.constant 0 : index
    %184 = vector.load %arg3[%c0_163, %c0_164] : memref<3x128xf32, #tpu.memory_space<vmem>>, vector<1x128xf32>
    %185 = vector.broadcast %184 : vector<1x128xf32> to vector<96x128xf32>
    %186 = arith.mulf %183, %185 : vector<96x128xf32>
    %c0_165 = arith.constant 0 : index
    %c0_166 = arith.constant 0 : index
    %187 = vector.load %arg4[%c0_165, %c0_166] : memref<3x128xf32, #tpu.memory_space<vmem>>, vector<1x128xf32>
    %188 = vector.broadcast %187 : vector<1x128xf32> to vector<96x128xf32>
    %189 = arith.addf %186, %188 : vector<96x128xf32>
    %cst_167 = arith.constant 0.000000e+00 : f32
    %190 = vector.broadcast %cst_167 : f32 to vector<96x128xf32>
    %191 = arith.maximumf %189, %190 : vector<96x128xf32>
    %192 = vector.extract_strided_slice %191 {offsets = [0, 0], sizes = [16, 128], strides = [1, 1]} : vector<96x128xf32> to vector<16x128xf32>
    %193 = tpu.concatenate %6, %192, %6 in 0 : vector<4x128xf32>, vector<16x128xf32>, vector<4x128xf32> -> vector<24x128xf32>
    %194 = arith.truncf %193 : vector<24x128xf32> to vector<24x128xbf16>
    %c288_168 = arith.constant 288 : index
    %c0_169 = arith.constant 0 : index
    %195 = vector.load %arg6[%c288_168, %c0_169] : memref<504x128xbf16, #tpu.memory_space<vmem>>, vector<24x128xbf16>
    tpu.vector_store %arg6[%c288_168, %c0_169], %194 {strides = array<i32>} : memref<504x128xbf16, #tpu.memory_space<vmem>>, vector<24x128xbf16>,
    %196 = vector.extract_strided_slice %191 {offsets = [24, 0], sizes = [16, 128], strides = [1, 1]} : vector<96x128xf32> to vector<16x128xf32>
    %197 = tpu.concatenate %6, %196, %6 in 0 : vector<4x128xf32>, vector<16x128xf32>, vector<4x128xf32> -> vector<24x128xf32>
    %198 = arith.truncf %197 : vector<24x128xf32> to vector<24x128xbf16>
    %c312_170 = arith.constant 312 : index
    %c0_171 = arith.constant 0 : index
    %199 = vector.load %arg6[%c312_170, %c0_171] : memref<504x128xbf16, #tpu.memory_space<vmem>>, vector<24x128xbf16>
    tpu.vector_store %arg6[%c312_170, %c0_171], %198 {strides = array<i32>} : memref<504x128xbf16, #tpu.memory_space<vmem>>, vector<24x128xbf16>,
    %200 = vector.extract_strided_slice %191 {offsets = [48, 0], sizes = [16, 128], strides = [1, 1]} : vector<96x128xf32> to vector<16x128xf32>
    %201 = tpu.concatenate %6, %200, %6 in 0 : vector<4x128xf32>, vector<16x128xf32>, vector<4x128xf32> -> vector<24x128xf32>
    %202 = arith.truncf %201 : vector<24x128xf32> to vector<24x128xbf16>
    %c336_172 = arith.constant 336 : index
    %c0_173 = arith.constant 0 : index
    %203 = vector.load %arg6[%c336_172, %c0_173] : memref<504x128xbf16, #tpu.memory_space<vmem>>, vector<24x128xbf16>
    tpu.vector_store %arg6[%c336_172, %c0_173], %202 {strides = array<i32>} : memref<504x128xbf16, #tpu.memory_space<vmem>>, vector<24x128xbf16>,
    %204 = vector.extract_strided_slice %191 {offsets = [72, 0], sizes = [16, 128], strides = [1, 1]} : vector<96x128xf32> to vector<16x128xf32>
    %205 = tpu.concatenate %6, %204, %6 in 0 : vector<4x128xf32>, vector<16x128xf32>, vector<4x128xf32> -> vector<24x128xf32>
    %206 = arith.truncf %205 : vector<24x128xf32> to vector<24x128xbf16>
    %c360 = arith.constant 360 : index
    %c0_174 = arith.constant 0 : index
    %207 = vector.load %arg6[%c360, %c0_174] : memref<504x128xbf16, #tpu.memory_space<vmem>>, vector<24x128xbf16>
    tpu.vector_store %arg6[%c360, %c0_174], %206 {strides = array<i32>} : memref<504x128xbf16, #tpu.memory_space<vmem>>, vector<24x128xbf16>,
    %cst_175 = arith.constant 0.000000e+00 : f32
    %208 = vector.broadcast %cst_175 : f32 to vector<96x128xf32>
    %c0_176 = arith.constant 0 : index
    %c288_177 = arith.constant 288 : index
    %c0_178 = arith.constant 0 : index
    %209 = vector.load %arg1[%c0_176, %c288_177, %c0_178] : memref<1x528x128xbf16, #tpu.memory_space<vmem>>, vector<1x96x128xbf16>
    %210 = vector.shape_cast %209 : vector<1x96x128xbf16> to vector<96x128xbf16>
    %c0_179 = arith.constant 0 : index
    %c0_180 = arith.constant 0 : index
    %c0_181 = arith.constant 0 : index
    %211 = vector.load %arg2[%c0_179, %c0_180, %c0_181] : memref<15x128x128xbf16, #tpu.memory_space<vmem>>, vector<1x128x128xbf16>
    %212 = vector.shape_cast %211 : vector<1x128x128xbf16> to vector<128x128xbf16>
    %cst_182 = arith.constant dense<0.000000e+00> : vector<96x128xf32>
    %213 = tpu.matmul %210, %212, %cst_182 {dimension_numbers = #tpu.dot_dimension_numbers<[1], [0], [0], [1], [0, 0, 1, 1], [], []>} : vector<96x128xbf16>, vector<128x128xbf16>, vector<96x128xf32> -> vector<96x128xf32>
    %214 = arith.addf %208, %213 : vector<96x128xf32>
    %c0_183 = arith.constant 0 : index
    %c312_184 = arith.constant 312 : index
    %c0_185 = arith.constant 0 : index
    %215 = vector.load %arg1[%c0_183, %c312_184, %c0_185] : memref<1x528x128xbf16, #tpu.memory_space<vmem>>, vector<1x96x128xbf16>
    %216 = vector.shape_cast %215 : vector<1x96x128xbf16> to vector<96x128xbf16>
    %c1_186 = arith.constant 1 : index
    %c0_187 = arith.constant 0 : index
    %c0_188 = arith.constant 0 : index
    %217 = vector.load %arg2[%c1_186, %c0_187, %c0_188] : memref<15x128x128xbf16, #tpu.memory_space<vmem>>, vector<1x128x128xbf16>
    %218 = vector.shape_cast %217 : vector<1x128x128xbf16> to vector<128x128xbf16>
    %cst_189 = arith.constant dense<0.000000e+00> : vector<96x128xf32>
    %219 = tpu.matmul %216, %218, %cst_189 {dimension_numbers = #tpu.dot_dimension_numbers<[1], [0], [0], [1], [0, 0, 1, 1], [], []>} : vector<96x128xbf16>, vector<128x128xbf16>, vector<96x128xf32> -> vector<96x128xf32>
    %220 = arith.addf %214, %219 : vector<96x128xf32>
    %c0_190 = arith.constant 0 : index
    %c336_191 = arith.constant 336 : index
    %c0_192 = arith.constant 0 : index
    %221 = vector.load %arg1[%c0_190, %c336_191, %c0_192] : memref<1x528x128xbf16, #tpu.memory_space<vmem>>, vector<1x96x128xbf16>
    %222 = vector.shape_cast %221 : vector<1x96x128xbf16> to vector<96x128xbf16>
    %c2_193 = arith.constant 2 : index
    %c0_194 = arith.constant 0 : index
    %c0_195 = arith.constant 0 : index
    %223 = vector.load %arg2[%c2_193, %c0_194, %c0_195] : memref<15x128x128xbf16, #tpu.memory_space<vmem>>, vector<1x128x128xbf16>
    %224 = vector.shape_cast %223 : vector<1x128x128xbf16> to vector<128x128xbf16>
    %cst_196 = arith.constant dense<0.000000e+00> : vector<96x128xf32>
    %225 = tpu.matmul %222, %224, %cst_196 {dimension_numbers = #tpu.dot_dimension_numbers<[1], [0], [0], [1], [0, 0, 1, 1], [], []>} : vector<96x128xbf16>, vector<128x128xbf16>, vector<96x128xf32> -> vector<96x128xf32>
    %226 = arith.addf %220, %225 : vector<96x128xf32>
    %c0_197 = arith.constant 0 : index
    %c360_198 = arith.constant 360 : index
    %c0_199 = arith.constant 0 : index
    %227 = vector.load %arg1[%c0_197, %c360_198, %c0_199] : memref<1x528x128xbf16, #tpu.memory_space<vmem>>, vector<1x96x128xbf16>
    %228 = vector.shape_cast %227 : vector<1x96x128xbf16> to vector<96x128xbf16>
    %c3_200 = arith.constant 3 : index
    %c0_201 = arith.constant 0 : index
    %c0_202 = arith.constant 0 : index
    %229 = vector.load %arg2[%c3_200, %c0_201, %c0_202] : memref<15x128x128xbf16, #tpu.memory_space<vmem>>, vector<1x128x128xbf16>
    %230 = vector.shape_cast %229 : vector<1x128x128xbf16> to vector<128x128xbf16>
    %cst_203 = arith.constant dense<0.000000e+00> : vector<96x128xf32>
    %231 = tpu.matmul %228, %230, %cst_203 {dimension_numbers = #tpu.dot_dimension_numbers<[1], [0], [0], [1], [0, 0, 1, 1], [], []>} : vector<96x128xbf16>, vector<128x128xbf16>, vector<96x128xf32> -> vector<96x128xf32>
    %232 = arith.addf %226, %231 : vector<96x128xf32>
    %c0_204 = arith.constant 0 : index
    %c384 = arith.constant 384 : index
    %c0_205 = arith.constant 0 : index
    %233 = vector.load %arg1[%c0_204, %c384, %c0_205] : memref<1x528x128xbf16, #tpu.memory_space<vmem>>, vector<1x96x128xbf16>
    %234 = vector.shape_cast %233 : vector<1x96x128xbf16> to vector<96x128xbf16>
    %c4_206 = arith.constant 4 : index
    %c0_207 = arith.constant 0 : index
    %c0_208 = arith.constant 0 : index
    %235 = vector.load %arg2[%c4_206, %c0_207, %c0_208] : memref<15x128x128xbf16, #tpu.memory_space<vmem>>, vector<1x128x128xbf16>
    %236 = vector.shape_cast %235 : vector<1x128x128xbf16> to vector<128x128xbf16>
    %cst_209 = arith.constant dense<0.000000e+00> : vector<96x128xf32>
    %237 = tpu.matmul %234, %236, %cst_209 {dimension_numbers = #tpu.dot_dimension_numbers<[1], [0], [0], [1], [0, 0, 1, 1], [], []>} : vector<96x128xbf16>, vector<128x128xbf16>, vector<96x128xf32> -> vector<96x128xf32>
    %238 = arith.addf %232, %237 : vector<96x128xf32>
    %c0_210 = arith.constant 0 : index
    %c408 = arith.constant 408 : index
    %c0_211 = arith.constant 0 : index
    %239 = vector.load %arg1[%c0_210, %c408, %c0_211] : memref<1x528x128xbf16, #tpu.memory_space<vmem>>, vector<1x96x128xbf16>
    %240 = vector.shape_cast %239 : vector<1x96x128xbf16> to vector<96x128xbf16>
    %c5_212 = arith.constant 5 : index
    %c0_213 = arith.constant 0 : index
    %c0_214 = arith.constant 0 : index
    %241 = vector.load %arg2[%c5_212, %c0_213, %c0_214] : memref<15x128x128xbf16, #tpu.memory_space<vmem>>, vector<1x128x128xbf16>
    %242 = vector.shape_cast %241 : vector<1x128x128xbf16> to vector<128x128xbf16>
    %cst_215 = arith.constant dense<0.000000e+00> : vector<96x128xf32>
    %243 = tpu.matmul %240, %242, %cst_215 {dimension_numbers = #tpu.dot_dimension_numbers<[1], [0], [0], [1], [0, 0, 1, 1], [], []>} : vector<96x128xbf16>, vector<128x128xbf16>, vector<96x128xf32> -> vector<96x128xf32>
    %244 = arith.addf %238, %243 : vector<96x128xf32>
    %c0_216 = arith.constant 0 : index
    %c432 = arith.constant 432 : index
    %c0_217 = arith.constant 0 : index
    %245 = vector.load %arg1[%c0_216, %c432, %c0_217] : memref<1x528x128xbf16, #tpu.memory_space<vmem>>, vector<1x96x128xbf16>
    %246 = vector.shape_cast %245 : vector<1x96x128xbf16> to vector<96x128xbf16>
    %c6_218 = arith.constant 6 : index
    %c0_219 = arith.constant 0 : index
    %c0_220 = arith.constant 0 : index
    %247 = vector.load %arg2[%c6_218, %c0_219, %c0_220] : memref<15x128x128xbf16, #tpu.memory_space<vmem>>, vector<1x128x128xbf16>
    %248 = vector.shape_cast %247 : vector<1x128x128xbf16> to vector<128x128xbf16>
    %cst_221 = arith.constant dense<0.000000e+00> : vector<96x128xf32>
    %249 = tpu.matmul %246, %248, %cst_221 {dimension_numbers = #tpu.dot_dimension_numbers<[1], [0], [0], [1], [0, 0, 1, 1], [], []>} : vector<96x128xbf16>, vector<128x128xbf16>, vector<96x128xf32> -> vector<96x128xf32>
    %250 = arith.addf %244, %249 : vector<96x128xf32>
    %c0_222 = arith.constant 0 : index
    %c0_223 = arith.constant 0 : index
    %251 = vector.load %arg3[%c0_222, %c0_223] : memref<3x128xf32, #tpu.memory_space<vmem>>, vector<1x128xf32>
    %252 = vector.broadcast %251 : vector<1x128xf32> to vector<96x128xf32>
    %253 = arith.mulf %250, %252 : vector<96x128xf32>
    %c0_224 = arith.constant 0 : index
    %c0_225 = arith.constant 0 : index
    %254 = vector.load %arg4[%c0_224, %c0_225] : memref<3x128xf32, #tpu.memory_space<vmem>>, vector<1x128xf32>
    %255 = vector.broadcast %254 : vector<1x128xf32> to vector<96x128xf32>
    %256 = arith.addf %253, %255 : vector<96x128xf32>
    %cst_226 = arith.constant 0.000000e+00 : f32
    %257 = vector.broadcast %cst_226 : f32 to vector<96x128xf32>
    %258 = arith.maximumf %256, %257 : vector<96x128xf32>
    %259 = vector.extract_strided_slice %258 {offsets = [0, 0], sizes = [16, 128], strides = [1, 1]} : vector<96x128xf32> to vector<16x128xf32>
    %260 = tpu.concatenate %6, %259, %6 in 0 : vector<4x128xf32>, vector<16x128xf32>, vector<4x128xf32> -> vector<24x128xf32>
    %261 = arith.truncf %260 : vector<24x128xf32> to vector<24x128xbf16>
    %c384_227 = arith.constant 384 : index
    %c0_228 = arith.constant 0 : index
    %262 = vector.load %arg6[%c384_227, %c0_228] : memref<504x128xbf16, #tpu.memory_space<vmem>>, vector<24x128xbf16>
    tpu.vector_store %arg6[%c384_227, %c0_228], %261 {strides = array<i32>} : memref<504x128xbf16, #tpu.memory_space<vmem>>, vector<24x128xbf16>,
    %263 = vector.extract_strided_slice %258 {offsets = [24, 0], sizes = [16, 128], strides = [1, 1]} : vector<96x128xf32> to vector<16x128xf32>
    %264 = tpu.concatenate %6, %263, %6 in 0 : vector<4x128xf32>, vector<16x128xf32>, vector<4x128xf32> -> vector<24x128xf32>
    %265 = arith.truncf %264 : vector<24x128xf32> to vector<24x128xbf16>
    %c408_229 = arith.constant 408 : index
    %c0_230 = arith.constant 0 : index
    %266 = vector.load %arg6[%c408_229, %c0_230] : memref<504x128xbf16, #tpu.memory_space<vmem>>, vector<24x128xbf16>
    tpu.vector_store %arg6[%c408_229, %c0_230], %265 {strides = array<i32>} : memref<504x128xbf16, #tpu.memory_space<vmem>>, vector<24x128xbf16>,
    %267 = vector.extract_strided_slice %258 {offsets = [48, 0], sizes = [16, 128], strides = [1, 1]} : vector<96x128xf32> to vector<16x128xf32>
    %268 = tpu.concatenate %6, %267, %6 in 0 : vector<4x128xf32>, vector<16x128xf32>, vector<4x128xf32> -> vector<24x128xf32>
    %269 = arith.truncf %268 : vector<24x128xf32> to vector<24x128xbf16>
    %c432_231 = arith.constant 432 : index
    %c0_232 = arith.constant 0 : index
    %270 = vector.load %arg6[%c432_231, %c0_232] : memref<504x128xbf16, #tpu.memory_space<vmem>>, vector<24x128xbf16>
    tpu.vector_store %arg6[%c432_231, %c0_232], %269 {strides = array<i32>} : memref<504x128xbf16, #tpu.memory_space<vmem>>, vector<24x128xbf16>,
    %271 = vector.extract_strided_slice %258 {offsets = [72, 0], sizes = [16, 128], strides = [1, 1]} : vector<96x128xf32> to vector<16x128xf32>
    %272 = tpu.concatenate %6, %271, %6 in 0 : vector<4x128xf32>, vector<16x128xf32>, vector<4x128xf32> -> vector<24x128xf32>
    %273 = arith.truncf %272 : vector<24x128xf32> to vector<24x128xbf16>
    %c456 = arith.constant 456 : index
    %c0_233 = arith.constant 0 : index
    %274 = vector.load %arg6[%c456, %c0_233] : memref<504x128xbf16, #tpu.memory_space<vmem>>, vector<24x128xbf16>
    tpu.vector_store %arg6[%c456, %c0_233], %273 {strides = array<i32>} : memref<504x128xbf16, #tpu.memory_space<vmem>>, vector<24x128xbf16>,
    %cst_234 = arith.constant 0.000000e+00 : bf16
    %275 = vector.broadcast %cst_234 : bf16 to vector<16x48xbf16>
    %cst_235 = arith.constant 0.000000e+00 : f32
    %276 = vector.broadcast %cst_235 : f32 to vector<16x128xf32>
    %c0_236 = arith.constant 0 : index
    %c0_237 = arith.constant 0 : index
    %277 = vector.load %arg6[%c0_236, %c0_237] : memref<504x128xbf16, #tpu.memory_space<vmem>>, vector<16x128xbf16>
    %278 = vector.extract_strided_slice %277 {offsets = [0, 0], sizes = [16, 16], strides = [1, 1]} : vector<16x128xbf16> to vector<16x16xbf16>
    %c2_238 = arith.constant 2 : index
    %c0_239 = arith.constant 0 : index
    %279 = vector.load %arg6[%c2_238, %c0_239] : memref<504x128xbf16, #tpu.memory_space<vmem>>, vector<16x128xbf16>
    %280 = vector.extract_strided_slice %279 {offsets = [0, 0], sizes = [16, 16], strides = [1, 1]} : vector<16x128xbf16> to vector<16x16xbf16>
    %c4_240 = arith.constant 4 : index
    %c0_241 = arith.constant 0 : index
    %281 = vector.load %arg6[%c4_240, %c0_241] : memref<504x128xbf16, #tpu.memory_space<vmem>>, vector<16x128xbf16>
    %282 = vector.extract_strided_slice %281 {offsets = [0, 0], sizes = [16, 16], strides = [1, 1]} : vector<16x128xbf16> to vector<16x16xbf16>
    %c6_242 = arith.constant 6 : index
    %c0_243 = arith.constant 0 : index
    %283 = vector.load %arg6[%c6_242, %c0_243] : memref<504x128xbf16, #tpu.memory_space<vmem>>, vector<16x128xbf16>
    %284 = vector.extract_strided_slice %283 {offsets = [0, 0], sizes = [16, 16], strides = [1, 1]} : vector<16x128xbf16> to vector<16x16xbf16>
    %c8 = arith.constant 8 : index
    %c0_244 = arith.constant 0 : index
    %285 = vector.load %arg6[%c8, %c0_244] : memref<504x128xbf16, #tpu.memory_space<vmem>>, vector<16x128xbf16>
    %286 = vector.extract_strided_slice %285 {offsets = [0, 0], sizes = [16, 16], strides = [1, 1]} : vector<16x128xbf16> to vector<16x16xbf16>
    %287 = tpu.concatenate %278, %280, %282, %284, %286, %275 in 1 : vector<16x16xbf16>, vector<16x16xbf16>, vector<16x16xbf16>, vector<16x16xbf16>, vector<16x16xbf16>, vector<16x48xbf16> -> vector<16x128xbf16>
    %c7 = arith.constant 7 : index
    %c0_245 = arith.constant 0 : index
    %c0_246 = arith.constant 0 : index
    %288 = vector.load %arg2[%c7, %c0_245, %c0_246] : memref<15x128x128xbf16, #tpu.memory_space<vmem>>, vector<1x128x128xbf16>
    %289 = vector.shape_cast %288 : vector<1x128x128xbf16> to vector<128x128xbf16>
    %cst_247 = arith.constant dense<0.000000e+00> : vector<16x128xf32>
    %290 = tpu.matmul %287, %289, %cst_247 {dimension_numbers = #tpu.dot_dimension_numbers<[1], [0], [0], [1], [0, 0, 1, 1], [], []>} : vector<16x128xbf16>, vector<128x128xbf16>, vector<16x128xf32> -> vector<16x128xf32>
    %291 = arith.addf %276, %290 : vector<16x128xf32>
    %c48_248 = arith.constant 48 : index
    %c0_249 = arith.constant 0 : index
    %292 = vector.load %arg6[%c48_248, %c0_249] : memref<504x128xbf16, #tpu.memory_space<vmem>>, vector<16x128xbf16>
    %293 = vector.extract_strided_slice %292 {offsets = [0, 0], sizes = [16, 16], strides = [1, 1]} : vector<16x128xbf16> to vector<16x16xbf16>
    %c50 = arith.constant 50 : index
    %c0_250 = arith.constant 0 : index
    %294 = vector.load %arg6[%c50, %c0_250] : memref<504x128xbf16, #tpu.memory_space<vmem>>, vector<16x128xbf16>
    %295 = vector.extract_strided_slice %294 {offsets = [0, 0], sizes = [16, 16], strides = [1, 1]} : vector<16x128xbf16> to vector<16x16xbf16>
    %c52 = arith.constant 52 : index
    %c0_251 = arith.constant 0 : index
    %296 = vector.load %arg6[%c52, %c0_251] : memref<504x128xbf16, #tpu.memory_space<vmem>>, vector<16x128xbf16>
    %297 = vector.extract_strided_slice %296 {offsets = [0, 0], sizes = [16, 16], strides = [1, 1]} : vector<16x128xbf16> to vector<16x16xbf16>
    %c54 = arith.constant 54 : index
    %c0_252 = arith.constant 0 : index
    %298 = vector.load %arg6[%c54, %c0_252] : memref<504x128xbf16, #tpu.memory_space<vmem>>, vector<16x128xbf16>
    %299 = vector.extract_strided_slice %298 {offsets = [0, 0], sizes = [16, 16], strides = [1, 1]} : vector<16x128xbf16> to vector<16x16xbf16>
    %c56 = arith.constant 56 : index
    %c0_253 = arith.constant 0 : index
    %300 = vector.load %arg6[%c56, %c0_253] : memref<504x128xbf16, #tpu.memory_space<vmem>>, vector<16x128xbf16>
    %301 = vector.extract_strided_slice %300 {offsets = [0, 0], sizes = [16, 16], strides = [1, 1]} : vector<16x128xbf16> to vector<16x16xbf16>
    %302 = tpu.concatenate %293, %295, %297, %299, %301, %275 in 1 : vector<16x16xbf16>, vector<16x16xbf16>, vector<16x16xbf16>, vector<16x16xbf16>, vector<16x16xbf16>, vector<16x48xbf16> -> vector<16x128xbf16>
    %c8_254 = arith.constant 8 : index
    %c0_255 = arith.constant 0 : index
    %c0_256 = arith.constant 0 : index
    %303 = vector.load %arg2[%c8_254, %c0_255, %c0_256] : memref<15x128x128xbf16, #tpu.memory_space<vmem>>, vector<1x128x128xbf16>
    %304 = vector.shape_cast %303 : vector<1x128x128xbf16> to vector<128x128xbf16>
    %cst_257 = arith.constant dense<0.000000e+00> : vector<16x128xf32>
    %305 = tpu.matmul %302, %304, %cst_257 {dimension_numbers = #tpu.dot_dimension_numbers<[1], [0], [0], [1], [0, 0, 1, 1], [], []>} : vector<16x128xbf16>, vector<128x128xbf16>, vector<16x128xf32> -> vector<16x128xf32>
    %306 = arith.addf %291, %305 : vector<16x128xf32>
    %c96_258 = arith.constant 96 : index
    %c0_259 = arith.constant 0 : index
    %307 = vector.load %arg6[%c96_258, %c0_259] : memref<504x128xbf16, #tpu.memory_space<vmem>>, vector<16x128xbf16>
    %308 = vector.extract_strided_slice %307 {offsets = [0, 0], sizes = [16, 16], strides = [1, 1]} : vector<16x128xbf16> to vector<16x16xbf16>
    %c98 = arith.constant 98 : index
    %c0_260 = arith.constant 0 : index
    %309 = vector.load %arg6[%c98, %c0_260] : memref<504x128xbf16, #tpu.memory_space<vmem>>, vector<16x128xbf16>
    %310 = vector.extract_strided_slice %309 {offsets = [0, 0], sizes = [16, 16], strides = [1, 1]} : vector<16x128xbf16> to vector<16x16xbf16>
    %c100 = arith.constant 100 : index
    %c0_261 = arith.constant 0 : index
    %311 = vector.load %arg6[%c100, %c0_261] : memref<504x128xbf16, #tpu.memory_space<vmem>>, vector<16x128xbf16>
    %312 = vector.extract_strided_slice %311 {offsets = [0, 0], sizes = [16, 16], strides = [1, 1]} : vector<16x128xbf16> to vector<16x16xbf16>
    %c102 = arith.constant 102 : index
    %c0_262 = arith.constant 0 : index
    %313 = vector.load %arg6[%c102, %c0_262] : memref<504x128xbf16, #tpu.memory_space<vmem>>, vector<16x128xbf16>
    %314 = vector.extract_strided_slice %313 {offsets = [0, 0], sizes = [16, 16], strides = [1, 1]} : vector<16x128xbf16> to vector<16x16xbf16>
    %c104 = arith.constant 104 : index
    %c0_263 = arith.constant 0 : index
    %315 = vector.load %arg6[%c104, %c0_263] : memref<504x128xbf16, #tpu.memory_space<vmem>>, vector<16x128xbf16>
    %316 = vector.extract_strided_slice %315 {offsets = [0, 0], sizes = [16, 16], strides = [1, 1]} : vector<16x128xbf16> to vector<16x16xbf16>
    %317 = tpu.concatenate %308, %310, %312, %314, %316, %275 in 1 : vector<16x16xbf16>, vector<16x16xbf16>, vector<16x16xbf16>, vector<16x16xbf16>, vector<16x16xbf16>, vector<16x48xbf16> -> vector<16x128xbf16>
    %c9 = arith.constant 9 : index
    %c0_264 = arith.constant 0 : index
    %c0_265 = arith.constant 0 : index
    %318 = vector.load %arg2[%c9, %c0_264, %c0_265] : memref<15x128x128xbf16, #tpu.memory_space<vmem>>, vector<1x128x128xbf16>
    %319 = vector.shape_cast %318 : vector<1x128x128xbf16> to vector<128x128xbf16>
    %cst_266 = arith.constant dense<0.000000e+00> : vector<16x128xf32>
    %320 = tpu.matmul %317, %319, %cst_266 {dimension_numbers = #tpu.dot_dimension_numbers<[1], [0], [0], [1], [0, 0, 1, 1], [], []>} : vector<16x128xbf16>, vector<128x128xbf16>, vector<16x128xf32> -> vector<16x128xf32>
    %321 = arith.addf %306, %320 : vector<16x128xf32>
    %c144_267 = arith.constant 144 : index
    %c0_268 = arith.constant 0 : index
    %322 = vector.load %arg6[%c144_267, %c0_268] : memref<504x128xbf16, #tpu.memory_space<vmem>>, vector<16x128xbf16>
    %323 = vector.extract_strided_slice %322 {offsets = [0, 0], sizes = [16, 16], strides = [1, 1]} : vector<16x128xbf16> to vector<16x16xbf16>
    %c146 = arith.constant 146 : index
    %c0_269 = arith.constant 0 : index
    %324 = vector.load %arg6[%c146, %c0_269] : memref<504x128xbf16, #tpu.memory_space<vmem>>, vector<16x128xbf16>
    %325 = vector.extract_strided_slice %324 {offsets = [0, 0], sizes = [16, 16], strides = [1, 1]} : vector<16x128xbf16> to vector<16x16xbf16>
    %c148 = arith.constant 148 : index
    %c0_270 = arith.constant 0 : index
    %326 = vector.load %arg6[%c148, %c0_270] : memref<504x128xbf16, #tpu.memory_space<vmem>>, vector<16x128xbf16>
    %327 = vector.extract_strided_slice %326 {offsets = [0, 0], sizes = [16, 16], strides = [1, 1]} : vector<16x128xbf16> to vector<16x16xbf16>
    %c150 = arith.constant 150 : index
    %c0_271 = arith.constant 0 : index
    %328 = vector.load %arg6[%c150, %c0_271] : memref<504x128xbf16, #tpu.memory_space<vmem>>, vector<16x128xbf16>
    %329 = vector.extract_strided_slice %328 {offsets = [0, 0], sizes = [16, 16], strides = [1, 1]} : vector<16x128xbf16> to vector<16x16xbf16>
    %c152 = arith.constant 152 : index
    %c0_272 = arith.constant 0 : index
    %330 = vector.load %arg6[%c152, %c0_272] : memref<504x128xbf16, #tpu.memory_space<vmem>>, vector<16x128xbf16>
    %331 = vector.extract_strided_slice %330 {offsets = [0, 0], sizes = [16, 16], strides = [1, 1]} : vector<16x128xbf16> to vector<16x16xbf16>
    %332 = tpu.concatenate %323, %325, %327, %329, %331, %275 in 1 : vector<16x16xbf16>, vector<16x16xbf16>, vector<16x16xbf16>, vector<16x16xbf16>, vector<16x16xbf16>, vector<16x48xbf16> -> vector<16x128xbf16>
    %c10 = arith.constant 10 : index
    %c0_273 = arith.constant 0 : index
    %c0_274 = arith.constant 0 : index
    %333 = vector.load %arg2[%c10, %c0_273, %c0_274] : memref<15x128x128xbf16, #tpu.memory_space<vmem>>, vector<1x128x128xbf16>
    %334 = vector.shape_cast %333 : vector<1x128x128xbf16> to vector<128x128xbf16>
    %cst_275 = arith.constant dense<0.000000e+00> : vector<16x128xf32>
    %335 = tpu.matmul %332, %334, %cst_275 {dimension_numbers = #tpu.dot_dimension_numbers<[1], [0], [0], [1], [0, 0, 1, 1], [], []>} : vector<16x128xbf16>, vector<128x128xbf16>, vector<16x128xf32> -> vector<16x128xf32>
    %336 = arith.addf %321, %335 : vector<16x128xf32>
    %c192_276 = arith.constant 192 : index
    %c0_277 = arith.constant 0 : index
    %337 = vector.load %arg6[%c192_276, %c0_277] : memref<504x128xbf16, #tpu.memory_space<vmem>>, vector<16x128xbf16>
    %338 = vector.extract_strided_slice %337 {offsets = [0, 0], sizes = [16, 16], strides = [1, 1]} : vector<16x128xbf16> to vector<16x16xbf16>
    %c194 = arith.constant 194 : index
    %c0_278 = arith.constant 0 : index
    %339 = vector.load %arg6[%c194, %c0_278] : memref<504x128xbf16, #tpu.memory_space<vmem>>, vector<16x128xbf16>
    %340 = vector.extract_strided_slice %339 {offsets = [0, 0], sizes = [16, 16], strides = [1, 1]} : vector<16x128xbf16> to vector<16x16xbf16>
    %c196 = arith.constant 196 : index
    %c0_279 = arith.constant 0 : index
    %341 = vector.load %arg6[%c196, %c0_279] : memref<504x128xbf16, #tpu.memory_space<vmem>>, vector<16x128xbf16>
    %342 = vector.extract_strided_slice %341 {offsets = [0, 0], sizes = [16, 16], strides = [1, 1]} : vector<16x128xbf16> to vector<16x16xbf16>
    %c198 = arith.constant 198 : index
    %c0_280 = arith.constant 0 : index
    %343 = vector.load %arg6[%c198, %c0_280] : memref<504x128xbf16, #tpu.memory_space<vmem>>, vector<16x128xbf16>
    %344 = vector.extract_strided_slice %343 {offsets = [0, 0], sizes = [16, 16], strides = [1, 1]} : vector<16x128xbf16> to vector<16x16xbf16>
    %c200 = arith.constant 200 : index
    %c0_281 = arith.constant 0 : index
    %345 = vector.load %arg6[%c200, %c0_281] : memref<504x128xbf16, #tpu.memory_space<vmem>>, vector<16x128xbf16>
    %346 = vector.extract_strided_slice %345 {offsets = [0, 0], sizes = [16, 16], strides = [1, 1]} : vector<16x128xbf16> to vector<16x16xbf16>
    %347 = tpu.concatenate %338, %340, %342, %344, %346, %275 in 1 : vector<16x16xbf16>, vector<16x16xbf16>, vector<16x16xbf16>, vector<16x16xbf16>, vector<16x16xbf16>, vector<16x48xbf16> -> vector<16x128xbf16>
    %c11 = arith.constant 11 : index
    %c0_282 = arith.constant 0 : index
    %c0_283 = arith.constant 0 : index
    %348 = vector.load %arg2[%c11, %c0_282, %c0_283] : memref<15x128x128xbf16, #tpu.memory_space<vmem>>, vector<1x128x128xbf16>
    %349 = vector.shape_cast %348 : vector<1x128x128xbf16> to vector<128x128xbf16>
    %cst_284 = arith.constant dense<0.000000e+00> : vector<16x128xf32>
    %350 = tpu.matmul %347, %349, %cst_284 {dimension_numbers = #tpu.dot_dimension_numbers<[1], [0], [0], [1], [0, 0, 1, 1], [], []>} : vector<16x128xbf16>, vector<128x128xbf16>, vector<16x128xf32> -> vector<16x128xf32>
    %351 = arith.addf %336, %350 : vector<16x128xf32>
    %c1_285 = arith.constant 1 : index
    %c0_286 = arith.constant 0 : index
    %352 = vector.load %arg3[%c1_285, %c0_286] : memref<3x128xf32, #tpu.memory_space<vmem>>, vector<1x128xf32>
    %353 = vector.broadcast %352 : vector<1x128xf32> to vector<16x128xf32>
    %354 = arith.mulf %351, %353 : vector<16x128xf32>
    %c1_287 = arith.constant 1 : index
    %c0_288 = arith.constant 0 : index
    %355 = vector.load %arg4[%c1_287, %c0_288] : memref<3x128xf32, #tpu.memory_space<vmem>>, vector<1x128xf32>
    %356 = vector.broadcast %355 : vector<1x128xf32> to vector<16x128xf32>
    %357 = arith.addf %354, %356 : vector<16x128xf32>
    %cst_289 = arith.constant 0.000000e+00 : f32
    %358 = vector.broadcast %cst_289 : f32 to vector<16x128xf32>
    %359 = arith.maximumf %357, %358 : vector<16x128xf32>
    %360 = tpu.concatenate %6, %359, %6 in 0 : vector<4x128xf32>, vector<16x128xf32>, vector<4x128xf32> -> vector<24x128xf32>
    %361 = arith.truncf %360 : vector<24x128xf32> to vector<24x128xbf16>
    %c96_290 = arith.constant 96 : index
    %c0_291 = arith.constant 0 : index
    %362 = vector.load %arg7[%c96_290, %c0_291] : memref<408x128xbf16, #tpu.memory_space<vmem>>, vector<24x128xbf16>
    tpu.vector_store %arg7[%c96_290, %c0_291], %361 {strides = array<i32>} : memref<408x128xbf16, #tpu.memory_space<vmem>>, vector<24x128xbf16>,
    %cst_292 = arith.constant 0.000000e+00 : f32
    %363 = vector.broadcast %cst_292 : f32 to vector<16x128xf32>
    %c96_293 = arith.constant 96 : index
    %c0_294 = arith.constant 0 : index
    %364 = vector.load %arg6[%c96_293, %c0_294] : memref<504x128xbf16, #tpu.memory_space<vmem>>, vector<16x128xbf16>
    %365 = vector.extract_strided_slice %364 {offsets = [0, 0], sizes = [16, 16], strides = [1, 1]} : vector<16x128xbf16> to vector<16x16xbf16>
    %c98_295 = arith.constant 98 : index
    %c0_296 = arith.constant 0 : index
    %366 = vector.load %arg6[%c98_295, %c0_296] : memref<504x128xbf16, #tpu.memory_space<vmem>>, vector<16x128xbf16>
    %367 = vector.extract_strided_slice %366 {offsets = [0, 0], sizes = [16, 16], strides = [1, 1]} : vector<16x128xbf16> to vector<16x16xbf16>
    %c100_297 = arith.constant 100 : index
    %c0_298 = arith.constant 0 : index
    %368 = vector.load %arg6[%c100_297, %c0_298] : memref<504x128xbf16, #tpu.memory_space<vmem>>, vector<16x128xbf16>
    %369 = vector.extract_strided_slice %368 {offsets = [0, 0], sizes = [16, 16], strides = [1, 1]} : vector<16x128xbf16> to vector<16x16xbf16>
    %c102_299 = arith.constant 102 : index
    %c0_300 = arith.constant 0 : index
    %370 = vector.load %arg6[%c102_299, %c0_300] : memref<504x128xbf16, #tpu.memory_space<vmem>>, vector<16x128xbf16>
    %371 = vector.extract_strided_slice %370 {offsets = [0, 0], sizes = [16, 16], strides = [1, 1]} : vector<16x128xbf16> to vector<16x16xbf16>
    %c104_301 = arith.constant 104 : index
    %c0_302 = arith.constant 0 : index
    %372 = vector.load %arg6[%c104_301, %c0_302] : memref<504x128xbf16, #tpu.memory_space<vmem>>, vector<16x128xbf16>
    %373 = vector.extract_strided_slice %372 {offsets = [0, 0], sizes = [16, 16], strides = [1, 1]} : vector<16x128xbf16> to vector<16x16xbf16>
    %374 = tpu.concatenate %365, %367, %369, %371, %373, %275 in 1 : vector<16x16xbf16>, vector<16x16xbf16>, vector<16x16xbf16>, vector<16x16xbf16>, vector<16x16xbf16>, vector<16x48xbf16> -> vector<16x128xbf16>
    %c7_303 = arith.constant 7 : index
    %c0_304 = arith.constant 0 : index
    %c0_305 = arith.constant 0 : index
    %375 = vector.load %arg2[%c7_303, %c0_304, %c0_305] : memref<15x128x128xbf16, #tpu.memory_space<vmem>>, vector<1x128x128xbf16>
    %376 = vector.shape_cast %375 : vector<1x128x128xbf16> to vector<128x128xbf16>
    %cst_306 = arith.constant dense<0.000000e+00> : vector<16x128xf32>
    %377 = tpu.matmul %374, %376, %cst_306 {dimension_numbers = #tpu.dot_dimension_numbers<[1], [0], [0], [1], [0, 0, 1, 1], [], []>} : vector<16x128xbf16>, vector<128x128xbf16>, vector<16x128xf32> -> vector<16x128xf32>
    %378 = arith.addf %363, %377 : vector<16x128xf32>
    %c144_307 = arith.constant 144 : index
    %c0_308 = arith.constant 0 : index
    %379 = vector.load %arg6[%c144_307, %c0_308] : memref<504x128xbf16, #tpu.memory_space<vmem>>, vector<16x128xbf16>
    %380 = vector.extract_strided_slice %379 {offsets = [0, 0], sizes = [16, 16], strides = [1, 1]} : vector<16x128xbf16> to vector<16x16xbf16>
    %c146_309 = arith.constant 146 : index
    %c0_310 = arith.constant 0 : index
    %381 = vector.load %arg6[%c146_309, %c0_310] : memref<504x128xbf16, #tpu.memory_space<vmem>>, vector<16x128xbf16>
    %382 = vector.extract_strided_slice %381 {offsets = [0, 0], sizes = [16, 16], strides = [1, 1]} : vector<16x128xbf16> to vector<16x16xbf16>
    %c148_311 = arith.constant 148 : index
    %c0_312 = arith.constant 0 : index
    %383 = vector.load %arg6[%c148_311, %c0_312] : memref<504x128xbf16, #tpu.memory_space<vmem>>, vector<16x128xbf16>
    %384 = vector.extract_strided_slice %383 {offsets = [0, 0], sizes = [16, 16], strides = [1, 1]} : vector<16x128xbf16> to vector<16x16xbf16>
    %c150_313 = arith.constant 150 : index
    %c0_314 = arith.constant 0 : index
    %385 = vector.load %arg6[%c150_313, %c0_314] : memref<504x128xbf16, #tpu.memory_space<vmem>>, vector<16x128xbf16>
    %386 = vector.extract_strided_slice %385 {offsets = [0, 0], sizes = [16, 16], strides = [1, 1]} : vector<16x128xbf16> to vector<16x16xbf16>
    %c152_315 = arith.constant 152 : index
    %c0_316 = arith.constant 0 : index
    %387 = vector.load %arg6[%c152_315, %c0_316] : memref<504x128xbf16, #tpu.memory_space<vmem>>, vector<16x128xbf16>
    %388 = vector.extract_strided_slice %387 {offsets = [0, 0], sizes = [16, 16], strides = [1, 1]} : vector<16x128xbf16> to vector<16x16xbf16>
    %389 = tpu.concatenate %380, %382, %384, %386, %388, %275 in 1 : vector<16x16xbf16>, vector<16x16xbf16>, vector<16x16xbf16>, vector<16x16xbf16>, vector<16x16xbf16>, vector<16x48xbf16> -> vector<16x128xbf16>
    %c8_317 = arith.constant 8 : index
    %c0_318 = arith.constant 0 : index
    %c0_319 = arith.constant 0 : index
    %390 = vector.load %arg2[%c8_317, %c0_318, %c0_319] : memref<15x128x128xbf16, #tpu.memory_space<vmem>>, vector<1x128x128xbf16>
    %391 = vector.shape_cast %390 : vector<1x128x128xbf16> to vector<128x128xbf16>
    %cst_320 = arith.constant dense<0.000000e+00> : vector<16x128xf32>
    %392 = tpu.matmul %389, %391, %cst_320 {dimension_numbers = #tpu.dot_dimension_numbers<[1], [0], [0], [1], [0, 0, 1, 1], [], []>} : vector<16x128xbf16>, vector<128x128xbf16>, vector<16x128xf32> -> vector<16x128xf32>
    %393 = arith.addf %378, %392 : vector<16x128xf32>
    %c192_321 = arith.constant 192 : index
    %c0_322 = arith.constant 0 : index
    %394 = vector.load %arg6[%c192_321, %c0_322] : memref<504x128xbf16, #tpu.memory_space<vmem>>, vector<16x128xbf16>
    %395 = vector.extract_strided_slice %394 {offsets = [0, 0], sizes = [16, 16], strides = [1, 1]} : vector<16x128xbf16> to vector<16x16xbf16>
    %c194_323 = arith.constant 194 : index
    %c0_324 = arith.constant 0 : index
    %396 = vector.load %arg6[%c194_323, %c0_324] : memref<504x128xbf16, #tpu.memory_space<vmem>>, vector<16x128xbf16>
    %397 = vector.extract_strided_slice %396 {offsets = [0, 0], sizes = [16, 16], strides = [1, 1]} : vector<16x128xbf16> to vector<16x16xbf16>
    %c196_325 = arith.constant 196 : index
    %c0_326 = arith.constant 0 : index
    %398 = vector.load %arg6[%c196_325, %c0_326] : memref<504x128xbf16, #tpu.memory_space<vmem>>, vector<16x128xbf16>
    %399 = vector.extract_strided_slice %398 {offsets = [0, 0], sizes = [16, 16], strides = [1, 1]} : vector<16x128xbf16> to vector<16x16xbf16>
    %c198_327 = arith.constant 198 : index
    %c0_328 = arith.constant 0 : index
    %400 = vector.load %arg6[%c198_327, %c0_328] : memref<504x128xbf16, #tpu.memory_space<vmem>>, vector<16x128xbf16>
    %401 = vector.extract_strided_slice %400 {offsets = [0, 0], sizes = [16, 16], strides = [1, 1]} : vector<16x128xbf16> to vector<16x16xbf16>
    %c200_329 = arith.constant 200 : index
    %c0_330 = arith.constant 0 : index
    %402 = vector.load %arg6[%c200_329, %c0_330] : memref<504x128xbf16, #tpu.memory_space<vmem>>, vector<16x128xbf16>
    %403 = vector.extract_strided_slice %402 {offsets = [0, 0], sizes = [16, 16], strides = [1, 1]} : vector<16x128xbf16> to vector<16x16xbf16>
    %404 = tpu.concatenate %395, %397, %399, %401, %403, %275 in 1 : vector<16x16xbf16>, vector<16x16xbf16>, vector<16x16xbf16>, vector<16x16xbf16>, vector<16x16xbf16>, vector<16x48xbf16> -> vector<16x128xbf16>
    %c9_331 = arith.constant 9 : index
    %c0_332 = arith.constant 0 : index
    %c0_333 = arith.constant 0 : index
    %405 = vector.load %arg2[%c9_331, %c0_332, %c0_333] : memref<15x128x128xbf16, #tpu.memory_space<vmem>>, vector<1x128x128xbf16>
    %406 = vector.shape_cast %405 : vector<1x128x128xbf16> to vector<128x128xbf16>
    %cst_334 = arith.constant dense<0.000000e+00> : vector<16x128xf32>
    %407 = tpu.matmul %404, %406, %cst_334 {dimension_numbers = #tpu.dot_dimension_numbers<[1], [0], [0], [1], [0, 0, 1, 1], [], []>} : vector<16x128xbf16>, vector<128x128xbf16>, vector<16x128xf32> -> vector<16x128xf32>
    %408 = arith.addf %393, %407 : vector<16x128xf32>
    %c240_335 = arith.constant 240 : index
    %c0_336 = arith.constant 0 : index
    %409 = vector.load %arg6[%c240_335, %c0_336] : memref<504x128xbf16, #tpu.memory_space<vmem>>, vector<16x128xbf16>
    %410 = vector.extract_strided_slice %409 {offsets = [0, 0], sizes = [16, 16], strides = [1, 1]} : vector<16x128xbf16> to vector<16x16xbf16>
    %c242 = arith.constant 242 : index
    %c0_337 = arith.constant 0 : index
    %411 = vector.load %arg6[%c242, %c0_337] : memref<504x128xbf16, #tpu.memory_space<vmem>>, vector<16x128xbf16>
    %412 = vector.extract_strided_slice %411 {offsets = [0, 0], sizes = [16, 16], strides = [1, 1]} : vector<16x128xbf16> to vector<16x16xbf16>
    %c244 = arith.constant 244 : index
    %c0_338 = arith.constant 0 : index
    %413 = vector.load %arg6[%c244, %c0_338] : memref<504x128xbf16, #tpu.memory_space<vmem>>, vector<16x128xbf16>
    %414 = vector.extract_strided_slice %413 {offsets = [0, 0], sizes = [16, 16], strides = [1, 1]} : vector<16x128xbf16> to vector<16x16xbf16>
    %c246 = arith.constant 246 : index
    %c0_339 = arith.constant 0 : index
    %415 = vector.load %arg6[%c246, %c0_339] : memref<504x128xbf16, #tpu.memory_space<vmem>>, vector<16x128xbf16>
    %416 = vector.extract_strided_slice %415 {offsets = [0, 0], sizes = [16, 16], strides = [1, 1]} : vector<16x128xbf16> to vector<16x16xbf16>
    %c248 = arith.constant 248 : index
    %c0_340 = arith.constant 0 : index
    %417 = vector.load %arg6[%c248, %c0_340] : memref<504x128xbf16, #tpu.memory_space<vmem>>, vector<16x128xbf16>
    %418 = vector.extract_strided_slice %417 {offsets = [0, 0], sizes = [16, 16], strides = [1, 1]} : vector<16x128xbf16> to vector<16x16xbf16>
    %419 = tpu.concatenate %410, %412, %414, %416, %418, %275 in 1 : vector<16x16xbf16>, vector<16x16xbf16>, vector<16x16xbf16>, vector<16x16xbf16>, vector<16x16xbf16>, vector<16x48xbf16> -> vector<16x128xbf16>
    %c10_341 = arith.constant 10 : index
    %c0_342 = arith.constant 0 : index
    %c0_343 = arith.constant 0 : index
    %420 = vector.load %arg2[%c10_341, %c0_342, %c0_343] : memref<15x128x128xbf16, #tpu.memory_space<vmem>>, vector<1x128x128xbf16>
    %421 = vector.shape_cast %420 : vector<1x128x128xbf16> to vector<128x128xbf16>
    %cst_344 = arith.constant dense<0.000000e+00> : vector<16x128xf32>
    %422 = tpu.matmul %419, %421, %cst_344 {dimension_numbers = #tpu.dot_dimension_numbers<[1], [0], [0], [1], [0, 0, 1, 1], [], []>} : vector<16x128xbf16>, vector<128x128xbf16>, vector<16x128xf32> -> vector<16x128xf32>
    %423 = arith.addf %408, %422 : vector<16x128xf32>
    %c288_345 = arith.constant 288 : index
    %c0_346 = arith.constant 0 : index
    %424 = vector.load %arg6[%c288_345, %c0_346] : memref<504x128xbf16, #tpu.memory_space<vmem>>, vector<16x128xbf16>
    %425 = vector.extract_strided_slice %424 {offsets = [0, 0], sizes = [16, 16], strides = [1, 1]} : vector<16x128xbf16> to vector<16x16xbf16>
    %c290 = arith.constant 290 : index
    %c0_347 = arith.constant 0 : index
    %426 = vector.load %arg6[%c290, %c0_347] : memref<504x128xbf16, #tpu.memory_space<vmem>>, vector<16x128xbf16>
    %427 = vector.extract_strided_slice %426 {offsets = [0, 0], sizes = [16, 16], strides = [1, 1]} : vector<16x128xbf16> to vector<16x16xbf16>
    %c292 = arith.constant 292 : index
    %c0_348 = arith.constant 0 : index
    %428 = vector.load %arg6[%c292, %c0_348] : memref<504x128xbf16, #tpu.memory_space<vmem>>, vector<16x128xbf16>
    %429 = vector.extract_strided_slice %428 {offsets = [0, 0], sizes = [16, 16], strides = [1, 1]} : vector<16x128xbf16> to vector<16x16xbf16>
    %c294 = arith.constant 294 : index
    %c0_349 = arith.constant 0 : index
    %430 = vector.load %arg6[%c294, %c0_349] : memref<504x128xbf16, #tpu.memory_space<vmem>>, vector<16x128xbf16>
    %431 = vector.extract_strided_slice %430 {offsets = [0, 0], sizes = [16, 16], strides = [1, 1]} : vector<16x128xbf16> to vector<16x16xbf16>
    %c296 = arith.constant 296 : index
    %c0_350 = arith.constant 0 : index
    %432 = vector.load %arg6[%c296, %c0_350] : memref<504x128xbf16, #tpu.memory_space<vmem>>, vector<16x128xbf16>
    %433 = vector.extract_strided_slice %432 {offsets = [0, 0], sizes = [16, 16], strides = [1, 1]} : vector<16x128xbf16> to vector<16x16xbf16>
    %434 = tpu.concatenate %425, %427, %429, %431, %433, %275 in 1 : vector<16x16xbf16>, vector<16x16xbf16>, vector<16x16xbf16>, vector<16x16xbf16>, vector<16x16xbf16>, vector<16x48xbf16> -> vector<16x128xbf16>
    %c11_351 = arith.constant 11 : index
    %c0_352 = arith.constant 0 : index
    %c0_353 = arith.constant 0 : index
    %435 = vector.load %arg2[%c11_351, %c0_352, %c0_353] : memref<15x128x128xbf16, #tpu.memory_space<vmem>>, vector<1x128x128xbf16>
    %436 = vector.shape_cast %435 : vector<1x128x128xbf16> to vector<128x128xbf16>
    %cst_354 = arith.constant dense<0.000000e+00> : vector<16x128xf32>
    %437 = tpu.matmul %434, %436, %cst_354 {dimension_numbers = #tpu.dot_dimension_numbers<[1], [0], [0], [1], [0, 0, 1, 1], [], []>} : vector<16x128xbf16>, vector<128x128xbf16>, vector<16x128xf32> -> vector<16x128xf32>
    %438 = arith.addf %423, %437 : vector<16x128xf32>
    %c1_355 = arith.constant 1 : index
    %c0_356 = arith.constant 0 : index
    %439 = vector.load %arg3[%c1_355, %c0_356] : memref<3x128xf32, #tpu.memory_space<vmem>>, vector<1x128xf32>
    %440 = vector.broadcast %439 : vector<1x128xf32> to vector<16x128xf32>
    %441 = arith.mulf %438, %440 : vector<16x128xf32>
    %c1_357 = arith.constant 1 : index
    %c0_358 = arith.constant 0 : index
    %442 = vector.load %arg4[%c1_357, %c0_358] : memref<3x128xf32, #tpu.memory_space<vmem>>, vector<1x128xf32>
    %443 = vector.broadcast %442 : vector<1x128xf32> to vector<16x128xf32>
    %444 = arith.addf %441, %443 : vector<16x128xf32>
    %cst_359 = arith.constant 0.000000e+00 : f32
    %445 = vector.broadcast %cst_359 : f32 to vector<16x128xf32>
    %446 = arith.maximumf %444, %445 : vector<16x128xf32>
    %447 = tpu.concatenate %6, %446, %6 in 0 : vector<4x128xf32>, vector<16x128xf32>, vector<4x128xf32> -> vector<24x128xf32>
    %448 = arith.truncf %447 : vector<24x128xf32> to vector<24x128xbf16>
    %c192_360 = arith.constant 192 : index
    %c0_361 = arith.constant 0 : index
    %449 = vector.load %arg7[%c192_360, %c0_361] : memref<408x128xbf16, #tpu.memory_space<vmem>>, vector<24x128xbf16>
    tpu.vector_store %arg7[%c192_360, %c0_361], %448 {strides = array<i32>} : memref<408x128xbf16, #tpu.memory_space<vmem>>, vector<24x128xbf16>,
    %cst_362 = arith.constant 0.000000e+00 : f32
    %450 = vector.broadcast %cst_362 : f32 to vector<16x128xf32>
    %c192_363 = arith.constant 192 : index
    %c0_364 = arith.constant 0 : index
    %451 = vector.load %arg6[%c192_363, %c0_364] : memref<504x128xbf16, #tpu.memory_space<vmem>>, vector<16x128xbf16>
    %452 = vector.extract_strided_slice %451 {offsets = [0, 0], sizes = [16, 16], strides = [1, 1]} : vector<16x128xbf16> to vector<16x16xbf16>
    %c194_365 = arith.constant 194 : index
    %c0_366 = arith.constant 0 : index
    %453 = vector.load %arg6[%c194_365, %c0_366] : memref<504x128xbf16, #tpu.memory_space<vmem>>, vector<16x128xbf16>
    %454 = vector.extract_strided_slice %453 {offsets = [0, 0], sizes = [16, 16], strides = [1, 1]} : vector<16x128xbf16> to vector<16x16xbf16>
    %c196_367 = arith.constant 196 : index
    %c0_368 = arith.constant 0 : index
    %455 = vector.load %arg6[%c196_367, %c0_368] : memref<504x128xbf16, #tpu.memory_space<vmem>>, vector<16x128xbf16>
    %456 = vector.extract_strided_slice %455 {offsets = [0, 0], sizes = [16, 16], strides = [1, 1]} : vector<16x128xbf16> to vector<16x16xbf16>
    %c198_369 = arith.constant 198 : index
    %c0_370 = arith.constant 0 : index
    %457 = vector.load %arg6[%c198_369, %c0_370] : memref<504x128xbf16, #tpu.memory_space<vmem>>, vector<16x128xbf16>
    %458 = vector.extract_strided_slice %457 {offsets = [0, 0], sizes = [16, 16], strides = [1, 1]} : vector<16x128xbf16> to vector<16x16xbf16>
    %c200_371 = arith.constant 200 : index
    %c0_372 = arith.constant 0 : index
    %459 = vector.load %arg6[%c200_371, %c0_372] : memref<504x128xbf16, #tpu.memory_space<vmem>>, vector<16x128xbf16>
    %460 = vector.extract_strided_slice %459 {offsets = [0, 0], sizes = [16, 16], strides = [1, 1]} : vector<16x128xbf16> to vector<16x16xbf16>
    %461 = tpu.concatenate %452, %454, %456, %458, %460, %275 in 1 : vector<16x16xbf16>, vector<16x16xbf16>, vector<16x16xbf16>, vector<16x16xbf16>, vector<16x16xbf16>, vector<16x48xbf16> -> vector<16x128xbf16>
    %c7_373 = arith.constant 7 : index
    %c0_374 = arith.constant 0 : index
    %c0_375 = arith.constant 0 : index
    %462 = vector.load %arg2[%c7_373, %c0_374, %c0_375] : memref<15x128x128xbf16, #tpu.memory_space<vmem>>, vector<1x128x128xbf16>
    %463 = vector.shape_cast %462 : vector<1x128x128xbf16> to vector<128x128xbf16>
    %cst_376 = arith.constant dense<0.000000e+00> : vector<16x128xf32>
    %464 = tpu.matmul %461, %463, %cst_376 {dimension_numbers = #tpu.dot_dimension_numbers<[1], [0], [0], [1], [0, 0, 1, 1], [], []>} : vector<16x128xbf16>, vector<128x128xbf16>, vector<16x128xf32> -> vector<16x128xf32>
    %465 = arith.addf %450, %464 : vector<16x128xf32>
    %c240_377 = arith.constant 240 : index
    %c0_378 = arith.constant 0 : index
    %466 = vector.load %arg6[%c240_377, %c0_378] : memref<504x128xbf16, #tpu.memory_space<vmem>>, vector<16x128xbf16>
    %467 = vector.extract_strided_slice %466 {offsets = [0, 0], sizes = [16, 16], strides = [1, 1]} : vector<16x128xbf16> to vector<16x16xbf16>
    %c242_379 = arith.constant 242 : index
    %c0_380 = arith.constant 0 : index
    %468 = vector.load %arg6[%c242_379, %c0_380] : memref<504x128xbf16, #tpu.memory_space<vmem>>, vector<16x128xbf16>
    %469 = vector.extract_strided_slice %468 {offsets = [0, 0], sizes = [16, 16], strides = [1, 1]} : vector<16x128xbf16> to vector<16x16xbf16>
    %c244_381 = arith.constant 244 : index
    %c0_382 = arith.constant 0 : index
    %470 = vector.load %arg6[%c244_381, %c0_382] : memref<504x128xbf16, #tpu.memory_space<vmem>>, vector<16x128xbf16>
    %471 = vector.extract_strided_slice %470 {offsets = [0, 0], sizes = [16, 16], strides = [1, 1]} : vector<16x128xbf16> to vector<16x16xbf16>
    %c246_383 = arith.constant 246 : index
    %c0_384 = arith.constant 0 : index
    %472 = vector.load %arg6[%c246_383, %c0_384] : memref<504x128xbf16, #tpu.memory_space<vmem>>, vector<16x128xbf16>
    %473 = vector.extract_strided_slice %472 {offsets = [0, 0], sizes = [16, 16], strides = [1, 1]} : vector<16x128xbf16> to vector<16x16xbf16>
    %c248_385 = arith.constant 248 : index
    %c0_386 = arith.constant 0 : index
    %474 = vector.load %arg6[%c248_385, %c0_386] : memref<504x128xbf16, #tpu.memory_space<vmem>>, vector<16x128xbf16>
    %475 = vector.extract_strided_slice %474 {offsets = [0, 0], sizes = [16, 16], strides = [1, 1]} : vector<16x128xbf16> to vector<16x16xbf16>
    %476 = tpu.concatenate %467, %469, %471, %473, %475, %275 in 1 : vector<16x16xbf16>, vector<16x16xbf16>, vector<16x16xbf16>, vector<16x16xbf16>, vector<16x16xbf16>, vector<16x48xbf16> -> vector<16x128xbf16>
    %c8_387 = arith.constant 8 : index
    %c0_388 = arith.constant 0 : index
    %c0_389 = arith.constant 0 : index
    %477 = vector.load %arg2[%c8_387, %c0_388, %c0_389] : memref<15x128x128xbf16, #tpu.memory_space<vmem>>, vector<1x128x128xbf16>
    %478 = vector.shape_cast %477 : vector<1x128x128xbf16> to vector<128x128xbf16>
    %cst_390 = arith.constant dense<0.000000e+00> : vector<16x128xf32>
    %479 = tpu.matmul %476, %478, %cst_390 {dimension_numbers = #tpu.dot_dimension_numbers<[1], [0], [0], [1], [0, 0, 1, 1], [], []>} : vector<16x128xbf16>, vector<128x128xbf16>, vector<16x128xf32> -> vector<16x128xf32>
    %480 = arith.addf %465, %479 : vector<16x128xf32>
    %c288_391 = arith.constant 288 : index
    %c0_392 = arith.constant 0 : index
    %481 = vector.load %arg6[%c288_391, %c0_392] : memref<504x128xbf16, #tpu.memory_space<vmem>>, vector<16x128xbf16>
    %482 = vector.extract_strided_slice %481 {offsets = [0, 0], sizes = [16, 16], strides = [1, 1]} : vector<16x128xbf16> to vector<16x16xbf16>
    %c290_393 = arith.constant 290 : index
    %c0_394 = arith.constant 0 : index
    %483 = vector.load %arg6[%c290_393, %c0_394] : memref<504x128xbf16, #tpu.memory_space<vmem>>, vector<16x128xbf16>
    %484 = vector.extract_strided_slice %483 {offsets = [0, 0], sizes = [16, 16], strides = [1, 1]} : vector<16x128xbf16> to vector<16x16xbf16>
    %c292_395 = arith.constant 292 : index
    %c0_396 = arith.constant 0 : index
    %485 = vector.load %arg6[%c292_395, %c0_396] : memref<504x128xbf16, #tpu.memory_space<vmem>>, vector<16x128xbf16>
    %486 = vector.extract_strided_slice %485 {offsets = [0, 0], sizes = [16, 16], strides = [1, 1]} : vector<16x128xbf16> to vector<16x16xbf16>
    %c294_397 = arith.constant 294 : index
    %c0_398 = arith.constant 0 : index
    %487 = vector.load %arg6[%c294_397, %c0_398] : memref<504x128xbf16, #tpu.memory_space<vmem>>, vector<16x128xbf16>
    %488 = vector.extract_strided_slice %487 {offsets = [0, 0], sizes = [16, 16], strides = [1, 1]} : vector<16x128xbf16> to vector<16x16xbf16>
    %c296_399 = arith.constant 296 : index
    %c0_400 = arith.constant 0 : index
    %489 = vector.load %arg6[%c296_399, %c0_400] : memref<504x128xbf16, #tpu.memory_space<vmem>>, vector<16x128xbf16>
    %490 = vector.extract_strided_slice %489 {offsets = [0, 0], sizes = [16, 16], strides = [1, 1]} : vector<16x128xbf16> to vector<16x16xbf16>
    %491 = tpu.concatenate %482, %484, %486, %488, %490, %275 in 1 : vector<16x16xbf16>, vector<16x16xbf16>, vector<16x16xbf16>, vector<16x16xbf16>, vector<16x16xbf16>, vector<16x48xbf16> -> vector<16x128xbf16>
    %c9_401 = arith.constant 9 : index
    %c0_402 = arith.constant 0 : index
    %c0_403 = arith.constant 0 : index
    %492 = vector.load %arg2[%c9_401, %c0_402, %c0_403] : memref<15x128x128xbf16, #tpu.memory_space<vmem>>, vector<1x128x128xbf16>
    %493 = vector.shape_cast %492 : vector<1x128x128xbf16> to vector<128x128xbf16>
    %cst_404 = arith.constant dense<0.000000e+00> : vector<16x128xf32>
    %494 = tpu.matmul %491, %493, %cst_404 {dimension_numbers = #tpu.dot_dimension_numbers<[1], [0], [0], [1], [0, 0, 1, 1], [], []>} : vector<16x128xbf16>, vector<128x128xbf16>, vector<16x128xf32> -> vector<16x128xf32>
    %495 = arith.addf %480, %494 : vector<16x128xf32>
    %c336_405 = arith.constant 336 : index
    %c0_406 = arith.constant 0 : index
    %496 = vector.load %arg6[%c336_405, %c0_406] : memref<504x128xbf16, #tpu.memory_space<vmem>>, vector<16x128xbf16>
    %497 = vector.extract_strided_slice %496 {offsets = [0, 0], sizes = [16, 16], strides = [1, 1]} : vector<16x128xbf16> to vector<16x16xbf16>
    %c338 = arith.constant 338 : index
    %c0_407 = arith.constant 0 : index
    %498 = vector.load %arg6[%c338, %c0_407] : memref<504x128xbf16, #tpu.memory_space<vmem>>, vector<16x128xbf16>
    %499 = vector.extract_strided_slice %498 {offsets = [0, 0], sizes = [16, 16], strides = [1, 1]} : vector<16x128xbf16> to vector<16x16xbf16>
    %c340 = arith.constant 340 : index
    %c0_408 = arith.constant 0 : index
    %500 = vector.load %arg6[%c340, %c0_408] : memref<504x128xbf16, #tpu.memory_space<vmem>>, vector<16x128xbf16>
    %501 = vector.extract_strided_slice %500 {offsets = [0, 0], sizes = [16, 16], strides = [1, 1]} : vector<16x128xbf16> to vector<16x16xbf16>
    %c342 = arith.constant 342 : index
    %c0_409 = arith.constant 0 : index
    %502 = vector.load %arg6[%c342, %c0_409] : memref<504x128xbf16, #tpu.memory_space<vmem>>, vector<16x128xbf16>
    %503 = vector.extract_strided_slice %502 {offsets = [0, 0], sizes = [16, 16], strides = [1, 1]} : vector<16x128xbf16> to vector<16x16xbf16>
    %c344 = arith.constant 344 : index
    %c0_410 = arith.constant 0 : index
    %504 = vector.load %arg6[%c344, %c0_410] : memref<504x128xbf16, #tpu.memory_space<vmem>>, vector<16x128xbf16>
    %505 = vector.extract_strided_slice %504 {offsets = [0, 0], sizes = [16, 16], strides = [1, 1]} : vector<16x128xbf16> to vector<16x16xbf16>
    %506 = tpu.concatenate %497, %499, %501, %503, %505, %275 in 1 : vector<16x16xbf16>, vector<16x16xbf16>, vector<16x16xbf16>, vector<16x16xbf16>, vector<16x16xbf16>, vector<16x48xbf16> -> vector<16x128xbf16>
    %c10_411 = arith.constant 10 : index
    %c0_412 = arith.constant 0 : index
    %c0_413 = arith.constant 0 : index
    %507 = vector.load %arg2[%c10_411, %c0_412, %c0_413] : memref<15x128x128xbf16, #tpu.memory_space<vmem>>, vector<1x128x128xbf16>
    %508 = vector.shape_cast %507 : vector<1x128x128xbf16> to vector<128x128xbf16>
    %cst_414 = arith.constant dense<0.000000e+00> : vector<16x128xf32>
    %509 = tpu.matmul %506, %508, %cst_414 {dimension_numbers = #tpu.dot_dimension_numbers<[1], [0], [0], [1], [0, 0, 1, 1], [], []>} : vector<16x128xbf16>, vector<128x128xbf16>, vector<16x128xf32> -> vector<16x128xf32>
    %510 = arith.addf %495, %509 : vector<16x128xf32>
    %c384_415 = arith.constant 384 : index
    %c0_416 = arith.constant 0 : index
    %511 = vector.load %arg6[%c384_415, %c0_416] : memref<504x128xbf16, #tpu.memory_space<vmem>>, vector<16x128xbf16>
    %512 = vector.extract_strided_slice %511 {offsets = [0, 0], sizes = [16, 16], strides = [1, 1]} : vector<16x128xbf16> to vector<16x16xbf16>
    %c386 = arith.constant 386 : index
    %c0_417 = arith.constant 0 : index
    %513 = vector.load %arg6[%c386, %c0_417] : memref<504x128xbf16, #tpu.memory_space<vmem>>, vector<16x128xbf16>
    %514 = vector.extract_strided_slice %513 {offsets = [0, 0], sizes = [16, 16], strides = [1, 1]} : vector<16x128xbf16> to vector<16x16xbf16>
    %c388 = arith.constant 388 : index
    %c0_418 = arith.constant 0 : index
    %515 = vector.load %arg6[%c388, %c0_418] : memref<504x128xbf16, #tpu.memory_space<vmem>>, vector<16x128xbf16>
    %516 = vector.extract_strided_slice %515 {offsets = [0, 0], sizes = [16, 16], strides = [1, 1]} : vector<16x128xbf16> to vector<16x16xbf16>
    %c390 = arith.constant 390 : index
    %c0_419 = arith.constant 0 : index
    %517 = vector.load %arg6[%c390, %c0_419] : memref<504x128xbf16, #tpu.memory_space<vmem>>, vector<16x128xbf16>
    %518 = vector.extract_strided_slice %517 {offsets = [0, 0], sizes = [16, 16], strides = [1, 1]} : vector<16x128xbf16> to vector<16x16xbf16>
    %c392 = arith.constant 392 : index
    %c0_420 = arith.constant 0 : index
    %519 = vector.load %arg6[%c392, %c0_420] : memref<504x128xbf16, #tpu.memory_space<vmem>>, vector<16x128xbf16>
    %520 = vector.extract_strided_slice %519 {offsets = [0, 0], sizes = [16, 16], strides = [1, 1]} : vector<16x128xbf16> to vector<16x16xbf16>
    %521 = tpu.concatenate %512, %514, %516, %518, %520, %275 in 1 : vector<16x16xbf16>, vector<16x16xbf16>, vector<16x16xbf16>, vector<16x16xbf16>, vector<16x16xbf16>, vector<16x48xbf16> -> vector<16x128xbf16>
    %c11_421 = arith.constant 11 : index
    %c0_422 = arith.constant 0 : index
    %c0_423 = arith.constant 0 : index
    %522 = vector.load %arg2[%c11_421, %c0_422, %c0_423] : memref<15x128x128xbf16, #tpu.memory_space<vmem>>, vector<1x128x128xbf16>
    %523 = vector.shape_cast %522 : vector<1x128x128xbf16> to vector<128x128xbf16>
    %cst_424 = arith.constant dense<0.000000e+00> : vector<16x128xf32>
    %524 = tpu.matmul %521, %523, %cst_424 {dimension_numbers = #tpu.dot_dimension_numbers<[1], [0], [0], [1], [0, 0, 1, 1], [], []>} : vector<16x128xbf16>, vector<128x128xbf16>, vector<16x128xf32> -> vector<16x128xf32>
    %525 = arith.addf %510, %524 : vector<16x128xf32>
    %c1_425 = arith.constant 1 : index
    %c0_426 = arith.constant 0 : index
    %526 = vector.load %arg3[%c1_425, %c0_426] : memref<3x128xf32, #tpu.memory_space<vmem>>, vector<1x128xf32>
    %527 = vector.broadcast %526 : vector<1x128xf32> to vector<16x128xf32>
    %528 = arith.mulf %525, %527 : vector<16x128xf32>
    %c1_427 = arith.constant 1 : index
    %c0_428 = arith.constant 0 : index
    %529 = vector.load %arg4[%c1_427, %c0_428] : memref<3x128xf32, #tpu.memory_space<vmem>>, vector<1x128xf32>
    %530 = vector.broadcast %529 : vector<1x128xf32> to vector<16x128xf32>
    %531 = arith.addf %528, %530 : vector<16x128xf32>
    %cst_429 = arith.constant 0.000000e+00 : f32
    %532 = vector.broadcast %cst_429 : f32 to vector<16x128xf32>
    %533 = arith.maximumf %531, %532 : vector<16x128xf32>
    %534 = tpu.concatenate %6, %533, %6 in 0 : vector<4x128xf32>, vector<16x128xf32>, vector<4x128xf32> -> vector<24x128xf32>
    %535 = arith.truncf %534 : vector<24x128xf32> to vector<24x128xbf16>
    %c288_430 = arith.constant 288 : index
    %c0_431 = arith.constant 0 : index
    %536 = vector.load %arg7[%c288_430, %c0_431] : memref<408x128xbf16, #tpu.memory_space<vmem>>, vector<24x128xbf16>
    tpu.vector_store %arg7[%c288_430, %c0_431], %535 {strides = array<i32>} : memref<408x128xbf16, #tpu.memory_space<vmem>>, vector<24x128xbf16>,
    %cst_432 = arith.constant 0.000000e+00 : f32
    %537 = vector.broadcast %cst_432 : f32 to vector<16x128xf32>
    %c288_433 = arith.constant 288 : index
    %c0_434 = arith.constant 0 : index
    %538 = vector.load %arg6[%c288_433, %c0_434] : memref<504x128xbf16, #tpu.memory_space<vmem>>, vector<16x128xbf16>
    %539 = vector.extract_strided_slice %538 {offsets = [0, 0], sizes = [16, 16], strides = [1, 1]} : vector<16x128xbf16> to vector<16x16xbf16>
    %c290_435 = arith.constant 290 : index
    %c0_436 = arith.constant 0 : index
    %540 = vector.load %arg6[%c290_435, %c0_436] : memref<504x128xbf16, #tpu.memory_space<vmem>>, vector<16x128xbf16>
    %541 = vector.extract_strided_slice %540 {offsets = [0, 0], sizes = [16, 16], strides = [1, 1]} : vector<16x128xbf16> to vector<16x16xbf16>
    %c292_437 = arith.constant 292 : index
    %c0_438 = arith.constant 0 : index
    %542 = vector.load %arg6[%c292_437, %c0_438] : memref<504x128xbf16, #tpu.memory_space<vmem>>, vector<16x128xbf16>
    %543 = vector.extract_strided_slice %542 {offsets = [0, 0], sizes = [16, 16], strides = [1, 1]} : vector<16x128xbf16> to vector<16x16xbf16>
    %c294_439 = arith.constant 294 : index
    %c0_440 = arith.constant 0 : index
    %544 = vector.load %arg6[%c294_439, %c0_440] : memref<504x128xbf16, #tpu.memory_space<vmem>>, vector<16x128xbf16>
    %545 = vector.extract_strided_slice %544 {offsets = [0, 0], sizes = [16, 16], strides = [1, 1]} : vector<16x128xbf16> to vector<16x16xbf16>
    %c296_441 = arith.constant 296 : index
    %c0_442 = arith.constant 0 : index
    %546 = vector.load %arg6[%c296_441, %c0_442] : memref<504x128xbf16, #tpu.memory_space<vmem>>, vector<16x128xbf16>
    %547 = vector.extract_strided_slice %546 {offsets = [0, 0], sizes = [16, 16], strides = [1, 1]} : vector<16x128xbf16> to vector<16x16xbf16>
    %548 = tpu.concatenate %539, %541, %543, %545, %547, %275 in 1 : vector<16x16xbf16>, vector<16x16xbf16>, vector<16x16xbf16>, vector<16x16xbf16>, vector<16x16xbf16>, vector<16x48xbf16> -> vector<16x128xbf16>
    %c7_443 = arith.constant 7 : index
    %c0_444 = arith.constant 0 : index
    %c0_445 = arith.constant 0 : index
    %549 = vector.load %arg2[%c7_443, %c0_444, %c0_445] : memref<15x128x128xbf16, #tpu.memory_space<vmem>>, vector<1x128x128xbf16>
    %550 = vector.shape_cast %549 : vector<1x128x128xbf16> to vector<128x128xbf16>
    %cst_446 = arith.constant dense<0.000000e+00> : vector<16x128xf32>
    %551 = tpu.matmul %548, %550, %cst_446 {dimension_numbers = #tpu.dot_dimension_numbers<[1], [0], [0], [1], [0, 0, 1, 1], [], []>} : vector<16x128xbf16>, vector<128x128xbf16>, vector<16x128xf32> -> vector<16x128xf32>
    %552 = arith.addf %537, %551 : vector<16x128xf32>
    %c336_447 = arith.constant 336 : index
    %c0_448 = arith.constant 0 : index
    %553 = vector.load %arg6[%c336_447, %c0_448] : memref<504x128xbf16, #tpu.memory_space<vmem>>, vector<16x128xbf16>
    %554 = vector.extract_strided_slice %553 {offsets = [0, 0], sizes = [16, 16], strides = [1, 1]} : vector<16x128xbf16> to vector<16x16xbf16>
    %c338_449 = arith.constant 338 : index
    %c0_450 = arith.constant 0 : index
    %555 = vector.load %arg6[%c338_449, %c0_450] : memref<504x128xbf16, #tpu.memory_space<vmem>>, vector<16x128xbf16>
    %556 = vector.extract_strided_slice %555 {offsets = [0, 0], sizes = [16, 16], strides = [1, 1]} : vector<16x128xbf16> to vector<16x16xbf16>
    %c340_451 = arith.constant 340 : index
    %c0_452 = arith.constant 0 : index
    %557 = vector.load %arg6[%c340_451, %c0_452] : memref<504x128xbf16, #tpu.memory_space<vmem>>, vector<16x128xbf16>
    %558 = vector.extract_strided_slice %557 {offsets = [0, 0], sizes = [16, 16], strides = [1, 1]} : vector<16x128xbf16> to vector<16x16xbf16>
    %c342_453 = arith.constant 342 : index
    %c0_454 = arith.constant 0 : index
    %559 = vector.load %arg6[%c342_453, %c0_454] : memref<504x128xbf16, #tpu.memory_space<vmem>>, vector<16x128xbf16>
    %560 = vector.extract_strided_slice %559 {offsets = [0, 0], sizes = [16, 16], strides = [1, 1]} : vector<16x128xbf16> to vector<16x16xbf16>
    %c344_455 = arith.constant 344 : index
    %c0_456 = arith.constant 0 : index
    %561 = vector.load %arg6[%c344_455, %c0_456] : memref<504x128xbf16, #tpu.memory_space<vmem>>, vector<16x128xbf16>
    %562 = vector.extract_strided_slice %561 {offsets = [0, 0], sizes = [16, 16], strides = [1, 1]} : vector<16x128xbf16> to vector<16x16xbf16>
    %563 = tpu.concatenate %554, %556, %558, %560, %562, %275 in 1 : vector<16x16xbf16>, vector<16x16xbf16>, vector<16x16xbf16>, vector<16x16xbf16>, vector<16x16xbf16>, vector<16x48xbf16> -> vector<16x128xbf16>
    %c8_457 = arith.constant 8 : index
    %c0_458 = arith.constant 0 : index
    %c0_459 = arith.constant 0 : index
    %564 = vector.load %arg2[%c8_457, %c0_458, %c0_459] : memref<15x128x128xbf16, #tpu.memory_space<vmem>>, vector<1x128x128xbf16>
    %565 = vector.shape_cast %564 : vector<1x128x128xbf16> to vector<128x128xbf16>
    %cst_460 = arith.constant dense<0.000000e+00> : vector<16x128xf32>
    %566 = tpu.matmul %563, %565, %cst_460 {dimension_numbers = #tpu.dot_dimension_numbers<[1], [0], [0], [1], [0, 0, 1, 1], [], []>} : vector<16x128xbf16>, vector<128x128xbf16>, vector<16x128xf32> -> vector<16x128xf32>
    %567 = arith.addf %552, %566 : vector<16x128xf32>
    %c384_461 = arith.constant 384 : index
    %c0_462 = arith.constant 0 : index
    %568 = vector.load %arg6[%c384_461, %c0_462] : memref<504x128xbf16, #tpu.memory_space<vmem>>, vector<16x128xbf16>
    %569 = vector.extract_strided_slice %568 {offsets = [0, 0], sizes = [16, 16], strides = [1, 1]} : vector<16x128xbf16> to vector<16x16xbf16>
    %c386_463 = arith.constant 386 : index
    %c0_464 = arith.constant 0 : index
    %570 = vector.load %arg6[%c386_463, %c0_464] : memref<504x128xbf16, #tpu.memory_space<vmem>>, vector<16x128xbf16>
    %571 = vector.extract_strided_slice %570 {offsets = [0, 0], sizes = [16, 16], strides = [1, 1]} : vector<16x128xbf16> to vector<16x16xbf16>
    %c388_465 = arith.constant 388 : index
    %c0_466 = arith.constant 0 : index
    %572 = vector.load %arg6[%c388_465, %c0_466] : memref<504x128xbf16, #tpu.memory_space<vmem>>, vector<16x128xbf16>
    %573 = vector.extract_strided_slice %572 {offsets = [0, 0], sizes = [16, 16], strides = [1, 1]} : vector<16x128xbf16> to vector<16x16xbf16>
    %c390_467 = arith.constant 390 : index
    %c0_468 = arith.constant 0 : index
    %574 = vector.load %arg6[%c390_467, %c0_468] : memref<504x128xbf16, #tpu.memory_space<vmem>>, vector<16x128xbf16>
    %575 = vector.extract_strided_slice %574 {offsets = [0, 0], sizes = [16, 16], strides = [1, 1]} : vector<16x128xbf16> to vector<16x16xbf16>
    %c392_469 = arith.constant 392 : index
    %c0_470 = arith.constant 0 : index
    %576 = vector.load %arg6[%c392_469, %c0_470] : memref<504x128xbf16, #tpu.memory_space<vmem>>, vector<16x128xbf16>
    %577 = vector.extract_strided_slice %576 {offsets = [0, 0], sizes = [16, 16], strides = [1, 1]} : vector<16x128xbf16> to vector<16x16xbf16>
    %578 = tpu.concatenate %569, %571, %573, %575, %577, %275 in 1 : vector<16x16xbf16>, vector<16x16xbf16>, vector<16x16xbf16>, vector<16x16xbf16>, vector<16x16xbf16>, vector<16x48xbf16> -> vector<16x128xbf16>
    %c9_471 = arith.constant 9 : index
    %c0_472 = arith.constant 0 : index
    %c0_473 = arith.constant 0 : index
    %579 = vector.load %arg2[%c9_471, %c0_472, %c0_473] : memref<15x128x128xbf16, #tpu.memory_space<vmem>>, vector<1x128x128xbf16>
    %580 = vector.shape_cast %579 : vector<1x128x128xbf16> to vector<128x128xbf16>
    %cst_474 = arith.constant dense<0.000000e+00> : vector<16x128xf32>
    %581 = tpu.matmul %578, %580, %cst_474 {dimension_numbers = #tpu.dot_dimension_numbers<[1], [0], [0], [1], [0, 0, 1, 1], [], []>} : vector<16x128xbf16>, vector<128x128xbf16>, vector<16x128xf32> -> vector<16x128xf32>
    %582 = arith.addf %567, %581 : vector<16x128xf32>
    %c432_475 = arith.constant 432 : index
    %c0_476 = arith.constant 0 : index
    %583 = vector.load %arg6[%c432_475, %c0_476] : memref<504x128xbf16, #tpu.memory_space<vmem>>, vector<16x128xbf16>
    %584 = vector.extract_strided_slice %583 {offsets = [0, 0], sizes = [16, 16], strides = [1, 1]} : vector<16x128xbf16> to vector<16x16xbf16>
    %c434 = arith.constant 434 : index
    %c0_477 = arith.constant 0 : index
    %585 = vector.load %arg6[%c434, %c0_477] : memref<504x128xbf16, #tpu.memory_space<vmem>>, vector<16x128xbf16>
    %586 = vector.extract_strided_slice %585 {offsets = [0, 0], sizes = [16, 16], strides = [1, 1]} : vector<16x128xbf16> to vector<16x16xbf16>
    %c436 = arith.constant 436 : index
    %c0_478 = arith.constant 0 : index
    %587 = vector.load %arg6[%c436, %c0_478] : memref<504x128xbf16, #tpu.memory_space<vmem>>, vector<16x128xbf16>
    %588 = vector.extract_strided_slice %587 {offsets = [0, 0], sizes = [16, 16], strides = [1, 1]} : vector<16x128xbf16> to vector<16x16xbf16>
    %c438 = arith.constant 438 : index
    %c0_479 = arith.constant 0 : index
    %589 = vector.load %arg6[%c438, %c0_479] : memref<504x128xbf16, #tpu.memory_space<vmem>>, vector<16x128xbf16>
    %590 = vector.extract_strided_slice %589 {offsets = [0, 0], sizes = [16, 16], strides = [1, 1]} : vector<16x128xbf16> to vector<16x16xbf16>
    %c440 = arith.constant 440 : index
    %c0_480 = arith.constant 0 : index
    %591 = vector.load %arg6[%c440, %c0_480] : memref<504x128xbf16, #tpu.memory_space<vmem>>, vector<16x128xbf16>
    %592 = vector.extract_strided_slice %591 {offsets = [0, 0], sizes = [16, 16], strides = [1, 1]} : vector<16x128xbf16> to vector<16x16xbf16>
    %593 = tpu.concatenate %584, %586, %588, %590, %592, %275 in 1 : vector<16x16xbf16>, vector<16x16xbf16>, vector<16x16xbf16>, vector<16x16xbf16>, vector<16x16xbf16>, vector<16x48xbf16> -> vector<16x128xbf16>
    %c10_481 = arith.constant 10 : index
    %c0_482 = arith.constant 0 : index
    %c0_483 = arith.constant 0 : index
    %594 = vector.load %arg2[%c10_481, %c0_482, %c0_483] : memref<15x128x128xbf16, #tpu.memory_space<vmem>>, vector<1x128x128xbf16>
    %595 = vector.shape_cast %594 : vector<1x128x128xbf16> to vector<128x128xbf16>
    %cst_484 = arith.constant dense<0.000000e+00> : vector<16x128xf32>
    %596 = tpu.matmul %593, %595, %cst_484 {dimension_numbers = #tpu.dot_dimension_numbers<[1], [0], [0], [1], [0, 0, 1, 1], [], []>} : vector<16x128xbf16>, vector<128x128xbf16>, vector<16x128xf32> -> vector<16x128xf32>
    %597 = arith.addf %582, %596 : vector<16x128xf32>
    %c480_485 = arith.constant 480 : index
    %c0_486 = arith.constant 0 : index
    %598 = vector.load %arg6[%c480_485, %c0_486] : memref<504x128xbf16, #tpu.memory_space<vmem>>, vector<16x128xbf16>
    %599 = vector.extract_strided_slice %598 {offsets = [0, 0], sizes = [16, 16], strides = [1, 1]} : vector<16x128xbf16> to vector<16x16xbf16>
    %c482 = arith.constant 482 : index
    %c0_487 = arith.constant 0 : index
    %600 = vector.load %arg6[%c482, %c0_487] : memref<504x128xbf16, #tpu.memory_space<vmem>>, vector<16x128xbf16>
    %601 = vector.extract_strided_slice %600 {offsets = [0, 0], sizes = [16, 16], strides = [1, 1]} : vector<16x128xbf16> to vector<16x16xbf16>
    %c484 = arith.constant 484 : index
    %c0_488 = arith.constant 0 : index
    %602 = vector.load %arg6[%c484, %c0_488] : memref<504x128xbf16, #tpu.memory_space<vmem>>, vector<16x128xbf16>
    %603 = vector.extract_strided_slice %602 {offsets = [0, 0], sizes = [16, 16], strides = [1, 1]} : vector<16x128xbf16> to vector<16x16xbf16>
    %c486 = arith.constant 486 : index
    %c0_489 = arith.constant 0 : index
    %604 = vector.load %arg6[%c486, %c0_489] : memref<504x128xbf16, #tpu.memory_space<vmem>>, vector<16x128xbf16>
    %605 = vector.extract_strided_slice %604 {offsets = [0, 0], sizes = [16, 16], strides = [1, 1]} : vector<16x128xbf16> to vector<16x16xbf16>
    %c488 = arith.constant 488 : index
    %c0_490 = arith.constant 0 : index
    %606 = vector.load %arg6[%c488, %c0_490] : memref<504x128xbf16, #tpu.memory_space<vmem>>, vector<16x128xbf16>
    %607 = vector.extract_strided_slice %606 {offsets = [0, 0], sizes = [16, 16], strides = [1, 1]} : vector<16x128xbf16> to vector<16x16xbf16>
    %608 = tpu.concatenate %599, %601, %603, %605, %607, %275 in 1 : vector<16x16xbf16>, vector<16x16xbf16>, vector<16x16xbf16>, vector<16x16xbf16>, vector<16x16xbf16>, vector<16x48xbf16> -> vector<16x128xbf16>
    %c11_491 = arith.constant 11 : index
    %c0_492 = arith.constant 0 : index
    %c0_493 = arith.constant 0 : index
    %609 = vector.load %arg2[%c11_491, %c0_492, %c0_493] : memref<15x128x128xbf16, #tpu.memory_space<vmem>>, vector<1x128x128xbf16>
    %610 = vector.shape_cast %609 : vector<1x128x128xbf16> to vector<128x128xbf16>
    %cst_494 = arith.constant dense<0.000000e+00> : vector<16x128xf32>
    %611 = tpu.matmul %608, %610, %cst_494 {dimension_numbers = #tpu.dot_dimension_numbers<[1], [0], [0], [1], [0, 0, 1, 1], [], []>} : vector<16x128xbf16>, vector<128x128xbf16>, vector<16x128xf32> -> vector<16x128xf32>
    %612 = arith.addf %597, %611 : vector<16x128xf32>
    %c1_495 = arith.constant 1 : index
    %c0_496 = arith.constant 0 : index
    %613 = vector.load %arg3[%c1_495, %c0_496] : memref<3x128xf32, #tpu.memory_space<vmem>>, vector<1x128xf32>
    %614 = vector.broadcast %613 : vector<1x128xf32> to vector<16x128xf32>
    %615 = arith.mulf %612, %614 : vector<16x128xf32>
    %c1_497 = arith.constant 1 : index
    %c0_498 = arith.constant 0 : index
    %616 = vector.load %arg4[%c1_497, %c0_498] : memref<3x128xf32, #tpu.memory_space<vmem>>, vector<1x128xf32>
    %617 = vector.broadcast %616 : vector<1x128xf32> to vector<16x128xf32>
    %618 = arith.addf %615, %617 : vector<16x128xf32>
    %cst_499 = arith.constant 0.000000e+00 : f32
    %619 = vector.broadcast %cst_499 : f32 to vector<16x128xf32>
    %620 = arith.maximumf %618, %619 : vector<16x128xf32>
    %621 = tpu.concatenate %6, %620, %6 in 0 : vector<4x128xf32>, vector<16x128xf32>, vector<4x128xf32> -> vector<24x128xf32>
    %622 = arith.truncf %621 : vector<24x128xf32> to vector<24x128xbf16>
    %c384_500 = arith.constant 384 : index
    %c0_501 = arith.constant 0 : index
    %623 = vector.load %arg7[%c384_500, %c0_501] : memref<408x128xbf16, #tpu.memory_space<vmem>>, vector<24x128xbf16>
    tpu.vector_store %arg7[%c384_500, %c0_501], %622 {strides = array<i32>} : memref<408x128xbf16, #tpu.memory_space<vmem>>, vector<24x128xbf16>,
    %cst_502 = arith.constant 0.000000e+00 : bf16
    %624 = vector.broadcast %cst_502 : bf16 to vector<16x32xbf16>
    %cst_503 = arith.constant 0.000000e+00 : f32
    %625 = vector.broadcast %cst_503 : f32 to vector<16x128xf32>
    %c0_504 = arith.constant 0 : index
    %c0_505 = arith.constant 0 : index
    %626 = vector.load %arg7[%c0_504, %c0_505] : memref<408x128xbf16, #tpu.memory_space<vmem>>, vector<16x128xbf16>
    %627 = vector.extract_strided_slice %626 {offsets = [0, 0], sizes = [16, 32], strides = [1, 1]} : vector<16x128xbf16> to vector<16x32xbf16>
    %c4_506 = arith.constant 4 : index
    %c0_507 = arith.constant 0 : index
    %628 = vector.load %arg7[%c4_506, %c0_507] : memref<408x128xbf16, #tpu.memory_space<vmem>>, vector<16x128xbf16>
    %629 = vector.extract_strided_slice %628 {offsets = [0, 0], sizes = [16, 32], strides = [1, 1]} : vector<16x128xbf16> to vector<16x32xbf16>
    %c8_508 = arith.constant 8 : index
    %c0_509 = arith.constant 0 : index
    %630 = vector.load %arg7[%c8_508, %c0_509] : memref<408x128xbf16, #tpu.memory_space<vmem>>, vector<16x128xbf16>
    %631 = vector.extract_strided_slice %630 {offsets = [0, 0], sizes = [16, 32], strides = [1, 1]} : vector<16x128xbf16> to vector<16x32xbf16>
    %632 = tpu.concatenate %627, %629, %631, %624 in 1 : vector<16x32xbf16>, vector<16x32xbf16>, vector<16x32xbf16>, vector<16x32xbf16> -> vector<16x128xbf16>
    %c12 = arith.constant 12 : index
    %c0_510 = arith.constant 0 : index
    %c0_511 = arith.constant 0 : index
    %633 = vector.load %arg2[%c12, %c0_510, %c0_511] : memref<15x128x128xbf16, #tpu.memory_space<vmem>>, vector<1x128x128xbf16>
    %634 = vector.shape_cast %633 : vector<1x128x128xbf16> to vector<128x128xbf16>
    %cst_512 = arith.constant dense<0.000000e+00> : vector<16x128xf32>
    %635 = tpu.matmul %632, %634, %cst_512 {dimension_numbers = #tpu.dot_dimension_numbers<[1], [0], [0], [1], [0, 0, 1, 1], [], []>} : vector<16x128xbf16>, vector<128x128xbf16>, vector<16x128xf32> -> vector<16x128xf32>
    %636 = arith.addf %625, %635 : vector<16x128xf32>
    %c96_513 = arith.constant 96 : index
    %c0_514 = arith.constant 0 : index
    %637 = vector.load %arg7[%c96_513, %c0_514] : memref<408x128xbf16, #tpu.memory_space<vmem>>, vector<16x128xbf16>
    %638 = vector.extract_strided_slice %637 {offsets = [0, 0], sizes = [16, 32], strides = [1, 1]} : vector<16x128xbf16> to vector<16x32xbf16>
    %c100_515 = arith.constant 100 : index
    %c0_516 = arith.constant 0 : index
    %639 = vector.load %arg7[%c100_515, %c0_516] : memref<408x128xbf16, #tpu.memory_space<vmem>>, vector<16x128xbf16>
    %640 = vector.extract_strided_slice %639 {offsets = [0, 0], sizes = [16, 32], strides = [1, 1]} : vector<16x128xbf16> to vector<16x32xbf16>
    %c104_517 = arith.constant 104 : index
    %c0_518 = arith.constant 0 : index
    %641 = vector.load %arg7[%c104_517, %c0_518] : memref<408x128xbf16, #tpu.memory_space<vmem>>, vector<16x128xbf16>
    %642 = vector.extract_strided_slice %641 {offsets = [0, 0], sizes = [16, 32], strides = [1, 1]} : vector<16x128xbf16> to vector<16x32xbf16>
    %643 = tpu.concatenate %638, %640, %642, %624 in 1 : vector<16x32xbf16>, vector<16x32xbf16>, vector<16x32xbf16>, vector<16x32xbf16> -> vector<16x128xbf16>
    %c13 = arith.constant 13 : index
    %c0_519 = arith.constant 0 : index
    %c0_520 = arith.constant 0 : index
    %644 = vector.load %arg2[%c13, %c0_519, %c0_520] : memref<15x128x128xbf16, #tpu.memory_space<vmem>>, vector<1x128x128xbf16>
    %645 = vector.shape_cast %644 : vector<1x128x128xbf16> to vector<128x128xbf16>
    %cst_521 = arith.constant dense<0.000000e+00> : vector<16x128xf32>
    %646 = tpu.matmul %643, %645, %cst_521 {dimension_numbers = #tpu.dot_dimension_numbers<[1], [0], [0], [1], [0, 0, 1, 1], [], []>} : vector<16x128xbf16>, vector<128x128xbf16>, vector<16x128xf32> -> vector<16x128xf32>
    %647 = arith.addf %636, %646 : vector<16x128xf32>
    %c192_522 = arith.constant 192 : index
    %c0_523 = arith.constant 0 : index
    %648 = vector.load %arg7[%c192_522, %c0_523] : memref<408x128xbf16, #tpu.memory_space<vmem>>, vector<16x128xbf16>
    %649 = vector.extract_strided_slice %648 {offsets = [0, 0], sizes = [16, 32], strides = [1, 1]} : vector<16x128xbf16> to vector<16x32xbf16>
    %c196_524 = arith.constant 196 : index
    %c0_525 = arith.constant 0 : index
    %650 = vector.load %arg7[%c196_524, %c0_525] : memref<408x128xbf16, #tpu.memory_space<vmem>>, vector<16x128xbf16>
    %651 = vector.extract_strided_slice %650 {offsets = [0, 0], sizes = [16, 32], strides = [1, 1]} : vector<16x128xbf16> to vector<16x32xbf16>
    %c200_526 = arith.constant 200 : index
    %c0_527 = arith.constant 0 : index
    %652 = vector.load %arg7[%c200_526, %c0_527] : memref<408x128xbf16, #tpu.memory_space<vmem>>, vector<16x128xbf16>
    %653 = vector.extract_strided_slice %652 {offsets = [0, 0], sizes = [16, 32], strides = [1, 1]} : vector<16x128xbf16> to vector<16x32xbf16>
    %654 = tpu.concatenate %649, %651, %653, %624 in 1 : vector<16x32xbf16>, vector<16x32xbf16>, vector<16x32xbf16>, vector<16x32xbf16> -> vector<16x128xbf16>
    %c14 = arith.constant 14 : index
    %c0_528 = arith.constant 0 : index
    %c0_529 = arith.constant 0 : index
    %655 = vector.load %arg2[%c14, %c0_528, %c0_529] : memref<15x128x128xbf16, #tpu.memory_space<vmem>>, vector<1x128x128xbf16>
    %656 = vector.shape_cast %655 : vector<1x128x128xbf16> to vector<128x128xbf16>
    %cst_530 = arith.constant dense<0.000000e+00> : vector<16x128xf32>
    %657 = tpu.matmul %654, %656, %cst_530 {dimension_numbers = #tpu.dot_dimension_numbers<[1], [0], [0], [1], [0, 0, 1, 1], [], []>} : vector<16x128xbf16>, vector<128x128xbf16>, vector<16x128xf32> -> vector<16x128xf32>
    %658 = arith.addf %647, %657 : vector<16x128xf32>
    %c2_531 = arith.constant 2 : index
    %c0_532 = arith.constant 0 : index
    %659 = vector.load %arg3[%c2_531, %c0_532] : memref<3x128xf32, #tpu.memory_space<vmem>>, vector<1x128xf32>
    %660 = vector.broadcast %659 : vector<1x128xf32> to vector<16x128xf32>
    %661 = arith.mulf %658, %660 : vector<16x128xf32>
    %c2_533 = arith.constant 2 : index
    %c0_534 = arith.constant 0 : index
    %662 = vector.load %arg4[%c2_533, %c0_534] : memref<3x128xf32, #tpu.memory_space<vmem>>, vector<1x128xf32>
    %663 = vector.broadcast %662 : vector<1x128xf32> to vector<16x128xf32>
    %664 = arith.addf %661, %663 : vector<16x128xf32>
    %cst_535 = arith.constant 0.000000e+00 : f32
    %665 = vector.broadcast %cst_535 : f32 to vector<16x128xf32>
    %666 = arith.maximumf %664, %665 : vector<16x128xf32>
    %667 = vector.extract_strided_slice %666 {offsets = [0, 0], sizes = [1, 128], strides = [1, 1]} : vector<16x128xf32> to vector<1x128xf32>
    %668 = vector.extract_strided_slice %666 {offsets = [8, 0], sizes = [1, 128], strides = [1, 1]} : vector<16x128xf32> to vector<1x128xf32>
    %cst_536 = arith.constant 0.000000e+00 : f32
    %669 = vector.broadcast %cst_536 : f32 to vector<16x128xf32>
    %c192_537 = arith.constant 192 : index
    %c0_538 = arith.constant 0 : index
    %670 = vector.load %arg7[%c192_537, %c0_538] : memref<408x128xbf16, #tpu.memory_space<vmem>>, vector<16x128xbf16>
    %671 = vector.extract_strided_slice %670 {offsets = [0, 0], sizes = [16, 32], strides = [1, 1]} : vector<16x128xbf16> to vector<16x32xbf16>
    %c196_539 = arith.constant 196 : index
    %c0_540 = arith.constant 0 : index
    %672 = vector.load %arg7[%c196_539, %c0_540] : memref<408x128xbf16, #tpu.memory_space<vmem>>, vector<16x128xbf16>
    %673 = vector.extract_strided_slice %672 {offsets = [0, 0], sizes = [16, 32], strides = [1, 1]} : vector<16x128xbf16> to vector<16x32xbf16>
    %c200_541 = arith.constant 200 : index
    %c0_542 = arith.constant 0 : index
    %674 = vector.load %arg7[%c200_541, %c0_542] : memref<408x128xbf16, #tpu.memory_space<vmem>>, vector<16x128xbf16>
    %675 = vector.extract_strided_slice %674 {offsets = [0, 0], sizes = [16, 32], strides = [1, 1]} : vector<16x128xbf16> to vector<16x32xbf16>
    %676 = tpu.concatenate %671, %673, %675, %624 in 1 : vector<16x32xbf16>, vector<16x32xbf16>, vector<16x32xbf16>, vector<16x32xbf16> -> vector<16x128xbf16>
    %c12_543 = arith.constant 12 : index
    %c0_544 = arith.constant 0 : index
    %c0_545 = arith.constant 0 : index
    %677 = vector.load %arg2[%c12_543, %c0_544, %c0_545] : memref<15x128x128xbf16, #tpu.memory_space<vmem>>, vector<1x128x128xbf16>
    %678 = vector.shape_cast %677 : vector<1x128x128xbf16> to vector<128x128xbf16>
    %cst_546 = arith.constant dense<0.000000e+00> : vector<16x128xf32>
    %679 = tpu.matmul %676, %678, %cst_546 {dimension_numbers = #tpu.dot_dimension_numbers<[1], [0], [0], [1], [0, 0, 1, 1], [], []>} : vector<16x128xbf16>, vector<128x128xbf16>, vector<16x128xf32> -> vector<16x128xf32>
    %680 = arith.addf %669, %679 : vector<16x128xf32>
    %c288_547 = arith.constant 288 : index
    %c0_548 = arith.constant 0 : index
    %681 = vector.load %arg7[%c288_547, %c0_548] : memref<408x128xbf16, #tpu.memory_space<vmem>>, vector<16x128xbf16>
    %682 = vector.extract_strided_slice %681 {offsets = [0, 0], sizes = [16, 32], strides = [1, 1]} : vector<16x128xbf16> to vector<16x32xbf16>
    %c292_549 = arith.constant 292 : index
    %c0_550 = arith.constant 0 : index
    %683 = vector.load %arg7[%c292_549, %c0_550] : memref<408x128xbf16, #tpu.memory_space<vmem>>, vector<16x128xbf16>
    %684 = vector.extract_strided_slice %683 {offsets = [0, 0], sizes = [16, 32], strides = [1, 1]} : vector<16x128xbf16> to vector<16x32xbf16>
    %c296_551 = arith.constant 296 : index
    %c0_552 = arith.constant 0 : index
    %685 = vector.load %arg7[%c296_551, %c0_552] : memref<408x128xbf16, #tpu.memory_space<vmem>>, vector<16x128xbf16>
    %686 = vector.extract_strided_slice %685 {offsets = [0, 0], sizes = [16, 32], strides = [1, 1]} : vector<16x128xbf16> to vector<16x32xbf16>
    %687 = tpu.concatenate %682, %684, %686, %624 in 1 : vector<16x32xbf16>, vector<16x32xbf16>, vector<16x32xbf16>, vector<16x32xbf16> -> vector<16x128xbf16>
    %c13_553 = arith.constant 13 : index
    %c0_554 = arith.constant 0 : index
    %c0_555 = arith.constant 0 : index
    %688 = vector.load %arg2[%c13_553, %c0_554, %c0_555] : memref<15x128x128xbf16, #tpu.memory_space<vmem>>, vector<1x128x128xbf16>
    %689 = vector.shape_cast %688 : vector<1x128x128xbf16> to vector<128x128xbf16>
    %cst_556 = arith.constant dense<0.000000e+00> : vector<16x128xf32>
    %690 = tpu.matmul %687, %689, %cst_556 {dimension_numbers = #tpu.dot_dimension_numbers<[1], [0], [0], [1], [0, 0, 1, 1], [], []>} : vector<16x128xbf16>, vector<128x128xbf16>, vector<16x128xf32> -> vector<16x128xf32>
    %691 = arith.addf %680, %690 : vector<16x128xf32>
    %c384_557 = arith.constant 384 : index
    %c0_558 = arith.constant 0 : index
    %692 = vector.load %arg7[%c384_557, %c0_558] : memref<408x128xbf16, #tpu.memory_space<vmem>>, vector<16x128xbf16>
    %693 = vector.extract_strided_slice %692 {offsets = [0, 0], sizes = [16, 32], strides = [1, 1]} : vector<16x128xbf16> to vector<16x32xbf16>
    %c388_559 = arith.constant 388 : index
    %c0_560 = arith.constant 0 : index
    %694 = vector.load %arg7[%c388_559, %c0_560] : memref<408x128xbf16, #tpu.memory_space<vmem>>, vector<16x128xbf16>
    %695 = vector.extract_strided_slice %694 {offsets = [0, 0], sizes = [16, 32], strides = [1, 1]} : vector<16x128xbf16> to vector<16x32xbf16>
    %c392_561 = arith.constant 392 : index
    %c0_562 = arith.constant 0 : index
    %696 = vector.load %arg7[%c392_561, %c0_562] : memref<408x128xbf16, #tpu.memory_space<vmem>>, vector<16x128xbf16>
    %697 = vector.extract_strided_slice %696 {offsets = [0, 0], sizes = [16, 32], strides = [1, 1]} : vector<16x128xbf16> to vector<16x32xbf16>
    %698 = tpu.concatenate %693, %695, %697, %624 in 1 : vector<16x32xbf16>, vector<16x32xbf16>, vector<16x32xbf16>, vector<16x32xbf16> -> vector<16x128xbf16>
    %c14_563 = arith.constant 14 : index
    %c0_564 = arith.constant 0 : index
    %c0_565 = arith.constant 0 : index
    %699 = vector.load %arg2[%c14_563, %c0_564, %c0_565] : memref<15x128x128xbf16, #tpu.memory_space<vmem>>, vector<1x128x128xbf16>
    %700 = vector.shape_cast %699 : vector<1x128x128xbf16> to vector<128x128xbf16>
    %cst_566 = arith.constant dense<0.000000e+00> : vector<16x128xf32>
    %701 = tpu.matmul %698, %700, %cst_566 {dimension_numbers = #tpu.dot_dimension_numbers<[1], [0], [0], [1], [0, 0, 1, 1], [], []>} : vector<16x128xbf16>, vector<128x128xbf16>, vector<16x128xf32> -> vector<16x128xf32>
    %702 = arith.addf %691, %701 : vector<16x128xf32>
    %c2_567 = arith.constant 2 : index
    %c0_568 = arith.constant 0 : index
    %703 = vector.load %arg3[%c2_567, %c0_568] : memref<3x128xf32, #tpu.memory_space<vmem>>, vector<1x128xf32>
    %704 = vector.broadcast %703 : vector<1x128xf32> to vector<16x128xf32>
    %705 = arith.mulf %702, %704 : vector<16x128xf32>
    %c2_569 = arith.constant 2 : index
    %c0_570 = arith.constant 0 : index
    %706 = vector.load %arg4[%c2_569, %c0_570] : memref<3x128xf32, #tpu.memory_space<vmem>>, vector<1x128xf32>
    %707 = vector.broadcast %706 : vector<1x128xf32> to vector<16x128xf32>
    %708 = arith.addf %705, %707 : vector<16x128xf32>
    %cst_571 = arith.constant 0.000000e+00 : f32
    %709 = vector.broadcast %cst_571 : f32 to vector<16x128xf32>
    %710 = arith.maximumf %708, %709 : vector<16x128xf32>
    %711 = vector.extract_strided_slice %710 {offsets = [0, 0], sizes = [1, 128], strides = [1, 1]} : vector<16x128xf32> to vector<1x128xf32>
    %712 = vector.extract_strided_slice %710 {offsets = [8, 0], sizes = [1, 128], strides = [1, 1]} : vector<16x128xf32> to vector<1x128xf32>
    %713 = tpu.concatenate %667, %668, %711, %712 in 0 : vector<1x128xf32>, vector<1x128xf32>, vector<1x128xf32>, vector<1x128xf32> -> vector<4x128xf32>
    %c0_572 = arith.constant 0 : index
    %c0_573 = arith.constant 0 : index
    %c0_574 = arith.constant 0 : index
    %714 = vector.load %arg5[%c0_572, %c0_573, %c0_574] : memref<1x4x128xf32, #tpu.memory_space<vmem>>, vector<1x4x128xf32>
    %715 = vector.shape_cast %714 : vector<1x4x128xf32> to vector<4x128xf32>
    %716 = vector.shape_cast %713 : vector<4x128xf32> to vector<1x4x128xf32>
    tpu.vector_store %arg5[%c0_572, %c0_573, %c0_574], %716 {strides = array<i32>} : memref<1x4x128xf32, #tpu.memory_space<vmem>>, vector<1x4x128xf32>,
    return
  }
  func.func @transform_0(%arg0: i32) -> (i32, i32, i32) {
    %c0_i32 = arith.constant 0 : i32
    %c0_i32_0 = arith.constant 0 : i32
    %c0_i32_1 = arith.constant 0 : i32
    return %arg0, %c0_i32, %c0_i32_0 : i32, i32, i32
  }
  func.func @transform_1(%arg0: i32) -> (i32, i32, i32) {
    %c0_i32 = arith.constant 0 : i32
    %c0_i32_0 = arith.constant 0 : i32
    %c0_i32_1 = arith.constant 0 : i32
    %c0_i32_2 = arith.constant 0 : i32
    return %c0_i32, %c0_i32_0, %c0_i32_1 : i32, i32, i32
  }
  func.func @transform_2(%arg0: i32) -> (i32, i32) {
    %c0_i32 = arith.constant 0 : i32
    %c0_i32_0 = arith.constant 0 : i32
    %c0_i32_1 = arith.constant 0 : i32
    return %c0_i32, %c0_i32_0 : i32, i32
  }
  func.func @transform_3(%arg0: i32) -> (i32, i32) {
    %c0_i32 = arith.constant 0 : i32
    %c0_i32_0 = arith.constant 0 : i32
    %c0_i32_1 = arith.constant 0 : i32
    return %c0_i32, %c0_i32_0 : i32, i32
  }
  func.func @transform_4(%arg0: i32) -> (i32, i32, i32) {
    %c0_i32 = arith.constant 0 : i32
    %c0_i32_0 = arith.constant 0 : i32
    %c0_i32_1 = arith.constant 0 : i32
    return %arg0, %c0_i32, %c0_i32_0 : i32, i32, i32
  }
}

</mosaic_0001>

<llo_original>
// kernel: rt_head_large_kernel.1
$region0: #{rt_head_large_kernel.1}
  #allocation0 [shape = 'u32[]', space=smem, size = 0x4, offset = 0x4, fixed_abs, tag = 'smem constant byte address 0x4 - core index']
  #allocation1 [shape = 'u32[144,128]{1,0:T(1,128)}', space=vmem, size = 0x12000, scoped, tag = 'internal scratch']
  #allocation2 [shape = 'bf16[504,128]{1,0:T(8,128)(2,1)}', space=vmem, size = 0x1f800, scoped, tag = 'scratch operand']
  #allocation3 [shape = 'bf16[408,128]{1,0:T(8,128)(2,1)}', space=vmem, size = 0x19800, scoped, tag = 'scratch operand']
  %s0 = inlined_call_operand.vmem [shape: bf16[2,528,128], index: 0, kind: input, shape index: {}]
  %s1 = inlined_call_operand.vmem [shape: bf16[15,128,128], index: 1, kind: input, shape index: {}]
  %s2 = inlined_call_operand.vmem [shape: f32[3,128], index: 2, kind: input, shape index: {}]
  %s3 = inlined_call_operand.vmem [shape: f32[3,128], index: 3, kind: input, shape index: {}]
  %s4 = inlined_call_operand.hbm [shape: f32[2,4,128], index: 4, kind: output, shape index: {}]
  %s5 = sld [smem:[#allocation0]]
  $region49: #{rt_head_large_kernel.1} parent=0
    _
  %s7 = ssub.s32 1, %s5
  %s8 = scalar_select 0, %s7, %s5
  $region1: #{rt_head_large_kernel.1} parent=0
    #allocation4 [shape = 'u8[4096]{0}', space=vmem, size = 0x1000, scoped, tag = 'output window, operand 0']
    #allocation5 [shape = 's32[2]{0}', space=sflag, size = 0x8, scoped, tag = 'scoped memory for rt_head_large_kernel.1']
    %9 = vsyncpa [#allocation5], 0
    %s10 = scalar_lea.sflag [#allocation5], 1
    %11 = vsyncpa %s10, 0
    loop: start=0, step=1, limit=4
    $region2: #{rt_head_large_kernel.1} parent=1 // loop_pre_header
      _
    $region3: #{rt_head_large_kernel.1} parent=1 // loop_header
      %s13 = sphi 0, %s17
      %p14 = scmp.ge.s32.totalorder %s13, 4
      %s23 = sphi 0, %s25
      %s26 = sphi 0, %s23
      %s27 = sphi 0, %s26
      %s43 = sphi 0, %s27
      %s47 = sphi 0, %s47
      %s49 = sphi 0, %s47
      %s50 = sphi 0, %s49
      %s64 = sphi 0, %s50
      %s68 = sphi 0, %s68
      %s70 = sphi 0, %s68
      %s71 = sphi 0, %s70
      %s85 = sphi 0, %s71
      %s89 = sphi 0, %s89
      %s91 = sphi 0, %s89
      %s92 = sphi 0, %s91
      %s106 = sphi 0, %s92
      %s112 = sphi 0, %s114
      %s115 = sphi 0, %s112
      %s116 = sphi 0, %s115
      %s132 = sphi 0, %s116
    $region4: #{rt_head_large_kernel.1} parent=1 // loop_header_branch
      %16 = sbr.rel (%p14) target = $region8
    $region5: #{rt_head_large_kernel.1} parent=1 // loop_body
      %s18 = ssub.s32 %s13, 1
      %s19 = ssub.s32 %s13, 2
      %s20 = sadd.s32 %s13, 1
      %s21 = ssub.s32 %s13, %s20
      %p22 = scmp.eq.s32.totalorder %s21, 0
      %s24 = sadd.s32 %s23, 1
      %s25 = scalar_select %p22, %s23, %s24
      %p28 = pneg %p22
      %p29 = scmp.eq.s32.totalorder %s13, 1
      %p30 = por %p28, %p29
      %p31 = scmp.ne.s32.totalorder %s23, %s26
      %p32 = scmp.eq.s32.totalorder %s13, 0
      %p33 = por %p31, %p32
      %p34 = scmp.ne.s32.totalorder %s23, %s26
      %p35 = scmp.eq.s32.totalorder %s18, 1
      %p36 = por %p34, %p35
      %p37 = scmp.ne.s32.totalorder %s26, %s27
      %p38 = scmp.eq.s32.totalorder %s18, 0
      %p39 = por %p37, %p38
      %p40 = scmp.ne.s32.totalorder %s26, %s27
      %p41 = scmp.eq.s32.totalorder %s19, 1
      %p42 = por %p40, %p41
      %p44 = scmp.ne.s32.totalorder %s27, %s43
      %p45 = scmp.eq.s32.totalorder %s19, 0
      %p46 = por %p44, %p45
      %s48 = sadd.s32 %s47, 1
      %p51 = scmp.eq.s32.totalorder %s13, 1
      %p52 = scmp.ne.s32.totalorder %s47, %s49
      %p53 = scmp.eq.s32.totalorder %s13, 0
      %p54 = por %p52, %p53
      %p55 = scmp.ne.s32.totalorder %s47, %s49
      %p56 = scmp.eq.s32.totalorder %s18, 1
      %p57 = por %p55, %p56
      %p58 = scmp.ne.s32.totalorder %s49, %s50
      %p59 = scmp.eq.s32.totalorder %s18, 0
      %p60 = por %p58, %p59
      %p61 = scmp.ne.s32.totalorder %s49, %s50
      %p62 = scmp.eq.s32.totalorder %s19, 1
      %p63 = por %p61, %p62
      %p65 = scmp.ne.s32.totalorder %s50, %s64
      %p66 = scmp.eq.s32.totalorder %s19, 0
      %p67 = por %p65, %p66
      %s69 = sadd.s32 %s68, 1
      %p72 = scmp.eq.s32.totalorder %s13, 1
      %p73 = scmp.ne.s32.totalorder %s68, %s70
      %p74 = scmp.eq.s32.totalorder %s13, 0
      %p75 = por %p73, %p74
      %p76 = scmp.ne.s32.totalorder %s68, %s70
      %p77 = scmp.eq.s32.totalorder %s18, 1
      %p78 = por %p76, %p77
      %p79 = scmp.ne.s32.totalorder %s70, %s71
      %p80 = scmp.eq.s32.totalorder %s18, 0
      %p81 = por %p79, %p80
      %p82 = scmp.ne.s32.totalorder %s70, %s71
      %p83 = scmp.eq.s32.totalorder %s19, 1
      %p84 = por %p82, %p83
      %p86 = scmp.ne.s32.totalorder %s71, %s85
      %p87 = scmp.eq.s32.totalorder %s19, 0
      %p88 = por %p86, %p87
      %s90 = sadd.s32 %s89, 1
      %p93 = scmp.eq.s32.totalorder %s13, 1
      %p94 = scmp.ne.s32.totalorder %s89, %s91
      %p95 = scmp.eq.s32.totalorder %s13, 0
      %p96 = por %p94, %p95
      %p97 = scmp.ne.s32.totalorder %s89, %s91
      %p98 = scmp.eq.s32.totalorder %s18, 1
      %p99 = por %p97, %p98
      %p100 = scmp.ne.s32.totalorder %s91, %s92
      %p101 = scmp.eq.s32.totalorder %s18, 0
      %p102 = por %p100, %p101
      %p103 = scmp.ne.s32.totalorder %s91, %s92
      %p104 = scmp.eq.s32.totalorder %s19, 1
      %p105 = por %p103, %p104
      %p107 = scmp.ne.s32.totalorder %s92, %s106
      %p108 = scmp.eq.s32.totalorder %s19, 0
      %p109 = por %p107, %p108
      %s110 = ssub.s32 %s13, %s20
      %p111 = scmp.eq.s32.totalorder %s110, 0
      %s113 = sadd.s32 %s112, 1
      %s114 = scalar_select %p111, %s112, %s113
      %p117 = pneg %p111
      %p118 = scmp.eq.s32.totalorder %s13, 1
      %p119 = por %p117, %p118
      %p120 = scmp.ne.s32.totalorder %s112, %s115
      %p121 = scmp.eq.s32.totalorder %s13, 0
      %p122 = por %p120, %p121
      %p123 = scmp.ne.s32.totalorder %s112, %s115
      %p124 = scmp.eq.s32.totalorder %s18, 1
      %p125 = por %p123, %p124
      %p126 = scmp.ne.s32.totalorder %s115, %s116
      %p127 = scmp.eq.s32.totalorder %s18, 0
      %p128 = por %p126, %p127
      %p129 = scmp.ne.s32.totalorder %s115, %s116
      %p130 = scmp.eq.s32.totalorder %s19, 1
      %p131 = por %p129, %p130
      %p133 = scmp.ne.s32.totalorder %s116, %s132
      %p134 = scmp.eq.s32.totalorder %s19, 0
      %p135 = por %p133, %p134
      %p136 = scmp.le.s32.totalorder 1, %s13
      %p137 = scmp.lt.s32.totalorder %s13, 3
      %p138 = pnand %p136, %p137
      %p139 = pneg %p138
      // Predicated region
      $region9: #{rt_head_large_kernel.1} parent=5 // pred_check
        _
      $region10: #{rt_head_large_kernel.1} parent=5 // pred_check_branch
        %141 = sbr.rel (%p138) target = $region12
      $region11: #{rt_head_large_kernel.1} parent=5 // pred_region
        %s142 = ssub.s32 %s13, 1
        // Predicated region
        $region13: #{rt_head_large_kernel.1} parent=11 // pred_check
          %p143 = pneg %p60
        $region14: #{rt_head_large_kernel.1} parent=11 // pred_check_branch
          %145 = sbr.rel (%p143) target = $region16
        $region15: #{rt_head_large_kernel.1} parent=11 // pred_region
          _
        $region16: #{rt_head_large_kernel.1} parent=11 // pred_fallthru
          _
        // Predicated region
        $region17: #{rt_head_large_kernel.1} parent=11 // pred_check
          %p146 = pneg %p81
        $region18: #{rt_head_large_kernel.1} parent=11 // pred_check_branch
          %148 = sbr.rel (%p146) target = $region20
        $region19: #{rt_head_large_kernel.1} parent=11 // pred_region
          _
        $region20: #{rt_head_large_kernel.1} parent=11 // pred_fallthru
          _
        // Predicated region
        $region21: #{rt_head_large_kernel.1} parent=11 // pred_check
          %p149 = pneg %p102
        $region22: #{rt_head_large_kernel.1} parent=11 // pred_check_branch
          %151 = sbr.rel (%p149) target = $region24
        $region23: #{rt_head_large_kernel.1} parent=11 // pred_region
          _
        $region24: #{rt_head_large_kernel.1} parent=11 // pred_fallthru
          _
      $region12: #{rt_head_large_kernel.1} parent=5 // pred_fallthru
        _
      %p152 = scmp.lt.s32.totalorder %s13, 2
      // Predicated region
      $region25: #{rt_head_large_kernel.1} parent=5 // pred_check
        %p153 = pneg %p152
      $region26: #{rt_head_large_kernel.1} parent=5 // pred_check_branch
        %155 = sbr.rel (%p153) target = $region28
      $region27: #{rt_head_large_kernel.1} parent=5 // pred_region
        // Predicated region
        $region29: #{rt_head_large_kernel.1} parent=27 // pred_check
          %p156 = pneg %p33
        $region30: #{rt_head_large_kernel.1} parent=27 // pred_check_branch
          %158 = sbr.rel (%p156) target = $region32
        $region31: #{rt_head_large_kernel.1} parent=27 // pred_region
          %p159 = scmp.lt.s32.totalorder %s13, 1
          %s160 = scalar_select %p159, %s13, 1
          %s161 = smul.addr %s160, 66
          %s162 = smul.addr %s161, 4
          %s163 = scalar_lea.vmem %s0, %s162
        $region32: #{rt_head_large_kernel.1} parent=27 // pred_fallthru
          _
      $region28: #{rt_head_large_kernel.1} parent=5 // pred_fallthru
        _
      %p164 = scmp.le.s32.totalorder 1, %s13
      %p165 = scmp.lt.s32.totalorder %s13, 3
      %p166 = pnand %p164, %p165
      %p167 = pneg %p166
      // Predicated region
      $region33: #{rt_head_large_kernel.1} parent=5 // pred_check
        _
      $region34: #{rt_head_large_kernel.1} parent=5 // pred_check_branch
        %169 = sbr.rel (%p166) target = $region36
      $region35: #{rt_head_large_kernel.1} parent=5 // pred_region
        %s170 = ssub.s32 %s13, 1
        %p171 = scmp.lt.s32.totalorder %s18, 1
        %s172 = scalar_select %p171, %s18, 1
        %s173 = smul.addr %s172, 66
        %s174 = smul.addr %s173, 4
        %s175 = scalar_lea.vmem %s0, %s174
        %p176 = pneg %p39
        %p177 = pneg %p36
        %p178 = pneg %p60
        %p179 = pneg %p57
        %p180 = pneg %p81
        %p181 = pneg %p78
        %p182 = pneg %p102
        %p183 = pneg %p99
        %p184 = pneg %p128
        %p185 = pneg %p125
        %s186 = sand.u32 %s115, 1
        %s187 = scalar_lea.sflag [#allocation5], %s186
        %s188 = sand.u32 %s115, 1
        %s189 = smul.addr %s188, 4
        %s190 = scalar_lea.vmem [#allocation4], %s189
        %p191 = scmp.lt.s32.totalorder %s18, 1
        %s192 = scalar_select %p191, %s18, 1
        %s193 = smul.addr %s192, 66
        %s194 = smul.addr %s193, 4
        %s195 = scalar_lea.vmem %s0, %s194
        %197 = vst [vmem:[#allocation2] sm:$0xf] 0
        %198 = vst [vmem:[#allocation2 + $0x4] sm:$0xf] 0
        %199 = vst [vmem:[#allocation2 + $0x8] sm:$0xf] 0
        %200 = vst [vmem:[#allocation2 + $0xc] sm:$0xf] 0
        %201 = vst [vmem:[#allocation2 + $0x10] sm:$0xf] 0
        %202 = vst [vmem:[#allocation2 + $0x14] sm:$0xf] 0
        %203 = vst [vmem:[#allocation2 + $0x18] sm:$0xf] 0
        %204 = vst [vmem:[#allocation2 + $0x1c] sm:$0xf] 0
        %205 = vst [vmem:[#allocation2 + $0x20] sm:$0xf] 0
        %206 = vst [vmem:[#allocation2 + $0x24] sm:$0xf] 0
        %207 = vst [vmem:[#allocation2 + $0x28] sm:$0xf] 0
        %208 = vst [vmem:[#allocation2 + $0x2c] sm:$0xf] 0
        %209 = vst [vmem:[#allocation2 + $0xf0] sm:$0xf] 0
        %210 = vst [vmem:[#allocation2 + $0xf4] sm:$0xf] 0
        %211 = vst [vmem:[#allocation2 + $0xf8] sm:$0xf] 0
        %212 = vst [vmem:[#allocation3] sm:$0xf] 0
        %213 = vst [vmem:[#allocation3 + $0x4] sm:$0xf] 0
        %214 = vst [vmem:[#allocation3 + $0x8] sm:$0xf] 0
        %215 = vst [vmem:[#allocation3 + $0xc] sm:$0xf] 0
        %216 = vst [vmem:[#allocation3 + $0x10] sm:$0xf] 0
        %217 = vst [vmem:[#allocation3 + $0x14] sm:$0xf] 0
        %218 = vst [vmem:[#allocation3 + $0x18] sm:$0xf] 0
        %219 = vst [vmem:[#allocation3 + $0x1c] sm:$0xf] 0
        %220 = vst [vmem:[#allocation3 + $0x20] sm:$0xf] 0
        %221 = vst [vmem:[#allocation3 + $0x24] sm:$0xf] 0
        %222 = vst [vmem:[#allocation3 + $0x28] sm:$0xf] 0
        %223 = vst [vmem:[#allocation3 + $0x2c] sm:$0xf] 0
        %v224 = vld [vmem:[%s195] sm:$0xf]
        %v225 = vld [vmem:[%s195 + $0x4] sm:$0xf]
        %v226 = vld [vmem:[%s195 + $0x8] sm:$0xf]
        %v227 = vld [vmem:[%s195 + $0xc] sm:$0xf]
        %v228 = vld [vmem:[%s195 + $0x10] sm:$0xf]
        %v229 = vld [vmem:[%s195 + $0x14] sm:$0xf]
        %v230 = vld [vmem:[%s195 + $0x18] sm:$0xf]
        %v231 = vld [vmem:[%s195 + $0x1c] sm:$0xf]
        %v232 = vld [vmem:[%s195 + $0x20] sm:$0xf]
        %v233 = vld [vmem:[%s195 + $0x24] sm:$0xf]
        %v234 = vld [vmem:[%s195 + $0x28] sm:$0xf]
        %v235 = vld [vmem:[%s195 + $0x2c] sm:$0xf]
        %v236 = vld [vmem:[%s1] sm:$0xf]
        %v237 = vld [vmem:[%s1 + $0x4] sm:$0xf]
        %v238 = vld [vmem:[%s1 + $0x8] sm:$0xf]
        %v239 = vld [vmem:[%s1 + $0xc] sm:$0xf]
        %v240 = vld [vmem:[%s1 + $0x10] sm:$0xf]
        %v241 = vld [vmem:[%s1 + $0x14] sm:$0xf]
        %v242 = vld [vmem:[%s1 + $0x18] sm:$0xf]
        %v243 = vld [vmem:[%s1 + $0x1c] sm:$0xf]
        %v244 = vld [vmem:[%s1 + $0x20] sm:$0xf]
        %v245 = vld [vmem:[%s1 + $0x24] sm:$0xf]
        %v246 = vld [vmem:[%s1 + $0x28] sm:$0xf]
        %v247 = vld [vmem:[%s1 + $0x2c] sm:$0xf]
        %v248 = vld [vmem:[%s1 + $0x30] sm:$0xf]
        %v249 = vld [vmem:[%s1 + $0x34] sm:$0xf]
        %v250 = vld [vmem:[%s1 + $0x38] sm:$0xf]
        %v251 = vld [vmem:[%s1 + $0x3c] sm:$0xf]
        %v252 = vld [vmem:[%s195 + $0x30] sm:$0xf]
        %v253 = vld [vmem:[%s195 + $0x34] sm:$0xf]
        %v254 = vld [vmem:[%s195 + $0x38] sm:$0xf]
        %s255 = scalar_lea.vmem %s1, 64
        %v256 = vld [vmem:[%s255] sm:$0xf]
        %v257 = vld [vmem:[%s255 + $0x4] sm:$0xf]
        %v258 = vld [vmem:[%s255 + $0x8] sm:$0xf]
        %v259 = vld [vmem:[%s255 + $0xc] sm:$0xf]
        %v260 = vld [vmem:[%s255 + $0x10] sm:$0xf]
        %v261 = vld [vmem:[%s255 + $0x14] sm:$0xf]
        %v262 = vld [vmem:[%s255 + $0x18] sm:$0xf]
        %v263 = vld [vmem:[%s255 + $0x1c] sm:$0xf]
        %v264 = vld [vmem:[%s255 + $0x20] sm:$0xf]
        %v265 = vld [vmem:[%s255 + $0x24] sm:$0xf]
        %v266 = vld [vmem:[%s255 + $0x28] sm:$0xf]
        %v267 = vld [vmem:[%s255 + $0x2c] sm:$0xf]
        %v268 = vld [vmem:[%s255 + $0x30] sm:$0xf]
        %v269 = vld [vmem:[%s255 + $0x34] sm:$0xf]
        %v270 = vld [vmem:[%s255 + $0x38] sm:$0xf]
        %v271 = vld [vmem:[%s255 + $0x3c] sm:$0xf]
        %v284 = vunpack.c.l.b16 %v227
        %v285 = vunpack.c.l.b16 %v228
        %v286 = vunpack.c.l.b16 %v229
        %v287 = vunpack.c.l.b16 %v230
        %v288 = vunpack.c.l.b16 %v231
        %v289 = vunpack.c.l.b16 %v232
        %v290 = vunpack.c.l.b16 %v233
        %v291 = vunpack.c.l.b16 %v234
        %v292 = vunpack.c.l.b16 %v235
        %v293 = vunpack.c.l.b16 %v252
        %v294 = vunpack.c.l.b16 %v253
        %v295 = vunpack.c.l.b16 %v254
        %v296 = vpack.c.b16 %v285, %v284
        %v297 = vpack.c.b16 %v287, %v286
        %v298 = vpack.c.b16 %v289, %v288
        %v299 = vpack.c.b16 %v291, %v290
        %v300 = vpack.c.b16 %v293, %v292
        %v301 = vpack.c.b16 %v295, %v294
        %v324 = vunpack.c.l.b16 %v256
        %v325 = vunpack.c.l.b16 %v257
        %v326 = vunpack.c.l.b16 %v258
        %v327 = vunpack.c.l.b16 %v259
        %v328 = vunpack.c.l.b16 %v260
        %v329 = vunpack.c.l.b16 %v261
        %v330 = vunpack.c.l.b16 %v262
        %v331 = vunpack.c.l.b16 %v263
        %v332 = vunpack.c.l.b16 %v264
        %v333 = vunpack.c.l.b16 %v265
        %v334 = vunpack.c.l.b16 %v266
        %v335 = vunpack.c.l.b16 %v267
        %v336 = vunpack.c.l.b16 %v268
        %v337 = vunpack.c.l.b16 %v269
        %v338 = vunpack.c.l.b16 %v270
        %v339 = vunpack.c.l.b16 %v271
        %v340 = vpack.c.b16 %v325, %v324
        %v341 = vpack.c.b16 %v327, %v326
        %v342 = vpack.c.b16 %v329, %v328
        %v343 = vpack.c.b16 %v331, %v330
        %v344 = vpack.c.b16 %v333, %v332
        %v345 = vpack.c.b16 %v335, %v334
        %v346 = vpack.c.b16 %v337, %v336
        %v347 = vpack.c.b16 %v339, %v338
        %356 = vmatprep.subr.bf16.mxu0 0
        %357 = vmatpush1.bf16.msra.mxu0 %v340
        %358 = vmatprep.subr.bf16.mxu0 0
        %359 = vmatpush1.bf16.msra.mxu0 %v341
        %360 = vmatprep.subr.bf16.mxu0 0
        %361 = vmatpush1.bf16.msra.mxu0 %v342
        %362 = vmatprep.subr.bf16.mxu0 0
        %363 = vmatpush1.bf16.msra.mxu0 %v343
        %364 = vmatprep.subr.bf16.mxu0 0
        %365 = vmatpush1.bf16.msra.mxu0 %v344
        %366 = vmatprep.subr.bf16.mxu0 0
        %367 = vmatpush1.bf16.msra.mxu0 %v345
        %368 = vmatprep.subr.bf16.mxu0 0
        %369 = vmatpush1.bf16.msra.mxu0 %v346
        %370 = vmatprep.subr.bf16.mxu0 0
        %371 = vmatpush1.bf16.msra.mxu0 %v347
        %372 = vmatprep.subr.bf16.mxu0 0
        %373 = vmatpush1.bf16.msra.mxu0 0
        %374 = vmatprep.subr.bf16.mxu0 0
        %375 = vmatpush1.bf16.msra.mxu0 0
        %376 = vmatprep.subr.bf16.mxu0 0
        %377 = vmatpush1.bf16.msra.mxu0 0
        %378 = vmatprep.subr.bf16.mxu0 0
        %379 = vmatpush1.bf16.msra.mxu0 0
        %380 = vmatprep.subr.bf16.mxu0 0
        %381 = vmatpush1.bf16.msra.mxu0 0
        %382 = vmatprep.subr.bf16.mxu0 0
        %383 = vmatpush1.bf16.msra.mxu0 0
        %384 = vmatprep.subr.bf16.mxu0 0
        %385 = vmatpush1.bf16.msra.mxu0 0
        %386 = vmatprep.subr.bf16.mxu0 0
        %387 = vmatpush1.bf16.msra.mxu0 0
        %388 = vmatprep.mubr.bf16.mxu0 0
        %389 = vmatmul.mubr.bf16.gmra.mrb[0].mxu0 %v296
        %v390 = vpop.f32.mrb[0].mxu0
        %v391 = vadd.f32 0.0, %v390
        %v392 = vpop.f32.mrb[0].mxu0
        %v393 = vpop.f32.mrb[0].mxu0
        %v394 = vadd.f32 0.0, %v393
        %v395 = vpop.f32.mrb[0].mxu0
        %396 = vmatprep.mubr.bf16.mxu0 0
        %397 = vmatmul.mubr.bf16.gmra.mrb[0].mxu0 %v297
        %v398 = vpop.f32.mrb[0].mxu0
        %v399 = vpop.f32.mrb[0].mxu0
        %v400 = vpop.f32.mrb[0].mxu0
        %v401 = vadd.f32 0.0, %v400
        %v402 = vpop.f32.mrb[0].mxu0
        %403 = vmatprep.mubr.bf16.mxu0 0
        %404 = vmatmul.mubr.bf16.gmra.mrb[0].mxu0 %v298
        %v405 = vpop.f32.mrb[0].mxu0
        %v406 = vadd.f32 0.0, %v405
        %v407 = vpop.f32.mrb[0].mxu0
        %v408 = vpop.f32.mrb[0].mxu0
        %v409 = vpop.f32.mrb[0].mxu0
        %410 = vmatprep.mubr.bf16.mxu0 0
        %411 = vmatmul.mubr.bf16.gmra.mrb[0].mxu0 %v299
        %v412 = vpop.f32.mrb[0].mxu0
        %v413 = vadd.f32 0.0, %v412
        %v414 = vpop.f32.mrb[0].mxu0
        %v415 = vpop.f32.mrb[0].mxu0
        %v416 = vadd.f32 0.0, %v415
        %v417 = vpop.f32.mrb[0].mxu0
        %418 = vmatprep.mubr.bf16.mxu0 0
        %419 = vmatmul.mubr.bf16.gmra.mrb[0].mxu0 %v300
        %v420 = vpop.f32.mrb[0].mxu0
        %v421 = vpop.f32.mrb[0].mxu0
        %v422 = vpop.f32.mrb[0].mxu0
        %v423 = vadd.f32 0.0, %v422
        %v424 = vpop.f32.mrb[0].mxu0
        %425 = vmatprep.mubr.bf16.mxu0 0
        %426 = vmatmul.mubr.bf16.gmra.mrb[0].mxu0 %v301
        %v427 = vpop.f32.mrb[0].mxu0
        %v428 = vadd.f32 0.0, %v427
        %v429 = vpop.f32.mrb[0].mxu0
        %v430 = vpop.f32.mrb[0].mxu0
        %v431 = vpop.f32.mrb[0].mxu0
        %432 = vdwg.mxu0
        %v436 = vunpack.c.l.b16 %v224
        %v437 = vunpack.c.l.b16 %v225
        %v438 = vunpack.c.l.b16 %v226
        %v439 = vpack.c.b16 %v437, %v436
        %v440 = vpack.c.b16 %v284, %v438
        %v441 = vpack.c.b16 %v286, %v285
        %v442 = vpack.c.b16 %v288, %v287
        %v443 = vpack.c.b16 %v290, %v289
        %v444 = vpack.c.b16 %v292, %v291
        %v467 = vunpack.c.l.b16 %v236
        %v468 = vunpack.c.l.b16 %v237
        %v469 = vunpack.c.l.b16 %v238
        %v470 = vunpack.c.l.b16 %v239
        %v471 = vunpack.c.l.b16 %v240
        %v472 = vunpack.c.l.b16 %v241
        %v473 = vunpack.c.l.b16 %v242
        %v474 = vunpack.c.l.b16 %v243
        %v475 = vunpack.c.l.b16 %v244
        %v476 = vunpack.c.l.b16 %v245
        %v477 = vunpack.c.l.b16 %v246
        %v478 = vunpack.c.l.b16 %v247
        %v479 = vunpack.c.l.b16 %v248
        %v480 = vunpack.c.l.b16 %v249
        %v481 = vunpack.c.l.b16 %v250
        %v482 = vunpack.c.l.b16 %v251
        %v483 = vpack.c.b16 %v468, %v467
        %v484 = vpack.c.b16 %v470, %v469
        %v485 = vpack.c.b16 %v472, %v471
        %v486 = vpack.c.b16 %v474, %v473
        %v487 = vpack.c.b16 %v476, %v475
        %v488 = vpack.c.b16 %v478, %v477
        %v489 = vpack.c.b16 %v480, %v479
        %v490 = vpack.c.b16 %v482, %v481
        %499 = vmatprep.subr.bf16.mxu0 0
        %500 = vmatpush1.bf16.msra.mxu0 %v483
        %501 = vmatprep.subr.bf16.mxu0 0
        %502 = vmatpush1.bf16.msra.mxu0 %v484
        %503 = vmatprep.subr.bf16.mxu0 0
        %504 = vmatpush1.bf16.msra.mxu0 %v485
        %505 = vmatprep.subr.bf16.mxu0 0
        %506 = vmatpush1.bf16.msra.mxu0 %v486
        %507 = vmatprep.subr.bf16.mxu0 0
        %508 = vmatpush1.bf16.msra.mxu0 %v487
        %509 = vmatprep.subr.bf16.mxu0 0
        %510 = vmatpush1.bf16.msra.mxu0 %v488
        %511 = vmatprep.subr.bf16.mxu0 0
        %512 = vmatpush1.bf16.msra.mxu0 %v489
        %513 = vmatprep.subr.bf16.mxu0 0
        %514 = vmatpush1.bf16.msra.mxu0 %v490
        %515 = vmatprep.subr.bf16.mxu0 0
        %516 = vmatpush1.bf16.msra.mxu0 0
        %517 = vmatprep.subr.bf16.mxu0 0
        %518 = vmatpush1.bf16.msra.mxu0 0
        %519 = vmatprep.subr.bf16.mxu0 0
        %520 = vmatpush1.bf16.msra.mxu0 0
        %521 = vmatprep.subr.bf16.mxu0 0
        %522 = vmatpush1.bf16.msra.mxu0 0
        %523 = vmatprep.subr.bf16.mxu0 0
        %524 = vmatpush1.bf16.msra.mxu0 0
        %525 = vmatprep.subr.bf16.mxu0 0
        %526 = vmatpush1.bf16.msra.mxu0 0
        %527 = vmatprep.subr.bf16.mxu0 0
        %528 = vmatpush1.bf16.msra.mxu0 0
        %529 = vmatprep.subr.bf16.mxu0 0
        %530 = vmatpush1.bf16.msra.mxu0 0
        %531 = vmatprep.mubr.bf16.mxu0 0
        %532 = vmatmul.mubr.bf16.gmra.mrb[0].mxu0 %v439
        %v533 = vpop.f32.mrb[0].mxu0
        %v534 = vadd.f32 %v391, %v533
        %v535 = vpop.f32.mrb[0].mxu0
        %v536 = vpop.f32.mrb[0].mxu0
        %v537 = vadd.f32 %v394, %v536
        %v538 = vpop.f32.mrb[0].mxu0
        %539 = vmatprep.mubr.bf16.mxu0 0
        %540 = vmatmul.mubr.bf16.gmra.mrb[0].mxu0 %v440
        %v541 = vpop.f32.mrb[0].mxu0
        %v542 = vpop.f32.mrb[0].mxu0
        %v543 = vpop.f32.mrb[0].mxu0
        %v544 = vadd.f32 %v401, %v543
        %v545 = vpop.f32.mrb[0].mxu0
        %546 = vmatprep.mubr.bf16.mxu0 0
        %547 = vmatmul.mubr.bf16.gmra.mrb[0].mxu0 %v441
        %v548 = vpop.f32.mrb[0].mxu0
        %v549 = vadd.f32 %v406, %v548
        %v550 = vpop.f32.mrb[0].mxu0
        %v551 = vpop.f32.mrb[0].mxu0
        %v552 = vpop.f32.mrb[0].mxu0
        %553 = vmatprep.mubr.bf16.mxu0 0
        %554 = vmatmul.mubr.bf16.gmra.mrb[0].mxu0 %v442
        %v555 = vpop.f32.mrb[0].mxu0
        %v556 = vadd.f32 %v413, %v555
        %v557 = vpop.f32.mrb[0].mxu0
        %v558 = vpop.f32.mrb[0].mxu0
        %v559 = vadd.f32 %v416, %v558
        %v560 = vpop.f32.mrb[0].mxu0
        %561 = vmatprep.mubr.bf16.mxu0 0
        %562 = vmatmul.mubr.bf16.gmra.mrb[0].mxu0 %v443
        %v563 = vpop.f32.mrb[0].mxu0
        %v564 = vpop.f32.mrb[0].mxu0
        %v565 = vpop.f32.mrb[0].mxu0
        %v566 = vadd.f32 %v423, %v565
        %v567 = vpop.f32.mrb[0].mxu0
        %568 = vmatprep.mubr.bf16.mxu0 0
        %569 = vmatmul.mubr.bf16.gmra.mrb[0].mxu0 %v444
        %v570 = vpop.f32.mrb[0].mxu0
        %v571 = vadd.f32 %v428, %v570
        %v572 = vpop.f32.mrb[0].mxu0
        %v573 = vpop.f32.mrb[0].mxu0
        %v574 = vpop.f32.mrb[0].mxu0
        %575 = vdwg.mxu0
        %v576 = vld [vmem:[%s195 + $0x18] sm:$0xf]
        %v577 = vld [vmem:[%s195 + $0x1c] sm:$0xf]
        %v578 = vld [vmem:[%s195 + $0x20] sm:$0xf]
        %v579 = vld [vmem:[%s195 + $0x24] sm:$0xf]
        %v580 = vld [vmem:[%s195 + $0x28] sm:$0xf]
        %v581 = vld [vmem:[%s195 + $0x2c] sm:$0xf]
        %v582 = vld [vmem:[%s195 + $0x30] sm:$0xf]
        %v583 = vld [vmem:[%s195 + $0x34] sm:$0xf]
        %v584 = vld [vmem:[%s195 + $0x38] sm:$0xf]
        %v585 = vld [vmem:[%s195 + $0x3c] sm:$0xf]
        %v586 = vld [vmem:[%s195 + $0x40] sm:$0xf]
        %v587 = vld [vmem:[%s195 + $0x44] sm:$0xf]
        %s588 = scalar_lea.vmem %s1, 128
        %v589 = vld [vmem:[%s588] sm:$0xf]
        %v590 = vld [vmem:[%s588 + $0x4] sm:$0xf]
        %v591 = vld [vmem:[%s588 + $0x8] sm:$0xf]
        %v592 = vld [vmem:[%s588 + $0xc] sm:$0xf]
        %v593 = vld [vmem:[%s588 + $0x10] sm:$0xf]
        %v594 = vld [vmem:[%s588 + $0x14] sm:$0xf]
        %v595 = vld [vmem:[%s588 + $0x18] sm:$0xf]
        %v596 = vld [vmem:[%s588 + $0x1c] sm:$0xf]
        %v597 = vld [vmem:[%s588 + $0x20] sm:$0xf]
        %v598 = vld [vmem:[%s588 + $0x24] sm:$0xf]
        %v599 = vld [vmem:[%s588 + $0x28] sm:$0xf]
        %v600 = vld [vmem:[%s588 + $0x2c] sm:$0xf]
        %v601 = vld [vmem:[%s588 + $0x30] sm:$0xf]
        %v602 = vld [vmem:[%s588 + $0x34] sm:$0xf]
        %v603 = vld [vmem:[%s588 + $0x38] sm:$0xf]
        %v604 = vld [vmem:[%s588 + $0x3c] sm:$0xf]
        %v617 = vunpack.c.l.b16 %v576
        %v618 = vunpack.c.l.b16 %v577
        %v619 = vunpack.c.l.b16 %v578
        %v620 = vunpack.c.l.b16 %v579
        %v621 = vunpack.c.l.b16 %v580
        %v622 = vunpack.c.l.b16 %v581
        %v623 = vunpack.c.l.b16 %v582
        %v624 = vunpack.c.l.b16 %v583
        %v625 = vunpack.c.l.b16 %v584
        %v626 = vunpack.c.l.b16 %v585
        %v627 = vunpack.c.l.b16 %v586
        %v628 = vunpack.c.l.b16 %v587
        %v629 = vpack.c.b16 %v618, %v617
        %v630 = vpack.c.b16 %v620, %v619
        %v631 = vpack.c.b16 %v622, %v621
        %v632 = vpack.c.b16 %v624, %v623
        %v633 = vpack.c.b16 %v626, %v625
        %v634 = vpack.c.b16 %v628, %v627
        %v657 = vunpack.c.l.b16 %v589
        %v658 = vunpack.c.l.b16 %v590
        %v659 = vunpack.c.l.b16 %v591
        %v660 = vunpack.c.l.b16 %v592
        %v661 = vunpack.c.l.b16 %v593
        %v662 = vunpack.c.l.b16 %v594
        %v663 = vunpack.c.l.b16 %v595
        %v664 = vunpack.c.l.b16 %v596
        %v665 = vunpack.c.l.b16 %v597
        %v666 = vunpack.c.l.b16 %v598
        %v667 = vunpack.c.l.b16 %v599
        %v668 = vunpack.c.l.b16 %v600
        %v669 = vunpack.c.l.b16 %v601
        %v670 = vunpack.c.l.b16 %v602
        %v671 = vunpack.c.l.b16 %v603
        %v672 = vunpack.c.l.b16 %v604
        %v673 = vpack.c.b16 %v658, %v657
        %v674 = vpack.c.b16 %v660, %v659
        %v675 = vpack.c.b16 %v662, %v661
        %v676 = vpack.c.b16 %v664, %v663
        %v677 = vpack.c.b16 %v666, %v665
        %v678 = vpack.c.b16 %v668, %v667
        %v679 = vpack.c.b16 %v670, %v669
        %v680 = vpack.c.b16 %v672, %v671
        %689 = vmatprep.subr.bf16.mxu0 0
        %690 = vmatpush1.bf16.msra.mxu0 %v673
        %691 = vmatprep.subr.bf16.mxu0 0
        %692 = vmatpush1.bf16.msra.mxu0 %v674
        %693 = vmatprep.subr.bf16.mxu0 0
        %694 = vmatpush1.bf16.msra.mxu0 %v675
        %695 = vmatprep.subr.bf16.mxu0 0
        %696 = vmatpush1.bf16.msra.mxu0 %v676
        %697 = vmatprep.subr.bf16.mxu0 0
        %698 = vmatpush1.bf16.msra.mxu0 %v677
        %699 = vmatprep.subr.bf16.mxu0 0
        %700 = vmatpush1.bf16.msra.mxu0 %v678
        %701 = vmatprep.subr.bf16.mxu0 0
        %702 = vmatpush1.bf16.msra.mxu0 %v679
        %703 = vmatprep.subr.bf16.mxu0 0
        %704 = vmatpush1.bf16.msra.mxu0 %v680
        %705 = vmatprep.subr.bf16.mxu0 0
        %706 = vmatpush1.bf16.msra.mxu0 0
        %707 = vmatprep.subr.bf16.mxu0 0
        %708 = vmatpush1.bf16.msra.mxu0 0
        %709 = vmatprep.subr.bf16.mxu0 0
        %710 = vmatpush1.bf16.msra.mxu0 0
        %711 = vmatprep.subr.bf16.mxu0 0
        %712 = vmatpush1.bf16.msra.mxu0 0
        %713 = vmatprep.subr.bf16.mxu0 0
        %714 = vmatpush1.bf16.msra.mxu0 0
        %715 = vmatprep.subr.bf16.mxu0 0
        %716 = vmatpush1.bf16.msra.mxu0 0
        %717 = vmatprep.subr.bf16.mxu0 0
        %718 = vmatpush1.bf16.msra.mxu0 0
        %719 = vmatprep.subr.bf16.mxu0 0
        %720 = vmatpush1.bf16.msra.mxu0 0
        %721 = vmatprep.mubr.bf16.mxu0 0
        %722 = vmatmul.mubr.bf16.gmra.mrb[0].mxu0 %v629
        %v723 = vpop.f32.mrb[0].mxu0
        %v724 = vadd.f32 0.0, %v723
        %v725 = vpop.f32.mrb[0].mxu0
        %v726 = vpop.f32.mrb[0].mxu0
        %v727 = vadd.f32 0.0, %v726
        %v728 = vpop.f32.mrb[0].mxu0
        %729 = vmatprep.mubr.bf16.mxu0 0
        %730 = vmatmul.mubr.bf16.gmra.mrb[0].mxu0 %v630
        %v731 = vpop.f32.mrb[0].mxu0
        %v732 = vpop.f32.mrb[0].mxu0
        %v733 = vpop.f32.mrb[0].mxu0
        %v734 = vadd.f32 0.0, %v733
        %v735 = vpop.f32.mrb[0].mxu0
        %736 = vmatprep.mubr.bf16.mxu0 0
        %737 = vmatmul.mubr.bf16.gmra.mrb[0].mxu0 %v631
        %v738 = vpop.f32.mrb[0].mxu0
        %v739 = vadd.f32 0.0, %v738
        %v740 = vpop.f32.mrb[0].mxu0
        %v741 = vpop.f32.mrb[0].mxu0
        %v742 = vpop.f32.mrb[0].mxu0
        %743 = vmatprep.mubr.bf16.mxu0 0
        %744 = vmatmul.mubr.bf16.gmra.mrb[0].mxu0 %v632
        %v745 = vpop.f32.mrb[0].mxu0
        %v746 = vadd.f32 0.0, %v745
        %v747 = vpop.f32.mrb[0].mxu0
        %v748 = vpop.f32.mrb[0].mxu0
        %v749 = vadd.f32 0.0, %v748
        %v750 = vpop.f32.mrb[0].mxu0
        %751 = vmatprep.mubr.bf16.mxu0 0
        %752 = vmatmul.mubr.bf16.gmra.mrb[0].mxu0 %v633
        %v753 = vpop.f32.mrb[0].mxu0
        %v754 = vpop.f32.mrb[0].mxu0
        %v755 = vpop.f32.mrb[0].mxu0
        %v756 = vadd.f32 0.0, %v755
        %v757 = vpop.f32.mrb[0].mxu0
        %758 = vmatprep.mubr.bf16.mxu0 0
        %759 = vmatmul.mubr.bf16.gmra.mrb[0].mxu0 %v634
        %v760 = vpop.f32.mrb[0].mxu0
        %v761 = vadd.f32 0.0, %v760
        %v762 = vpop.f32.mrb[0].mxu0
        %v763 = vpop.f32.mrb[0].mxu0
        %v764 = vpop.f32.mrb[0].mxu0
        %765 = vdwg.mxu0
        %v766 = vadd.f32 %v534, %v724
        %v767 = vadd.f32 %v537, %v727
        %v768 = vadd.f32 %v544, %v734
        %v769 = vadd.f32 %v549, %v739
        %v770 = vadd.f32 %v556, %v746
        %v771 = vadd.f32 %v559, %v749
        %v772 = vadd.f32 %v566, %v756
        %v773 = vadd.f32 %v571, %v761
        %v774 = vld [vmem:[%s195 + $0x24] sm:$0xf]
        %v775 = vld [vmem:[%s195 + $0x28] sm:$0xf]
        %v776 = vld [vmem:[%s195 + $0x2c] sm:$0xf]
        %v777 = vld [vmem:[%s195 + $0x30] sm:$0xf]
        %v778 = vld [vmem:[%s195 + $0x34] sm:$0xf]
        %v779 = vld [vmem:[%s195 + $0x38] sm:$0xf]
        %v780 = vld [vmem:[%s195 + $0x3c] sm:$0xf]
        %v781 = vld [vmem:[%s195 + $0x40] sm:$0xf]
        %v782 = vld [vmem:[%s195 + $0x44] sm:$0xf]
        %v783 = vld [vmem:[%s195 + $0x48] sm:$0xf]
        %v784 = vld [vmem:[%s195 + $0x4c] sm:$0xf]
        %v785 = vld [vmem:[%s195 + $0x50] sm:$0xf]
        %s786 = scalar_lea.vmem %s1, 192
        %v787 = vld [vmem:[%s786] sm:$0xf]
        %v788 = vld [vmem:[%s786 + $0x4] sm:$0xf]
        %v789 = vld [vmem:[%s786 + $0x8] sm:$0xf]
        %v790 = vld [vmem:[%s786 + $0xc] sm:$0xf]
        %v791 = vld [vmem:[%s786 + $0x10] sm:$0xf]
        %v792 = vld [vmem:[%s786 + $0x14] sm:$0xf]
        %v793 = vld [vmem:[%s786 + $0x18] sm:$0xf]
        %v794 = vld [vmem:[%s786 + $0x1c] sm:$0xf]
        %v795 = vld [vmem:[%s786 + $0x20] sm:$0xf]
        %v796 = vld [vmem:[%s786 + $0x24] sm:$0xf]
        %v797 = vld [vmem:[%s786 + $0x28] sm:$0xf]
        %v798 = vld [vmem:[%s786 + $0x2c] sm:$0xf]
        %v799 = vld [vmem:[%s786 + $0x30] sm:$0xf]
        %v800 = vld [vmem:[%s786 + $0x34] sm:$0xf]
        %v801 = vld [vmem:[%s786 + $0x38] sm:$0xf]
        %v802 = vld [vmem:[%s786 + $0x3c] sm:$0xf]
        %v815 = vunpack.c.l.b16 %v774
        %v816 = vunpack.c.l.b16 %v775
        %v817 = vunpack.c.l.b16 %v776
        %v818 = vunpack.c.l.b16 %v777
        %v819 = vunpack.c.l.b16 %v778
        %v820 = vunpack.c.l.b16 %v779
        %v821 = vunpack.c.l.b16 %v780
        %v822 = vunpack.c.l.b16 %v781
        %v823 = vunpack.c.l.b16 %v782
        %v824 = vunpack.c.l.b16 %v783
        %v825 = vunpack.c.l.b16 %v784
        %v826 = vunpack.c.l.b16 %v785
        %v827 = vpack.c.b16 %v816, %v815
        %v828 = vpack.c.b16 %v818, %v817
        %v829 = vpack.c.b16 %v820, %v819
        %v830 = vpack.c.b16 %v822, %v821
        %v831 = vpack.c.b16 %v824, %v823
        %v832 = vpack.c.b16 %v826, %v825
        %v855 = vunpack.c.l.b16 %v787
        %v856 = vunpack.c.l.b16 %v788
        %v857 = vunpack.c.l.b16 %v789
        %v858 = vunpack.c.l.b16 %v790
        %v859 = vunpack.c.l.b16 %v791
        %v860 = vunpack.c.l.b16 %v792
        %v861 = vunpack.c.l.b16 %v793
        %v862 = vunpack.c.l.b16 %v794
        %v863 = vunpack.c.l.b16 %v795
        %v864 = vunpack.c.l.b16 %v796
        %v865 = vunpack.c.l.b16 %v797
        %v866 = vunpack.c.l.b16 %v798
        %v867 = vunpack.c.l.b16 %v799
        %v868 = vunpack.c.l.b16 %v800
        %v869 = vunpack.c.l.b16 %v801
        %v870 = vunpack.c.l.b16 %v802
        %v871 = vpack.c.b16 %v856, %v855
        %v872 = vpack.c.b16 %v858, %v857
        %v873 = vpack.c.b16 %v860, %v859
        %v874 = vpack.c.b16 %v862, %v861
        %v875 = vpack.c.b16 %v864, %v863
        %v876 = vpack.c.b16 %v866, %v865
        %v877 = vpack.c.b16 %v868, %v867
        %v878 = vpack.c.b16 %v870, %v869
        %887 = vmatprep.subr.bf16.mxu0 0
        %888 = vmatpush1.bf16.msra.mxu0 %v871
        %889 = vmatprep.subr.bf16.mxu0 0
        %890 = vmatpush1.bf16.msra.mxu0 %v872
        %891 = vmatprep.subr.bf16.mxu0 0
        %892 = vmatpush1.bf16.msra.mxu0 %v873
        %893 = vmatprep.subr.bf16.mxu0 0
        %894 = vmatpush1.bf16.msra.mxu0 %v874
        %895 = vmatprep.subr.bf16.mxu0 0
        %896 = vmatpush1.bf16.msra.mxu0 %v875
        %897 = vmatprep.subr.bf16.mxu0 0
        %898 = vmatpush1.bf16.msra.mxu0 %v876
        %899 = vmatprep.subr.bf16.mxu0 0
        %900 = vmatpush1.bf16.msra.mxu0 %v877
        %901 = vmatprep.subr.bf16.mxu0 0
        %902 = vmatpush1.bf16.msra.mxu0 %v878
        %903 = vmatprep.subr.bf16.mxu0 0
        %904 = vmatpush1.bf16.msra.mxu0 0
        %905 = vmatprep.subr.bf16.mxu0 0
        %906 = vmatpush1.bf16.msra.mxu0 0
        %907 = vmatprep.subr.bf16.mxu0 0
        %908 = vmatpush1.bf16.msra.mxu0 0
        %909 = vmatprep.subr.bf16.mxu0 0
        %910 = vmatpush1.bf16.msra.mxu0 0
        %911 = vmatprep.subr.bf16.mxu0 0
        %912 = vmatpush1.bf16.msra.mxu0 0
        %913 = vmatprep.subr.bf16.mxu0 0
        %914 = vmatpush1.bf16.msra.mxu0 0
        %915 = vmatprep.subr.bf16.mxu0 0
        %916 = vmatpush1.bf16.msra.mxu0 0
        %917 = vmatprep.subr.bf16.mxu0 0
        %918 = vmatpush1.bf16.msra.mxu0 0
        %919 = vmatprep.mubr.bf16.mxu0 0
        %920 = vmatmul.mubr.bf16.gmra.mrb[0].mxu0 %v827
        %v921 = vpop.f32.mrb[0].mxu0
        %v922 = vadd.f32 0.0, %v921
        %v923 = vpop.f32.mrb[0].mxu0
        %v924 = vpop.f32.mrb[0].mxu0
        %v925 = vadd.f32 0.0, %v924
        %v926 = vpop.f32.mrb[0].mxu0
        %927 = vmatprep.mubr.bf16.mxu0 0
        %928 = vmatmul.mubr.bf16.gmra.mrb[0].mxu0 %v828
        %v929 = vpop.f32.mrb[0].mxu0
        %v930 = vpop.f32.mrb[0].mxu0
        %v931 = vpop.f32.mrb[0].mxu0
        %v932 = vadd.f32 0.0, %v931
        %v933 = vpop.f32.mrb[0].mxu0
        %934 = vmatprep.mubr.bf16.mxu0 0
        %935 = vmatmul.mubr.bf16.gmra.mrb[0].mxu0 %v829
        %v936 = vpop.f32.mrb[0].mxu0
        %v937 = vadd.f32 0.0, %v936
        %v938 = vpop.f32.mrb[0].mxu0
        %v939 = vpop.f32.mrb[0].mxu0
        %v940 = vpop.f32.mrb[0].mxu0
        %941 = vmatprep.mubr.bf16.mxu0 0
        %942 = vmatmul.mubr.bf16.gmra.mrb[0].mxu0 %v830
        %v943 = vpop.f32.mrb[0].mxu0
        %v944 = vadd.f32 0.0, %v943
        %v945 = vpop.f32.mrb[0].mxu0
        %v946 = vpop.f32.mrb[0].mxu0
        %v947 = vadd.f32 0.0, %v946
        %v948 = vpop.f32.mrb[0].mxu0
        %949 = vmatprep.mubr.bf16.mxu0 0
        %950 = vmatmul.mubr.bf16.gmra.mrb[0].mxu0 %v831
        %v951 = vpop.f32.mrb[0].mxu0
        %v952 = vpop.f32.mrb[0].mxu0
        %v953 = vpop.f32.mrb[0].mxu0
        %v954 = vadd.f32 0.0, %v953
        %v955 = vpop.f32.mrb[0].mxu0
        %956 = vmatprep.mubr.bf16.mxu0 0
        %957 = vmatmul.mubr.bf16.gmra.mrb[0].mxu0 %v832
        %v958 = vpop.f32.mrb[0].mxu0
        %v959 = vadd.f32 0.0, %v958
        %v960 = vpop.f32.mrb[0].mxu0
        %v961 = vpop.f32.mrb[0].mxu0
        %v962 = vpop.f32.mrb[0].mxu0
        %963 = vdwg.mxu0
        %v964 = vadd.f32 %v766, %v922
        %v965 = vadd.f32 %v767, %v925
        %v966 = vadd.f32 %v768, %v932
        %v967 = vadd.f32 %v769, %v937
        %v968 = vadd.f32 %v770, %v944
        %v969 = vadd.f32 %v771, %v947
        %v970 = vadd.f32 %v772, %v954
        %v971 = vadd.f32 %v773, %v959
        %v972 = vld [vmem:[%s195 + $0x30] sm:$0xf]
        %v973 = vld [vmem:[%s195 + $0x34] sm:$0xf]
        %v974 = vld [vmem:[%s195 + $0x38] sm:$0xf]
        %v975 = vld [vmem:[%s195 + $0x3c] sm:$0xf]
        %v976 = vld [vmem:[%s195 + $0x40] sm:$0xf]
        %v977 = vld [vmem:[%s195 + $0x44] sm:$0xf]
        %v978 = vld [vmem:[%s195 + $0x48] sm:$0xf]
        %v979 = vld [vmem:[%s195 + $0x4c] sm:$0xf]
        %v980 = vld [vmem:[%s195 + $0x50] sm:$0xf]
        %v981 = vld [vmem:[%s195 + $0x54] sm:$0xf]
        %v982 = vld [vmem:[%s195 + $0x58] sm:$0xf]
        %v983 = vld [vmem:[%s195 + $0x5c] sm:$0xf]
        %s984 = scalar_lea.vmem %s1, 256
        %v985 = vld [vmem:[%s984] sm:$0xf]
        %v986 = vld [vmem:[%s984 + $0x4] sm:$0xf]
        %v987 = vld [vmem:[%s984 + $0x8] sm:$0xf]
        %v988 = vld [vmem:[%s984 + $0xc] sm:$0xf]
        %v989 = vld [vmem:[%s984 + $0x10] sm:$0xf]
        %v990 = vld [vmem:[%s984 + $0x14] sm:$0xf]
        %v991 = vld [vmem:[%s984 + $0x18] sm:$0xf]
        %v992 = vld [vmem:[%s984 + $0x1c] sm:$0xf]
        %v993 = vld [vmem:[%s984 + $0x20] sm:$0xf]
        %v994 = vld [vmem:[%s984 + $0x24] sm:$0xf]
        %v995 = vld [vmem:[%s984 + $0x28] sm:$0xf]
        %v996 = vld [vmem:[%s984 + $0x2c] sm:$0xf]
        %v997 = vld [vmem:[%s984 + $0x30] sm:$0xf]
        %v998 = vld [vmem:[%s984 + $0x34] sm:$0xf]
        %v999 = vld [vmem:[%s984 + $0x38] sm:$0xf]
        %v1000 = vld [vmem:[%s984 + $0x3c] sm:$0xf]
        %v1013 = vunpack.c.l.b16 %v972
        %v1014 = vunpack.c.l.b16 %v973
        %v1015 = vunpack.c.l.b16 %v974
        %v1016 = vunpack.c.l.b16 %v975
        %v1017 = vunpack.c.l.b16 %v976
        %v1018 = vunpack.c.l.b16 %v977
        %v1019 = vunpack.c.l.b16 %v978
        %v1020 = vunpack.c.l.b16 %v979
        %v1021 = vunpack.c.l.b16 %v980
        %v1022 = vunpack.c.l.b16 %v981
        %v1023 = vunpack.c.l.b16 %v982
        %v1024 = vunpack.c.l.b16 %v983
        %v1025 = vpack.c.b16 %v1014, %v1013
        %v1026 = vpack.c.b16 %v1016, %v1015
        %v1027 = vpack.c.b16 %v1018, %v1017
        %v1028 = vpack.c.b16 %v1020, %v1019
        %v1029 = vpack.c.b16 %v1022, %v1021
        %v1030 = vpack.c.b16 %v1024, %v1023
        %v1053 = vunpack.c.l.b16 %v985
        %v1054 = vunpack.c.l.b16 %v986
        %v1055 = vunpack.c.l.b16 %v987
        %v1056 = vunpack.c.l.b16 %v988
        %v1057 = vunpack.c.l.b16 %v989
        %v1058 = vunpack.c.l.b16 %v990
        %v1059 = vunpack.c.l.b16 %v991
        %v1060 = vunpack.c.l.b16 %v992
        %v1061 = vunpack.c.l.b16 %v993
        %v1062 = vunpack.c.l.b16 %v994
        %v1063 = vunpack.c.l.b16 %v995
        %v1064 = vunpack.c.l.b16 %v996
        %v1065 = vunpack.c.l.b16 %v997
        %v1066 = vunpack.c.l.b16 %v998
        %v1067 = vunpack.c.l.b16 %v999
        %v1068 = vunpack.c.l.b16 %v1000
        %v1069 = vpack.c.b16 %v1054, %v1053
        %v1070 = vpack.c.b16 %v1056, %v1055
        %v1071 = vpack.c.b16 %v1058, %v1057
        %v1072 = vpack.c.b16 %v1060, %v1059
        %v1073 = vpack.c.b16 %v1062, %v1061
        %v1074 = vpack.c.b16 %v1064, %v1063
        %v1075 = vpack.c.b16 %v1066, %v1065
        %v1076 = vpack.c.b16 %v1068, %v1067
        %1085 = vmatprep.subr.bf16.mxu0 0
        %1086 = vmatpush1.bf16.msra.mxu0 %v1069
        %1087 = vmatprep.subr.bf16.mxu0 0
        %1088 = vmatpush1.bf16.msra.mxu0 %v1070
        %1089 = vmatprep.subr.bf16.mxu0 0
        %1090 = vmatpush1.bf16.msra.mxu0 %v1071
        %1091 = vmatprep.subr.bf16.mxu0 0
        %1092 = vmatpush1.bf16.msra.mxu0 %v1072
        %1093 = vmatprep.subr.bf16.mxu0 0
        %1094 = vmatpush1.bf16.msra.mxu0 %v1073
        %1095 = vmatprep.subr.bf16.mxu0 0
        %1096 = vmatpush1.bf16.msra.mxu0 %v1074
        %1097 = vmatprep.subr.bf16.mxu0 0
        %1098 = vmatpush1.bf16.msra.mxu0 %v1075
        %1099 = vmatprep.subr.bf16.mxu0 0
        %1100 = vmatpush1.bf16.msra.mxu0 %v1076
        %1101 = vmatprep.subr.bf16.mxu0 0
        %1102 = vmatpush1.bf16.msra.mxu0 0
        %1103 = vmatprep.subr.bf16.mxu0 0
        %1104 = vmatpush1.bf16.msra.mxu0 0
        %1105 = vmatprep.subr.bf16.mxu0 0
        %1106 = vmatpush1.bf16.msra.mxu0 0
        %1107 = vmatprep.subr.bf16.mxu0 0
        %1108 = vmatpush1.bf16.msra.mxu0 0
        %1109 = vmatprep.subr.bf16.mxu0 0
        %1110 = vmatpush1.bf16.msra.mxu0 0
        %1111 = vmatprep.subr.bf16.mxu0 0
        %1112 = vmatpush1.bf16.msra.mxu0 0
        %1113 = vmatprep.subr.bf16.mxu0 0
        %1114 = vmatpush1.bf16.msra.mxu0 0
        %1115 = vmatprep.subr.bf16.mxu0 0
        %1116 = vmatpush1.bf16.msra.mxu0 0
        %1117 = vmatprep.mubr.bf16.mxu0 0
        %1118 = vmatmul.mubr.bf16.gmra.mrb[0].mxu0 %v1025
        %v1119 = vpop.f32.mrb[0].mxu0
        %v1120 = vadd.f32 0.0, %v1119
        %v1121 = vpop.f32.mrb[0].mxu0
        %v1122 = vpop.f32.mrb[0].mxu0
        %v1123 = vadd.f32 0.0, %v1122
        %v1124 = vpop.f32.mrb[0].mxu0
        %1125 = vmatprep.mubr.bf16.mxu0 0
        %1126 = vmatmul.mubr.bf16.gmra.mrb[0].mxu0 %v1026
        %v1127 = vpop.f32.mrb[0].mxu0
        %v1128 = vpop.f32.mrb[0].mxu0
        %v1129 = vpop.f32.mrb[0].mxu0
        %v1130 = vadd.f32 0.0, %v1129
        %v1131 = vpop.f32.mrb[0].mxu0
        %1132 = vmatprep.mubr.bf16.mxu0 0
        %1133 = vmatmul.mubr.bf16.gmra.mrb[0].mxu0 %v1027
        %v1134 = vpop.f32.mrb[0].mxu0
        %v1135 = vadd.f32 0.0, %v1134
        %v1136 = vpop.f32.mrb[0].mxu0
        %v1137 = vpop.f32.mrb[0].mxu0
        %v1138 = vpop.f32.mrb[0].mxu0
        %1139 = vmatprep.mubr.bf16.mxu0 0
        %1140 = vmatmul.mubr.bf16.gmra.mrb[0].mxu0 %v1028
        %v1141 = vpop.f32.mrb[0].mxu0
        %v1142 = vadd.f32 0.0, %v1141
        %v1143 = vpop.f32.mrb[0].mxu0
        %v1144 = vpop.f32.mrb[0].mxu0
        %v1145 = vadd.f32 0.0, %v1144
        %v1146 = vpop.f32.mrb[0].mxu0
        %1147 = vmatprep.mubr.bf16.mxu0 0
        %1148 = vmatmul.mubr.bf16.gmra.mrb[0].mxu0 %v1029
        %v1149 = vpop.f32.mrb[0].mxu0
        %v1150 = vpop.f32.mrb[0].mxu0
        %v1151 = vpop.f32.mrb[0].mxu0
        %v1152 = vadd.f32 0.0, %v1151
        %v1153 = vpop.f32.mrb[0].mxu0
        %1154 = vmatprep.mubr.bf16.mxu0 0
        %1155 = vmatmul.mubr.bf16.gmra.mrb[0].mxu0 %v1030
        %v1156 = vpop.f32.mrb[0].mxu0
        %v1157 = vadd.f32 0.0, %v1156
        %v1158 = vpop.f32.mrb[0].mxu0
        %v1159 = vpop.f32.mrb[0].mxu0
        %v1160 = vpop.f32.mrb[0].mxu0
        %1161 = vdwg.mxu0
        %v1162 = vadd.f32 %v964, %v1120
        %v1163 = vadd.f32 %v965, %v1123
        %v1164 = vadd.f32 %v966, %v1130
        %v1165 = vadd.f32 %v967, %v1135
        %v1166 = vadd.f32 %v968, %v1142
        %v1167 = vadd.f32 %v969, %v1145
        %v1168 = vadd.f32 %v970, %v1152
        %v1169 = vadd.f32 %v971, %v1157
        %v1170 = vld [vmem:[%s195 + $0x3c] sm:$0xf]
        %v1171 = vld [vmem:[%s195 + $0x40] sm:$0xf]
        %v1172 = vld [vmem:[%s195 + $0x44] sm:$0xf]
        %v1173 = vld [vmem:[%s195 + $0x48] sm:$0xf]
        %v1174 = vld [vmem:[%s195 + $0x4c] sm:$0xf]
        %v1175 = vld [vmem:[%s195 + $0x50] sm:$0xf]
        %v1176 = vld [vmem:[%s195 + $0x54] sm:$0xf]
        %v1177 = vld [vmem:[%s195 + $0x58] sm:$0xf]
        %v1178 = vld [vmem:[%s195 + $0x5c] sm:$0xf]
        %v1179 = vld [vmem:[%s195 + $0x60] sm:$0xf]
        %v1180 = vld [vmem:[%s195 + $0x64] sm:$0xf]
        %v1181 = vld [vmem:[%s195 + $0x68] sm:$0xf]
        %s1182 = scalar_lea.vmem %s1, 320
        %v1183 = vld [vmem:[%s1182] sm:$0xf]
        %v1184 = vld [vmem:[%s1182 + $0x4] sm:$0xf]
        %v1185 = vld [vmem:[%s1182 + $0x8] sm:$0xf]
        %v1186 = vld [vmem:[%s1182 + $0xc] sm:$0xf]
        %v1187 = vld [vmem:[%s1182 + $0x10] sm:$0xf]
        %v1188 = vld [vmem:[%s1182 + $0x14] sm:$0xf]
        %v1189 = vld [vmem:[%s1182 + $0x18] sm:$0xf]
        %v1190 = vld [vmem:[%s1182 + $0x1c] sm:$0xf]
        %v1191 = vld [vmem:[%s1182 + $0x20] sm:$0xf]
        %v1192 = vld [vmem:[%s1182 + $0x24] sm:$0xf]
        %v1193 = vld [vmem:[%s1182 + $0x28] sm:$0xf]
        %v1194 = vld [vmem:[%s1182 + $0x2c] sm:$0xf]
        %v1195 = vld [vmem:[%s1182 + $0x30] sm:$0xf]
        %v1196 = vld [vmem:[%s1182 + $0x34] sm:$0xf]
        %v1197 = vld [vmem:[%s1182 + $0x38] sm:$0xf]
        %v1198 = vld [vmem:[%s1182 + $0x3c] sm:$0xf]
        %v1211 = vunpack.c.l.b16 %v1170
        %v1212 = vunpack.c.l.b16 %v1171
        %v1213 = vunpack.c.l.b16 %v1172
        %v1214 = vunpack.c.l.b16 %v1173
        %v1215 = vunpack.c.l.b16 %v1174
        %v1216 = vunpack.c.l.b16 %v1175
        %v1217 = vunpack.c.l.b16 %v1176
        %v1218 = vunpack.c.l.b16 %v1177
        %v1219 = vunpack.c.l.b16 %v1178
        %v1220 = vunpack.c.l.b16 %v1179
        %v1221 = vunpack.c.l.b16 %v1180
        %v1222 = vunpack.c.l.b16 %v1181
        %v1223 = vpack.c.b16 %v1212, %v1211
        %v1224 = vpack.c.b16 %v1214, %v1213
        %v1225 = vpack.c.b16 %v1216, %v1215
        %v1226 = vpack.c.b16 %v1218, %v1217
        %v1227 = vpack.c.b16 %v1220, %v1219
        %v1228 = vpack.c.b16 %v1222, %v1221
        %v1251 = vunpack.c.l.b16 %v1183
        %v1252 = vunpack.c.l.b16 %v1184
        %v1253 = vunpack.c.l.b16 %v1185
        %v1254 = vunpack.c.l.b16 %v1186
        %v1255 = vunpack.c.l.b16 %v1187
        %v1256 = vunpack.c.l.b16 %v1188
        %v1257 = vunpack.c.l.b16 %v1189
        %v1258 = vunpack.c.l.b16 %v1190
        %v1259 = vunpack.c.l.b16 %v1191
        %v1260 = vunpack.c.l.b16 %v1192
        %v1261 = vunpack.c.l.b16 %v1193
        %v1262 = vunpack.c.l.b16 %v1194
        %v1263 = vunpack.c.l.b16 %v1195
        %v1264 = vunpack.c.l.b16 %v1196
        %v1265 = vunpack.c.l.b16 %v1197
        %v1266 = vunpack.c.l.b16 %v1198
        %v1267 = vpack.c.b16 %v1252, %v1251
        %v1268 = vpack.c.b16 %v1254, %v1253
        %v1269 = vpack.c.b16 %v1256, %v1255
        %v1270 = vpack.c.b16 %v1258, %v1257
        %v1271 = vpack.c.b16 %v1260, %v1259
        %v1272 = vpack.c.b16 %v1262, %v1261
        %v1273 = vpack.c.b16 %v1264, %v1263
        %v1274 = vpack.c.b16 %v1266, %v1265
        %1283 = vmatprep.subr.bf16.mxu0 0
        %1284 = vmatpush1.bf16.msra.mxu0 %v1267
        %1285 = vmatprep.subr.bf16.mxu0 0
        %1286 = vmatpush1.bf16.msra.mxu0 %v1268
        %1287 = vmatprep.subr.bf16.mxu0 0
        %1288 = vmatpush1.bf16.msra.mxu0 %v1269
        %1289 = vmatprep.subr.bf16.mxu0 0
        %1290 = vmatpush1.bf16.msra.mxu0 %v1270
        %1291 = vmatprep.subr.bf16.mxu0 0
        %1292 = vmatpush1.bf16.msra.mxu0 %v1271
        %1293 = vmatprep.subr.bf16.mxu0 0
        %1294 = vmatpush1.bf16.msra.mxu0 %v1272
        %1295 = vmatprep.subr.bf16.mxu0 0
        %1296 = vmatpush1.bf16.msra.mxu0 %v1273
        %1297 = vmatprep.subr.bf16.mxu0 0
        %1298 = vmatpush1.bf16.msra.mxu0 %v1274
        %1299 = vmatprep.subr.bf16.mxu0 0
        %1300 = vmatpush1.bf16.msra.mxu0 0
        %1301 = vmatprep.subr.bf16.mxu0 0
        %1302 = vmatpush1.bf16.msra.mxu0 0
        %1303 = vmatprep.subr.bf16.mxu0 0
        %1304 = vmatpush1.bf16.msra.mxu0 0
        %1305 = vmatprep.subr.bf16.mxu0 0
        %1306 = vmatpush1.bf16.msra.mxu0 0
        %1307 = vmatprep.subr.bf16.mxu0 0
        %1308 = vmatpush1.bf16.msra.mxu0 0
        %1309 = vmatprep.subr.bf16.mxu0 0
        %1310 = vmatpush1.bf16.msra.mxu0 0
        %1311 = vmatprep.subr.bf16.mxu0 0
        %1312 = vmatpush1.bf16.msra.mxu0 0
        %1313 = vmatprep.subr.bf16.mxu0 0
        %1314 = vmatpush1.bf16.msra.mxu0 0
        %1315 = vmatprep.mubr.bf16.mxu0 0
        %1316 = vmatmul.mubr.bf16.gmra.mrb[0].mxu0 %v1223
        %v1317 = vpop.f32.mrb[0].mxu0
        %v1318 = vadd.f32 0.0, %v1317
        %v1319 = vpop.f32.mrb[0].mxu0
        %v1320 = vpop.f32.mrb[0].mxu0
        %v1321 = vadd.f32 0.0, %v1320
        %v1322 = vpop.f32.mrb[0].mxu0
        %1323 = vmatprep.mubr.bf16.mxu0 0
        %1324 = vmatmul.mubr.bf16.gmra.mrb[0].mxu0 %v1224
        %v1325 = vpop.f32.mrb[0].mxu0
        %v1326 = vpop.f32.mrb[0].mxu0
        %v1327 = vpop.f32.mrb[0].mxu0
        %v1328 = vadd.f32 0.0, %v1327
        %v1329 = vpop.f32.mrb[0].mxu0
        %1330 = vmatprep.mubr.bf16.mxu0 0
        %1331 = vmatmul.mubr.bf16.gmra.mrb[0].mxu0 %v1225
        %v1332 = vpop.f32.mrb[0].mxu0
        %v1333 = vadd.f32 0.0, %v1332
        %v1334 = vpop.f32.mrb[0].mxu0
        %v1335 = vpop.f32.mrb[0].mxu0
        %v1336 = vpop.f32.mrb[0].mxu0
        %1337 = vmatprep.mubr.bf16.mxu0 0
        %1338 = vmatmul.mubr.bf16.gmra.mrb[0].mxu0 %v1226
        %v1339 = vpop.f32.mrb[0].mxu0
        %v1340 = vadd.f32 0.0, %v1339
        %v1341 = vpop.f32.mrb[0].mxu0
        %v1342 = vpop.f32.mrb[0].mxu0
        %v1343 = vadd.f32 0.0, %v1342
        %v1344 = vpop.f32.mrb[0].mxu0
        %1345 = vmatprep.mubr.bf16.mxu0 0
        %1346 = vmatmul.mubr.bf16.gmra.mrb[0].mxu0 %v1227
        %v1347 = vpop.f32.mrb[0].mxu0
        %v1348 = vpop.f32.mrb[0].mxu0
        %v1349 = vpop.f32.mrb[0].mxu0
        %v1350 = vadd.f32 0.0, %v1349
        %v1351 = vpop.f32.mrb[0].mxu0
        %1352 = vmatprep.mubr.bf16.mxu0 0
        %1353 = vmatmul.mubr.bf16.gmra.mrb[0].mxu0 %v1228
        %v1354 = vpop.f32.mrb[0].mxu0
        %v1355 = vadd.f32 0.0, %v1354
        %v1356 = vpop.f32.mrb[0].mxu0
        %v1357 = vpop.f32.mrb[0].mxu0
        %v1358 = vpop.f32.mrb[0].mxu0
        %1359 = vdwg.mxu0
        %v1360 = vadd.f32 %v1162, %v1318
        %v1361 = vadd.f32 %v1163, %v1321
        %v1362 = vadd.f32 %v1164, %v1328
        %v1363 = vadd.f32 %v1165, %v1333
        %v1364 = vadd.f32 %v1166, %v1340
        %v1365 = vadd.f32 %v1167, %v1343
        %v1366 = vadd.f32 %v1168, %v1350
        %v1367 = vadd.f32 %v1169, %v1355
        %v1368 = vld [vmem:[%s195 + $0x48] sm:$0xf]
        %v1369 = vld [vmem:[%s195 + $0x4c] sm:$0xf]
        %v1370 = vld [vmem:[%s195 + $0x50] sm:$0xf]
        %v1371 = vld [vmem:[%s195 + $0x54] sm:$0xf]
        %v1372 = vld [vmem:[%s195 + $0x58] sm:$0xf]
        %v1373 = vld [vmem:[%s195 + $0x5c] sm:$0xf]
        %v1374 = vld [vmem:[%s195 + $0x60] sm:$0xf]
        %v1375 = vld [vmem:[%s195 + $0x64] sm:$0xf]
        %v1376 = vld [vmem:[%s195 + $0x68] sm:$0xf]
        %v1377 = vld [vmem:[%s195 + $0x6c] sm:$0xf]
        %v1378 = vld [vmem:[%s195 + $0x70] sm:$0xf]
        %v1379 = vld [vmem:[%s195 + $0x74] sm:$0xf]
        %s1380 = scalar_lea.vmem %s1, 384
        %v1381 = vld [vmem:[%s1380] sm:$0xf]
        %v1382 = vld [vmem:[%s1380 + $0x4] sm:$0xf]
        %v1383 = vld [vmem:[%s1380 + $0x8] sm:$0xf]
        %v1384 = vld [vmem:[%s1380 + $0xc] sm:$0xf]
        %v1385 = vld [vmem:[%s1380 + $0x10] sm:$0xf]
        %v1386 = vld [vmem:[%s1380 + $0x14] sm:$0xf]
        %v1387 = vld [vmem:[%s1380 + $0x18] sm:$0xf]
        %v1388 = vld [vmem:[%s1380 + $0x1c] sm:$0xf]
        %v1389 = vld [vmem:[%s1380 + $0x20] sm:$0xf]
        %v1390 = vld [vmem:[%s1380 + $0x24] sm:$0xf]
        %v1391 = vld [vmem:[%s1380 + $0x28] sm:$0xf]
        %v1392 = vld [vmem:[%s1380 + $0x2c] sm:$0xf]
        %v1393 = vld [vmem:[%s1380 + $0x30] sm:$0xf]
        %v1394 = vld [vmem:[%s1380 + $0x34] sm:$0xf]
        %v1395 = vld [vmem:[%s1380 + $0x38] sm:$0xf]
        %v1396 = vld [vmem:[%s1380 + $0x3c] sm:$0xf]
        %v1409 = vunpack.c.l.b16 %v1368
        %v1410 = vunpack.c.l.b16 %v1369
        %v1411 = vunpack.c.l.b16 %v1370
        %v1412 = vunpack.c.l.b16 %v1371
        %v1413 = vunpack.c.l.b16 %v1372
        %v1414 = vunpack.c.l.b16 %v1373
        %v1415 = vunpack.c.l.b16 %v1374
        %v1416 = vunpack.c.l.b16 %v1375
        %v1417 = vunpack.c.l.b16 %v1376
        %v1418 = vunpack.c.l.b16 %v1377
        %v1419 = vunpack.c.l.b16 %v1378
        %v1420 = vunpack.c.l.b16 %v1379
        %v1421 = vpack.c.b16 %v1410, %v1409
        %v1422 = vpack.c.b16 %v1412, %v1411
        %v1423 = vpack.c.b16 %v1414, %v1413
        %v1424 = vpack.c.b16 %v1416, %v1415
        %v1425 = vpack.c.b16 %v1418, %v1417
        %v1426 = vpack.c.b16 %v1420, %v1419
        %v1449 = vunpack.c.l.b16 %v1381
        %v1450 = vunpack.c.l.b16 %v1382
        %v1451 = vunpack.c.l.b16 %v1383
        %v1452 = vunpack.c.l.b16 %v1384
        %v1453 = vunpack.c.l.b16 %v1385
        %v1454 = vunpack.c.l.b16 %v1386
        %v1455 = vunpack.c.l.b16 %v1387
        %v1456 = vunpack.c.l.b16 %v1388
        %v1457 = vunpack.c.l.b16 %v1389
        %v1458 = vunpack.c.l.b16 %v1390
        %v1459 = vunpack.c.l.b16 %v1391
        %v1460 = vunpack.c.l.b16 %v1392
        %v1461 = vunpack.c.l.b16 %v1393
        %v1462 = vunpack.c.l.b16 %v1394
        %v1463 = vunpack.c.l.b16 %v1395
        %v1464 = vunpack.c.l.b16 %v1396
        %v1465 = vpack.c.b16 %v1450, %v1449
        %v1466 = vpack.c.b16 %v1452, %v1451
        %v1467 = vpack.c.b16 %v1454, %v1453
        %v1468 = vpack.c.b16 %v1456, %v1455
        %v1469 = vpack.c.b16 %v1458, %v1457
        %v1470 = vpack.c.b16 %v1460, %v1459
        %v1471 = vpack.c.b16 %v1462, %v1461
        %v1472 = vpack.c.b16 %v1464, %v1463
        %1481 = vmatprep.subr.bf16.mxu0 0
        %1482 = vmatpush1.bf16.msra.mxu0 %v1465
        %1483 = vmatprep.subr.bf16.mxu0 0
        %1484 = vmatpush1.bf16.msra.mxu0 %v1466
        %1485 = vmatprep.subr.bf16.mxu0 0
        %1486 = vmatpush1.bf16.msra.mxu0 %v1467
        %1487 = vmatprep.subr.bf16.mxu0 0
        %1488 = vmatpush1.bf16.msra.mxu0 %v1468
        %1489 = vmatprep.subr.bf16.mxu0 0
        %1490 = vmatpush1.bf16.msra.mxu0 %v1469
        %1491 = vmatprep.subr.bf16.mxu0 0
        %1492 = vmatpush1.bf16.msra.mxu0 %v1470
        %1493 = vmatprep.subr.bf16.mxu0 0
        %1494 = vmatpush1.bf16.msra.mxu0 %v1471
        %1495 = vmatprep.subr.bf16.mxu0 0
        %1496 = vmatpush1.bf16.msra.mxu0 %v1472
        %1497 = vmatprep.subr.bf16.mxu0 0
        %1498 = vmatpush1.bf16.msra.mxu0 0
        %1499 = vmatprep.subr.bf16.mxu0 0
        %1500 = vmatpush1.bf16.msra.mxu0 0
        %1501 = vmatprep.subr.bf16.mxu0 0
        %1502 = vmatpush1.bf16.msra.mxu0 0
        %1503 = vmatprep.subr.bf16.mxu0 0
        %1504 = vmatpush1.bf16.msra.mxu0 0
        %1505 = vmatprep.subr.bf16.mxu0 0
        %1506 = vmatpush1.bf16.msra.mxu0 0
        %1507 = vmatprep.subr.bf16.mxu0 0
        %1508 = vmatpush1.bf16.msra.mxu0 0
        %1509 = vmatprep.subr.bf16.mxu0 0
        %1510 = vmatpush1.bf16.msra.mxu0 0
        %1511 = vmatprep.subr.bf16.mxu0 0
        %1512 = vmatpush1.bf16.msra.mxu0 0
        %1513 = vmatprep.mubr.bf16.mxu0 0
        %1514 = vmatmul.mubr.bf16.gmra.mrb[0].mxu0 %v1421
        %v1515 = vpop.f32.mrb[0].mxu0
        %v1516 = vadd.f32 0.0, %v1515
        %v1517 = vpop.f32.mrb[0].mxu0
        %v1518 = vpop.f32.mrb[0].mxu0
        %v1519 = vadd.f32 0.0, %v1518
        %v1520 = vpop.f32.mrb[0].mxu0
        %1521 = vmatprep.mubr.bf16.mxu0 0
        %1522 = vmatmul.mubr.bf16.gmra.mrb[0].mxu0 %v1422
        %v1523 = vpop.f32.mrb[0].mxu0
        %v1524 = vpop.f32.mrb[0].mxu0
        %v1525 = vpop.f32.mrb[0].mxu0
        %v1526 = vadd.f32 0.0, %v1525
        %v1527 = vpop.f32.mrb[0].mxu0
        %1528 = vmatprep.mubr.bf16.mxu0 0
        %1529 = vmatmul.mubr.bf16.gmra.mrb[0].mxu0 %v1423
        %v1530 = vpop.f32.mrb[0].mxu0
        %v1531 = vadd.f32 0.0, %v1530
        %v1532 = vpop.f32.mrb[0].mxu0
        %v1533 = vpop.f32.mrb[0].mxu0
        %v1534 = vpop.f32.mrb[0].mxu0
        %1535 = vmatprep.mubr.bf16.mxu0 0
        %1536 = vmatmul.mubr.bf16.gmra.mrb[0].mxu0 %v1424
        %v1537 = vpop.f32.mrb[0].mxu0
        %v1538 = vadd.f32 0.0, %v1537
        %v1539 = vpop.f32.mrb[0].mxu0
        %v1540 = vpop.f32.mrb[0].mxu0
        %v1541 = vadd.f32 0.0, %v1540
        %v1542 = vpop.f32.mrb[0].mxu0
        %1543 = vmatprep.mubr.bf16.mxu0 0
        %1544 = vmatmul.mubr.bf16.gmra.mrb[0].mxu0 %v1425
        %v1545 = vpop.f32.mrb[0].mxu0
        %v1546 = vpop.f32.mrb[0].mxu0
        %v1547 = vpop.f32.mrb[0].mxu0
        %v1548 = vadd.f32 0.0, %v1547
        %v1549 = vpop.f32.mrb[0].mxu0
        %1550 = vmatprep.mubr.bf16.mxu0 0
        %1551 = vmatmul.mubr.bf16.gmra.mrb[0].mxu0 %v1426
        %v1552 = vpop.f32.mrb[0].mxu0
        %v1553 = vadd.f32 0.0, %v1552
        %v1554 = vpop.f32.mrb[0].mxu0
        %v1555 = vpop.f32.mrb[0].mxu0
        %v1556 = vpop.f32.mrb[0].mxu0
        %1557 = vdwg.mxu0
        %v1558 = vadd.f32 %v1360, %v1516
        %v1559 = vadd.f32 %v1361, %v1519
        %v1560 = vadd.f32 %v1362, %v1526
        %v1561 = vadd.f32 %v1363, %v1531
        %v1562 = vadd.f32 %v1364, %v1538
        %v1563 = vadd.f32 %v1365, %v1541
        %v1564 = vadd.f32 %v1366, %v1548
        %v1565 = vadd.f32 %v1367, %v1553
        %v1566 = vld [vmem:[%s2] sm:$0x1]
        %v1567 = vlaneseq
        %v1568 = vshrl.u32 %v1567, 7
        %v1569 = vsub.s32 0, %v1568
        %v1570 = vrot.slane %v1566, %v1569
        %v1571 = vmul.f32 %v1558, %v1570
        %v1572 = vmul.f32 %v1559, %v1570
        %v1573 = vmul.f32 %v1560, %v1570
        %v1574 = vmul.f32 %v1561, %v1570
        %v1575 = vmul.f32 %v1562, %v1570
        %v1576 = vmul.f32 %v1563, %v1570
        %v1577 = vmul.f32 %v1564, %v1570
        %v1578 = vmul.f32 %v1565, %v1570
        %v1579 = vld [vmem:[%s3] sm:$0x1]
        %v1580 = vlaneseq
        %v1581 = vshrl.u32 %v1580, 7
        %v1582 = vsub.s32 0, %v1581
        %v1583 = vrot.slane %v1579, %v1582
        %v1584 = vadd.f32 %v1571, %v1583
        %v1585 = vadd.f32 %v1572, %v1583
        %v1586 = vadd.f32 %v1573, %v1583
        %v1587 = vadd.f32 %v1574, %v1583
        %v1588 = vadd.f32 %v1575, %v1583
        %v1589 = vadd.f32 %v1576, %v1583
        %v1590 = vadd.f32 %v1577, %v1583
        %v1591 = vadd.f32 %v1578, %v1583
        %v1592 = vmax.f32 %v1584, 0.0
        %v1593 = vmax.f32 %v1585, 0.0
        %v1594 = vmax.f32 %v1586, 0.0
        %v1595 = vmax.f32 %v1587, 0.0
        %v1596 = vmax.f32 %v1588, 0.0
        %v1597 = vmax.f32 %v1589, 0.0
        %v1598 = vmax.f32 %v1590, 0.0
        %v1599 = vmax.f32 %v1591, 0.0
        %vm1602 = vcmask 1043456
        %v1603 = vrot.slane %v1592, 4
        %v1604 = vrot.slane %v1593, 4
        %v1605 = vsel %vm1602, %v1603, %v1604
        %v1609 = vsel %vm1602, 0.0, %v1603
        %v1610 = vsel %vm1602, %v1604, 0.0
        %v1611 = vpack.c.bf16 %v1605, %v1609
        %v1612 = vpack.c.bf16 %v1610, %v1610
        %v1615 = vunpack.c.l.b16 %v1611
        %v1616 = vunpack.c.h.b16 %v1611
        %v1617 = vunpack.c.l.b16 %v1612
        %v1618 = vpack.c.b16 %v1615, %v1615
        %v1619 = vpack.c.b16 %v1616, %v1616
        %v1620 = vpack.c.b16 %v1617, %v1617
        %1624 = vst [vmem:[#allocation2 + $0x30] sm:$0xf] %v1618
        %1625 = vst [vmem:[#allocation2 + $0x34] sm:$0xf] %v1619
        %1626 = vst [vmem:[#allocation2 + $0x38] sm:$0xf] %v1620
        %v1629 = vrot.slane %v1594, 4
        %v1630 = vrot.slane %v1595, 4
        %v1631 = vsel %vm1602, %v1629, %v1630
        %v1635 = vsel %vm1602, 0.0, %v1629
        %v1636 = vsel %vm1602, %v1630, 0.0
        %v1637 = vpack.c.bf16 %v1631, %v1635
        %v1638 = vpack.c.bf16 %v1636, %v1636
        %v1641 = vunpack.c.l.b16 %v1637
        %v1642 = vunpack.c.h.b16 %v1637
        %v1643 = vunpack.c.l.b16 %v1638
        %v1644 = vpack.c.b16 %v1641, %v1641
        %v1645 = vpack.c.b16 %v1642, %v1642
        %v1646 = vpack.c.b16 %v1643, %v1643
        %1650 = vst [vmem:[#allocation2 + $0x3c] sm:$0xf] %v1644
        %1651 = vst [vmem:[#allocation2 + $0x40] sm:$0xf] %v1645
        %1652 = vst [vmem:[#allocation2 + $0x44] sm:$0xf] %v1646
        %v1655 = vrot.slane %v1596, 4
        %v1656 = vrot.slane %v1597, 4
        %v1657 = vsel %vm1602, %v1655, %v1656
        %v1661 = vsel %vm1602, 0.0, %v1655
        %v1662 = vsel %vm1602, %v1656, 0.0
        %v1663 = vpack.c.bf16 %v1657, %v1661
        %v1664 = vpack.c.bf16 %v1662, %v1662
        %v1667 = vunpack.c.l.b16 %v1663
        %v1668 = vunpack.c.h.b16 %v1663
        %v1669 = vunpack.c.l.b16 %v1664
        %v1670 = vpack.c.b16 %v1667, %v1667
        %v1671 = vpack.c.b16 %v1668, %v1668
        %v1672 = vpack.c.b16 %v1669, %v1669
        %1676 = vst [vmem:[#allocation2 + $0x48] sm:$0xf] %v1670
        %1677 = vst [vmem:[#allocation2 + $0x4c] sm:$0xf] %v1671
        %1678 = vst [vmem:[#allocation2 + $0x50] sm:$0xf] %v1672
        %v1681 = vrot.slane %v1598, 4
        %v1682 = vrot.slane %v1599, 4
        %v1683 = vsel %vm1602, %v1681, %v1682
        %v1687 = vsel %vm1602, 0.0, %v1681
        %v1688 = vsel %vm1602, %v1682, 0.0
        %v1689 = vpack.c.bf16 %v1683, %v1687
        %v1690 = vpack.c.bf16 %v1688, %v1688
        %v1693 = vunpack.c.l.b16 %v1689
        %v1694 = vunpack.c.h.b16 %v1689
        %v1695 = vunpack.c.l.b16 %v1690
        %v1696 = vpack.c.b16 %v1693, %v1693
        %v1697 = vpack.c.b16 %v1694, %v1694
        %v1698 = vpack.c.b16 %v1695, %v1695
        %1702 = vst [vmem:[#allocation2 + $0x54] sm:$0xf] %v1696
        %1703 = vst [vmem:[#allocation2 + $0x58] sm:$0xf] %v1697
        %1704 = vst [vmem:[#allocation2 + $0x5c] sm:$0xf] %v1698
        %v1705 = vld [vmem:[%s195 + $0x30] sm:$0xf]
        %v1706 = vld [vmem:[%s195 + $0x34] sm:$0xf]
        %v1707 = vld [vmem:[%s195 + $0x38] sm:$0xf]
        %v1708 = vld [vmem:[%s195 + $0x3c] sm:$0xf]
        %v1709 = vld [vmem:[%s195 + $0x40] sm:$0xf]
        %v1710 = vld [vmem:[%s195 + $0x44] sm:$0xf]
        %v1711 = vld [vmem:[%s195 + $0x48] sm:$0xf]
        %v1712 = vld [vmem:[%s195 + $0x4c] sm:$0xf]
        %v1713 = vld [vmem:[%s195 + $0x50] sm:$0xf]
        %v1714 = vld [vmem:[%s195 + $0x54] sm:$0xf]
        %v1715 = vld [vmem:[%s195 + $0x58] sm:$0xf]
        %v1716 = vld [vmem:[%s195 + $0x5c] sm:$0xf]
        %v1717 = vld [vmem:[%s1] sm:$0xf]
        %v1718 = vld [vmem:[%s1 + $0x4] sm:$0xf]
        %v1719 = vld [vmem:[%s1 + $0x8] sm:$0xf]
        %v1720 = vld [vmem:[%s1 + $0xc] sm:$0xf]
        %v1721 = vld [vmem:[%s1 + $0x10] sm:$0xf]
        %v1722 = vld [vmem:[%s1 + $0x14] sm:$0xf]
        %v1723 = vld [vmem:[%s1 + $0x18] sm:$0xf]
        %v1724 = vld [vmem:[%s1 + $0x1c] sm:$0xf]
        %v1725 = vld [vmem:[%s1 + $0x20] sm:$0xf]
        %v1726 = vld [vmem:[%s1 + $0x24] sm:$0xf]
        %v1727 = vld [vmem:[%s1 + $0x28] sm:$0xf]
        %v1728 = vld [vmem:[%s1 + $0x2c] sm:$0xf]
        %v1729 = vld [vmem:[%s1 + $0x30] sm:$0xf]
        %v1730 = vld [vmem:[%s1 + $0x34] sm:$0xf]
        %v1731 = vld [vmem:[%s1 + $0x38] sm:$0xf]
        %v1732 = vld [vmem:[%s1 + $0x3c] sm:$0xf]
        %v1733 = vld [vmem:[%s195 + $0x60] sm:$0xf]
        %v1734 = vld [vmem:[%s195 + $0x64] sm:$0xf]
        %v1735 = vld [vmem:[%s195 + $0x68] sm:$0xf]
        %v1736 = vld [vmem:[%s255] sm:$0xf]
        %v1737 = vld [vmem:[%s255 + $0x4] sm:$0xf]
        %v1738 = vld [vmem:[%s255 + $0x8] sm:$0xf]
        %v1739 = vld [vmem:[%s255 + $0xc] sm:$0xf]
        %v1740 = vld [vmem:[%s255 + $0x10] sm:$0xf]
        %v1741 = vld [vmem:[%s255 + $0x14] sm:$0xf]
        %v1742 = vld [vmem:[%s255 + $0x18] sm:$0xf]
        %v1743 = vld [vmem:[%s255 + $0x1c] sm:$0xf]
        %v1744 = vld [vmem:[%s255 + $0x20] sm:$0xf]
        %v1745 = vld [vmem:[%s255 + $0x24] sm:$0xf]
        %v1746 = vld [vmem:[%s255 + $0x28] sm:$0xf]
        %v1747 = vld [vmem:[%s255 + $0x2c] sm:$0xf]
        %v1748 = vld [vmem:[%s255 + $0x30] sm:$0xf]
        %v1749 = vld [vmem:[%s255 + $0x34] sm:$0xf]
        %v1750 = vld [vmem:[%s255 + $0x38] sm:$0xf]
        %v1751 = vld [vmem:[%s255 + $0x3c] sm:$0xf]
        %v1764 = vunpack.c.l.b16 %v1708
        %v1765 = vunpack.c.l.b16 %v1709
        %v1766 = vunpack.c.l.b16 %v1710
        %v1767 = vunpack.c.l.b16 %v1711
        %v1768 = vunpack.c.l.b16 %v1712
        %v1769 = vunpack.c.l.b16 %v1713
        %v1770 = vunpack.c.l.b16 %v1714
        %v1771 = vunpack.c.l.b16 %v1715
        %v1772 = vunpack.c.l.b16 %v1716
        %v1773 = vunpack.c.l.b16 %v1733
        %v1774 = vunpack.c.l.b16 %v1734
        %v1775 = vunpack.c.l.b16 %v1735
        %v1776 = vpack.c.b16 %v1765, %v1764
        %v1777 = vpack.c.b16 %v1767, %v1766
        %v1778 = vpack.c.b16 %v1769, %v1768
        %v1779 = vpack.c.b16 %v1771, %v1770
        %v1780 = vpack.c.b16 %v1773, %v1772
        %v1781 = vpack.c.b16 %v1775, %v1774
        %v1804 = vunpack.c.l.b16 %v1736
        %v1805 = vunpack.c.l.b16 %v1737
        %v1806 = vunpack.c.l.b16 %v1738
        %v1807 = vunpack.c.l.b16 %v1739
        %v1808 = vunpack.c.l.b16 %v1740
        %v1809 = vunpack.c.l.b16 %v1741
        %v1810 = vunpack.c.l.b16 %v1742
        %v1811 = vunpack.c.l.b16 %v1743
        %v1812 = vunpack.c.l.b16 %v1744
        %v1813 = vunpack.c.l.b16 %v1745
        %v1814 = vunpack.c.l.b16 %v1746
        %v1815 = vunpack.c.l.b16 %v1747
        %v1816 = vunpack.c.l.b16 %v1748
        %v1817 = vunpack.c.l.b16 %v1749
        %v1818 = vunpack.c.l.b16 %v1750
        %v1819 = vunpack.c.l.b16 %v1751
        %v1820 = vpack.c.b16 %v1805, %v1804
        %v1821 = vpack.c.b16 %v1807, %v1806
        %v1822 = vpack.c.b16 %v1809, %v1808
        %v1823 = vpack.c.b16 %v1811, %v1810
        %v1824 = vpack.c.b16 %v1813, %v1812
        %v1825 = vpack.c.b16 %v1815, %v1814
        %v1826 = vpack.c.b16 %v1817, %v1816
        %v1827 = vpack.c.b16 %v1819, %v1818
        %1836 = vmatprep.subr.bf16.mxu0 0
        %1837 = vmatpush1.bf16.msra.mxu0 %v1820
        %1838 = vmatprep.subr.bf16.mxu0 0
        %1839 = vmatpush1.bf16.msra.mxu0 %v1821
        %1840 = vmatprep.subr.bf16.mxu0 0
        %1841 = vmatpush1.bf16.msra.mxu0 %v1822
        %1842 = vmatprep.subr.bf16.mxu0 0
        %1843 = vmatpush1.bf16.msra.mxu0 %v1823
        %1844 = vmatprep.subr.bf16.mxu0 0
        %1845 = vmatpush1.bf16.msra.mxu0 %v1824
        %1846 = vmatprep.subr.bf16.mxu0 0
        %1847 = vmatpush1.bf16.msra.mxu0 %v1825
        %1848 = vmatprep.subr.bf16.mxu0 0
        %1849 = vmatpush1.bf16.msra.mxu0 %v1826
        %1850 = vmatprep.subr.bf16.mxu0 0
        %1851 = vmatpush1.bf16.msra.mxu0 %v1827
        %1852 = vmatprep.subr.bf16.mxu0 0
        %1853 = vmatpush1.bf16.msra.mxu0 0
        %1854 = vmatprep.subr.bf16.mxu0 0
        %1855 = vmatpush1.bf16.msra.mxu0 0
        %1856 = vmatprep.subr.bf16.mxu0 0
        %1857 = vmatpush1.bf16.msra.mxu0 0
        %1858 = vmatprep.subr.bf16.mxu0 0
        %1859 = vmatpush1.bf16.msra.mxu0 0
        %1860 = vmatprep.subr.bf16.mxu0 0
        %1861 = vmatpush1.bf16.msra.mxu0 0
        %1862 = vmatprep.subr.bf16.mxu0 0
        %1863 = vmatpush1.bf16.msra.mxu0 0
        %1864 = vmatprep.subr.bf16.mxu0 0
        %1865 = vmatpush1.bf16.msra.mxu0 0
        %1866 = vmatprep.subr.bf16.mxu0 0
        %1867 = vmatpush1.bf16.msra.mxu0 0
        %1868 = vmatprep.mubr.bf16.mxu0 0
        %1869 = vmatmul.mubr.bf16.gmra.mrb[0].mxu0 %v1776
        %v1870 = vpop.f32.mrb[0].mxu0
        %v1871 = vadd.f32 0.0, %v1870
        %v1872 = vpop.f32.mrb[0].mxu0
        %v1873 = vpop.f32.mrb[0].mxu0
        %v1874 = vadd.f32 0.0, %v1873
        %v1875 = vpop.f32.mrb[0].mxu0
        %1876 = vmatprep.mubr.bf16.mxu0 0
        %1877 = vmatmul.mubr.bf16.gmra.mrb[0].mxu0 %v1777
        %v1878 = vpop.f32.mrb[0].mxu0
        %v1879 = vpop.f32.mrb[0].mxu0
        %v1880 = vpop.f32.mrb[0].mxu0
        %v1881 = vadd.f32 0.0, %v1880
        %v1882 = vpop.f32.mrb[0].mxu0
        %1883 = vmatprep.mubr.bf16.mxu0 0
        %1884 = vmatmul.mubr.bf16.gmra.mrb[0].mxu0 %v1778
        %v1885 = vpop.f32.mrb[0].mxu0
        %v1886 = vadd.f32 0.0, %v1885
        %v1887 = vpop.f32.mrb[0].mxu0
        %v1888 = vpop.f32.mrb[0].mxu0
        %v1889 = vpop.f32.mrb[0].mxu0
        %1890 = vmatprep.mubr.bf16.mxu0 0
        %1891 = vmatmul.mubr.bf16.gmra.mrb[0].mxu0 %v1779
        %v1892 = vpop.f32.mrb[0].mxu0
        %v1893 = vadd.f32 0.0, %v1892
        %v1894 = vpop.f32.mrb[0].mxu0
        %v1895 = vpop.f32.mrb[0].mxu0
        %v1896 = vadd.f32 0.0, %v1895
        %v1897 = vpop.f32.mrb[0].mxu0
        %1898 = vmatprep.mubr.bf16.mxu0 0
        %1899 = vmatmul.mubr.bf16.gmra.mrb[0].mxu0 %v1780
        %v1900 = vpop.f32.mrb[0].mxu0
        %v1901 = vpop.f32.mrb[0].mxu0
        %v1902 = vpop.f32.mrb[0].mxu0
        %v1903 = vadd.f32 0.0, %v1902
        %v1904 = vpop.f32.mrb[0].mxu0
        %1905 = vmatprep.mubr.bf16.mxu0 0
        %1906 = vmatmul.mubr.bf16.gmra.mrb[0].mxu0 %v1781
        %v1907 = vpop.f32.mrb[0].mxu0
        %v1908 = vadd.f32 0.0, %v1907
        %v1909 = vpop.f32.mrb[0].mxu0
        %v1910 = vpop.f32.mrb[0].mxu0
        %v1911 = vpop.f32.mrb[0].mxu0
        %1912 = vdwg.mxu0
        %v1916 = vunpack.c.l.b16 %v1705
        %v1917 = vunpack.c.l.b16 %v1706
        %v1918 = vunpack.c.l.b16 %v1707
        %v1919 = vpack.c.b16 %v1917, %v1916
        %v1920 = vpack.c.b16 %v1764, %v1918
        %v1921 = vpack.c.b16 %v1766, %v1765
        %v1922 = vpack.c.b16 %v1768, %v1767
        %v1923 = vpack.c.b16 %v1770, %v1769
        %v1924 = vpack.c.b16 %v1772, %v1771
        %v1947 = vunpack.c.l.b16 %v1717
        %v1948 = vunpack.c.l.b16 %v1718
        %v1949 = vunpack.c.l.b16 %v1719
        %v1950 = vunpack.c.l.b16 %v1720
        %v1951 = vunpack.c.l.b16 %v1721
        %v1952 = vunpack.c.l.b16 %v1722
        %v1953 = vunpack.c.l.b16 %v1723
        %v1954 = vunpack.c.l.b16 %v1724
        %v1955 = vunpack.c.l.b16 %v1725
        %v1956 = vunpack.c.l.b16 %v1726
        %v1957 = vunpack.c.l.b16 %v1727
        %v1958 = vunpack.c.l.b16 %v1728
        %v1959 = vunpack.c.l.b16 %v1729
        %v1960 = vunpack.c.l.b16 %v1730
        %v1961 = vunpack.c.l.b16 %v1731
        %v1962 = vunpack.c.l.b16 %v1732
        %v1963 = vpack.c.b16 %v1948, %v1947
        %v1964 = vpack.c.b16 %v1950, %v1949
        %v1965 = vpack.c.b16 %v1952, %v1951
        %v1966 = vpack.c.b16 %v1954, %v1953
        %v1967 = vpack.c.b16 %v1956, %v1955
        %v1968 = vpack.c.b16 %v1958, %v1957
        %v1969 = vpack.c.b16 %v1960, %v1959
        %v1970 = vpack.c.b16 %v1962, %v1961
        %1979 = vmatprep.subr.bf16.mxu0 0
        %1980 = vmatpush1.bf16.msra.mxu0 %v1963
        %1981 = vmatprep.subr.bf16.mxu0 0
        %1982 = vmatpush1.bf16.msra.mxu0 %v1964
        %1983 = vmatprep.subr.bf16.mxu0 0
        %1984 = vmatpush1.bf16.msra.mxu0 %v1965
        %1985 = vmatprep.subr.bf16.mxu0 0
        %1986 = vmatpush1.bf16.msra.mxu0 %v1966
        %1987 = vmatprep.subr.bf16.mxu0 0
        %1988 = vmatpush1.bf16.msra.mxu0 %v1967
        %1989 = vmatprep.subr.bf16.mxu0 0
        %1990 = vmatpush1.bf16.msra.mxu0 %v1968
        %1991 = vmatprep.subr.bf16.mxu0 0
        %1992 = vmatpush1.bf16.msra.mxu0 %v1969
        %1993 = vmatprep.subr.bf16.mxu0 0
        %1994 = vmatpush1.bf16.msra.mxu0 %v1970
        %1995 = vmatprep.subr.bf16.mxu0 0
        %1996 = vmatpush1.bf16.msra.mxu0 0
        %1997 = vmatprep.subr.bf16.mxu0 0
        %1998 = vmatpush1.bf16.msra.mxu0 0
        %1999 = vmatprep.subr.bf16.mxu0 0
        %2000 = vmatpush1.bf16.msra.mxu0 0
        %2001 = vmatprep.subr.bf16.mxu0 0
        %2002 = vmatpush1.bf16.msra.mxu0 0
        %2003 = vmatprep.subr.bf16.mxu0 0
        %2004 = vmatpush1.bf16.msra.mxu0 0
        %2005 = vmatprep.subr.bf16.mxu0 0
        %2006 = vmatpush1.bf16.msra.mxu0 0
        %2007 = vmatprep.subr.bf16.mxu0 0
        %2008 = vmatpush1.bf16.msra.mxu0 0
        %2009 = vmatprep.subr.bf16.mxu0 0
        %2010 = vmatpush1.bf16.msra.mxu0 0
        %2011 = vmatprep.mubr.bf16.mxu0 0
        %2012 = vmatmul.mubr.bf16.gmra.mrb[0].mxu0 %v1919
        %v2013 = vpop.f32.mrb[0].mxu0
        %v2014 = vadd.f32 %v1871, %v2013
        %v2015 = vpop.f32.mrb[0].mxu0
        %v2016 = vpop.f32.mrb[0].mxu0
        %v2017 = vadd.f32 %v1874, %v2016
        %v2018 = vpop.f32.mrb[0].mxu0
        %2019 = vmatprep.mubr.bf16.mxu0 0
        %2020 = vmatmul.mubr.bf16.gmra.mrb[0].mxu0 %v1920
        %v2021 = vpop.f32.mrb[0].mxu0
        %v2022 = vpop.f32.mrb[0].mxu0
        %v2023 = vpop.f32.mrb[0].mxu0
        %v2024 = vadd.f32 %v1881, %v2023
        %v2025 = vpop.f32.mrb[0].mxu0
        %2026 = vmatprep.mubr.bf16.mxu0 0
        %2027 = vmatmul.mubr.bf16.gmra.mrb[0].mxu0 %v1921
        %v2028 = vpop.f32.mrb[0].mxu0
        %v2029 = vadd.f32 %v1886, %v2028
        %v2030 = vpop.f32.mrb[0].mxu0
        %v2031 = vpop.f32.mrb[0].mxu0
        %v2032 = vpop.f32.mrb[0].mxu0
        %2033 = vmatprep.mubr.bf16.mxu0 0
        %2034 = vmatmul.mubr.bf16.gmra.mrb[0].mxu0 %v1922
        %v2035 = vpop.f32.mrb[0].mxu0
        %v2036 = vadd.f32 %v1893, %v2035
        %v2037 = vpop.f32.mrb[0].mxu0
        %v2038 = vpop.f32.mrb[0].mxu0
        %v2039 = vadd.f32 %v1896, %v2038
        %v2040 = vpop.f32.mrb[0].mxu0
        %2041 = vmatprep.mubr.bf16.mxu0 0
        %2042 = vmatmul.mubr.bf16.gmra.mrb[0].mxu0 %v1923
        %v2043 = vpop.f32.mrb[0].mxu0
        %v2044 = vpop.f32.mrb[0].mxu0
        %v2045 = vpop.f32.mrb[0].mxu0
        %v2046 = vadd.f32 %v1903, %v2045
        %v2047 = vpop.f32.mrb[0].mxu0
        %2048 = vmatprep.mubr.bf16.mxu0 0
        %2049 = vmatmul.mubr.bf16.gmra.mrb[0].mxu0 %v1924
        %v2050 = vpop.f32.mrb[0].mxu0
        %v2051 = vadd.f32 %v1908, %v2050
        %v2052 = vpop.f32.mrb[0].mxu0
        %v2053 = vpop.f32.mrb[0].mxu0
        %v2054 = vpop.f32.mrb[0].mxu0
        %2055 = vdwg.mxu0
        %v2056 = vld [vmem:[%s195 + $0x48] sm:$0xf]
        %v2057 = vld [vmem:[%s195 + $0x4c] sm:$0xf]
        %v2058 = vld [vmem:[%s195 + $0x50] sm:$0xf]
        %v2059 = vld [vmem:[%s195 + $0x54] sm:$0xf]
        %v2060 = vld [vmem:[%s195 + $0x58] sm:$0xf]
        %v2061 = vld [vmem:[%s195 + $0x5c] sm:$0xf]
        %v2062 = vld [vmem:[%s195 + $0x60] sm:$0xf]
        %v2063 = vld [vmem:[%s195 + $0x64] sm:$0xf]
        %v2064 = vld [vmem:[%s195 + $0x68] sm:$0xf]
        %v2065 = vld [vmem:[%s195 + $0x6c] sm:$0xf]
        %v2066 = vld [vmem:[%s195 + $0x70] sm:$0xf]
        %v2067 = vld [vmem:[%s195 + $0x74] sm:$0xf]
        %v2068 = vld [vmem:[%s588] sm:$0xf]
        %v2069 = vld [vmem:[%s588 + $0x4] sm:$0xf]
        %v2070 = vld [vmem:[%s588 + $0x8] sm:$0xf]
        %v2071 = vld [vmem:[%s588 + $0xc] sm:$0xf]
        %v2072 = vld [vmem:[%s588 + $0x10] sm:$0xf]
        %v2073 = vld [vmem:[%s588 + $0x14] sm:$0xf]
        %v2074 = vld [vmem:[%s588 + $0x18] sm:$0xf]
        %v2075 = vld [vmem:[%s588 + $0x1c] sm:$0xf]
        %v2076 = vld [vmem:[%s588 + $0x20] sm:$0xf]
        %v2077 = vld [vmem:[%s588 + $0x24] sm:$0xf]
        %v2078 = vld [vmem:[%s588 + $0x28] sm:$0xf]
        %v2079 = vld [vmem:[%s588 + $0x2c] sm:$0xf]
        %v2080 = vld [vmem:[%s588 + $0x30] sm:$0xf]
        %v2081 = vld [vmem:[%s588 + $0x34] sm:$0xf]
        %v2082 = vld [vmem:[%s588 + $0x38] sm:$0xf]
        %v2083 = vld [vmem:[%s588 + $0x3c] sm:$0xf]
        %v2096 = vunpack.c.l.b16 %v2056
        %v2097 = vunpack.c.l.b16 %v2057
        %v2098 = vunpack.c.l.b16 %v2058
        %v2099 = vunpack.c.l.b16 %v2059
        %v2100 = vunpack.c.l.b16 %v2060
        %v2101 = vunpack.c.l.b16 %v2061
        %v2102 = vunpack.c.l.b16 %v2062
        %v2103 = vunpack.c.l.b16 %v2063
        %v2104 = vunpack.c.l.b16 %v2064
        %v2105 = vunpack.c.l.b16 %v2065
        %v2106 = vunpack.c.l.b16 %v2066
        %v2107 = vunpack.c.l.b16 %v2067
        %v2108 = vpack.c.b16 %v2097, %v2096
        %v2109 = vpack.c.b16 %v2099, %v2098
        %v2110 = vpack.c.b16 %v2101, %v2100
        %v2111 = vpack.c.b16 %v2103, %v2102
        %v2112 = vpack.c.b16 %v2105, %v2104
        %v2113 = vpack.c.b16 %v2107, %v2106
        %v2136 = vunpack.c.l.b16 %v2068
        %v2137 = vunpack.c.l.b16 %v2069
        %v2138 = vunpack.c.l.b16 %v2070
        %v2139 = vunpack.c.l.b16 %v2071
        %v2140 = vunpack.c.l.b16 %v2072
        %v2141 = vunpack.c.l.b16 %v2073
        %v2142 = vunpack.c.l.b16 %v2074
        %v2143 = vunpack.c.l.b16 %v2075
        %v2144 = vunpack.c.l.b16 %v2076
        %v2145 = vunpack.c.l.b16 %v2077
        %v2146 = vunpack.c.l.b16 %v2078
        %v2147 = vunpack.c.l.b16 %v2079
        %v2148 = vunpack.c.l.b16 %v2080
        %v2149 = vunpack.c.l.b16 %v2081
        %v2150 = vunpack.c.l.b16 %v2082
        %v2151 = vunpack.c.l.b16 %v2083
        %v2152 = vpack.c.b16 %v2137, %v2136
        %v2153 = vpack.c.b16 %v2139, %v2138
        %v2154 = vpack.c.b16 %v2141, %v2140
        %v2155 = vpack.c.b16 %v2143, %v2142
        %v2156 = vpack.c.b16 %v2145, %v2144
        %v2157 = vpack.c.b16 %v2147, %v2146
        %v2158 = vpack.c.b16 %v2149, %v2148
        %v2159 = vpack.c.b16 %v2151, %v2150
        %2168 = vmatprep.subr.bf16.mxu0 0
        %2169 = vmatpush1.bf16.msra.mxu0 %v2152
        %2170 = vmatprep.subr.bf16.mxu0 0
        %2171 = vmatpush1.bf16.msra.mxu0 %v2153
        %2172 = vmatprep.subr.bf16.mxu0 0
        %2173 = vmatpush1.bf16.msra.mxu0 %v2154
        %2174 = vmatprep.subr.bf16.mxu0 0
        %2175 = vmatpush1.bf16.msra.mxu0 %v2155
        %2176 = vmatprep.subr.bf16.mxu0 0
        %2177 = vmatpush1.bf16.msra.mxu0 %v2156
        %2178 = vmatprep.subr.bf16.mxu0 0
        %2179 = vmatpush1.bf16.msra.mxu0 %v2157
        %2180 = vmatprep.subr.bf16.mxu0 0
        %2181 = vmatpush1.bf16.msra.mxu0 %v2158
        %2182 = vmatprep.subr.bf16.mxu0 0
        %2183 = vmatpush1.bf16.msra.mxu0 %v2159
        %2184 = vmatprep.subr.bf16.mxu0 0
        %2185 = vmatpush1.bf16.msra.mxu0 0
        %2186 = vmatprep.subr.bf16.mxu0 0
        %2187 = vmatpush1.bf16.msra.mxu0 0
        %2188 = vmatprep.subr.bf16.mxu0 0
        %2189 = vmatpush1.bf16.msra.mxu0 0
        %2190 = vmatprep.subr.bf16.mxu0 0
        %2191 = vmatpush1.bf16.msra.mxu0 0
        %2192 = vmatprep.subr.bf16.mxu0 0
        %2193 = vmatpush1.bf16.msra.mxu0 0
        %2194 = vmatprep.subr.bf16.mxu0 0
        %2195 = vmatpush1.bf16.msra.mxu0 0
        %2196 = vmatprep.subr.bf16.mxu0 0
        %2197 = vmatpush1.bf16.msra.mxu0 0
        %2198 = vmatprep.subr.bf16.mxu0 0
        %2199 = vmatpush1.bf16.msra.mxu0 0
        %2200 = vmatprep.mubr.bf16.mxu0 0
        %2201 = vmatmul.mubr.bf16.gmra.mrb[0].mxu0 %v2108
        %v2202 = vpop.f32.mrb[0].mxu0
        %v2203 = vadd.f32 0.0, %v2202
        %v2204 = vpop.f32.mrb[0].mxu0
        %v2205 = vpop.f32.mrb[0].mxu0
        %v2206 = vadd.f32 0.0, %v2205
        %v2207 = vpop.f32.mrb[0].mxu0
        %2208 = vmatprep.mubr.bf16.mxu0 0
        %2209 = vmatmul.mubr.bf16.gmra.mrb[0].mxu0 %v2109
        %v2210 = vpop.f32.mrb[0].mxu0
        %v2211 = vpop.f32.mrb[0].mxu0
        %v2212 = vpop.f32.mrb[0].mxu0
        %v2213 = vadd.f32 0.0, %v2212
        %v2214 = vpop.f32.mrb[0].mxu0
        %2215 = vmatprep.mubr.bf16.mxu0 0
        %2216 = vmatmul.mubr.bf16.gmra.mrb[0].mxu0 %v2110
        %v2217 = vpop.f32.mrb[0].mxu0
        %v2218 = vadd.f32 0.0, %v2217
        %v2219 = vpop.f32.mrb[0].mxu0
        %v2220 = vpop.f32.mrb[0].mxu0
        %v2221 = vpop.f32.mrb[0].mxu0
        %2222 = vmatprep.mubr.bf16.mxu0 0
        %2223 = vmatmul.mubr.bf16.gmra.mrb[0].mxu0 %v2111
        %v2224 = vpop.f32.mrb[0].mxu0
        %v2225 = vadd.f32 0.0, %v2224
        %v2226 = vpop.f32.mrb[0].mxu0
        %v2227 = vpop.f32.mrb[0].mxu0
        %v2228 = vadd.f32 0.0, %v2227
        %v2229 = vpop.f32.mrb[0].mxu0
        %2230 = vmatprep.mubr.bf16.mxu0 0
        %2231 = vmatmul.mubr.bf16.gmra.mrb[0].mxu0 %v2112
        %v2232 = vpop.f32.mrb[0].mxu0
        %v2233 = vpop.f32.mrb[0].mxu0
        %v2234 = vpop.f32.mrb[0].mxu0
        %v2235 = vadd.f32 0.0, %v2234
        %v2236 = vpop.f32.mrb[0].mxu0
        %2237 = vmatprep.mubr.bf16.mxu0 0
        %2238 = vmatmul.mubr.bf16.gmra.mrb[0].mxu0 %v2113
        %v2239 = vpop.f32.mrb[0].mxu0
        %v2240 = vadd.f32 0.0, %v2239
        %v2241 = vpop.f32.mrb[0].mxu0
        %v2242 = vpop.f32.mrb[0].mxu0
        %v2243 = vpop.f32.mrb[0].mxu0
        %2244 = vdwg.mxu0
        %v2245 = vadd.f32 %v2014, %v2203
        %v2246 = vadd.f32 %v2017, %v2206
        %v2247 = vadd.f32 %v2024, %v2213
        %v2248 = vadd.f32 %v2029, %v2218
        %v2249 = vadd.f32 %v2036, %v2225
        %v2250 = vadd.f32 %v2039, %v2228
        %v2251 = vadd.f32 %v2046, %v2235
        %v2252 = vadd.f32 %v2051, %v2240
        %v2253 = vld [vmem:[%s195 + $0x54] sm:$0xf]
        %v2254 = vld [vmem:[%s195 + $0x58] sm:$0xf]
        %v2255 = vld [vmem:[%s195 + $0x5c] sm:$0xf]
        %v2256 = vld [vmem:[%s195 + $0x60] sm:$0xf]
        %v2257 = vld [vmem:[%s195 + $0x64] sm:$0xf]
        %v2258 = vld [vmem:[%s195 + $0x68] sm:$0xf]
        %v2259 = vld [vmem:[%s195 + $0x6c] sm:$0xf]
        %v2260 = vld [vmem:[%s195 + $0x70] sm:$0xf]
        %v2261 = vld [vmem:[%s195 + $0x74] sm:$0xf]
        %v2262 = vld [vmem:[%s195 + $0x78] sm:$0xf]
        %v2263 = vld [vmem:[%s195 + $0x7c] sm:$0xf]
        %v2264 = vld [vmem:[%s195 + $0x80] sm:$0xf]
        %v2265 = vld [vmem:[%s786] sm:$0xf]
        %v2266 = vld [vmem:[%s786 + $0x4] sm:$0xf]
        %v2267 = vld [vmem:[%s786 + $0x8] sm:$0xf]
        %v2268 = vld [vmem:[%s786 + $0xc] sm:$0xf]
        %v2269 = vld [vmem:[%s786 + $0x10] sm:$0xf]
        %v2270 = vld [vmem:[%s786 + $0x14] sm:$0xf]
        %v2271 = vld [vmem:[%s786 + $0x18] sm:$0xf]
        %v2272 = vld [vmem:[%s786 + $0x1c] sm:$0xf]
        %v2273 = vld [vmem:[%s786 + $0x20] sm:$0xf]
        %v2274 = vld [vmem:[%s786 + $0x24] sm:$0xf]
        %v2275 = vld [vmem:[%s786 + $0x28] sm:$0xf]
        %v2276 = vld [vmem:[%s786 + $0x2c] sm:$0xf]
        %v2277 = vld [vmem:[%s786 + $0x30] sm:$0xf]
        %v2278 = vld [vmem:[%s786 + $0x34] sm:$0xf]
        %v2279 = vld [vmem:[%s786 + $0x38] sm:$0xf]
        %v2280 = vld [vmem:[%s786 + $0x3c] sm:$0xf]
        %v2293 = vunpack.c.l.b16 %v2253
        %v2294 = vunpack.c.l.b16 %v2254
        %v2295 = vunpack.c.l.b16 %v2255
        %v2296 = vunpack.c.l.b16 %v2256
        %v2297 = vunpack.c.l.b16 %v2257
        %v2298 = vunpack.c.l.b16 %v2258
        %v2299 = vunpack.c.l.b16 %v2259
        %v2300 = vunpack.c.l.b16 %v2260
        %v2301 = vunpack.c.l.b16 %v2261
        %v2302 = vunpack.c.l.b16 %v2262
        %v2303 = vunpack.c.l.b16 %v2263
        %v2304 = vunpack.c.l.b16 %v2264
        %v2305 = vpack.c.b16 %v2294, %v2293
        %v2306 = vpack.c.b16 %v2296, %v2295
        %v2307 = vpack.c.b16 %v2298, %v2297
        %v2308 = vpack.c.b16 %v2300, %v2299
        %v2309 = vpack.c.b16 %v2302, %v2301
        %v2310 = vpack.c.b16 %v2304, %v2303
        %v2333 = vunpack.c.l.b16 %v2265
        %v2334 = vunpack.c.l.b16 %v2266
        %v2335 = vunpack.c.l.b16 %v2267
        %v2336 = vunpack.c.l.b16 %v2268
        %v2337 = vunpack.c.l.b16 %v2269
        %v2338 = vunpack.c.l.b16 %v2270
        %v2339 = vunpack.c.l.b16 %v2271
        %v2340 = vunpack.c.l.b16 %v2272
        %v2341 = vunpack.c.l.b16 %v2273
        %v2342 = vunpack.c.l.b16 %v2274
        %v2343 = vunpack.c.l.b16 %v2275
        %v2344 = vunpack.c.l.b16 %v2276
        %v2345 = vunpack.c.l.b16 %v2277
        %v2346 = vunpack.c.l.b16 %v2278
        %v2347 = vunpack.c.l.b16 %v2279
        %v2348 = vunpack.c.l.b16 %v2280
        %v2349 = vpack.c.b16 %v2334, %v2333
        %v2350 = vpack.c.b16 %v2336, %v2335
        %v2351 = vpack.c.b16 %v2338, %v2337
        %v2352 = vpack.c.b16 %v2340, %v2339
        %v2353 = vpack.c.b16 %v2342, %v2341
        %v2354 = vpack.c.b16 %v2344, %v2343
        %v2355 = vpack.c.b16 %v2346, %v2345
        %v2356 = vpack.c.b16 %v2348, %v2347
        %2365 = vmatprep.subr.bf16.mxu0 0
        %2366 = vmatpush1.bf16.msra.mxu0 %v2349
        %2367 = vmatprep.subr.bf16.mxu0 0
        %2368 = vmatpush1.bf16.msra.mxu0 %v2350
        %2369 = vmatprep.subr.bf16.mxu0 0
        %2370 = vmatpush1.bf16.msra.mxu0 %v2351
        %2371 = vmatprep.subr.bf16.mxu0 0
        %2372 = vmatpush1.bf16.msra.mxu0 %v2352
        %2373 = vmatprep.subr.bf16.mxu0 0
        %2374 = vmatpush1.bf16.msra.mxu0 %v2353
        %2375 = vmatprep.subr.bf16.mxu0 0
        %2376 = vmatpush1.bf16.msra.mxu0 %v2354
        %2377 = vmatprep.subr.bf16.mxu0 0
        %2378 = vmatpush1.bf16.msra.mxu0 %v2355
        %2379 = vmatprep.subr.bf16.mxu0 0
        %2380 = vmatpush1.bf16.msra.mxu0 %v2356
        %2381 = vmatprep.subr.bf16.mxu0 0
        %2382 = vmatpush1.bf16.msra.mxu0 0
        %2383 = vmatprep.subr.bf16.mxu0 0
        %2384 = vmatpush1.bf16.msra.mxu0 0
        %2385 = vmatprep.subr.bf16.mxu0 0
        %2386 = vmatpush1.bf16.msra.mxu0 0
        %2387 = vmatprep.subr.bf16.mxu0 0
        %2388 = vmatpush1.bf16.msra.mxu0 0
        %2389 = vmatprep.subr.bf16.mxu0 0
        %2390 = vmatpush1.bf16.msra.mxu0 0
        %2391 = vmatprep.subr.bf16.mxu0 0
        %2392 = vmatpush1.bf16.msra.mxu0 0
        %2393 = vmatprep.subr.bf16.mxu0 0
        %2394 = vmatpush1.bf16.msra.mxu0 0
        %2395 = vmatprep.subr.bf16.mxu0 0
        %2396 = vmatpush1.bf16.msra.mxu0 0
        %2397 = vmatprep.mubr.bf16.mxu0 0
        %2398 = vmatmul.mubr.bf16.gmra.mrb[0].mxu0 %v2305
        %v2399 = vpop.f32.mrb[0].mxu0
        %v2400 = vadd.f32 0.0, %v2399
        %v2401 = vpop.f32.mrb[0].mxu0
        %v2402 = vpop.f32.mrb[0].mxu0
        %v2403 = vadd.f32 0.0, %v2402
        %v2404 = vpop.f32.mrb[0].mxu0
        %2405 = vmatprep.mubr.bf16.mxu0 0
        %2406 = vmatmul.mubr.bf16.gmra.mrb[0].mxu0 %v2306
        %v2407 = vpop.f32.mrb[0].mxu0
        %v2408 = vpop.f32.mrb[0].mxu0
        %v2409 = vpop.f32.mrb[0].mxu0
        %v2410 = vadd.f32 0.0, %v2409
        %v2411 = vpop.f32.mrb[0].mxu0
        %2412 = vmatprep.mubr.bf16.mxu0 0
        %2413 = vmatmul.mubr.bf16.gmra.mrb[0].mxu0 %v2307
        %v2414 = vpop.f32.mrb[0].mxu0
        %v2415 = vadd.f32 0.0, %v2414
        %v2416 = vpop.f32.mrb[0].mxu0
        %v2417 = vpop.f32.mrb[0].mxu0
        %v2418 = vpop.f32.mrb[0].mxu0
        %2419 = vmatprep.mubr.bf16.mxu0 0
        %2420 = vmatmul.mubr.bf16.gmra.mrb[0].mxu0 %v2308
        %v2421 = vpop.f32.mrb[0].mxu0
        %v2422 = vadd.f32 0.0, %v2421
        %v2423 = vpop.f32.mrb[0].mxu0
        %v2424 = vpop.f32.mrb[0].mxu0
        %v2425 = vadd.f32 0.0, %v2424
        %v2426 = vpop.f32.mrb[0].mxu0
        %2427 = vmatprep.mubr.bf16.mxu0 0
        %2428 = vmatmul.mubr.bf16.gmra.mrb[0].mxu0 %v2309
        %v2429 = vpop.f32.mrb[0].mxu0
        %v2430 = vpop.f32.mrb[0].mxu0
        %v2431 = vpop.f32.mrb[0].mxu0
        %v2432 = vadd.f32 0.0, %v2431
        %v2433 = vpop.f32.mrb[0].mxu0
        %2434 = vmatprep.mubr.bf16.mxu0 0
        %2435 = vmatmul.mubr.bf16.gmra.mrb[0].mxu0 %v2310
        %v2436 = vpop.f32.mrb[0].mxu0
        %v2437 = vadd.f32 0.0, %v2436
        %v2438 = vpop.f32.mrb[0].mxu0
        %v2439 = vpop.f32.mrb[0].mxu0
        %v2440 = vpop.f32.mrb[0].mxu0
        %2441 = vdwg.mxu0
        %v2442 = vadd.f32 %v2245, %v2400
        %v2443 = vadd.f32 %v2246, %v2403
        %v2444 = vadd.f32 %v2247, %v2410
        %v2445 = vadd.f32 %v2248, %v2415
        %v2446 = vadd.f32 %v2249, %v2422
        %v2447 = vadd.f32 %v2250, %v2425
        %v2448 = vadd.f32 %v2251, %v2432
        %v2449 = vadd.f32 %v2252, %v2437
        %v2450 = vld [vmem:[%s195 + $0x60] sm:$0xf]
        %v2451 = vld [vmem:[%s195 + $0x64] sm:$0xf]
        %v2452 = vld [vmem:[%s195 + $0x68] sm:$0xf]
        %v2453 = vld [vmem:[%s195 + $0x6c] sm:$0xf]
        %v2454 = vld [vmem:[%s195 + $0x70] sm:$0xf]
        %v2455 = vld [vmem:[%s195 + $0x74] sm:$0xf]
        %v2456 = vld [vmem:[%s195 + $0x78] sm:$0xf]
        %v2457 = vld [vmem:[%s195 + $0x7c] sm:$0xf]
        %v2458 = vld [vmem:[%s195 + $0x80] sm:$0xf]
        %v2459 = vld [vmem:[%s195 + $0x84] sm:$0xf]
        %v2460 = vld [vmem:[%s195 + $0x88] sm:$0xf]
        %v2461 = vld [vmem:[%s195 + $0x8c] sm:$0xf]
        %v2462 = vld [vmem:[%s984] sm:$0xf]
        %v2463 = vld [vmem:[%s984 + $0x4] sm:$0xf]
        %v2464 = vld [vmem:[%s984 + $0x8] sm:$0xf]
        %v2465 = vld [vmem:[%s984 + $0xc] sm:$0xf]
        %v2466 = vld [vmem:[%s984 + $0x10] sm:$0xf]
        %v2467 = vld [vmem:[%s984 + $0x14] sm:$0xf]
        %v2468 = vld [vmem:[%s984 + $0x18] sm:$0xf]
        %v2469 = vld [vmem:[%s984 + $0x1c] sm:$0xf]
        %v2470 = vld [vmem:[%s984 + $0x20] sm:$0xf]
        %v2471 = vld [vmem:[%s984 + $0x24] sm:$0xf]
        %v2472 = vld [vmem:[%s984 + $0x28] sm:$0xf]
        %v2473 = vld [vmem:[%s984 + $0x2c] sm:$0xf]
        %v2474 = vld [vmem:[%s984 + $0x30] sm:$0xf]
        %v2475 = vld [vmem:[%s984 + $0x34] sm:$0xf]
        %v2476 = vld [vmem:[%s984 + $0x38] sm:$0xf]
        %v2477 = vld [vmem:[%s984 + $0x3c] sm:$0xf]
        %v2490 = vunpack.c.l.b16 %v2450
        %v2491 = vunpack.c.l.b16 %v2451
        %v2492 = vunpack.c.l.b16 %v2452
        %v2493 = vunpack.c.l.b16 %v2453
        %v2494 = vunpack.c.l.b16 %v2454
        %v2495 = vunpack.c.l.b16 %v2455
        %v2496 = vunpack.c.l.b16 %v2456
        %v2497 = vunpack.c.l.b16 %v2457
        %v2498 = vunpack.c.l.b16 %v2458
        %v2499 = vunpack.c.l.b16 %v2459
        %v2500 = vunpack.c.l.b16 %v2460
        %v2501 = vunpack.c.l.b16 %v2461
        %v2502 = vpack.c.b16 %v2491, %v2490
        %v2503 = vpack.c.b16 %v2493, %v2492
        %v2504 = vpack.c.b16 %v2495, %v2494
        %v2505 = vpack.c.b16 %v2497, %v2496
        %v2506 = vpack.c.b16 %v2499, %v2498
        %v2507 = vpack.c.b16 %v2501, %v2500
        %v2530 = vunpack.c.l.b16 %v2462
        %v2531 = vunpack.c.l.b16 %v2463
        %v2532 = vunpack.c.l.b16 %v2464
        %v2533 = vunpack.c.l.b16 %v2465
        %v2534 = vunpack.c.l.b16 %v2466
        %v2535 = vunpack.c.l.b16 %v2467
        %v2536 = vunpack.c.l.b16 %v2468
        %v2537 = vunpack.c.l.b16 %v2469
        %v2538 = vunpack.c.l.b16 %v2470
        %v2539 = vunpack.c.l.b16 %v2471
        %v2540 = vunpack.c.l.b16 %v2472
        %v2541 = vunpack.c.l.b16 %v2473
        %v2542 = vunpack.c.l.b16 %v2474
        %v2543 = vunpack.c.l.b16 %v2475
        %v2544 = vunpack.c.l.b16 %v2476
        %v2545 = vunpack.c.l.b16 %v2477
        %v2546 = vpack.c.b16 %v2531, %v2530
        %v2547 = vpack.c.b16 %v2533, %v2532
        %v2548 = vpack.c.b16 %v2535, %v2534
        %v2549 = vpack.c.b16 %v2537, %v2536
        %v2550 = vpack.c.b16 %v2539, %v2538
        %v2551 = vpack.c.b16 %v2541, %v2540
        %v2552 = vpack.c.b16 %v2543, %v2542
        %v2553 = vpack.c.b16 %v2545, %v2544
        %2562 = vmatprep.subr.bf16.mxu0 0
        %2563 = vmatpush1.bf16.msra.mxu0 %v2546
        %2564 = vmatprep.subr.bf16.mxu0 0
        %2565 = vmatpush1.bf16.msra.mxu0 %v2547
        %2566 = vmatprep.subr.bf16.mxu0 0
        %2567 = vmatpush1.bf16.msra.mxu0 %v2548
        %2568 = vmatprep.subr.bf16.mxu0 0
        %2569 = vmatpush1.bf16.msra.mxu0 %v2549
        %2570 = vmatprep.subr.bf16.mxu0 0
        %2571 = vmatpush1.bf16.msra.mxu0 %v2550
        %2572 = vmatprep.subr.bf16.mxu0 0
        %2573 = vmatpush1.bf16.msra.mxu0 %v2551
        %2574 = vmatprep.subr.bf16.mxu0 0
        %2575 = vmatpush1.bf16.msra.mxu0 %v2552
        %2576 = vmatprep.subr.bf16.mxu0 0
        %2577 = vmatpush1.bf16.msra.mxu0 %v2553
        %2578 = vmatprep.subr.bf16.mxu0 0
        %2579 = vmatpush1.bf16.msra.mxu0 0
        %2580 = vmatprep.subr.bf16.mxu0 0
        %2581 = vmatpush1.bf16.msra.mxu0 0
        %2582 = vmatprep.subr.bf16.mxu0 0
        %2583 = vmatpush1.bf16.msra.mxu0 0
        %2584 = vmatprep.subr.bf16.mxu0 0
        %2585 = vmatpush1.bf16.msra.mxu0 0
        %2586 = vmatprep.subr.bf16.mxu0 0
        %2587 = vmatpush1.bf16.msra.mxu0 0
        %2588 = vmatprep.subr.bf16.mxu0 0
        %2589 = vmatpush1.bf16.msra.mxu0 0
        %2590 = vmatprep.subr.bf16.mxu0 0
        %2591 = vmatpush1.bf16.msra.mxu0 0
        %2592 = vmatprep.subr.bf16.mxu0 0
        %2593 = vmatpush1.bf16.msra.mxu0 0
        %2594 = vmatprep.mubr.bf16.mxu0 0
        %2595 = vmatmul.mubr.bf16.gmra.mrb[0].mxu0 %v2502
        %v2596 = vpop.f32.mrb[0].mxu0
        %v2597 = vadd.f32 0.0, %v2596
        %v2598 = vpop.f32.mrb[0].mxu0
        %v2599 = vpop.f32.mrb[0].mxu0
        %v2600 = vadd.f32 0.0, %v2599
        %v2601 = vpop.f32.mrb[0].mxu0
        %2602 = vmatprep.mubr.bf16.mxu0 0
        %2603 = vmatmul.mubr.bf16.gmra.mrb[0].mxu0 %v2503
        %v2604 = vpop.f32.mrb[0].mxu0
        %v2605 = vpop.f32.mrb[0].mxu0
        %v2606 = vpop.f32.mrb[0].mxu0
        %v2607 = vadd.f32 0.0, %v2606
        %v2608 = vpop.f32.mrb[0].mxu0
        %2609 = vmatprep.mubr.bf16.mxu0 0
        %2610 = vmatmul.mubr.bf16.gmra.mrb[0].mxu0 %v2504
        %v2611 = vpop.f32.mrb[0].mxu0
        %v2612 = vadd.f32 0.0, %v2611
        %v2613 = vpop.f32.mrb[0].mxu0
        %v2614 = vpop.f32.mrb[0].mxu0
        %v2615 = vpop.f32.mrb[0].mxu0
        %2616 = vmatprep.mubr.bf16.mxu0 0
        %2617 = vmatmul.mubr.bf16.gmra.mrb[0].mxu0 %v2505
        %v2618 = vpop.f32.mrb[0].mxu0
        %v2619 = vadd.f32 0.0, %v2618
        %v2620 = vpop.f32.mrb[0].mxu0
        %v2621 = vpop.f32.mrb[0].mxu0
        %v2622 = vadd.f32 0.0, %v2621
        %v2623 = vpop.f32.mrb[0].mxu0
        %2624 = vmatprep.mubr.bf16.mxu0 0
        %2625 = vmatmul.mubr.bf16.gmra.mrb[0].mxu0 %v2506
        %v2626 = vpop.f32.mrb[0].mxu0
        %v2627 = vpop.f32.mrb[0].mxu0
        %v2628 = vpop.f32.mrb[0].mxu0
        %v2629 = vadd.f32 0.0, %v2628
        %v2630 = vpop.f32.mrb[0].mxu0
        %2631 = vmatprep.mubr.bf16.mxu0 0
        %2632 = vmatmul.mubr.bf16.gmra.mrb[0].mxu0 %v2507
        %v2633 = vpop.f32.mrb[0].mxu0
        %v2634 = vadd.f32 0.0, %v2633
        %v2635 = vpop.f32.mrb[0].mxu0
        %v2636 = vpop.f32.mrb[0].mxu0
        %v2637 = vpop.f32.mrb[0].mxu0
        %2638 = vdwg.mxu0
        %v2639 = vadd.f32 %v2442, %v2597
        %v2640 = vadd.f32 %v2443, %v2600
        %v2641 = vadd.f32 %v2444, %v2607
        %v2642 = vadd.f32 %v2445, %v2612
        %v2643 = vadd.f32 %v2446, %v2619
        %v2644 = vadd.f32 %v2447, %v2622
        %v2645 = vadd.f32 %v2448, %v2629
        %v2646 = vadd.f32 %v2449, %v2634
        %v2647 = vld [vmem:[%s195 + $0x6c] sm:$0xf]
        %v2648 = vld [vmem:[%s195 + $0x70] sm:$0xf]
        %v2649 = vld [vmem:[%s195 + $0x74] sm:$0xf]
        %v2650 = vld [vmem:[%s195 + $0x78] sm:$0xf]
        %v2651 = vld [vmem:[%s195 + $0x7c] sm:$0xf]
        %v2652 = vld [vmem:[%s195 + $0x80] sm:$0xf]
        %v2653 = vld [vmem:[%s195 + $0x84] sm:$0xf]
        %v2654 = vld [vmem:[%s195 + $0x88] sm:$0xf]
        %v2655 = vld [vmem:[%s195 + $0x8c] sm:$0xf]
        %v2656 = vld [vmem:[%s195 + $0x90] sm:$0xf]
        %v2657 = vld [vmem:[%s195 + $0x94] sm:$0xf]
        %v2658 = vld [vmem:[%s195 + $0x98] sm:$0xf]
        %v2659 = vld [vmem:[%s1182] sm:$0xf]
        %v2660 = vld [vmem:[%s1182 + $0x4] sm:$0xf]
        %v2661 = vld [vmem:[%s1182 + $0x8] sm:$0xf]
        %v2662 = vld [vmem:[%s1182 + $0xc] sm:$0xf]
        %v2663 = vld [vmem:[%s1182 + $0x10] sm:$0xf]
        %v2664 = vld [vmem:[%s1182 + $0x14] sm:$0xf]
        %v2665 = vld [vmem:[%s1182 + $0x18] sm:$0xf]
        %v2666 = vld [vmem:[%s1182 + $0x1c] sm:$0xf]
        %v2667 = vld [vmem:[%s1182 + $0x20] sm:$0xf]
        %v2668 = vld [vmem:[%s1182 + $0x24] sm:$0xf]
        %v2669 = vld [vmem:[%s1182 + $0x28] sm:$0xf]
        %v2670 = vld [vmem:[%s1182 + $0x2c] sm:$0xf]
        %v2671 = vld [vmem:[%s1182 + $0x30] sm:$0xf]
        %v2672 = vld [vmem:[%s1182 + $0x34] sm:$0xf]
        %v2673 = vld [vmem:[%s1182 + $0x38] sm:$0xf]
        %v2674 = vld [vmem:[%s1182 + $0x3c] sm:$0xf]
        %v2687 = vunpack.c.l.b16 %v2647
        %v2688 = vunpack.c.l.b16 %v2648
        %v2689 = vunpack.c.l.b16 %v2649
        %v2690 = vunpack.c.l.b16 %v2650
        %v2691 = vunpack.c.l.b16 %v2651
        %v2692 = vunpack.c.l.b16 %v2652
        %v2693 = vunpack.c.l.b16 %v2653
        %v2694 = vunpack.c.l.b16 %v2654
        %v2695 = vunpack.c.l.b16 %v2655
        %v2696 = vunpack.c.l.b16 %v2656
        %v2697 = vunpack.c.l.b16 %v2657
        %v2698 = vunpack.c.l.b16 %v2658
        %v2699 = vpack.c.b16 %v2688, %v2687
        %v2700 = vpack.c.b16 %v2690, %v2689
        %v2701 = vpack.c.b16 %v2692, %v2691
        %v2702 = vpack.c.b16 %v2694, %v2693
        %v2703 = vpack.c.b16 %v2696, %v2695
        %v2704 = vpack.c.b16 %v2698, %v2697
        %v2727 = vunpack.c.l.b16 %v2659
        %v2728 = vunpack.c.l.b16 %v2660
        %v2729 = vunpack.c.l.b16 %v2661
        %v2730 = vunpack.c.l.b16 %v2662
        %v2731 = vunpack.c.l.b16 %v2663
        %v2732 = vunpack.c.l.b16 %v2664
        %v2733 = vunpack.c.l.b16 %v2665
        %v2734 = vunpack.c.l.b16 %v2666
        %v2735 = vunpack.c.l.b16 %v2667
        %v2736 = vunpack.c.l.b16 %v2668
        %v2737 = vunpack.c.l.b16 %v2669
        %v2738 = vunpack.c.l.b16 %v2670
        %v2739 = vunpack.c.l.b16 %v2671
        %v2740 = vunpack.c.l.b16 %v2672
        %v2741 = vunpack.c.l.b16 %v2673
        %v2742 = vunpack.c.l.b16 %v2674
        %v2743 = vpack.c.b16 %v2728, %v2727
        %v2744 = vpack.c.b16 %v2730, %v2729
        %v2745 = vpack.c.b16 %v2732, %v2731
        %v2746 = vpack.c.b16 %v2734, %v2733
        %v2747 = vpack.c.b16 %v2736, %v2735
        %v2748 = vpack.c.b16 %v2738, %v2737
        %v2749 = vpack.c.b16 %v2740, %v2739
        %v2750 = vpack.c.b16 %v2742, %v2741
        %2759 = vmatprep.subr.bf16.mxu0 0
        %2760 = vmatpush1.bf16.msra.mxu0 %v2743
        %2761 = vmatprep.subr.bf16.mxu0 0
        %2762 = vmatpush1.bf16.msra.mxu0 %v2744
        %2763 = vmatprep.subr.bf16.mxu0 0
        %2764 = vmatpush1.bf16.msra.mxu0 %v2745
        %2765 = vmatprep.subr.bf16.mxu0 0
        %2766 = vmatpush1.bf16.msra.mxu0 %v2746
        %2767 = vmatprep.subr.bf16.mxu0 0
        %2768 = vmatpush1.bf16.msra.mxu0 %v2747
        %2769 = vmatprep.subr.bf16.mxu0 0
        %2770 = vmatpush1.bf16.msra.mxu0 %v2748
        %2771 = vmatprep.subr.bf16.mxu0 0
        %2772 = vmatpush1.bf16.msra.mxu0 %v2749
        %2773 = vmatprep.subr.bf16.mxu0 0
        %2774 = vmatpush1.bf16.msra.mxu0 %v2750
        %2775 = vmatprep.subr.bf16.mxu0 0
        %2776 = vmatpush1.bf16.msra.mxu0 0
        %2777 = vmatprep.subr.bf16.mxu0 0
        %2778 = vmatpush1.bf16.msra.mxu0 0
        %2779 = vmatprep.subr.bf16.mxu0 0
        %2780 = vmatpush1.bf16.msra.mxu0 0
        %2781 = vmatprep.subr.bf16.mxu0 0
        %2782 = vmatpush1.bf16.msra.mxu0 0
        %2783 = vmatprep.subr.bf16.mxu0 0
        %2784 = vmatpush1.bf16.msra.mxu0 0
        %2785 = vmatprep.subr.bf16.mxu0 0
        %2786 = vmatpush1.bf16.msra.mxu0 0
        %2787 = vmatprep.subr.bf16.mxu0 0
        %2788 = vmatpush1.bf16.msra.mxu0 0
        %2789 = vmatprep.subr.bf16.mxu0 0
        %2790 = vmatpush1.bf16.msra.mxu0 0
        %2791 = vmatprep.mubr.bf16.mxu0 0
        %2792 = vmatmul.mubr.bf16.gmra.mrb[0].mxu0 %v2699
        %v2793 = vpop.f32.mrb[0].mxu0
        %v2794 = vadd.f32 0.0, %v2793
        %v2795 = vpop.f32.mrb[0].mxu0
        %v2796 = vpop.f32.mrb[0].mxu0
        %v2797 = vadd.f32 0.0, %v2796
        %v2798 = vpop.f32.mrb[0].mxu0
        %2799 = vmatprep.mubr.bf16.mxu0 0
        %2800 = vmatmul.mubr.bf16.gmra.mrb[0].mxu0 %v2700
        %v2801 = vpop.f32.mrb[0].mxu0
        %v2802 = vpop.f32.mrb[0].mxu0
        %v2803 = vpop.f32.mrb[0].mxu0
        %v2804 = vadd.f32 0.0, %v2803
        %v2805 = vpop.f32.mrb[0].mxu0
        %2806 = vmatprep.mubr.bf16.mxu0 0
        %2807 = vmatmul.mubr.bf16.gmra.mrb[0].mxu0 %v2701
        %v2808 = vpop.f32.mrb[0].mxu0
        %v2809 = vadd.f32 0.0, %v2808
        %v2810 = vpop.f32.mrb[0].mxu0
        %v2811 = vpop.f32.mrb[0].mxu0
        %v2812 = vpop.f32.mrb[0].mxu0
        %2813 = vmatprep.mubr.bf16.mxu0 0
        %2814 = vmatmul.mubr.bf16.gmra.mrb[0].mxu0 %v2702
        %v2815 = vpop.f32.mrb[0].mxu0
        %v2816 = vadd.f32 0.0, %v2815
        %v2817 = vpop.f32.mrb[0].mxu0
        %v2818 = vpop.f32.mrb[0].mxu0
        %v2819 = vadd.f32 0.0, %v2818
        %v2820 = vpop.f32.mrb[0].mxu0
        %2821 = vmatprep.mubr.bf16.mxu0 0
        %2822 = vmatmul.mubr.bf16.gmra.mrb[0].mxu0 %v2703
        %v2823 = vpop.f32.mrb[0].mxu0
        %v2824 = vpop.f32.mrb[0].mxu0
        %v2825 = vpop.f32.mrb[0].mxu0
        %v2826 = vadd.f32 0.0, %v2825
        %v2827 = vpop.f32.mrb[0].mxu0
        %2828 = vmatprep.mubr.bf16.mxu0 0
        %2829 = vmatmul.mubr.bf16.gmra.mrb[0].mxu0 %v2704
        %v2830 = vpop.f32.mrb[0].mxu0
        %v2831 = vadd.f32 0.0, %v2830
        %v2832 = vpop.f32.mrb[0].mxu0
        %v2833 = vpop.f32.mrb[0].mxu0
        %v2834 = vpop.f32.mrb[0].mxu0
        %2835 = vdwg.mxu0
        %v2836 = vadd.f32 %v2639, %v2794
        %v2837 = vadd.f32 %v2640, %v2797
        %v2838 = vadd.f32 %v2641, %v2804
        %v2839 = vadd.f32 %v2642, %v2809
        %v2840 = vadd.f32 %v2643, %v2816
        %v2841 = vadd.f32 %v2644, %v2819
        %v2842 = vadd.f32 %v2645, %v2826
        %v2843 = vadd.f32 %v2646, %v2831
        %v2844 = vld [vmem:[%s195 + $0x78] sm:$0xf]
        %v2845 = vld [vmem:[%s195 + $0x7c] sm:$0xf]
        %v2846 = vld [vmem:[%s195 + $0x80] sm:$0xf]
        %v2847 = vld [vmem:[%s195 + $0x84] sm:$0xf]
        %v2848 = vld [vmem:[%s195 + $0x88] sm:$0xf]
        %v2849 = vld [vmem:[%s195 + $0x8c] sm:$0xf]
        %v2850 = vld [vmem:[%s195 + $0x90] sm:$0xf]
        %v2851 = vld [vmem:[%s195 + $0x94] sm:$0xf]
        %v2852 = vld [vmem:[%s195 + $0x98] sm:$0xf]
        %v2853 = vld [vmem:[%s195 + $0x9c] sm:$0xf]
        %v2854 = vld [vmem:[%s195 + $0xa0] sm:$0xf]
        %v2855 = vld [vmem:[%s195 + $0xa4] sm:$0xf]
        %v2856 = vld [vmem:[%s1380] sm:$0xf]
        %v2857 = vld [vmem:[%s1380 + $0x4] sm:$0xf]
        %v2858 = vld [vmem:[%s1380 + $0x8] sm:$0xf]
        %v2859 = vld [vmem:[%s1380 + $0xc] sm:$0xf]
        %v2860 = vld [vmem:[%s1380 + $0x10] sm:$0xf]
        %v2861 = vld [vmem:[%s1380 + $0x14] sm:$0xf]
        %v2862 = vld [vmem:[%s1380 + $0x18] sm:$0xf]
        %v2863 = vld [vmem:[%s1380 + $0x1c] sm:$0xf]
        %v2864 = vld [vmem:[%s1380 + $0x20] sm:$0xf]
        %v2865 = vld [vmem:[%s1380 + $0x24] sm:$0xf]
        %v2866 = vld [vmem:[%s1380 + $0x28] sm:$0xf]
        %v2867 = vld [vmem:[%s1380 + $0x2c] sm:$0xf]
        %v2868 = vld [vmem:[%s1380 + $0x30] sm:$0xf]
        %v2869 = vld [vmem:[%s1380 + $0x34] sm:$0xf]
        %v2870 = vld [vmem:[%s1380 + $0x38] sm:$0xf]
        %v2871 = vld [vmem:[%s1380 + $0x3c] sm:$0xf]
        %v2884 = vunpack.c.l.b16 %v2844
        %v2885 = vunpack.c.l.b16 %v2845
        %v2886 = vunpack.c.l.b16 %v2846
        %v2887 = vunpack.c.l.b16 %v2847
        %v2888 = vunpack.c.l.b16 %v2848
        %v2889 = vunpack.c.l.b16 %v2849
        %v2890 = vunpack.c.l.b16 %v2850
        %v2891 = vunpack.c.l.b16 %v2851
        %v2892 = vunpack.c.l.b16 %v2852
        %v2893 = vunpack.c.l.b16 %v2853
        %v2894 = vunpack.c.l.b16 %v2854
        %v2895 = vunpack.c.l.b16 %v2855
        %v2896 = vpack.c.b16 %v2885, %v2884
        %v2897 = vpack.c.b16 %v2887, %v2886
        %v2898 = vpack.c.b16 %v2889, %v2888
        %v2899 = vpack.c.b16 %v2891, %v2890
        %v2900 = vpack.c.b16 %v2893, %v2892
        %v2901 = vpack.c.b16 %v2895, %v2894
        %v2924 = vunpack.c.l.b16 %v2856
        %v2925 = vunpack.c.l.b16 %v2857
        %v2926 = vunpack.c.l.b16 %v2858
        %v2927 = vunpack.c.l.b16 %v2859
        %v2928 = vunpack.c.l.b16 %v2860
        %v2929 = vunpack.c.l.b16 %v2861
        %v2930 = vunpack.c.l.b16 %v2862
        %v2931 = vunpack.c.l.b16 %v2863
        %v2932 = vunpack.c.l.b16 %v2864
        %v2933 = vunpack.c.l.b16 %v2865
        %v2934 = vunpack.c.l.b16 %v2866
        %v2935 = vunpack.c.l.b16 %v2867
        %v2936 = vunpack.c.l.b16 %v2868
        %v2937 = vunpack.c.l.b16 %v2869
        %v2938 = vunpack.c.l.b16 %v2870
        %v2939 = vunpack.c.l.b16 %v2871
        %v2940 = vpack.c.b16 %v2925, %v2924
        %v2941 = vpack.c.b16 %v2927, %v2926
        %v2942 = vpack.c.b16 %v2929, %v2928
        %v2943 = vpack.c.b16 %v2931, %v2930
        %v2944 = vpack.c.b16 %v2933, %v2932
        %v2945 = vpack.c.b16 %v2935, %v2934
        %v2946 = vpack.c.b16 %v2937, %v2936
        %v2947 = vpack.c.b16 %v2939, %v2938
        %2956 = vmatprep.subr.bf16.mxu0 0
        %2957 = vmatpush1.bf16.msra.mxu0 %v2940
        %2958 = vmatprep.subr.bf16.mxu0 0
        %2959 = vmatpush1.bf16.msra.mxu0 %v2941
        %2960 = vmatprep.subr.bf16.mxu0 0
        %2961 = vmatpush1.bf16.msra.mxu0 %v2942
        %2962 = vmatprep.subr.bf16.mxu0 0
        %2963 = vmatpush1.bf16.msra.mxu0 %v2943
        %2964 = vmatprep.subr.bf16.mxu0 0
        %2965 = vmatpush1.bf16.msra.mxu0 %v2944
        %2966 = vmatprep.subr.bf16.mxu0 0
        %2967 = vmatpush1.bf16.msra.mxu0 %v2945
        %2968 = vmatprep.subr.bf16.mxu0 0
        %2969 = vmatpush1.bf16.msra.mxu0 %v2946
        %2970 = vmatprep.subr.bf16.mxu0 0
        %2971 = vmatpush1.bf16.msra.mxu0 %v2947
        %2972 = vmatprep.subr.bf16.mxu0 0
        %2973 = vmatpush1.bf16.msra.mxu0 0
        %2974 = vmatprep.subr.bf16.mxu0 0
        %2975 = vmatpush1.bf16.msra.mxu0 0
        %2976 = vmatprep.subr.bf16.mxu0 0
        %2977 = vmatpush1.bf16.msra.mxu0 0
        %2978 = vmatprep.subr.bf16.mxu0 0
        %2979 = vmatpush1.bf16.msra.mxu0 0
        %2980 = vmatprep.subr.bf16.mxu0 0
        %2981 = vmatpush1.bf16.msra.mxu0 0
        %2982 = vmatprep.subr.bf16.mxu0 0
        %2983 = vmatpush1.bf16.msra.mxu0 0
        %2984 = vmatprep.subr.bf16.mxu0 0
        %2985 = vmatpush1.bf16.msra.mxu0 0
        %2986 = vmatprep.subr.bf16.mxu0 0
        %2987 = vmatpush1.bf16.msra.mxu0 0
        %2988 = vmatprep.mubr.bf16.mxu0 0
        %2989 = vmatmul.mubr.bf16.gmra.mrb[0].mxu0 %v2896
        %v2990 = vpop.f32.mrb[0].mxu0
        %v2991 = vadd.f32 0.0, %v2990
        %v2992 = vpop.f32.mrb[0].mxu0
        %v2993 = vpop.f32.mrb[0].mxu0
        %v2994 = vadd.f32 0.0, %v2993
        %v2995 = vpop.f32.mrb[0].mxu0
        %2996 = vmatprep.mubr.bf16.mxu0 0
        %2997 = vmatmul.mubr.bf16.gmra.mrb[0].mxu0 %v2897
        %v2998 = vpop.f32.mrb[0].mxu0
        %v2999 = vpop.f32.mrb[0].mxu0
        %v3000 = vpop.f32.mrb[0].mxu0
        %v3001 = vadd.f32 0.0, %v3000
        %v3002 = vpop.f32.mrb[0].mxu0
        %3003 = vmatprep.mubr.bf16.mxu0 0
        %3004 = vmatmul.mubr.bf16.gmra.mrb[0].mxu0 %v2898
        %v3005 = vpop.f32.mrb[0].mxu0
        %v3006 = vadd.f32 0.0, %v3005
        %v3007 = vpop.f32.mrb[0].mxu0
        %v3008 = vpop.f32.mrb[0].mxu0
        %v3009 = vpop.f32.mrb[0].mxu0
        %3010 = vmatprep.mubr.bf16.mxu0 0
        %3011 = vmatmul.mubr.bf16.gmra.mrb[0].mxu0 %v2899
        %v3012 = vpop.f32.mrb[0].mxu0
        %v3013 = vadd.f32 0.0, %v3012
        %v3014 = vpop.f32.mrb[0].mxu0
        %v3015 = vpop.f32.mrb[0].mxu0
        %v3016 = vadd.f32 0.0, %v3015
        %v3017 = vpop.f32.mrb[0].mxu0
        %3018 = vmatprep.mubr.bf16.mxu0 0
        %3019 = vmatmul.mubr.bf16.gmra.mrb[0].mxu0 %v2900
        %v3020 = vpop.f32.mrb[0].mxu0
        %v3021 = vpop.f32.mrb[0].mxu0
        %v3022 = vpop.f32.mrb[0].mxu0
        %v3023 = vadd.f32 0.0, %v3022
        %v3024 = vpop.f32.mrb[0].mxu0
        %3025 = vmatprep.mubr.bf16.mxu0 0
        %3026 = vmatmul.mubr.bf16.gmra.mrb[0].mxu0 %v2901
        %v3027 = vpop.f32.mrb[0].mxu0
        %v3028 = vadd.f32 0.0, %v3027
        %v3029 = vpop.f32.mrb[0].mxu0
        %v3030 = vpop.f32.mrb[0].mxu0
        %v3031 = vpop.f32.mrb[0].mxu0
        %3032 = vdwg.mxu0
        %v3033 = vadd.f32 %v2836, %v2991
        %v3034 = vadd.f32 %v2837, %v2994
        %v3035 = vadd.f32 %v2838, %v3001
        %v3036 = vadd.f32 %v2839, %v3006
        %v3037 = vadd.f32 %v2840, %v3013
        %v3038 = vadd.f32 %v2841, %v3016
        %v3039 = vadd.f32 %v2842, %v3023
        %v3040 = vadd.f32 %v2843, %v3028
        %v3041 = vld [vmem:[%s2] sm:$0x1]
        %v3042 = vlaneseq
        %v3043 = vshrl.u32 %v3042, 7
        %v3044 = vsub.s32 0, %v3043
        %v3045 = vrot.slane %v3041, %v3044
        %v3046 = vmul.f32 %v3033, %v3045
        %v3047 = vmul.f32 %v3034, %v3045
        %v3048 = vmul.f32 %v3035, %v3045
        %v3049 = vmul.f32 %v3036, %v3045
        %v3050 = vmul.f32 %v3037, %v3045
        %v3051 = vmul.f32 %v3038, %v3045
        %v3052 = vmul.f32 %v3039, %v3045
        %v3053 = vmul.f32 %v3040, %v3045
        %v3054 = vld [vmem:[%s3] sm:$0x1]
        %v3055 = vlaneseq
        %v3056 = vshrl.u32 %v3055, 7
        %v3057 = vsub.s32 0, %v3056
        %v3058 = vrot.slane %v3054, %v3057
        %v3059 = vadd.f32 %v3046, %v3058
        %v3060 = vadd.f32 %v3047, %v3058
        %v3061 = vadd.f32 %v3048, %v3058
        %v3062 = vadd.f32 %v3049, %v3058
        %v3063 = vadd.f32 %v3050, %v3058
        %v3064 = vadd.f32 %v3051, %v3058
        %v3065 = vadd.f32 %v3052, %v3058
        %v3066 = vadd.f32 %v3053, %v3058
        %v3067 = vmax.f32 %v3059, 0.0
        %v3068 = vmax.f32 %v3060, 0.0
        %v3069 = vmax.f32 %v3061, 0.0
        %v3070 = vmax.f32 %v3062, 0.0
        %v3071 = vmax.f32 %v3063, 0.0
        %v3072 = vmax.f32 %v3064, 0.0
        %v3073 = vmax.f32 %v3065, 0.0
        %v3074 = vmax.f32 %v3066, 0.0
        %v3077 = vrot.slane %v3067, 4
        %v3078 = vrot.slane %v3068, 4
        %v3079 = vsel %vm1602, %v3077, %v3078
        %v3083 = vsel %vm1602, 0.0, %v3077
        %v3084 = vsel %vm1602, %v3078, 0.0
        %v3085 = vpack.c.bf16 %v3079, %v3083
        %v3086 = vpack.c.bf16 %v3084, %v3084
        %v3089 = vunpack.c.l.b16 %v3085
        %v3090 = vunpack.c.h.b16 %v3085
        %v3091 = vunpack.c.l.b16 %v3086
        %v3092 = vpack.c.b16 %v3089, %v3089
        %v3093 = vpack.c.b16 %v3090, %v3090
        %v3094 = vpack.c.b16 %v3091, %v3091
        %3098 = vst [vmem:[#allocation2 + $0x60] sm:$0xf] %v3092
        %3099 = vst [vmem:[#allocation2 + $0x64] sm:$0xf] %v3093
        %3100 = vst [vmem:[#allocation2 + $0x68] sm:$0xf] %v3094
        %v3103 = vrot.slane %v3069, 4
        %v3104 = vrot.slane %v3070, 4
        %v3105 = vsel %vm1602, %v3103, %v3104
        %v3109 = vsel %vm1602, 0.0, %v3103
        %v3110 = vsel %vm1602, %v3104, 0.0
        %v3111 = vpack.c.bf16 %v3105, %v3109
        %v3112 = vpack.c.bf16 %v3110, %v3110
        %v3115 = vunpack.c.l.b16 %v3111
        %v3116 = vunpack.c.h.b16 %v3111
        %v3117 = vunpack.c.l.b16 %v3112
        %v3118 = vpack.c.b16 %v3115, %v3115
        %v3119 = vpack.c.b16 %v3116, %v3116
        %v3120 = vpack.c.b16 %v3117, %v3117
        %3124 = vst [vmem:[#allocation2 + $0x6c] sm:$0xf] %v3118
        %3125 = vst [vmem:[#allocation2 + $0x70] sm:$0xf] %v3119
        %3126 = vst [vmem:[#allocation2 + $0x74] sm:$0xf] %v3120
        %v3129 = vrot.slane %v3071, 4
        %v3130 = vrot.slane %v3072, 4
        %v3131 = vsel %vm1602, %v3129, %v3130
        %v3135 = vsel %vm1602, 0.0, %v3129
        %v3136 = vsel %vm1602, %v3130, 0.0
        %v3137 = vpack.c.bf16 %v3131, %v3135
        %v3138 = vpack.c.bf16 %v3136, %v3136
        %v3141 = vunpack.c.l.b16 %v3137
        %v3142 = vunpack.c.h.b16 %v3137
        %v3143 = vunpack.c.l.b16 %v3138
        %v3144 = vpack.c.b16 %v3141, %v3141
        %v3145 = vpack.c.b16 %v3142, %v3142
        %v3146 = vpack.c.b16 %v3143, %v3143
        %3150 = vst [vmem:[#allocation2 + $0x78] sm:$0xf] %v3144
        %3151 = vst [vmem:[#allocation2 + $0x7c] sm:$0xf] %v3145
        %3152 = vst [vmem:[#allocation2 + $0x80] sm:$0xf] %v3146
        %v3155 = vrot.slane %v3073, 4
        %v3156 = vrot.slane %v3074, 4
        %v3157 = vsel %vm1602, %v3155, %v3156
        %v3161 = vsel %vm1602, 0.0, %v3155
        %v3162 = vsel %vm1602, %v3156, 0.0
        %v3163 = vpack.c.bf16 %v3157, %v3161
        %v3164 = vpack.c.bf16 %v3162, %v3162
        %v3167 = vunpack.c.l.b16 %v3163
        %v3168 = vunpack.c.h.b16 %v3163
        %v3169 = vunpack.c.l.b16 %v3164
        %v3170 = vpack.c.b16 %v3167, %v3167
        %v3171 = vpack.c.b16 %v3168, %v3168
        %v3172 = vpack.c.b16 %v3169, %v3169
        %3176 = vst [vmem:[#allocation2 + $0x84] sm:$0xf] %v3170
        %3177 = vst [vmem:[#allocation2 + $0x88] sm:$0xf] %v3171
        %3178 = vst [vmem:[#allocation2 + $0x8c] sm:$0xf] %v3172
        %v3179 = vld [vmem:[%s195 + $0x60] sm:$0xf]
        %v3180 = vld [vmem:[%s195 + $0x64] sm:$0xf]
        %v3181 = vld [vmem:[%s195 + $0x68] sm:$0xf]
        %v3182 = vld [vmem:[%s195 + $0x6c] sm:$0xf]
        %v3183 = vld [vmem:[%s195 + $0x70] sm:$0xf]
        %v3184 = vld [vmem:[%s195 + $0x74] sm:$0xf]
        %v3185 = vld [vmem:[%s195 + $0x78] sm:$0xf]
        %v3186 = vld [vmem:[%s195 + $0x7c] sm:$0xf]
        %v3187 = vld [vmem:[%s195 + $0x80] sm:$0xf]
        %v3188 = vld [vmem:[%s195 + $0x84] sm:$0xf]
        %v3189 = vld [vmem:[%s195 + $0x88] sm:$0xf]
        %v3190 = vld [vmem:[%s195 + $0x8c] sm:$0xf]
        %v3191 = vld [vmem:[%s1] sm:$0xf]
        %v3192 = vld [vmem:[%s1 + $0x4] sm:$0xf]
        %v3193 = vld [vmem:[%s1 + $0x8] sm:$0xf]
        %v3194 = vld [vmem:[%s1 + $0xc] sm:$0xf]
        %v3195 = vld [vmem:[%s1 + $0x10] sm:$0xf]
        %v3196 = vld [vmem:[%s1 + $0x14] sm:$0xf]
        %v3197 = vld [vmem:[%s1 + $0x18] sm:$0xf]
        %v3198 = vld [vmem:[%s1 + $0x1c] sm:$0xf]
        %v3199 = vld [vmem:[%s1 + $0x20] sm:$0xf]
        %v3200 = vld [vmem:[%s1 + $0x24] sm:$0xf]
        %v3201 = vld [vmem:[%s1 + $0x28] sm:$0xf]
        %v3202 = vld [vmem:[%s1 + $0x2c] sm:$0xf]
        %v3203 = vld [vmem:[%s1 + $0x30] sm:$0xf]
        %v3204 = vld [vmem:[%s1 + $0x34] sm:$0xf]
        %v3205 = vld [vmem:[%s1 + $0x38] sm:$0xf]
        %v3206 = vld [vmem:[%s1 + $0x3c] sm:$0xf]
        %v3207 = vld [vmem:[%s195 + $0x90] sm:$0xf]
        %v3208 = vld [vmem:[%s195 + $0x94] sm:$0xf]
        %v3209 = vld [vmem:[%s195 + $0x98] sm:$0xf]
        %v3210 = vld [vmem:[%s255] sm:$0xf]
        %v3211 = vld [vmem:[%s255 + $0x4] sm:$0xf]
        %v3212 = vld [vmem:[%s255 + $0x8] sm:$0xf]
        %v3213 = vld [vmem:[%s255 + $0xc] sm:$0xf]
        %v3214 = vld [vmem:[%s255 + $0x10] sm:$0xf]
        %v3215 = vld [vmem:[%s255 + $0x14] sm:$0xf]
        %v3216 = vld [vmem:[%s255 + $0x18] sm:$0xf]
        %v3217 = vld [vmem:[%s255 + $0x1c] sm:$0xf]
        %v3218 = vld [vmem:[%s255 + $0x20] sm:$0xf]
        %v3219 = vld [vmem:[%s255 + $0x24] sm:$0xf]
        %v3220 = vld [vmem:[%s255 + $0x28] sm:$0xf]
        %v3221 = vld [vmem:[%s255 + $0x2c] sm:$0xf]
        %v3222 = vld [vmem:[%s255 + $0x30] sm:$0xf]
        %v3223 = vld [vmem:[%s255 + $0x34] sm:$0xf]
        %v3224 = vld [vmem:[%s255 + $0x38] sm:$0xf]
        %v3225 = vld [vmem:[%s255 + $0x3c] sm:$0xf]
        %v3238 = vunpack.c.l.b16 %v3182
        %v3239 = vunpack.c.l.b16 %v3183
        %v3240 = vunpack.c.l.b16 %v3184
        %v3241 = vunpack.c.l.b16 %v3185
        %v3242 = vunpack.c.l.b16 %v3186
        %v3243 = vunpack.c.l.b16 %v3187
        %v3244 = vunpack.c.l.b16 %v3188
        %v3245 = vunpack.c.l.b16 %v3189
        %v3246 = vunpack.c.l.b16 %v3190
        %v3247 = vunpack.c.l.b16 %v3207
        %v3248 = vunpack.c.l.b16 %v3208
        %v3249 = vunpack.c.l.b16 %v3209
        %v3250 = vpack.c.b16 %v3239, %v3238
        %v3251 = vpack.c.b16 %v3241, %v3240
        %v3252 = vpack.c.b16 %v3243, %v3242
        %v3253 = vpack.c.b16 %v3245, %v3244
        %v3254 = vpack.c.b16 %v3247, %v3246
        %v3255 = vpack.c.b16 %v3249, %v3248
        %v3278 = vunpack.c.l.b16 %v3210
        %v3279 = vunpack.c.l.b16 %v3211
        %v3280 = vunpack.c.l.b16 %v3212
        %v3281 = vunpack.c.l.b16 %v3213
        %v3282 = vunpack.c.l.b16 %v3214
        %v3283 = vunpack.c.l.b16 %v3215
        %v3284 = vunpack.c.l.b16 %v3216
        %v3285 = vunpack.c.l.b16 %v3217
        %v3286 = vunpack.c.l.b16 %v3218
        %v3287 = vunpack.c.l.b16 %v3219
        %v3288 = vunpack.c.l.b16 %v3220
        %v3289 = vunpack.c.l.b16 %v3221
        %v3290 = vunpack.c.l.b16 %v3222
        %v3291 = vunpack.c.l.b16 %v3223
        %v3292 = vunpack.c.l.b16 %v3224
        %v3293 = vunpack.c.l.b16 %v3225
        %v3294 = vpack.c.b16 %v3279, %v3278
        %v3295 = vpack.c.b16 %v3281, %v3280
        %v3296 = vpack.c.b16 %v3283, %v3282
        %v3297 = vpack.c.b16 %v3285, %v3284
        %v3298 = vpack.c.b16 %v3287, %v3286
        %v3299 = vpack.c.b16 %v3289, %v3288
        %v3300 = vpack.c.b16 %v3291, %v3290
        %v3301 = vpack.c.b16 %v3293, %v3292
        %3310 = vmatprep.subr.bf16.mxu0 0
        %3311 = vmatpush1.bf16.msra.mxu0 %v3294
        %3312 = vmatprep.subr.bf16.mxu0 0
        %3313 = vmatpush1.bf16.msra.mxu0 %v3295
        %3314 = vmatprep.subr.bf16.mxu0 0
        %3315 = vmatpush1.bf16.msra.mxu0 %v3296
        %3316 = vmatprep.subr.bf16.mxu0 0
        %3317 = vmatpush1.bf16.msra.mxu0 %v3297
        %3318 = vmatprep.subr.bf16.mxu0 0
        %3319 = vmatpush1.bf16.msra.mxu0 %v3298
        %3320 = vmatprep.subr.bf16.mxu0 0
        %3321 = vmatpush1.bf16.msra.mxu0 %v3299
        %3322 = vmatprep.subr.bf16.mxu0 0
        %3323 = vmatpush1.bf16.msra.mxu0 %v3300
        %3324 = vmatprep.subr.bf16.mxu0 0
        %3325 = vmatpush1.bf16.msra.mxu0 %v3301
        %3326 = vmatprep.subr.bf16.mxu0 0
        %3327 = vmatpush1.bf16.msra.mxu0 0
        %3328 = vmatprep.subr.bf16.mxu0 0
        %3329 = vmatpush1.bf16.msra.mxu0 0
        %3330 = vmatprep.subr.bf16.mxu0 0
        %3331 = vmatpush1.bf16.msra.mxu0 0
        %3332 = vmatprep.subr.bf16.mxu0 0
        %3333 = vmatpush1.bf16.msra.mxu0 0
        %3334 = vmatprep.subr.bf16.mxu0 0
        %3335 = vmatpush1.bf16.msra.mxu0 0
        %3336 = vmatprep.subr.bf16.mxu0 0
        %3337 = vmatpush1.bf16.msra.mxu0 0
        %3338 = vmatprep.subr.bf16.mxu0 0
        %3339 = vmatpush1.bf16.msra.mxu0 0
        %3340 = vmatprep.subr.bf16.mxu0 0
        %3341 = vmatpush1.bf16.msra.mxu0 0
        %3342 = vmatprep.mubr.bf16.mxu0 0
        %3343 = vmatmul.mubr.bf16.gmra.mrb[0].mxu0 %v3250
        %v3344 = vpop.f32.mrb[0].mxu0
        %v3345 = vadd.f32 0.0, %v3344
        %v3346 = vpop.f32.mrb[0].mxu0
        %v3347 = vpop.f32.mrb[0].mxu0
        %v3348 = vadd.f32 0.0, %v3347
        %v3349 = vpop.f32.mrb[0].mxu0
        %3350 = vmatprep.mubr.bf16.mxu0 0
        %3351 = vmatmul.mubr.bf16.gmra.mrb[0].mxu0 %v3251
        %v3352 = vpop.f32.mrb[0].mxu0
        %v3353 = vpop.f32.mrb[0].mxu0
        %v3354 = vpop.f32.mrb[0].mxu0
        %v3355 = vadd.f32 0.0, %v3354
        %v3356 = vpop.f32.mrb[0].mxu0
        %3357 = vmatprep.mubr.bf16.mxu0 0
        %3358 = vmatmul.mubr.bf16.gmra.mrb[0].mxu0 %v3252
        %v3359 = vpop.f32.mrb[0].mxu0
        %v3360 = vadd.f32 0.0, %v3359
        %v3361 = vpop.f32.mrb[0].mxu0
        %v3362 = vpop.f32.mrb[0].mxu0
        %v3363 = vpop.f32.mrb[0].mxu0
        %3364 = vmatprep.mubr.bf16.mxu0 0
        %3365 = vmatmul.mubr.bf16.gmra.mrb[0].mxu0 %v3253
        %v3366 = vpop.f32.mrb[0].mxu0
        %v3367 = vadd.f32 0.0, %v3366
        %v3368 = vpop.f32.mrb[0].mxu0
        %v3369 = vpop.f32.mrb[0].mxu0
        %v3370 = vadd.f32 0.0, %v3369
        %v3371 = vpop.f32.mrb[0].mxu0
        %3372 = vmatprep.mubr.bf16.mxu0 0
        %3373 = vmatmul.mubr.bf16.gmra.mrb[0].mxu0 %v3254
        %v3374 = vpop.f32.mrb[0].mxu0
        %v3375 = vpop.f32.mrb[0].mxu0
        %v3376 = vpop.f32.mrb[0].mxu0
        %v3377 = vadd.f32 0.0, %v3376
        %v3378 = vpop.f32.mrb[0].mxu0
        %3379 = vmatprep.mubr.bf16.mxu0 0
        %3380 = vmatmul.mubr.bf16.gmra.mrb[0].mxu0 %v3255
        %v3381 = vpop.f32.mrb[0].mxu0
        %v3382 = vadd.f32 0.0, %v3381
        %v3383 = vpop.f32.mrb[0].mxu0
        %v3384 = vpop.f32.mrb[0].mxu0
        %v3385 = vpop.f32.mrb[0].mxu0
        %3386 = vdwg.mxu0
        %v3390 = vunpack.c.l.b16 %v3179
        %v3391 = vunpack.c.l.b16 %v3180
        %v3392 = vunpack.c.l.b16 %v3181
        %v3393 = vpack.c.b16 %v3391, %v3390
        %v3394 = vpack.c.b16 %v3238, %v3392
        %v3395 = vpack.c.b16 %v3240, %v3239
        %v3396 = vpack.c.b16 %v3242, %v3241
        %v3397 = vpack.c.b16 %v3244, %v3243
        %v3398 = vpack.c.b16 %v3246, %v3245
        %v3421 = vunpack.c.l.b16 %v3191
        %v3422 = vunpack.c.l.b16 %v3192
        %v3423 = vunpack.c.l.b16 %v3193
        %v3424 = vunpack.c.l.b16 %v3194
        %v3425 = vunpack.c.l.b16 %v3195
        %v3426 = vunpack.c.l.b16 %v3196
        %v3427 = vunpack.c.l.b16 %v3197
        %v3428 = vunpack.c.l.b16 %v3198
        %v3429 = vunpack.c.l.b16 %v3199
        %v3430 = vunpack.c.l.b16 %v3200
        %v3431 = vunpack.c.l.b16 %v3201
        %v3432 = vunpack.c.l.b16 %v3202
        %v3433 = vunpack.c.l.b16 %v3203
        %v3434 = vunpack.c.l.b16 %v3204
        %v3435 = vunpack.c.l.b16 %v3205
        %v3436 = vunpack.c.l.b16 %v3206
        %v3437 = vpack.c.b16 %v3422, %v3421
        %v3438 = vpack.c.b16 %v3424, %v3423
        %v3439 = vpack.c.b16 %v3426, %v3425
        %v3440 = vpack.c.b16 %v3428, %v3427
        %v3441 = vpack.c.b16 %v3430, %v3429
        %v3442 = vpack.c.b16 %v3432, %v3431
        %v3443 = vpack.c.b16 %v3434, %v3433
        %v3444 = vpack.c.b16 %v3436, %v3435
        %3453 = vmatprep.subr.bf16.mxu0 0
        %3454 = vmatpush1.bf16.msra.mxu0 %v3437
        %3455 = vmatprep.subr.bf16.mxu0 0
        %3456 = vmatpush1.bf16.msra.mxu0 %v3438
        %3457 = vmatprep.subr.bf16.mxu0 0
        %3458 = vmatpush1.bf16.msra.mxu0 %v3439
        %3459 = vmatprep.subr.bf16.mxu0 0
        %3460 = vmatpush1.bf16.msra.mxu0 %v3440
        %3461 = vmatprep.subr.bf16.mxu0 0
        %3462 = vmatpush1.bf16.msra.mxu0 %v3441
        %3463 = vmatprep.subr.bf16.mxu0 0
        %3464 = vmatpush1.bf16.msra.mxu0 %v3442
        %3465 = vmatprep.subr.bf16.mxu0 0
        %3466 = vmatpush1.bf16.msra.mxu0 %v3443
        %3467 = vmatprep.subr.bf16.mxu0 0
        %3468 = vmatpush1.bf16.msra.mxu0 %v3444
        %3469 = vmatprep.subr.bf16.mxu0 0
        %3470 = vmatpush1.bf16.msra.mxu0 0
        %3471 = vmatprep.subr.bf16.mxu0 0
        %3472 = vmatpush1.bf16.msra.mxu0 0
        %3473 = vmatprep.subr.bf16.mxu0 0
        %3474 = vmatpush1.bf16.msra.mxu0 0
        %3475 = vmatprep.subr.bf16.mxu0 0
        %3476 = vmatpush1.bf16.msra.mxu0 0
        %3477 = vmatprep.subr.bf16.mxu0 0
        %3478 = vmatpush1.bf16.msra.mxu0 0
        %3479 = vmatprep.subr.bf16.mxu0 0
        %3480 = vmatpush1.bf16.msra.mxu0 0
        %3481 = vmatprep.subr.bf16.mxu0 0
        %3482 = vmatpush1.bf16.msra.mxu0 0
        %3483 = vmatprep.subr.bf16.mxu0 0
        %3484 = vmatpush1.bf16.msra.mxu0 0
        %3485 = vmatprep.mubr.bf16.mxu0 0
        %3486 = vmatmul.mubr.bf16.gmra.mrb[0].mxu0 %v3393
        %v3487 = vpop.f32.mrb[0].mxu0
        %v3488 = vadd.f32 %v3345, %v3487
        %v3489 = vpop.f32.mrb[0].mxu0
        %v3490 = vpop.f32.mrb[0].mxu0
        %v3491 = vadd.f32 %v3348, %v3490
        %v3492 = vpop.f32.mrb[0].mxu0
        %3493 = vmatprep.mubr.bf16.mxu0 0
        %3494 = vmatmul.mubr.bf16.gmra.mrb[0].mxu0 %v3394
        %v3495 = vpop.f32.mrb[0].mxu0
        %v3496 = vpop.f32.mrb[0].mxu0
        %v3497 = vpop.f32.mrb[0].mxu0
        %v3498 = vadd.f32 %v3355, %v3497
        %v3499 = vpop.f32.mrb[0].mxu0
        %3500 = vmatprep.mubr.bf16.mxu0 0
        %3501 = vmatmul.mubr.bf16.gmra.mrb[0].mxu0 %v3395
        %v3502 = vpop.f32.mrb[0].mxu0
        %v3503 = vadd.f32 %v3360, %v3502
        %v3504 = vpop.f32.mrb[0].mxu0
        %v3505 = vpop.f32.mrb[0].mxu0
        %v3506 = vpop.f32.mrb[0].mxu0
        %3507 = vmatprep.mubr.bf16.mxu0 0
        %3508 = vmatmul.mubr.bf16.gmra.mrb[0].mxu0 %v3396
        %v3509 = vpop.f32.mrb[0].mxu0
        %v3510 = vadd.f32 %v3367, %v3509
        %v3511 = vpop.f32.mrb[0].mxu0
        %v3512 = vpop.f32.mrb[0].mxu0
        %v3513 = vadd.f32 %v3370, %v3512
        %v3514 = vpop.f32.mrb[0].mxu0
        %3515 = vmatprep.mubr.bf16.mxu0 0
        %3516 = vmatmul.mubr.bf16.gmra.mrb[0].mxu0 %v3397
        %v3517 = vpop.f32.mrb[0].mxu0
        %v3518 = vpop.f32.mrb[0].mxu0
        %v3519 = vpop.f32.mrb[0].mxu0
        %v3520 = vadd.f32 %v3377, %v3519
        %v3521 = vpop.f32.mrb[0].mxu0
        %3522 = vmatprep.mubr.bf16.mxu0 0
        %3523 = vmatmul.mubr.bf16.gmra.mrb[0].mxu0 %v3398
        %v3524 = vpop.f32.mrb[0].mxu0
        %v3525 = vadd.f32 %v3382, %v3524
        %v3526 = vpop.f32.mrb[0].mxu0
        %v3527 = vpop.f32.mrb[0].mxu0
        %v3528 = vpop.f32.mrb[0].mxu0
        %3529 = vdwg.mxu0
        %v3530 = vld [vmem:[%s195 + $0x78] sm:$0xf]
        %v3531 = vld [vmem:[%s195 + $0x7c] sm:$0xf]
        %v3532 = vld [vmem:[%s195 + $0x80] sm:$0xf]
        %v3533 = vld [vmem:[%s195 + $0x84] sm:$0xf]
        %v3534 = vld [vmem:[%s195 + $0x88] sm:$0xf]
        %v3535 = vld [vmem:[%s195 + $0x8c] sm:$0xf]
        %v3536 = vld [vmem:[%s195 + $0x90] sm:$0xf]
        %v3537 = vld [vmem:[%s195 + $0x94] sm:$0xf]
        %v3538 = vld [vmem:[%s195 + $0x98] sm:$0xf]
        %v3539 = vld [vmem:[%s195 + $0x9c] sm:$0xf]
        %v3540 = vld [vmem:[%s195 + $0xa0] sm:$0xf]
        %v3541 = vld [vmem:[%s195 + $0xa4] sm:$0xf]
        %v3542 = vld [vmem:[%s588] sm:$0xf]
        %v3543 = vld [vmem:[%s588 + $0x4] sm:$0xf]
        %v3544 = vld [vmem:[%s588 + $0x8] sm:$0xf]
        %v3545 = vld [vmem:[%s588 + $0xc] sm:$0xf]
        %v3546 = vld [vmem:[%s588 + $0x10] sm:$0xf]
        %v3547 = vld [vmem:[%s588 + $0x14] sm:$0xf]
        %v3548 = vld [vmem:[%s588 + $0x18] sm:$0xf]
        %v3549 = vld [vmem:[%s588 + $0x1c] sm:$0xf]
        %v3550 = vld [vmem:[%s588 + $0x20] sm:$0xf]
        %v3551 = vld [vmem:[%s588 + $0x24] sm:$0xf]
        %v3552 = vld [vmem:[%s588 + $0x28] sm:$0xf]
        %v3553 = vld [vmem:[%s588 + $0x2c] sm:$0xf]
        %v3554 = vld [vmem:[%s588 + $0x30] sm:$0xf]
        %v3555 = vld [vmem:[%s588 + $0x34] sm:$0xf]
        %v3556 = vld [vmem:[%s588 + $0x38] sm:$0xf]
        %v3557 = vld [vmem:[%s588 + $0x3c] sm:$0xf]
        %v3570 = vunpack.c.l.b16 %v3530
        %v3571 = vunpack.c.l.b16 %v3531
        %v3572 = vunpack.c.l.b16 %v3532
        %v3573 = vunpack.c.l.b16 %v3533
        %v3574 = vunpack.c.l.b16 %v3534
        %v3575 = vunpack.c.l.b16 %v3535
        %v3576 = vunpack.c.l.b16 %v3536
        %v3577 = vunpack.c.l.b16 %v3537
        %v3578 = vunpack.c.l.b16 %v3538
        %v3579 = vunpack.c.l.b16 %v3539
        %v3580 = vunpack.c.l.b16 %v3540
        %v3581 = vunpack.c.l.b16 %v3541
        %v3582 = vpack.c.b16 %v3571, %v3570
        %v3583 = vpack.c.b16 %v3573, %v3572
        %v3584 = vpack.c.b16 %v3575, %v3574
        %v3585 = vpack.c.b16 %v3577, %v3576
        %v3586 = vpack.c.b16 %v3579, %v3578
        %v3587 = vpack.c.b16 %v3581, %v3580
        %v3610 = vunpack.c.l.b16 %v3542
        %v3611 = vunpack.c.l.b16 %v3543
        %v3612 = vunpack.c.l.b16 %v3544
        %v3613 = vunpack.c.l.b16 %v3545
        %v3614 = vunpack.c.l.b16 %v3546
        %v3615 = vunpack.c.l.b16 %v3547
        %v3616 = vunpack.c.l.b16 %v3548
        %v3617 = vunpack.c.l.b16 %v3549
        %v3618 = vunpack.c.l.b16 %v3550
        %v3619 = vunpack.c.l.b16 %v3551
        %v3620 = vunpack.c.l.b16 %v3552
        %v3621 = vunpack.c.l.b16 %v3553
        %v3622 = vunpack.c.l.b16 %v3554
        %v3623 = vunpack.c.l.b16 %v3555
        %v3624 = vunpack.c.l.b16 %v3556
        %v3625 = vunpack.c.l.b16 %v3557
        %v3626 = vpack.c.b16 %v3611, %v3610
        %v3627 = vpack.c.b16 %v3613, %v3612
        %v3628 = vpack.c.b16 %v3615, %v3614
        %v3629 = vpack.c.b16 %v3617, %v3616
        %v3630 = vpack.c.b16 %v3619, %v3618
        %v3631 = vpack.c.b16 %v3621, %v3620
        %v3632 = vpack.c.b16 %v3623, %v3622
        %v3633 = vpack.c.b16 %v3625, %v3624
        %3642 = vmatprep.subr.bf16.mxu0 0
        %3643 = vmatpush1.bf16.msra.mxu0 %v3626
        %3644 = vmatprep.subr.bf16.mxu0 0
        %3645 = vmatpush1.bf16.msra.mxu0 %v3627
        %3646 = vmatprep.subr.bf16.mxu0 0
        %3647 = vmatpush1.bf16.msra.mxu0 %v3628
        %3648 = vmatprep.subr.bf16.mxu0 0
        %3649 = vmatpush1.bf16.msra.mxu0 %v3629
        %3650 = vmatprep.subr.bf16.mxu0 0
        %3651 = vmatpush1.bf16.msra.mxu0 %v3630
        %3652 = vmatprep.subr.bf16.mxu0 0
        %3653 = vmatpush1.bf16.msra.mxu0 %v3631
        %3654 = vmatprep.subr.bf16.mxu0 0
        %3655 = vmatpush1.bf16.msra.mxu0 %v3632
        %3656 = vmatprep.subr.bf16.mxu0 0
        %3657 = vmatpush1.bf16.msra.mxu0 %v3633
        %3658 = vmatprep.subr.bf16.mxu0 0
        %3659 = vmatpush1.bf16.msra.mxu0 0
        %3660 = vmatprep.subr.bf16.mxu0 0
        %3661 = vmatpush1.bf16.msra.mxu0 0
        %3662 = vmatprep.subr.bf16.mxu0 0
        %3663 = vmatpush1.bf16.msra.mxu0 0
        %3664 = vmatprep.subr.bf16.mxu0 0
        %3665 = vmatpush1.bf16.msra.mxu0 0
        %3666 = vmatprep.subr.bf16.mxu0 0
        %3667 = vmatpush1.bf16.msra.mxu0 0
        %3668 = vmatprep.subr.bf16.mxu0 0
        %3669 = vmatpush1.bf16.msra.mxu0 0
        %3670 = vmatprep.subr.bf16.mxu0 0
        %3671 = vmatpush1.bf16.msra.mxu0 0
        %3672 = vmatprep.subr.bf16.mxu0 0
        %3673 = vmatpush1.bf16.msra.mxu0 0
        %3674 = vmatprep.mubr.bf16.mxu0 0
        %3675 = vmatmul.mubr.bf16.gmra.mrb[0].mxu0 %v3582
        %v3676 = vpop.f32.mrb[0].mxu0
        %v3677 = vadd.f32 0.0, %v3676
        %v3678 = vpop.f32.mrb[0].mxu0
        %v3679 = vpop.f32.mrb[0].mxu0
        %v3680 = vadd.f32 0.0, %v3679
        %v3681 = vpop.f32.mrb[0].mxu0
        %3682 = vmatprep.mubr.bf16.mxu0 0
        %3683 = vmatmul.mubr.bf16.gmra.mrb[0].mxu0 %v3583
        %v3684 = vpop.f32.mrb[0].mxu0
        %v3685 = vpop.f32.mrb[0].mxu0
        %v3686 = vpop.f32.mrb[0].mxu0
        %v3687 = vadd.f32 0.0, %v3686
        %v3688 = vpop.f32.mrb[0].mxu0
        %3689 = vmatprep.mubr.bf16.mxu0 0
        %3690 = vmatmul.mubr.bf16.gmra.mrb[0].mxu0 %v3584
        %v3691 = vpop.f32.mrb[0].mxu0
        %v3692 = vadd.f32 0.0, %v3691
        %v3693 = vpop.f32.mrb[0].mxu0
        %v3694 = vpop.f32.mrb[0].mxu0
        %v3695 = vpop.f32.mrb[0].mxu0
        %3696 = vmatprep.mubr.bf16.mxu0 0
        %3697 = vmatmul.mubr.bf16.gmra.mrb[0].mxu0 %v3585
        %v3698 = vpop.f32.mrb[0].mxu0
        %v3699 = vadd.f32 0.0, %v3698
        %v3700 = vpop.f32.mrb[0].mxu0
        %v3701 = vpop.f32.mrb[0].mxu0
        %v3702 = vadd.f32 0.0, %v3701
        %v3703 = vpop.f32.mrb[0].mxu0
        %3704 = vmatprep.mubr.bf16.mxu0 0
        %3705 = vmatmul.mubr.bf16.gmra.mrb[0].mxu0 %v3586
        %v3706 = vpop.f32.mrb[0].mxu0
        %v3707 = vpop.f32.mrb[0].mxu0
        %v3708 = vpop.f32.mrb[0].mxu0
        %v3709 = vadd.f32 0.0, %v3708
        %v3710 = vpop.f32.mrb[0].mxu0
        %3711 = vmatprep.mubr.bf16.mxu0 0
        %3712 = vmatmul.mubr.bf16.gmra.mrb[0].mxu0 %v3587
        %v3713 = vpop.f32.mrb[0].mxu0
        %v3714 = vadd.f32 0.0, %v3713
        %v3715 = vpop.f32.mrb[0].mxu0
        %v3716 = vpop.f32.mrb[0].mxu0
        %v3717 = vpop.f32.mrb[0].mxu0
        %3718 = vdwg.mxu0
        %v3719 = vadd.f32 %v3488, %v3677
        %v3720 = vadd.f32 %v3491, %v3680
        %v3721 = vadd.f32 %v3498, %v3687
        %v3722 = vadd.f32 %v3503, %v3692
        %v3723 = vadd.f32 %v3510, %v3699
        %v3724 = vadd.f32 %v3513, %v3702
        %v3725 = vadd.f32 %v3520, %v3709
        %v3726 = vadd.f32 %v3525, %v3714
        %v3727 = vld [vmem:[%s195 + $0x84] sm:$0xf]
        %v3728 = vld [vmem:[%s195 + $0x88] sm:$0xf]
        %v3729 = vld [vmem:[%s195 + $0x8c] sm:$0xf]
        %v3730 = vld [vmem:[%s195 + $0x90] sm:$0xf]
        %v3731 = vld [vmem:[%s195 + $0x94] sm:$0xf]
        %v3732 = vld [vmem:[%s195 + $0x98] sm:$0xf]
        %v3733 = vld [vmem:[%s195 + $0x9c] sm:$0xf]
        %v3734 = vld [vmem:[%s195 + $0xa0] sm:$0xf]
        %v3735 = vld [vmem:[%s195 + $0xa4] sm:$0xf]
        %v3736 = vld [vmem:[%s195 + $0xa8] sm:$0xf]
        %v3737 = vld [vmem:[%s195 + $0xac] sm:$0xf]
        %v3738 = vld [vmem:[%s195 + $0xb0] sm:$0xf]
        %v3739 = vld [vmem:[%s786] sm:$0xf]
        %v3740 = vld [vmem:[%s786 + $0x4] sm:$0xf]
        %v3741 = vld [vmem:[%s786 + $0x8] sm:$0xf]
        %v3742 = vld [vmem:[%s786 + $0xc] sm:$0xf]
        %v3743 = vld [vmem:[%s786 + $0x10] sm:$0xf]
        %v3744 = vld [vmem:[%s786 + $0x14] sm:$0xf]
        %v3745 = vld [vmem:[%s786 + $0x18] sm:$0xf]
        %v3746 = vld [vmem:[%s786 + $0x1c] sm:$0xf]
        %v3747 = vld [vmem:[%s786 + $0x20] sm:$0xf]
        %v3748 = vld [vmem:[%s786 + $0x24] sm:$0xf]
        %v3749 = vld [vmem:[%s786 + $0x28] sm:$0xf]
        %v3750 = vld [vmem:[%s786 + $0x2c] sm:$0xf]
        %v3751 = vld [vmem:[%s786 + $0x30] sm:$0xf]
        %v3752 = vld [vmem:[%s786 + $0x34] sm:$0xf]
        %v3753 = vld [vmem:[%s786 + $0x38] sm:$0xf]
        %v3754 = vld [vmem:[%s786 + $0x3c] sm:$0xf]
        %v3767 = vunpack.c.l.b16 %v3727
        %v3768 = vunpack.c.l.b16 %v3728
        %v3769 = vunpack.c.l.b16 %v3729
        %v3770 = vunpack.c.l.b16 %v3730
        %v3771 = vunpack.c.l.b16 %v3731
        %v3772 = vunpack.c.l.b16 %v3732
        %v3773 = vunpack.c.l.b16 %v3733
        %v3774 = vunpack.c.l.b16 %v3734
        %v3775 = vunpack.c.l.b16 %v3735
        %v3776 = vunpack.c.l.b16 %v3736
        %v3777 = vunpack.c.l.b16 %v3737
        %v3778 = vunpack.c.l.b16 %v3738
        %v3779 = vpack.c.b16 %v3768, %v3767
        %v3780 = vpack.c.b16 %v3770, %v3769
        %v3781 = vpack.c.b16 %v3772, %v3771
        %v3782 = vpack.c.b16 %v3774, %v3773
        %v3783 = vpack.c.b16 %v3776, %v3775
        %v3784 = vpack.c.b16 %v3778, %v3777
        %v3807 = vunpack.c.l.b16 %v3739
        %v3808 = vunpack.c.l.b16 %v3740
        %v3809 = vunpack.c.l.b16 %v3741
        %v3810 = vunpack.c.l.b16 %v3742
        %v3811 = vunpack.c.l.b16 %v3743
        %v3812 = vunpack.c.l.b16 %v3744
        %v3813 = vunpack.c.l.b16 %v3745
        %v3814 = vunpack.c.l.b16 %v3746
        %v3815 = vunpack.c.l.b16 %v3747
        %v3816 = vunpack.c.l.b16 %v3748
        %v3817 = vunpack.c.l.b16 %v3749
        %v3818 = vunpack.c.l.b16 %v3750
        %v3819 = vunpack.c.l.b16 %v3751
        %v3820 = vunpack.c.l.b16 %v3752
        %v3821 = vunpack.c.l.b16 %v3753
        %v3822 = vunpack.c.l.b16 %v3754
        %v3823 = vpack.c.b16 %v3808, %v3807
        %v3824 = vpack.c.b16 %v3810, %v3809
        %v3825 = vpack.c.b16 %v3812, %v3811
        %v3826 = vpack.c.b16 %v3814, %v3813
        %v3827 = vpack.c.b16 %v3816, %v3815
        %v3828 = vpack.c.b16 %v3818, %v3817
        %v3829 = vpack.c.b16 %v3820, %v3819
        %v3830 = vpack.c.b16 %v3822, %v3821
        %3839 = vmatprep.subr.bf16.mxu0 0
        %3840 = vmatpush1.bf16.msra.mxu0 %v3823
        %3841 = vmatprep.subr.bf16.mxu0 0
        %3842 = vmatpush1.bf16.msra.mxu0 %v3824
        %3843 = vmatprep.subr.bf16.mxu0 0
        %3844 = vmatpush1.bf16.msra.mxu0 %v3825
        %3845 = vmatprep.subr.bf16.mxu0 0
        %3846 = vmatpush1.bf16.msra.mxu0 %v3826
        %3847 = vmatprep.subr.bf16.mxu0 0
        %3848 = vmatpush1.bf16.msra.mxu0 %v3827
        %3849 = vmatprep.subr.bf16.mxu0 0
        %3850 = vmatpush1.bf16.msra.mxu0 %v3828
        %3851 = vmatprep.subr.bf16.mxu0 0
        %3852 = vmatpush1.bf16.msra.mxu0 %v3829
        %3853 = vmatprep.subr.bf16.mxu0 0
        %3854 = vmatpush1.bf16.msra.mxu0 %v3830
        %3855 = vmatprep.subr.bf16.mxu0 0
        %3856 = vmatpush1.bf16.msra.mxu0 0
        %3857 = vmatprep.subr.bf16.mxu0 0
        %3858 = vmatpush1.bf16.msra.mxu0 0
        %3859 = vmatprep.subr.bf16.mxu0 0
        %3860 = vmatpush1.bf16.msra.mxu0 0
        %3861 = vmatprep.subr.bf16.mxu0 0
        %3862 = vmatpush1.bf16.msra.mxu0 0
        %3863 = vmatprep.subr.bf16.mxu0 0
        %3864 = vmatpush1.bf16.msra.mxu0 0
        %3865 = vmatprep.subr.bf16.mxu0 0
        %3866 = vmatpush1.bf16.msra.mxu0 0
        %3867 = vmatprep.subr.bf16.mxu0 0
        %3868 = vmatpush1.bf16.msra.mxu0 0
        %3869 = vmatprep.subr.bf16.mxu0 0
        %3870 = vmatpush1.bf16.msra.mxu0 0
        %3871 = vmatprep.mubr.bf16.mxu0 0
        %3872 = vmatmul.mubr.bf16.gmra.mrb[0].mxu0 %v3779
        %v3873 = vpop.f32.mrb[0].mxu0
        %v3874 = vadd.f32 0.0, %v3873
        %v3875 = vpop.f32.mrb[0].mxu0
        %v3876 = vpop.f32.mrb[0].mxu0
        %v3877 = vadd.f32 0.0, %v3876
        %v3878 = vpop.f32.mrb[0].mxu0
        %3879 = vmatprep.mubr.bf16.mxu0 0
        %3880 = vmatmul.mubr.bf16.gmra.mrb[0].mxu0 %v3780
        %v3881 = vpop.f32.mrb[0].mxu0
        %v3882 = vpop.f32.mrb[0].mxu0
        %v3883 = vpop.f32.mrb[0].mxu0
        %v3884 = vadd.f32 0.0, %v3883
        %v3885 = vpop.f32.mrb[0].mxu0
        %3886 = vmatprep.mubr.bf16.mxu0 0
        %3887 = vmatmul.mubr.bf16.gmra.mrb[0].mxu0 %v3781
        %v3888 = vpop.f32.mrb[0].mxu0
        %v3889 = vadd.f32 0.0, %v3888
        %v3890 = vpop.f32.mrb[0].mxu0
        %v3891 = vpop.f32.mrb[0].mxu0
        %v3892 = vpop.f32.mrb[0].mxu0
        %3893 = vmatprep.mubr.bf16.mxu0 0
        %3894 = vmatmul.mubr.bf16.gmra.mrb[0].mxu0 %v3782
        %v3895 = vpop.f32.mrb[0].mxu0
        %v3896 = vadd.f32 0.0, %v3895
        %v3897 = vpop.f32.mrb[0].mxu0
        %v3898 = vpop.f32.mrb[0].mxu0
        %v3899 = vadd.f32 0.0, %v3898
        %v3900 = vpop.f32.mrb[0].mxu0
        %3901 = vmatprep.mubr.bf16.mxu0 0
        %3902 = vmatmul.mubr.bf16.gmra.mrb[0].mxu0 %v3783
        %v3903 = vpop.f32.mrb[0].mxu0
        %v3904 = vpop.f32.mrb[0].mxu0
        %v3905 = vpop.f32.mrb[0].mxu0
        %v3906 = vadd.f32 0.0, %v3905
        %v3907 = vpop.f32.mrb[0].mxu0
        %3908 = vmatprep.mubr.bf16.mxu0 0
        %3909 = vmatmul.mubr.bf16.gmra.mrb[0].mxu0 %v3784
        %v3910 = vpop.f32.mrb[0].mxu0
        %v3911 = vadd.f32 0.0, %v3910
        %v3912 = vpop.f32.mrb[0].mxu0
        %v3913 = vpop.f32.mrb[0].mxu0
        %v3914 = vpop.f32.mrb[0].mxu0
        %3915 = vdwg.mxu0
        %v3916 = vadd.f32 %v3719, %v3874
        %v3917 = vadd.f32 %v3720, %v3877
        %v3918 = vadd.f32 %v3721, %v3884
        %v3919 = vadd.f32 %v3722, %v3889
        %v3920 = vadd.f32 %v3723, %v3896
        %v3921 = vadd.f32 %v3724, %v3899
        %v3922 = vadd.f32 %v3725, %v3906
        %v3923 = vadd.f32 %v3726, %v3911
        %v3924 = vld [vmem:[%s195 + $0x90] sm:$0xf]
        %v3925 = vld [vmem:[%s195 + $0x94] sm:$0xf]
        %v3926 = vld [vmem:[%s195 + $0x98] sm:$0xf]
        %v3927 = vld [vmem:[%s195 + $0x9c] sm:$0xf]
        %v3928 = vld [vmem:[%s195 + $0xa0] sm:$0xf]
        %v3929 = vld [vmem:[%s195 + $0xa4] sm:$0xf]
        %v3930 = vld [vmem:[%s195 + $0xa8] sm:$0xf]
        %v3931 = vld [vmem:[%s195 + $0xac] sm:$0xf]
        %v3932 = vld [vmem:[%s195 + $0xb0] sm:$0xf]
        %v3933 = vld [vmem:[%s195 + $0xb4] sm:$0xf]
        %v3934 = vld [vmem:[%s195 + $0xb8] sm:$0xf]
        %v3935 = vld [vmem:[%s195 + $0xbc] sm:$0xf]
        %v3936 = vld [vmem:[%s984] sm:$0xf]
        %v3937 = vld [vmem:[%s984 + $0x4] sm:$0xf]
        %v3938 = vld [vmem:[%s984 + $0x8] sm:$0xf]
        %v3939 = vld [vmem:[%s984 + $0xc] sm:$0xf]
        %v3940 = vld [vmem:[%s984 + $0x10] sm:$0xf]
        %v3941 = vld [vmem:[%s984 + $0x14] sm:$0xf]
        %v3942 = vld [vmem:[%s984 + $0x18] sm:$0xf]
        %v3943 = vld [vmem:[%s984 + $0x1c] sm:$0xf]
        %v3944 = vld [vmem:[%s984 + $0x20] sm:$0xf]
        %v3945 = vld [vmem:[%s984 + $0x24] sm:$0xf]
        %v3946 = vld [vmem:[%s984 + $0x28] sm:$0xf]
        %v3947 = vld [vmem:[%s984 + $0x2c] sm:$0xf]
        %v3948 = vld [vmem:[%s984 + $0x30] sm:$0xf]
        %v3949 = vld [vmem:[%s984 + $0x34] sm:$0xf]
        %v3950 = vld [vmem:[%s984 + $0x38] sm:$0xf]
        %v3951 = vld [vmem:[%s984 + $0x3c] sm:$0xf]
        %v3964 = vunpack.c.l.b16 %v3924
        %v3965 = vunpack.c.l.b16 %v3925
        %v3966 = vunpack.c.l.b16 %v3926
        %v3967 = vunpack.c.l.b16 %v3927
        %v3968 = vunpack.c.l.b16 %v3928
        %v3969 = vunpack.c.l.b16 %v3929
        %v3970 = vunpack.c.l.b16 %v3930
        %v3971 = vunpack.c.l.b16 %v3931
        %v3972 = vunpack.c.l.b16 %v3932
        %v3973 = vunpack.c.l.b16 %v3933
        %v3974 = vunpack.c.l.b16 %v3934
        %v3975 = vunpack.c.l.b16 %v3935
        %v3976 = vpack.c.b16 %v3965, %v3964
        %v3977 = vpack.c.b16 %v3967, %v3966
        %v3978 = vpack.c.b16 %v3969, %v3968
        %v3979 = vpack.c.b16 %v3971, %v3970
        %v3980 = vpack.c.b16 %v3973, %v3972
        %v3981 = vpack.c.b16 %v3975, %v3974
        %v4004 = vunpack.c.l.b16 %v3936
        %v4005 = vunpack.c.l.b16 %v3937
        %v4006 = vunpack.c.l.b16 %v3938
        %v4007 = vunpack.c.l.b16 %v3939
        %v4008 = vunpack.c.l.b16 %v3940
        %v4009 = vunpack.c.l.b16 %v3941
        %v4010 = vunpack.c.l.b16 %v3942
        %v4011 = vunpack.c.l.b16 %v3943
        %v4012 = vunpack.c.l.b16 %v3944
        %v4013 = vunpack.c.l.b16 %v3945
        %v4014 = vunpack.c.l.b16 %v3946
        %v4015 = vunpack.c.l.b16 %v3947
        %v4016 = vunpack.c.l.b16 %v3948
        %v4017 = vunpack.c.l.b16 %v3949
        %v4018 = vunpack.c.l.b16 %v3950
        %v4019 = vunpack.c.l.b16 %v3951
        %v4020 = vpack.c.b16 %v4005, %v4004
        %v4021 = vpack.c.b16 %v4007, %v4006
        %v4022 = vpack.c.b16 %v4009, %v4008
        %v4023 = vpack.c.b16 %v4011, %v4010
        %v4024 = vpack.c.b16 %v4013, %v4012
        %v4025 = vpack.c.b16 %v4015, %v4014
        %v4026 = vpack.c.b16 %v4017, %v4016
        %v4027 = vpack.c.b16 %v4019, %v4018
        %4036 = vmatprep.subr.bf16.mxu0 0
        %4037 = vmatpush1.bf16.msra.mxu0 %v4020
        %4038 = vmatprep.subr.bf16.mxu0 0
        %4039 = vmatpush1.bf16.msra.mxu0 %v4021
        %4040 = vmatprep.subr.bf16.mxu0 0
        %4041 = vmatpush1.bf16.msra.mxu0 %v4022
        %4042 = vmatprep.subr.bf16.mxu0 0
        %4043 = vmatpush1.bf16.msra.mxu0 %v4023
        %4044 = vmatprep.subr.bf16.mxu0 0
        %4045 = vmatpush1.bf16.msra.mxu0 %v4024
        %4046 = vmatprep.subr.bf16.mxu0 0
        %4047 = vmatpush1.bf16.msra.mxu0 %v4025
        %4048 = vmatprep.subr.bf16.mxu0 0
        %4049 = vmatpush1.bf16.msra.mxu0 %v4026
        %4050 = vmatprep.subr.bf16.mxu0 0
        %4051 = vmatpush1.bf16.msra.mxu0 %v4027
        %4052 = vmatprep.subr.bf16.mxu0 0
        %4053 = vmatpush1.bf16.msra.mxu0 0
        %4054 = vmatprep.subr.bf16.mxu0 0
        %4055 = vmatpush1.bf16.msra.mxu0 0
        %4056 = vmatprep.subr.bf16.mxu0 0
        %4057 = vmatpush1.bf16.msra.mxu0 0
        %4058 = vmatprep.subr.bf16.mxu0 0
        %4059 = vmatpush1.bf16.msra.mxu0 0
        %4060 = vmatprep.subr.bf16.mxu0 0
        %4061 = vmatpush1.bf16.msra.mxu0 0
        %4062 = vmatprep.subr.bf16.mxu0 0
        %4063 = vmatpush1.bf16.msra.mxu0 0
        %4064 = vmatprep.subr.bf16.mxu0 0
        %4065 = vmatpush1.bf16.msra.mxu0 0
        %4066 = vmatprep.subr.bf16.mxu0 0
        %4067 = vmatpush1.bf16.msra.mxu0 0
        %4068 = vmatprep.mubr.bf16.mxu0 0
        %4069 = vmatmul.mubr.bf16.gmra.mrb[0].mxu0 %v3976
        %v4070 = vpop.f32.mrb[0].mxu0
        %v4071 = vadd.f32 0.0, %v4070
        %v4072 = vpop.f32.mrb[0].mxu0
        %v4073 = vpop.f32.mrb[0].mxu0
        %v4074 = vadd.f32 0.0, %v4073
        %v4075 = vpop.f32.mrb[0].mxu0
        %4076 = vmatprep.mubr.bf16.mxu0 0
        %4077 = vmatmul.mubr.bf16.gmra.mrb[0].mxu0 %v3977
        %v4078 = vpop.f32.mrb[0].mxu0
        %v4079 = vpop.f32.mrb[0].mxu0
        %v4080 = vpop.f32.mrb[0].mxu0
        %v4081 = vadd.f32 0.0, %v4080
        %v4082 = vpop.f32.mrb[0].mxu0
        %4083 = vmatprep.mubr.bf16.mxu0 0
        %4084 = vmatmul.mubr.bf16.gmra.mrb[0].mxu0 %v3978
        %v4085 = vpop.f32.mrb[0].mxu0
        %v4086 = vadd.f32 0.0, %v4085
        %v4087 = vpop.f32.mrb[0].mxu0
        %v4088 = vpop.f32.mrb[0].mxu0
        %v4089 = vpop.f32.mrb[0].mxu0
        %4090 = vmatprep.mubr.bf16.mxu0 0
        %4091 = vmatmul.mubr.bf16.gmra.mrb[0].mxu0 %v3979
        %v4092 = vpop.f32.mrb[0].mxu0
        %v4093 = vadd.f32 0.0, %v4092
        %v4094 = vpop.f32.mrb[0].mxu0
        %v4095 = vpop.f32.mrb[0].mxu0
        %v4096 = vadd.f32 0.0, %v4095
        %v4097 = vpop.f32.mrb[0].mxu0
        %4098 = vmatprep.mubr.bf16.mxu0 0
        %4099 = vmatmul.mubr.bf16.gmra.mrb[0].mxu0 %v3980
        %v4100 = vpop.f32.mrb[0].mxu0
        %v4101 = vpop.f32.mrb[0].mxu0
        %v4102 = vpop.f32.mrb[0].mxu0
        %v4103 = vadd.f32 0.0, %v4102
        %v4104 = vpop.f32.mrb[0].mxu0
        %4105 = vmatprep.mubr.bf16.mxu0 0
        %4106 = vmatmul.mubr.bf16.gmra.mrb[0].mxu0 %v3981
        %v4107 = vpop.f32.mrb[0].mxu0
        %v4108 = vadd.f32 0.0, %v4107
        %v4109 = vpop.f32.mrb[0].mxu0
        %v4110 = vpop.f32.mrb[0].mxu0
        %v4111 = vpop.f32.mrb[0].mxu0
        %4112 = vdwg.mxu0
        %v4113 = vadd.f32 %v3916, %v4071
        %v4114 = vadd.f32 %v3917, %v4074
        %v4115 = vadd.f32 %v3918, %v4081
        %v4116 = vadd.f32 %v3919, %v4086
        %v4117 = vadd.f32 %v3920, %v4093
        %v4118 = vadd.f32 %v3921, %v4096
        %v4119 = vadd.f32 %v3922, %v4103
        %v4120 = vadd.f32 %v3923, %v4108
        %v4121 = vld [vmem:[%s195 + $0x9c] sm:$0xf]
        %v4122 = vld [vmem:[%s195 + $0xa0] sm:$0xf]
        %v4123 = vld [vmem:[%s195 + $0xa4] sm:$0xf]
        %v4124 = vld [vmem:[%s195 + $0xa8] sm:$0xf]
        %v4125 = vld [vmem:[%s195 + $0xac] sm:$0xf]
        %v4126 = vld [vmem:[%s195 + $0xb0] sm:$0xf]
        %v4127 = vld [vmem:[%s195 + $0xb4] sm:$0xf]
        %v4128 = vld [vmem:[%s195 + $0xb8] sm:$0xf]
        %v4129 = vld [vmem:[%s195 + $0xbc] sm:$0xf]
        %v4130 = vld [vmem:[%s195 + $0xc0] sm:$0xf]
        %v4131 = vld [vmem:[%s195 + $0xc4] sm:$0xf]
        %v4132 = vld [vmem:[%s195 + $0xc8] sm:$0xf]
        %v4133 = vld [vmem:[%s1182] sm:$0xf]
        %v4134 = vld [vmem:[%s1182 + $0x4] sm:$0xf]
        %v4135 = vld [vmem:[%s1182 + $0x8] sm:$0xf]
        %v4136 = vld [vmem:[%s1182 + $0xc] sm:$0xf]
        %v4137 = vld [vmem:[%s1182 + $0x10] sm:$0xf]
        %v4138 = vld [vmem:[%s1182 + $0x14] sm:$0xf]
        %v4139 = vld [vmem:[%s1182 + $0x18] sm:$0xf]
        %v4140 = vld [vmem:[%s1182 + $0x1c] sm:$0xf]
        %v4141 = vld [vmem:[%s1182 + $0x20] sm:$0xf]
        %v4142 = vld [vmem:[%s1182 + $0x24] sm:$0xf]
        %v4143 = vld [vmem:[%s1182 + $0x28] sm:$0xf]
        %v4144 = vld [vmem:[%s1182 + $0x2c] sm:$0xf]
        %v4145 = vld [vmem:[%s1182 + $0x30] sm:$0xf]
        %v4146 = vld [vmem:[%s1182 + $0x34] sm:$0xf]
        %v4147 = vld [vmem:[%s1182 + $0x38] sm:$0xf]
        %v4148 = vld [vmem:[%s1182 + $0x3c] sm:$0xf]
        %v4161 = vunpack.c.l.b16 %v4121
        %v4162 = vunpack.c.l.b16 %v4122
        %v4163 = vunpack.c.l.b16 %v4123
        %v4164 = vunpack.c.l.b16 %v4124
        %v4165 = vunpack.c.l.b16 %v4125
        %v4166 = vunpack.c.l.b16 %v4126
        %v4167 = vunpack.c.l.b16 %v4127
        %v4168 = vunpack.c.l.b16 %v4128
        %v4169 = vunpack.c.l.b16 %v4129
        %v4170 = vunpack.c.l.b16 %v4130
        %v4171 = vunpack.c.l.b16 %v4131
        %v4172 = vunpack.c.l.b16 %v4132
        %v4173 = vpack.c.b16 %v4162, %v4161
        %v4174 = vpack.c.b16 %v4164, %v4163
        %v4175 = vpack.c.b16 %v4166, %v4165
        %v4176 = vpack.c.b16 %v4168, %v4167
        %v4177 = vpack.c.b16 %v4170, %v4169
        %v4178 = vpack.c.b16 %v4172, %v4171
        %v4201 = vunpack.c.l.b16 %v4133
        %v4202 = vunpack.c.l.b16 %v4134
        %v4203 = vunpack.c.l.b16 %v4135
        %v4204 = vunpack.c.l.b16 %v4136
        %v4205 = vunpack.c.l.b16 %v4137
        %v4206 = vunpack.c.l.b16 %v4138
        %v4207 = vunpack.c.l.b16 %v4139
        %v4208 = vunpack.c.l.b16 %v4140
        %v4209 = vunpack.c.l.b16 %v4141
        %v4210 = vunpack.c.l.b16 %v4142
        %v4211 = vunpack.c.l.b16 %v4143
        %v4212 = vunpack.c.l.b16 %v4144
        %v4213 = vunpack.c.l.b16 %v4145
        %v4214 = vunpack.c.l.b16 %v4146
        %v4215 = vunpack.c.l.b16 %v4147
        %v4216 = vunpack.c.l.b16 %v4148
        %v4217 = vpack.c.b16 %v4202, %v4201
        %v4218 = vpack.c.b16 %v4204, %v4203
        %v4219 = vpack.c.b16 %v4206, %v4205
        %v4220 = vpack.c.b16 %v4208, %v4207
        %v4221 = vpack.c.b16 %v4210, %v4209
        %v4222 = vpack.c.b16 %v4212, %v4211
        %v4223 = vpack.c.b16 %v4214, %v4213
        %v4224 = vpack.c.b16 %v4216, %v4215
        %4233 = vmatprep.subr.bf16.mxu0 0
        %4234 = vmatpush1.bf16.msra.mxu0 %v4217
        %4235 = vmatprep.subr.bf16.mxu0 0
        %4236 = vmatpush1.bf16.msra.mxu0 %v4218
        %4237 = vmatprep.subr.bf16.mxu0 0
        %4238 = vmatpush1.bf16.msra.mxu0 %v4219
        %4239 = vmatprep.subr.bf16.mxu0 0
        %4240 = vmatpush1.bf16.msra.mxu0 %v4220
        %4241 = vmatprep.subr.bf16.mxu0 0
        %4242 = vmatpush1.bf16.msra.mxu0 %v4221
        %4243 = vmatprep.subr.bf16.mxu0 0
        %4244 = vmatpush1.bf16.msra.mxu0 %v4222
        %4245 = vmatprep.subr.bf16.mxu0 0
        %4246 = vmatpush1.bf16.msra.mxu0 %v4223
        %4247 = vmatprep.subr.bf16.mxu0 0
        %4248 = vmatpush1.bf16.msra.mxu0 %v4224
        %4249 = vmatprep.subr.bf16.mxu0 0
        %4250 = vmatpush1.bf16.msra.mxu0 0
        %4251 = vmatprep.subr.bf16.mxu0 0
        %4252 = vmatpush1.bf16.msra.mxu0 0
        %4253 = vmatprep.subr.bf16.mxu0 0
        %4254 = vmatpush1.bf16.msra.mxu0 0
        %4255 = vmatprep.subr.bf16.mxu0 0
        %4256 = vmatpush1.bf16.msra.mxu0 0
        %4257 = vmatprep.subr.bf16.mxu0 0
        %4258 = vmatpush1.bf16.msra.mxu0 0
        %4259 = vmatprep.subr.bf16.mxu0 0
        %4260 = vmatpush1.bf16.msra.mxu0 0
        %4261 = vmatprep.subr.bf16.mxu0 0
        %4262 = vmatpush1.bf16.msra.mxu0 0
        %4263 = vmatprep.subr.bf16.mxu0 0
        %4264 = vmatpush1.bf16.msra.mxu0 0
        %4265 = vmatprep.mubr.bf16.mxu0 0
        %4266 = vmatmul.mubr.bf16.gmra.mrb[0].mxu0 %v4173
        %v4267 = vpop.f32.mrb[0].mxu0
        %v4268 = vadd.f32 0.0, %v4267
        %v4269 = vpop.f32.mrb[0].mxu0
        %v4270 = vpop.f32.mrb[0].mxu0
        %v4271 = vadd.f32 0.0, %v4270
        %v4272 = vpop.f32.mrb[0].mxu0
        %4273 = vmatprep.mubr.bf16.mxu0 0
        %4274 = vmatmul.mubr.bf16.gmra.mrb[0].mxu0 %v4174
        %v4275 = vpop.f32.mrb[0].mxu0
        %v4276 = vpop.f32.mrb[0].mxu0
        %v4277 = vpop.f32.mrb[0].mxu0
        %v4278 = vadd.f32 0.0, %v4277
        %v4279 = vpop.f32.mrb[0].mxu0
        %4280 = vmatprep.mubr.bf16.mxu0 0
        %4281 = vmatmul.mubr.bf16.gmra.mrb[0].mxu0 %v4175
        %v4282 = vpop.f32.mrb[0].mxu0
        %v4283 = vadd.f32 0.0, %v4282
        %v4284 = vpop.f32.mrb[0].mxu0
        %v4285 = vpop.f32.mrb[0].mxu0
        %v4286 = vpop.f32.mrb[0].mxu0
        %4287 = vmatprep.mubr.bf16.mxu0 0
        %4288 = vmatmul.mubr.bf16.gmra.mrb[0].mxu0 %v4176
        %v4289 = vpop.f32.mrb[0].mxu0
        %v4290 = vadd.f32 0.0, %v4289
        %v4291 = vpop.f32.mrb[0].mxu0
        %v4292 = vpop.f32.mrb[0].mxu0
        %v4293 = vadd.f32 0.0, %v4292
        %v4294 = vpop.f32.mrb[0].mxu0
        %4295 = vmatprep.mubr.bf16.mxu0 0
        %4296 = vmatmul.mubr.bf16.gmra.mrb[0].mxu0 %v4177
        %v4297 = vpop.f32.mrb[0].mxu0
        %v4298 = vpop.f32.mrb[0].mxu0
        %v4299 = vpop.f32.mrb[0].mxu0
        %v4300 = vadd.f32 0.0, %v4299
        %v4301 = vpop.f32.mrb[0].mxu0
        %4302 = vmatprep.mubr.bf16.mxu0 0
        %4303 = vmatmul.mubr.bf16.gmra.mrb[0].mxu0 %v4178
        %v4304 = vpop.f32.mrb[0].mxu0
        %v4305 = vadd.f32 0.0, %v4304
        %v4306 = vpop.f32.mrb[0].mxu0
        %v4307 = vpop.f32.mrb[0].mxu0
        %v4308 = vpop.f32.mrb[0].mxu0
        %4309 = vdwg.mxu0
        %v4310 = vadd.f32 %v4113, %v4268
        %v4311 = vadd.f32 %v4114, %v4271
        %v4312 = vadd.f32 %v4115, %v4278
        %v4313 = vadd.f32 %v4116, %v4283
        %v4314 = vadd.f32 %v4117, %v4290
        %v4315 = vadd.f32 %v4118, %v4293
        %v4316 = vadd.f32 %v4119, %v4300
        %v4317 = vadd.f32 %v4120, %v4305
        %v4318 = vld [vmem:[%s195 + $0xa8] sm:$0xf]
        %v4319 = vld [vmem:[%s195 + $0xac] sm:$0xf]
        %v4320 = vld [vmem:[%s195 + $0xb0] sm:$0xf]
        %v4321 = vld [vmem:[%s195 + $0xb4] sm:$0xf]
        %v4322 = vld [vmem:[%s195 + $0xb8] sm:$0xf]
        %v4323 = vld [vmem:[%s195 + $0xbc] sm:$0xf]
        %v4324 = vld [vmem:[%s195 + $0xc0] sm:$0xf]
        %v4325 = vld [vmem:[%s195 + $0xc4] sm:$0xf]
        %v4326 = vld [vmem:[%s195 + $0xc8] sm:$0xf]
        %v4327 = vld [vmem:[%s195 + $0xcc] sm:$0xf]
        %v4328 = vld [vmem:[%s195 + $0xd0] sm:$0xf]
        %v4329 = vld [vmem:[%s195 + $0xd4] sm:$0xf]
        %v4330 = vld [vmem:[%s1380] sm:$0xf]
        %v4331 = vld [vmem:[%s1380 + $0x4] sm:$0xf]
        %v4332 = vld [vmem:[%s1380 + $0x8] sm:$0xf]
        %v4333 = vld [vmem:[%s1380 + $0xc] sm:$0xf]
        %v4334 = vld [vmem:[%s1380 + $0x10] sm:$0xf]
        %v4335 = vld [vmem:[%s1380 + $0x14] sm:$0xf]
        %v4336 = vld [vmem:[%s1380 + $0x18] sm:$0xf]
        %v4337 = vld [vmem:[%s1380 + $0x1c] sm:$0xf]
        %v4338 = vld [vmem:[%s1380 + $0x20] sm:$0xf]
        %v4339 = vld [vmem:[%s1380 + $0x24] sm:$0xf]
        %v4340 = vld [vmem:[%s1380 + $0x28] sm:$0xf]
        %v4341 = vld [vmem:[%s1380 + $0x2c] sm:$0xf]
        %v4342 = vld [vmem:[%s1380 + $0x30] sm:$0xf]
        %v4343 = vld [vmem:[%s1380 + $0x34] sm:$0xf]
        %v4344 = vld [vmem:[%s1380 + $0x38] sm:$0xf]
        %v4345 = vld [vmem:[%s1380 + $0x3c] sm:$0xf]
        %v4358 = vunpack.c.l.b16 %v4318
        %v4359 = vunpack.c.l.b16 %v4319
        %v4360 = vunpack.c.l.b16 %v4320
        %v4361 = vunpack.c.l.b16 %v4321
        %v4362 = vunpack.c.l.b16 %v4322
        %v4363 = vunpack.c.l.b16 %v4323
        %v4364 = vunpack.c.l.b16 %v4324
        %v4365 = vunpack.c.l.b16 %v4325
        %v4366 = vunpack.c.l.b16 %v4326
        %v4367 = vunpack.c.l.b16 %v4327
        %v4368 = vunpack.c.l.b16 %v4328
        %v4369 = vunpack.c.l.b16 %v4329
        %v4370 = vpack.c.b16 %v4359, %v4358
        %v4371 = vpack.c.b16 %v4361, %v4360
        %v4372 = vpack.c.b16 %v4363, %v4362
        %v4373 = vpack.c.b16 %v4365, %v4364
        %v4374 = vpack.c.b16 %v4367, %v4366
        %v4375 = vpack.c.b16 %v4369, %v4368
        %v4398 = vunpack.c.l.b16 %v4330
        %v4399 = vunpack.c.l.b16 %v4331
        %v4400 = vunpack.c.l.b16 %v4332
        %v4401 = vunpack.c.l.b16 %v4333
        %v4402 = vunpack.c.l.b16 %v4334
        %v4403 = vunpack.c.l.b16 %v4335
        %v4404 = vunpack.c.l.b16 %v4336
        %v4405 = vunpack.c.l.b16 %v4337
        %v4406 = vunpack.c.l.b16 %v4338
        %v4407 = vunpack.c.l.b16 %v4339
        %v4408 = vunpack.c.l.b16 %v4340
        %v4409 = vunpack.c.l.b16 %v4341
        %v4410 = vunpack.c.l.b16 %v4342
        %v4411 = vunpack.c.l.b16 %v4343
        %v4412 = vunpack.c.l.b16 %v4344
        %v4413 = vunpack.c.l.b16 %v4345
        %v4414 = vpack.c.b16 %v4399, %v4398
        %v4415 = vpack.c.b16 %v4401, %v4400
        %v4416 = vpack.c.b16 %v4403, %v4402
        %v4417 = vpack.c.b16 %v4405, %v4404
        %v4418 = vpack.c.b16 %v4407, %v4406
        %v4419 = vpack.c.b16 %v4409, %v4408
        %v4420 = vpack.c.b16 %v4411, %v4410
        %v4421 = vpack.c.b16 %v4413, %v4412
        %4430 = vmatprep.subr.bf16.mxu0 0
        %4431 = vmatpush1.bf16.msra.mxu0 %v4414
        %4432 = vmatprep.subr.bf16.mxu0 0
        %4433 = vmatpush1.bf16.msra.mxu0 %v4415
        %4434 = vmatprep.subr.bf16.mxu0 0
        %4435 = vmatpush1.bf16.msra.mxu0 %v4416
        %4436 = vmatprep.subr.bf16.mxu0 0
        %4437 = vmatpush1.bf16.msra.mxu0 %v4417
        %4438 = vmatprep.subr.bf16.mxu0 0
        %4439 = vmatpush1.bf16.msra.mxu0 %v4418
        %4440 = vmatprep.subr.bf16.mxu0 0
        %4441 = vmatpush1.bf16.msra.mxu0 %v4419
        %4442 = vmatprep.subr.bf16.mxu0 0
        %4443 = vmatpush1.bf16.msra.mxu0 %v4420
        %4444 = vmatprep.subr.bf16.mxu0 0
        %4445 = vmatpush1.bf16.msra.mxu0 %v4421
        %4446 = vmatprep.subr.bf16.mxu0 0
        %4447 = vmatpush1.bf16.msra.mxu0 0
        %4448 = vmatprep.subr.bf16.mxu0 0
        %4449 = vmatpush1.bf16.msra.mxu0 0
        %4450 = vmatprep.subr.bf16.mxu0 0
        %4451 = vmatpush1.bf16.msra.mxu0 0
        %4452 = vmatprep.subr.bf16.mxu0 0
        %4453 = vmatpush1.bf16.msra.mxu0 0
        %4454 = vmatprep.subr.bf16.mxu0 0
        %4455 = vmatpush1.bf16.msra.mxu0 0
        %4456 = vmatprep.subr.bf16.mxu0 0
        %4457 = vmatpush1.bf16.msra.mxu0 0
        %4458 = vmatprep.subr.bf16.mxu0 0
        %4459 = vmatpush1.bf16.msra.mxu0 0
        %4460 = vmatprep.subr.bf16.mxu0 0
        %4461 = vmatpush1.bf16.msra.mxu0 0
        %4462 = vmatprep.mubr.bf16.mxu0 0
        %4463 = vmatmul.mubr.bf16.gmra.mrb[0].mxu0 %v4370
        %v4464 = vpop.f32.mrb[0].mxu0
        %v4465 = vadd.f32 0.0, %v4464
        %v4466 = vpop.f32.mrb[0].mxu0
        %v4467 = vpop.f32.mrb[0].mxu0
        %v4468 = vadd.f32 0.0, %v4467
        %v4469 = vpop.f32.mrb[0].mxu0
        %4470 = vmatprep.mubr.bf16.mxu0 0
        %4471 = vmatmul.mubr.bf16.gmra.mrb[0].mxu0 %v4371
        %v4472 = vpop.f32.mrb[0].mxu0
        %v4473 = vpop.f32.mrb[0].mxu0
        %v4474 = vpop.f32.mrb[0].mxu0
        %v4475 = vadd.f32 0.0, %v4474
        %v4476 = vpop.f32.mrb[0].mxu0
        %4477 = vmatprep.mubr.bf16.mxu0 0
        %4478 = vmatmul.mubr.bf16.gmra.mrb[0].mxu0 %v4372
        %v4479 = vpop.f32.mrb[0].mxu0
        %v4480 = vadd.f32 0.0, %v4479
        %v4481 = vpop.f32.mrb[0].mxu0
        %v4482 = vpop.f32.mrb[0].mxu0
        %v4483 = vpop.f32.mrb[0].mxu0
        %4484 = vmatprep.mubr.bf16.mxu0 0
        %4485 = vmatmul.mubr.bf16.gmra.mrb[0].mxu0 %v4373
        %v4486 = vpop.f32.mrb[0].mxu0
        %v4487 = vadd.f32 0.0, %v4486
        %v4488 = vpop.f32.mrb[0].mxu0
        %v4489 = vpop.f32.mrb[0].mxu0
        %v4490 = vadd.f32 0.0, %v4489
        %v4491 = vpop.f32.mrb[0].mxu0
        %4492 = vmatprep.mubr.bf16.mxu0 0
        %4493 = vmatmul.mubr.bf16.gmra.mrb[0].mxu0 %v4374
        %v4494 = vpop.f32.mrb[0].mxu0
        %v4495 = vpop.f32.mrb[0].mxu0
        %v4496 = vpop.f32.mrb[0].mxu0
        %v4497 = vadd.f32 0.0, %v4496
        %v4498 = vpop.f32.mrb[0].mxu0
        %4499 = vmatprep.mubr.bf16.mxu0 0
        %4500 = vmatmul.mubr.bf16.gmra.mrb[0].mxu0 %v4375
        %v4501 = vpop.f32.mrb[0].mxu0
        %v4502 = vadd.f32 0.0, %v4501
        %v4503 = vpop.f32.mrb[0].mxu0
        %v4504 = vpop.f32.mrb[0].mxu0
        %v4505 = vpop.f32.mrb[0].mxu0
        %4506 = vdwg.mxu0
        %v4507 = vadd.f32 %v4310, %v4465
        %v4508 = vadd.f32 %v4311, %v4468
        %v4509 = vadd.f32 %v4312, %v4475
        %v4510 = vadd.f32 %v4313, %v4480
        %v4511 = vadd.f32 %v4314, %v4487
        %v4512 = vadd.f32 %v4315, %v4490
        %v4513 = vadd.f32 %v4316, %v4497
        %v4514 = vadd.f32 %v4317, %v4502
        %v4515 = vld [vmem:[%s2] sm:$0x1]
        %v4516 = vlaneseq
        %v4517 = vshrl.u32 %v4516, 7
        %v4518 = vsub.s32 0, %v4517
        %v4519 = vrot.slane %v4515, %v4518
        %v4520 = vmul.f32 %v4507, %v4519
        %v4521 = vmul.f32 %v4508, %v4519
        %v4522 = vmul.f32 %v4509, %v4519
        %v4523 = vmul.f32 %v4510, %v4519
        %v4524 = vmul.f32 %v4511, %v4519
        %v4525 = vmul.f32 %v4512, %v4519
        %v4526 = vmul.f32 %v4513, %v4519
        %v4527 = vmul.f32 %v4514, %v4519
        %v4528 = vld [vmem:[%s3] sm:$0x1]
        %v4529 = vlaneseq
        %v4530 = vshrl.u32 %v4529, 7
        %v4531 = vsub.s32 0, %v4530
        %v4532 = vrot.slane %v4528, %v4531
        %v4533 = vadd.f32 %v4520, %v4532
        %v4534 = vadd.f32 %v4521, %v4532
        %v4535 = vadd.f32 %v4522, %v4532
        %v4536 = vadd.f32 %v4523, %v4532
        %v4537 = vadd.f32 %v4524, %v4532
        %v4538 = vadd.f32 %v4525, %v4532
        %v4539 = vadd.f32 %v4526, %v4532
        %v4540 = vadd.f32 %v4527, %v4532
        %v4541 = vmax.f32 %v4533, 0.0
        %v4542 = vmax.f32 %v4534, 0.0
        %v4543 = vmax.f32 %v4535, 0.0
        %v4544 = vmax.f32 %v4536, 0.0
        %v4545 = vmax.f32 %v4537, 0.0
        %v4546 = vmax.f32 %v4538, 0.0
        %v4547 = vmax.f32 %v4539, 0.0
        %v4548 = vmax.f32 %v4540, 0.0
        %v4551 = vrot.slane %v4541, 4
        %v4552 = vrot.slane %v4542, 4
        %v4553 = vsel %vm1602, %v4551, %v4552
        %v4557 = vsel %vm1602, 0.0, %v4551
        %v4558 = vsel %vm1602, %v4552, 0.0
        %v4559 = vpack.c.bf16 %v4553, %v4557
        %v4560 = vpack.c.bf16 %v4558, %v4558
        %v4563 = vunpack.c.l.b16 %v4559
        %v4564 = vunpack.c.h.b16 %v4559
        %v4565 = vunpack.c.l.b16 %v4560
        %v4566 = vpack.c.b16 %v4563, %v4563
        %v4567 = vpack.c.b16 %v4564, %v4564
        %v4568 = vpack.c.b16 %v4565, %v4565
        %4572 = vst [vmem:[#allocation2 + $0x90] sm:$0xf] %v4566
        %4573 = vst [vmem:[#allocation2 + $0x94] sm:$0xf] %v4567
        %4574 = vst [vmem:[#allocation2 + $0x98] sm:$0xf] %v4568
        %v4577 = vrot.slane %v4543, 4
        %v4578 = vrot.slane %v4544, 4
        %v4579 = vsel %vm1602, %v4577, %v4578
        %v4583 = vsel %vm1602, 0.0, %v4577
        %v4584 = vsel %vm1602, %v4578, 0.0
        %v4585 = vpack.c.bf16 %v4579, %v4583
        %v4586 = vpack.c.bf16 %v4584, %v4584
        %v4589 = vunpack.c.l.b16 %v4585
        %v4590 = vunpack.c.h.b16 %v4585
        %v4591 = vunpack.c.l.b16 %v4586
        %v4592 = vpack.c.b16 %v4589, %v4589
        %v4593 = vpack.c.b16 %v4590, %v4590
        %v4594 = vpack.c.b16 %v4591, %v4591
        %4598 = vst [vmem:[#allocation2 + $0x9c] sm:$0xf] %v4592
        %4599 = vst [vmem:[#allocation2 + $0xa0] sm:$0xf] %v4593
        %4600 = vst [vmem:[#allocation2 + $0xa4] sm:$0xf] %v4594
        %v4603 = vrot.slane %v4545, 4
        %v4604 = vrot.slane %v4546, 4
        %v4605 = vsel %vm1602, %v4603, %v4604
        %v4609 = vsel %vm1602, 0.0, %v4603
        %v4610 = vsel %vm1602, %v4604, 0.0
        %v4611 = vpack.c.bf16 %v4605, %v4609
        %v4612 = vpack.c.bf16 %v4610, %v4610
        %v4615 = vunpack.c.l.b16 %v4611
        %v4616 = vunpack.c.h.b16 %v4611
        %v4617 = vunpack.c.l.b16 %v4612
        %v4618 = vpack.c.b16 %v4615, %v4615
        %v4619 = vpack.c.b16 %v4616, %v4616
        %v4620 = vpack.c.b16 %v4617, %v4617
        %4624 = vst [vmem:[#allocation2 + $0xa8] sm:$0xf] %v4618
        %4625 = vst [vmem:[#allocation2 + $0xac] sm:$0xf] %v4619
        %4626 = vst [vmem:[#allocation2 + $0xb0] sm:$0xf] %v4620
        %v4629 = vrot.slane %v4547, 4
        %v4630 = vrot.slane %v4548, 4
        %v4631 = vsel %vm1602, %v4629, %v4630
        %v4635 = vsel %vm1602, 0.0, %v4629
        %v4636 = vsel %vm1602, %v4630, 0.0
        %v4637 = vpack.c.bf16 %v4631, %v4635
        %v4638 = vpack.c.bf16 %v4636, %v4636
        %v4641 = vunpack.c.l.b16 %v4637
        %v4642 = vunpack.c.h.b16 %v4637
        %v4643 = vunpack.c.l.b16 %v4638
        %v4644 = vpack.c.b16 %v4641, %v4641
        %v4645 = vpack.c.b16 %v4642, %v4642
        %v4646 = vpack.c.b16 %v4643, %v4643
        %4650 = vst [vmem:[#allocation2 + $0xb4] sm:$0xf] %v4644
        %4651 = vst [vmem:[#allocation2 + $0xb8] sm:$0xf] %v4645
        %4652 = vst [vmem:[#allocation2 + $0xbc] sm:$0xf] %v4646
        %v4653 = vld [vmem:[%s195 + $0x90] sm:$0xf]
        %v4654 = vld [vmem:[%s195 + $0x94] sm:$0xf]
        %v4655 = vld [vmem:[%s195 + $0x98] sm:$0xf]
        %v4656 = vld [vmem:[%s195 + $0x9c] sm:$0xf]
        %v4657 = vld [vmem:[%s195 + $0xa0] sm:$0xf]
        %v4658 = vld [vmem:[%s195 + $0xa4] sm:$0xf]
        %v4659 = vld [vmem:[%s195 + $0xa8] sm:$0xf]
        %v4660 = vld [vmem:[%s195 + $0xac] sm:$0xf]
        %v4661 = vld [vmem:[%s195 + $0xb0] sm:$0xf]
        %v4662 = vld [vmem:[%s195 + $0xb4] sm:$0xf]
        %v4663 = vld [vmem:[%s195 + $0xb8] sm:$0xf]
        %v4664 = vld [vmem:[%s195 + $0xbc] sm:$0xf]
        %v4665 = vld [vmem:[%s1] sm:$0xf]
        %v4666 = vld [vmem:[%s1 + $0x4] sm:$0xf]
        %v4667 = vld [vmem:[%s1 + $0x8] sm:$0xf]
        %v4668 = vld [vmem:[%s1 + $0xc] sm:$0xf]
        %v4669 = vld [vmem:[%s1 + $0x10] sm:$0xf]
        %v4670 = vld [vmem:[%s1 + $0x14] sm:$0xf]
        %v4671 = vld [vmem:[%s1 + $0x18] sm:$0xf]
        %v4672 = vld [vmem:[%s1 + $0x1c] sm:$0xf]
        %v4673 = vld [vmem:[%s1 + $0x20] sm:$0xf]
        %v4674 = vld [vmem:[%s1 + $0x24] sm:$0xf]
        %v4675 = vld [vmem:[%s1 + $0x28] sm:$0xf]
        %v4676 = vld [vmem:[%s1 + $0x2c] sm:$0xf]
        %v4677 = vld [vmem:[%s1 + $0x30] sm:$0xf]
        %v4678 = vld [vmem:[%s1 + $0x34] sm:$0xf]
        %v4679 = vld [vmem:[%s1 + $0x38] sm:$0xf]
        %v4680 = vld [vmem:[%s1 + $0x3c] sm:$0xf]
        %v4681 = vld [vmem:[%s195 + $0xc0] sm:$0xf]
        %v4682 = vld [vmem:[%s195 + $0xc4] sm:$0xf]
        %v4683 = vld [vmem:[%s195 + $0xc8] sm:$0xf]
        %v4684 = vld [vmem:[%s255] sm:$0xf]
        %v4685 = vld [vmem:[%s255 + $0x4] sm:$0xf]
        %v4686 = vld [vmem:[%s255 + $0x8] sm:$0xf]
        %v4687 = vld [vmem:[%s255 + $0xc] sm:$0xf]
        %v4688 = vld [vmem:[%s255 + $0x10] sm:$0xf]
        %v4689 = vld [vmem:[%s255 + $0x14] sm:$0xf]
        %v4690 = vld [vmem:[%s255 + $0x18] sm:$0xf]
        %v4691 = vld [vmem:[%s255 + $0x1c] sm:$0xf]
        %v4692 = vld [vmem:[%s255 + $0x20] sm:$0xf]
        %v4693 = vld [vmem:[%s255 + $0x24] sm:$0xf]
        %v4694 = vld [vmem:[%s255 + $0x28] sm:$0xf]
        %v4695 = vld [vmem:[%s255 + $0x2c] sm:$0xf]
        %v4696 = vld [vmem:[%s255 + $0x30] sm:$0xf]
        %v4697 = vld [vmem:[%s255 + $0x34] sm:$0xf]
        %v4698 = vld [vmem:[%s255 + $0x38] sm:$0xf]
        %v4699 = vld [vmem:[%s255 + $0x3c] sm:$0xf]
        %v4712 = vunpack.c.l.b16 %v4656
        %v4713 = vunpack.c.l.b16 %v4657
        %v4714 = vunpack.c.l.b16 %v4658
        %v4715 = vunpack.c.l.b16 %v4659
        %v4716 = vunpack.c.l.b16 %v4660
        %v4717 = vunpack.c.l.b16 %v4661
        %v4718 = vunpack.c.l.b16 %v4662
        %v4719 = vunpack.c.l.b16 %v4663
        %v4720 = vunpack.c.l.b16 %v4664
        %v4721 = vunpack.c.l.b16 %v4681
        %v4722 = vunpack.c.l.b16 %v4682
        %v4723 = vunpack.c.l.b16 %v4683
        %v4724 = vpack.c.b16 %v4713, %v4712
        %v4725 = vpack.c.b16 %v4715, %v4714
        %v4726 = vpack.c.b16 %v4717, %v4716
        %v4727 = vpack.c.b16 %v4719, %v4718
        %v4728 = vpack.c.b16 %v4721, %v4720
        %v4729 = vpack.c.b16 %v4723, %v4722
        %v4752 = vunpack.c.l.b16 %v4684
        %v4753 = vunpack.c.l.b16 %v4685
        %v4754 = vunpack.c.l.b16 %v4686
        %v4755 = vunpack.c.l.b16 %v4687
        %v4756 = vunpack.c.l.b16 %v4688
        %v4757 = vunpack.c.l.b16 %v4689
        %v4758 = vunpack.c.l.b16 %v4690
        %v4759 = vunpack.c.l.b16 %v4691
        %v4760 = vunpack.c.l.b16 %v4692
        %v4761 = vunpack.c.l.b16 %v4693
        %v4762 = vunpack.c.l.b16 %v4694
        %v4763 = vunpack.c.l.b16 %v4695
        %v4764 = vunpack.c.l.b16 %v4696
        %v4765 = vunpack.c.l.b16 %v4697
        %v4766 = vunpack.c.l.b16 %v4698
        %v4767 = vunpack.c.l.b16 %v4699
        %v4768 = vpack.c.b16 %v4753, %v4752
        %v4769 = vpack.c.b16 %v4755, %v4754
        %v4770 = vpack.c.b16 %v4757, %v4756
        %v4771 = vpack.c.b16 %v4759, %v4758
        %v4772 = vpack.c.b16 %v4761, %v4760
        %v4773 = vpack.c.b16 %v4763, %v4762
        %v4774 = vpack.c.b16 %v4765, %v4764
        %v4775 = vpack.c.b16 %v4767, %v4766
        %4784 = vmatprep.subr.bf16.mxu0 0
        %4785 = vmatpush1.bf16.msra.mxu0 %v4768
        %4786 = vmatprep.subr.bf16.mxu0 0
        %4787 = vmatpush1.bf16.msra.mxu0 %v4769
        %4788 = vmatprep.subr.bf16.mxu0 0
        %4789 = vmatpush1.bf16.msra.mxu0 %v4770
        %4790 = vmatprep.subr.bf16.mxu0 0
        %4791 = vmatpush1.bf16.msra.mxu0 %v4771
        %4792 = vmatprep.subr.bf16.mxu0 0
        %4793 = vmatpush1.bf16.msra.mxu0 %v4772
        %4794 = vmatprep.subr.bf16.mxu0 0
        %4795 = vmatpush1.bf16.msra.mxu0 %v4773
        %4796 = vmatprep.subr.bf16.mxu0 0
        %4797 = vmatpush1.bf16.msra.mxu0 %v4774
        %4798 = vmatprep.subr.bf16.mxu0 0
        %4799 = vmatpush1.bf16.msra.mxu0 %v4775
        %4800 = vmatprep.subr.bf16.mxu0 0
        %4801 = vmatpush1.bf16.msra.mxu0 0
        %4802 = vmatprep.subr.bf16.mxu0 0
        %4803 = vmatpush1.bf16.msra.mxu0 0
        %4804 = vmatprep.subr.bf16.mxu0 0
        %4805 = vmatpush1.bf16.msra.mxu0 0
        %4806 = vmatprep.subr.bf16.mxu0 0
        %4807 = vmatpush1.bf16.msra.mxu0 0
        %4808 = vmatprep.subr.bf16.mxu0 0
        %4809 = vmatpush1.bf16.msra.mxu0 0
        %4810 = vmatprep.subr.bf16.mxu0 0
        %4811 = vmatpush1.bf16.msra.mxu0 0
        %4812 = vmatprep.subr.bf16.mxu0 0
        %4813 = vmatpush1.bf16.msra.mxu0 0
        %4814 = vmatprep.subr.bf16.mxu0 0
        %4815 = vmatpush1.bf16.msra.mxu0 0
        %4816 = vmatprep.mubr.bf16.mxu0 0
        %4817 = vmatmul.mubr.bf16.gmra.mrb[0].mxu0 %v4724
        %v4818 = vpop.f32.mrb[0].mxu0
        %v4819 = vadd.f32 0.0, %v4818
        %v4820 = vpop.f32.mrb[0].mxu0
        %v4821 = vpop.f32.mrb[0].mxu0
        %v4822 = vadd.f32 0.0, %v4821
        %v4823 = vpop.f32.mrb[0].mxu0
        %4824 = vmatprep.mubr.bf16.mxu0 0
        %4825 = vmatmul.mubr.bf16.gmra.mrb[0].mxu0 %v4725
        %v4826 = vpop.f32.mrb[0].mxu0
        %v4827 = vpop.f32.mrb[0].mxu0
        %v4828 = vpop.f32.mrb[0].mxu0
        %v4829 = vadd.f32 0.0, %v4828
        %v4830 = vpop.f32.mrb[0].mxu0
        %4831 = vmatprep.mubr.bf16.mxu0 0
        %4832 = vmatmul.mubr.bf16.gmra.mrb[0].mxu0 %v4726
        %v4833 = vpop.f32.mrb[0].mxu0
        %v4834 = vadd.f32 0.0, %v4833
        %v4835 = vpop.f32.mrb[0].mxu0
        %v4836 = vpop.f32.mrb[0].mxu0
        %v4837 = vpop.f32.mrb[0].mxu0
        %4838 = vmatprep.mubr.bf16.mxu0 0
        %4839 = vmatmul.mubr.bf16.gmra.mrb[0].mxu0 %v4727
        %v4840 = vpop.f32.mrb[0].mxu0
        %v4841 = vadd.f32 0.0, %v4840
        %v4842 = vpop.f32.mrb[0].mxu0
        %v4843 = vpop.f32.mrb[0].mxu0
        %v4844 = vadd.f32 0.0, %v4843
        %v4845 = vpop.f32.mrb[0].mxu0
        %4846 = vmatprep.mubr.bf16.mxu0 0
        %4847 = vmatmul.mubr.bf16.gmra.mrb[0].mxu0 %v4728
        %v4848 = vpop.f32.mrb[0].mxu0
        %v4849 = vpop.f32.mrb[0].mxu0
        %v4850 = vpop.f32.mrb[0].mxu0
        %v4851 = vadd.f32 0.0, %v4850
        %v4852 = vpop.f32.mrb[0].mxu0
        %4853 = vmatprep.mubr.bf16.mxu0 0
        %4854 = vmatmul.mubr.bf16.gmra.mrb[0].mxu0 %v4729
        %v4855 = vpop.f32.mrb[0].mxu0
        %v4856 = vadd.f32 0.0, %v4855
        %v4857 = vpop.f32.mrb[0].mxu0
        %v4858 = vpop.f32.mrb[0].mxu0
        %v4859 = vpop.f32.mrb[0].mxu0
        %4860 = vdwg.mxu0
        %v4864 = vunpack.c.l.b16 %v4653
        %v4865 = vunpack.c.l.b16 %v4654
        %v4866 = vunpack.c.l.b16 %v4655
        %v4867 = vpack.c.b16 %v4865, %v4864
        %v4868 = vpack.c.b16 %v4712, %v4866
        %v4869 = vpack.c.b16 %v4714, %v4713
        %v4870 = vpack.c.b16 %v4716, %v4715
        %v4871 = vpack.c.b16 %v4718, %v4717
        %v4872 = vpack.c.b16 %v4720, %v4719
        %v4895 = vunpack.c.l.b16 %v4665
        %v4896 = vunpack.c.l.b16 %v4666
        %v4897 = vunpack.c.l.b16 %v4667
        %v4898 = vunpack.c.l.b16 %v4668
        %v4899 = vunpack.c.l.b16 %v4669
        %v4900 = vunpack.c.l.b16 %v4670
        %v4901 = vunpack.c.l.b16 %v4671
        %v4902 = vunpack.c.l.b16 %v4672
        %v4903 = vunpack.c.l.b16 %v4673
        %v4904 = vunpack.c.l.b16 %v4674
        %v4905 = vunpack.c.l.b16 %v4675
        %v4906 = vunpack.c.l.b16 %v4676
        %v4907 = vunpack.c.l.b16 %v4677
        %v4908 = vunpack.c.l.b16 %v4678
        %v4909 = vunpack.c.l.b16 %v4679
        %v4910 = vunpack.c.l.b16 %v4680
        %v4911 = vpack.c.b16 %v4896, %v4895
        %v4912 = vpack.c.b16 %v4898, %v4897
        %v4913 = vpack.c.b16 %v4900, %v4899
        %v4914 = vpack.c.b16 %v4902, %v4901
        %v4915 = vpack.c.b16 %v4904, %v4903
        %v4916 = vpack.c.b16 %v4906, %v4905
        %v4917 = vpack.c.b16 %v4908, %v4907
        %v4918 = vpack.c.b16 %v4910, %v4909
        %4927 = vmatprep.subr.bf16.mxu0 0
        %4928 = vmatpush1.bf16.msra.mxu0 %v4911
        %4929 = vmatprep.subr.bf16.mxu0 0
        %4930 = vmatpush1.bf16.msra.mxu0 %v4912
        %4931 = vmatprep.subr.bf16.mxu0 0
        %4932 = vmatpush1.bf16.msra.mxu0 %v4913
        %4933 = vmatprep.subr.bf16.mxu0 0
        %4934 = vmatpush1.bf16.msra.mxu0 %v4914
        %4935 = vmatprep.subr.bf16.mxu0 0
        %4936 = vmatpush1.bf16.msra.mxu0 %v4915
        %4937 = vmatprep.subr.bf16.mxu0 0
        %4938 = vmatpush1.bf16.msra.mxu0 %v4916
        %4939 = vmatprep.subr.bf16.mxu0 0
        %4940 = vmatpush1.bf16.msra.mxu0 %v4917
        %4941 = vmatprep.subr.bf16.mxu0 0
        %4942 = vmatpush1.bf16.msra.mxu0 %v4918
        %4943 = vmatprep.subr.bf16.mxu0 0
        %4944 = vmatpush1.bf16.msra.mxu0 0
        %4945 = vmatprep.subr.bf16.mxu0 0
        %4946 = vmatpush1.bf16.msra.mxu0 0
        %4947 = vmatprep.subr.bf16.mxu0 0
        %4948 = vmatpush1.bf16.msra.mxu0 0
        %4949 = vmatprep.subr.bf16.mxu0 0
        %4950 = vmatpush1.bf16.msra.mxu0 0
        %4951 = vmatprep.subr.bf16.mxu0 0
        %4952 = vmatpush1.bf16.msra.mxu0 0
        %4953 = vmatprep.subr.bf16.mxu0 0
        %4954 = vmatpush1.bf16.msra.mxu0 0
        %4955 = vmatprep.subr.bf16.mxu0 0
        %4956 = vmatpush1.bf16.msra.mxu0 0
        %4957 = vmatprep.subr.bf16.mxu0 0
        %4958 = vmatpush1.bf16.msra.mxu0 0
        %4959 = vmatprep.mubr.bf16.mxu0 0
        %4960 = vmatmul.mubr.bf16.gmra.mrb[0].mxu0 %v4867
        %v4961 = vpop.f32.mrb[0].mxu0
        %v4962 = vadd.f32 %v4819, %v4961
        %v4963 = vpop.f32.mrb[0].mxu0
        %v4964 = vpop.f32.mrb[0].mxu0
        %v4965 = vadd.f32 %v4822, %v4964
        %v4966 = vpop.f32.mrb[0].mxu0
        %4967 = vmatprep.mubr.bf16.mxu0 0
        %4968 = vmatmul.mubr.bf16.gmra.mrb[0].mxu0 %v4868
        %v4969 = vpop.f32.mrb[0].mxu0
        %v4970 = vpop.f32.mrb[0].mxu0
        %v4971 = vpop.f32.mrb[0].mxu0
        %v4972 = vadd.f32 %v4829, %v4971
        %v4973 = vpop.f32.mrb[0].mxu0
        %4974 = vmatprep.mubr.bf16.mxu0 0
        %4975 = vmatmul.mubr.bf16.gmra.mrb[0].mxu0 %v4869
        %v4976 = vpop.f32.mrb[0].mxu0
        %v4977 = vadd.f32 %v4834, %v4976
        %v4978 = vpop.f32.mrb[0].mxu0
        %v4979 = vpop.f32.mrb[0].mxu0
        %v4980 = vpop.f32.mrb[0].mxu0
        %4981 = vmatprep.mubr.bf16.mxu0 0
        %4982 = vmatmul.mubr.bf16.gmra.mrb[0].mxu0 %v4870
        %v4983 = vpop.f32.mrb[0].mxu0
        %v4984 = vadd.f32 %v4841, %v4983
        %v4985 = vpop.f32.mrb[0].mxu0
        %v4986 = vpop.f32.mrb[0].mxu0
        %v4987 = vadd.f32 %v4844, %v4986
        %v4988 = vpop.f32.mrb[0].mxu0
        %4989 = vmatprep.mubr.bf16.mxu0 0
        %4990 = vmatmul.mubr.bf16.gmra.mrb[0].mxu0 %v4871
        %v4991 = vpop.f32.mrb[0].mxu0
        %v4992 = vpop.f32.mrb[0].mxu0
        %v4993 = vpop.f32.mrb[0].mxu0
        %v4994 = vadd.f32 %v4851, %v4993
        %v4995 = vpop.f32.mrb[0].mxu0
        %4996 = vmatprep.mubr.bf16.mxu0 0
        %4997 = vmatmul.mubr.bf16.gmra.mrb[0].mxu0 %v4872
        %v4998 = vpop.f32.mrb[0].mxu0
        %v4999 = vadd.f32 %v4856, %v4998
        %v5000 = vpop.f32.mrb[0].mxu0
        %v5001 = vpop.f32.mrb[0].mxu0
        %v5002 = vpop.f32.mrb[0].mxu0
        %5003 = vdwg.mxu0
        %v5004 = vld [vmem:[%s195 + $0xa8] sm:$0xf]
        %v5005 = vld [vmem:[%s195 + $0xac] sm:$0xf]
        %v5006 = vld [vmem:[%s195 + $0xb0] sm:$0xf]
        %v5007 = vld [vmem:[%s195 + $0xb4] sm:$0xf]
        %v5008 = vld [vmem:[%s195 + $0xb8] sm:$0xf]
        %v5009 = vld [vmem:[%s195 + $0xbc] sm:$0xf]
        %v5010 = vld [vmem:[%s195 + $0xc0] sm:$0xf]
        %v5011 = vld [vmem:[%s195 + $0xc4] sm:$0xf]
        %v5012 = vld [vmem:[%s195 + $0xc8] sm:$0xf]
        %v5013 = vld [vmem:[%s195 + $0xcc] sm:$0xf]
        %v5014 = vld [vmem:[%s195 + $0xd0] sm:$0xf]
        %v5015 = vld [vmem:[%s195 + $0xd4] sm:$0xf]
        %v5016 = vld [vmem:[%s588] sm:$0xf]
        %v5017 = vld [vmem:[%s588 + $0x4] sm:$0xf]
        %v5018 = vld [vmem:[%s588 + $0x8] sm:$0xf]
        %v5019 = vld [vmem:[%s588 + $0xc] sm:$0xf]
        %v5020 = vld [vmem:[%s588 + $0x10] sm:$0xf]
        %v5021 = vld [vmem:[%s588 + $0x14] sm:$0xf]
        %v5022 = vld [vmem:[%s588 + $0x18] sm:$0xf]
        %v5023 = vld [vmem:[%s588 + $0x1c] sm:$0xf]
        %v5024 = vld [vmem:[%s588 + $0x20] sm:$0xf]
        %v5025 = vld [vmem:[%s588 + $0x24] sm:$0xf]
        %v5026 = vld [vmem:[%s588 + $0x28] sm:$0xf]
        %v5027 = vld [vmem:[%s588 + $0x2c] sm:$0xf]
        %v5028 = vld [vmem:[%s588 + $0x30] sm:$0xf]
        %v5029 = vld [vmem:[%s588 + $0x34] sm:$0xf]
        %v5030 = vld [vmem:[%s588 + $0x38] sm:$0xf]
        %v5031 = vld [vmem:[%s588 + $0x3c] sm:$0xf]
        %v5044 = vunpack.c.l.b16 %v5004
        %v5045 = vunpack.c.l.b16 %v5005
        %v5046 = vunpack.c.l.b16 %v5006
        %v5047 = vunpack.c.l.b16 %v5007
        %v5048 = vunpack.c.l.b16 %v5008
        %v5049 = vunpack.c.l.b16 %v5009
        %v5050 = vunpack.c.l.b16 %v5010
        %v5051 = vunpack.c.l.b16 %v5011
        %v5052 = vunpack.c.l.b16 %v5012
        %v5053 = vunpack.c.l.b16 %v5013
        %v5054 = vunpack.c.l.b16 %v5014
        %v5055 = vunpack.c.l.b16 %v5015
        %v5056 = vpack.c.b16 %v5045, %v5044
        %v5057 = vpack.c.b16 %v5047, %v5046
        %v5058 = vpack.c.b16 %v5049, %v5048
        %v5059 = vpack.c.b16 %v5051, %v5050
        %v5060 = vpack.c.b16 %v5053, %v5052
        %v5061 = vpack.c.b16 %v5055, %v5054
        %v5084 = vunpack.c.l.b16 %v5016
        %v5085 = vunpack.c.l.b16 %v5017
        %v5086 = vunpack.c.l.b16 %v5018
        %v5087 = vunpack.c.l.b16 %v5019
        %v5088 = vunpack.c.l.b16 %v5020
        %v5089 = vunpack.c.l.b16 %v5021
        %v5090 = vunpack.c.l.b16 %v5022
        %v5091 = vunpack.c.l.b16 %v5023
        %v5092 = vunpack.c.l.b16 %v5024
        %v5093 = vunpack.c.l.b16 %v5025
        %v5094 = vunpack.c.l.b16 %v5026
        %v5095 = vunpack.c.l.b16 %v5027
        %v5096 = vunpack.c.l.b16 %v5028
        %v5097 = vunpack.c.l.b16 %v5029
        %v5098 = vunpack.c.l.b16 %v5030
        %v5099 = vunpack.c.l.b16 %v5031
        %v5100 = vpack.c.b16 %v5085, %v5084
        %v5101 = vpack.c.b16 %v5087, %v5086
        %v5102 = vpack.c.b16 %v5089, %v5088
        %v5103 = vpack.c.b16 %v5091, %v5090
        %v5104 = vpack.c.b16 %v5093, %v5092
        %v5105 = vpack.c.b16 %v5095, %v5094
        %v5106 = vpack.c.b16 %v5097, %v5096
        %v5107 = vpack.c.b16 %v5099, %v5098
        %5116 = vmatprep.subr.bf16.mxu0 0
        %5117 = vmatpush1.bf16.msra.mxu0 %v5100
        %5118 = vmatprep.subr.bf16.mxu0 0
        %5119 = vmatpush1.bf16.msra.mxu0 %v5101
        %5120 = vmatprep.subr.bf16.mxu0 0
        %5121 = vmatpush1.bf16.msra.mxu0 %v5102
        %5122 = vmatprep.subr.bf16.mxu0 0
        %5123 = vmatpush1.bf16.msra.mxu0 %v5103
        %5124 = vmatprep.subr.bf16.mxu0 0
        %5125 = vmatpush1.bf16.msra.mxu0 %v5104
        %5126 = vmatprep.subr.bf16.mxu0 0
        %5127 = vmatpush1.bf16.msra.mxu0 %v5105
        %5128 = vmatprep.subr.bf16.mxu0 0
        %5129 = vmatpush1.bf16.msra.mxu0 %v5106
        %5130 = vmatprep.subr.bf16.mxu0 0
        %5131 = vmatpush1.bf16.msra.mxu0 %v5107
        %5132 = vmatprep.subr.bf16.mxu0 0
        %5133 = vmatpush1.bf16.msra.mxu0 0
        %5134 = vmatprep.subr.bf16.mxu0 0
        %5135 = vmatpush1.bf16.msra.mxu0 0
        %5136 = vmatprep.subr.bf16.mxu0 0
        %5137 = vmatpush1.bf16.msra.mxu0 0
        %5138 = vmatprep.subr.bf16.mxu0 0
        %5139 = vmatpush1.bf16.msra.mxu0 0
        %5140 = vmatprep.subr.bf16.mxu0 0
        %5141 = vmatpush1.bf16.msra.mxu0 0
        %5142 = vmatprep.subr.bf16.mxu0 0
        %5143 = vmatpush1.bf16.msra.mxu0 0
        %5144 = vmatprep.subr.bf16.mxu0 0
        %5145 = vmatpush1.bf16.msra.mxu0 0
        %5146 = vmatprep.subr.bf16.mxu0 0
        %5147 = vmatpush1.bf16.msra.mxu0 0
        %5148 = vmatprep.mubr.bf16.mxu0 0
        %5149 = vmatmul.mubr.bf16.gmra.mrb[0].mxu0 %v5056
        %v5150 = vpop.f32.mrb[0].mxu0
        %v5151 = vadd.f32 0.0, %v5150
        %v5152 = vpop.f32.mrb[0].mxu0
        %v5153 = vpop.f32.mrb[0].mxu0
        %v5154 = vadd.f32 0.0, %v5153
        %v5155 = vpop.f32.mrb[0].mxu0
        %5156 = vmatprep.mubr.bf16.mxu0 0
        %5157 = vmatmul.mubr.bf16.gmra.mrb[0].mxu0 %v5057
        %v5158 = vpop.f32.mrb[0].mxu0
        %v5159 = vpop.f32.mrb[0].mxu0
        %v5160 = vpop.f32.mrb[0].mxu0
        %v5161 = vadd.f32 0.0, %v5160
        %v5162 = vpop.f32.mrb[0].mxu0
        %5163 = vmatprep.mubr.bf16.mxu0 0
        %5164 = vmatmul.mubr.bf16.gmra.mrb[0].mxu0 %v5058
        %v5165 = vpop.f32.mrb[0].mxu0
        %v5166 = vadd.f32 0.0, %v5165
        %v5167 = vpop.f32.mrb[0].mxu0
        %v5168 = vpop.f32.mrb[0].mxu0
        %v5169 = vpop.f32.mrb[0].mxu0
        %5170 = vmatprep.mubr.bf16.mxu0 0
        %5171 = vmatmul.mubr.bf16.gmra.mrb[0].mxu0 %v5059
        %v5172 = vpop.f32.mrb[0].mxu0
        %v5173 = vadd.f32 0.0, %v5172
        %v5174 = vpop.f32.mrb[0].mxu0
        %v5175 = vpop.f32.mrb[0].mxu0
        %v5176 = vadd.f32 0.0, %v5175
        %v5177 = vpop.f32.mrb[0].mxu0
        %5178 = vmatprep.mubr.bf16.mxu0 0
        %5179 = vmatmul.mubr.bf16.gmra.mrb[0].mxu0 %v5060
        %v5180 = vpop.f32.mrb[0].mxu0
        %v5181 = vpop.f32.mrb[0].mxu0
        %v5182 = vpop.f32.mrb[0].mxu0
        %v5183 = vadd.f32 0.0, %v5182
        %v5184 = vpop.f32.mrb[0].mxu0
        %5185 = vmatprep.mubr.bf16.mxu0 0
        %5186 = vmatmul.mubr.bf16.gmra.mrb[0].mxu0 %v5061
        %v5187 = vpop.f32.mrb[0].mxu0
        %v5188 = vadd.f32 0.0, %v5187
        %v5189 = vpop.f32.mrb[0].mxu0
        %v5190 = vpop.f32.mrb[0].mxu0
        %v5191 = vpop.f32.mrb[0].mxu0
        %5192 = vdwg.mxu0
        %v5193 = vadd.f32 %v4962, %v5151
        %v5194 = vadd.f32 %v4965, %v5154
        %v5195 = vadd.f32 %v4972, %v5161
        %v5196 = vadd.f32 %v4977, %v5166
        %v5197 = vadd.f32 %v4984, %v5173
        %v5198 = vadd.f32 %v4987, %v5176
        %v5199 = vadd.f32 %v4994, %v5183
        %v5200 = vadd.f32 %v4999, %v5188
        %v5201 = vld [vmem:[%s195 + $0xb4] sm:$0xf]
        %v5202 = vld [vmem:[%s195 + $0xb8] sm:$0xf]
        %v5203 = vld [vmem:[%s195 + $0xbc] sm:$0xf]
        %v5204 = vld [vmem:[%s195 + $0xc0] sm:$0xf]
        %v5205 = vld [vmem:[%s195 + $0xc4] sm:$0xf]
        %v5206 = vld [vmem:[%s195 + $0xc8] sm:$0xf]
        %v5207 = vld [vmem:[%s195 + $0xcc] sm:$0xf]
        %v5208 = vld [vmem:[%s195 + $0xd0] sm:$0xf]
        %v5209 = vld [vmem:[%s195 + $0xd4] sm:$0xf]
        %v5210 = vld [vmem:[%s195 + $0xd8] sm:$0xf]
        %v5211 = vld [vmem:[%s195 + $0xdc] sm:$0xf]
        %v5212 = vld [vmem:[%s195 + $0xe0] sm:$0xf]
        %v5213 = vld [vmem:[%s786] sm:$0xf]
        %v5214 = vld [vmem:[%s786 + $0x4] sm:$0xf]
        %v5215 = vld [vmem:[%s786 + $0x8] sm:$0xf]
        %v5216 = vld [vmem:[%s786 + $0xc] sm:$0xf]
        %v5217 = vld [vmem:[%s786 + $0x10] sm:$0xf]
        %v5218 = vld [vmem:[%s786 + $0x14] sm:$0xf]
        %v5219 = vld [vmem:[%s786 + $0x18] sm:$0xf]
        %v5220 = vld [vmem:[%s786 + $0x1c] sm:$0xf]
        %v5221 = vld [vmem:[%s786 + $0x20] sm:$0xf]
        %v5222 = vld [vmem:[%s786 + $0x24] sm:$0xf]
        %v5223 = vld [vmem:[%s786 + $0x28] sm:$0xf]
        %v5224 = vld [vmem:[%s786 + $0x2c] sm:$0xf]
        %v5225 = vld [vmem:[%s786 + $0x30] sm:$0xf]
        %v5226 = vld [vmem:[%s786 + $0x34] sm:$0xf]
        %v5227 = vld [vmem:[%s786 + $0x38] sm:$0xf]
        %v5228 = vld [vmem:[%s786 + $0x3c] sm:$0xf]
        %v5241 = vunpack.c.l.b16 %v5201
        %v5242 = vunpack.c.l.b16 %v5202
        %v5243 = vunpack.c.l.b16 %v5203
        %v5244 = vunpack.c.l.b16 %v5204
        %v5245 = vunpack.c.l.b16 %v5205
        %v5246 = vunpack.c.l.b16 %v5206
        %v5247 = vunpack.c.l.b16 %v5207
        %v5248 = vunpack.c.l.b16 %v5208
        %v5249 = vunpack.c.l.b16 %v5209
        %v5250 = vunpack.c.l.b16 %v5210
        %v5251 = vunpack.c.l.b16 %v5211
        %v5252 = vunpack.c.l.b16 %v5212
        %v5253 = vpack.c.b16 %v5242, %v5241
        %v5254 = vpack.c.b16 %v5244, %v5243
        %v5255 = vpack.c.b16 %v5246, %v5245
        %v5256 = vpack.c.b16 %v5248, %v5247
        %v5257 = vpack.c.b16 %v5250, %v5249
        %v5258 = vpack.c.b16 %v5252, %v5251
        %v5281 = vunpack.c.l.b16 %v5213
        %v5282 = vunpack.c.l.b16 %v5214
        %v5283 = vunpack.c.l.b16 %v5215
        %v5284 = vunpack.c.l.b16 %v5216
        %v5285 = vunpack.c.l.b16 %v5217
        %v5286 = vunpack.c.l.b16 %v5218
        %v5287 = vunpack.c.l.b16 %v5219
        %v5288 = vunpack.c.l.b16 %v5220
        %v5289 = vunpack.c.l.b16 %v5221
        %v5290 = vunpack.c.l.b16 %v5222
        %v5291 = vunpack.c.l.b16 %v5223
        %v5292 = vunpack.c.l.b16 %v5224
        %v5293 = vunpack.c.l.b16 %v5225
        %v5294 = vunpack.c.l.b16 %v5226
        %v5295 = vunpack.c.l.b16 %v5227
        %v5296 = vunpack.c.l.b16 %v5228
        %v5297 = vpack.c.b16 %v5282, %v5281
        %v5298 = vpack.c.b16 %v5284, %v5283
        %v5299 = vpack.c.b16 %v5286, %v5285
        %v5300 = vpack.c.b16 %v5288, %v5287
        %v5301 = vpack.c.b16 %v5290, %v5289
        %v5302 = vpack.c.b16 %v5292, %v5291
        %v5303 = vpack.c.b16 %v5294, %v5293
        %v5304 = vpack.c.b16 %v5296, %v5295
        %5313 = vmatprep.subr.bf16.mxu0 0
        %5314 = vmatpush1.bf16.msra.mxu0 %v5297
        %5315 = vmatprep.subr.bf16.mxu0 0
        %5316 = vmatpush1.bf16.msra.mxu0 %v5298
        %5317 = vmatprep.subr.bf16.mxu0 0
        %5318 = vmatpush1.bf16.msra.mxu0 %v5299
        %5319 = vmatprep.subr.bf16.mxu0 0
        %5320 = vmatpush1.bf16.msra.mxu0 %v5300
        %5321 = vmatprep.subr.bf16.mxu0 0
        %5322 = vmatpush1.bf16.msra.mxu0 %v5301
        %5323 = vmatprep.subr.bf16.mxu0 0
        %5324 = vmatpush1.bf16.msra.mxu0 %v5302
        %5325 = vmatprep.subr.bf16.mxu0 0
        %5326 = vmatpush1.bf16.msra.mxu0 %v5303
        %5327 = vmatprep.subr.bf16.mxu0 0
        %5328 = vmatpush1.bf16.msra.mxu0 %v5304
        %5329 = vmatprep.subr.bf16.mxu0 0
        %5330 = vmatpush1.bf16.msra.mxu0 0
        %5331 = vmatprep.subr.bf16.mxu0 0
        %5332 = vmatpush1.bf16.msra.mxu0 0
        %5333 = vmatprep.subr.bf16.mxu0 0
        %5334 = vmatpush1.bf16.msra.mxu0 0
        %5335 = vmatprep.subr.bf16.mxu0 0
        %5336 = vmatpush1.bf16.msra.mxu0 0
        %5337 = vmatprep.subr.bf16.mxu0 0
        %5338 = vmatpush1.bf16.msra.mxu0 0
        %5339 = vmatprep.subr.bf16.mxu0 0
        %5340 = vmatpush1.bf16.msra.mxu0 0
        %5341 = vmatprep.subr.bf16.mxu0 0
        %5342 = vmatpush1.bf16.msra.mxu0 0
        %5343 = vmatprep.subr.bf16.mxu0 0
        %5344 = vmatpush1.bf16.msra.mxu0 0
        %5345 = vmatprep.mubr.bf16.mxu0 0
        %5346 = vmatmul.mubr.bf16.gmra.mrb[0].mxu0 %v5253
        %v5347 = vpop.f32.mrb[0].mxu0
        %v5348 = vadd.f32 0.0, %v5347
        %v5349 = vpop.f32.mrb[0].mxu0
        %v5350 = vpop.f32.mrb[0].mxu0
        %v5351 = vadd.f32 0.0, %v5350
        %v5352 = vpop.f32.mrb[0].mxu0
        %5353 = vmatprep.mubr.bf16.mxu0 0
        %5354 = vmatmul.mubr.bf16.gmra.mrb[0].mxu0 %v5254
        %v5355 = vpop.f32.mrb[0].mxu0
        %v5356 = vpop.f32.mrb[0].mxu0
        %v5357 = vpop.f32.mrb[0].mxu0
        %v5358 = vadd.f32 0.0, %v5357
        %v5359 = vpop.f32.mrb[0].mxu0
        %5360 = vmatprep.mubr.bf16.mxu0 0
        %5361 = vmatmul.mubr.bf16.gmra.mrb[0].mxu0 %v5255
        %v5362 = vpop.f32.mrb[0].mxu0
        %v5363 = vadd.f32 0.0, %v5362
        %v5364 = vpop.f32.mrb[0].mxu0
        %v5365 = vpop.f32.mrb[0].mxu0
        %v5366 = vpop.f32.mrb[0].mxu0
        %5367 = vmatprep.mubr.bf16.mxu0 0
        %5368 = vmatmul.mubr.bf16.gmra.mrb[0].mxu0 %v5256
        %v5369 = vpop.f32.mrb[0].mxu0
        %v5370 = vadd.f32 0.0, %v5369
        %v5371 = vpop.f32.mrb[0].mxu0
        %v5372 = vpop.f32.mrb[0].mxu0
        %v5373 = vadd.f32 0.0, %v5372
        %v5374 = vpop.f32.mrb[0].mxu0
        %5375 = vmatprep.mubr.bf16.mxu0 0
        %5376 = vmatmul.mubr.bf16.gmra.mrb[0].mxu0 %v5257
        %v5377 = vpop.f32.mrb[0].mxu0
        %v5378 = vpop.f32.mrb[0].mxu0
        %v5379 = vpop.f32.mrb[0].mxu0
        %v5380 = vadd.f32 0.0, %v5379
        %v5381 = vpop.f32.mrb[0].mxu0
        %5382 = vmatprep.mubr.bf16.mxu0 0
        %5383 = vmatmul.mubr.bf16.gmra.mrb[0].mxu0 %v5258
        %v5384 = vpop.f32.mrb[0].mxu0
        %v5385 = vadd.f32 0.0, %v5384
        %v5386 = vpop.f32.mrb[0].mxu0
        %v5387 = vpop.f32.mrb[0].mxu0
        %v5388 = vpop.f32.mrb[0].mxu0
        %5389 = vdwg.mxu0
        %v5390 = vadd.f32 %v5193, %v5348
        %v5391 = vadd.f32 %v5194, %v5351
        %v5392 = vadd.f32 %v5195, %v5358
        %v5393 = vadd.f32 %v5196, %v5363
        %v5394 = vadd.f32 %v5197, %v5370
        %v5395 = vadd.f32 %v5198, %v5373
        %v5396 = vadd.f32 %v5199, %v5380
        %v5397 = vadd.f32 %v5200, %v5385
        %v5398 = vld [vmem:[%s195 + $0xc0] sm:$0xf]
        %v5399 = vld [vmem:[%s195 + $0xc4] sm:$0xf]
        %v5400 = vld [vmem:[%s195 + $0xc8] sm:$0xf]
        %v5401 = vld [vmem:[%s195 + $0xcc] sm:$0xf]
        %v5402 = vld [vmem:[%s195 + $0xd0] sm:$0xf]
        %v5403 = vld [vmem:[%s195 + $0xd4] sm:$0xf]
        %v5404 = vld [vmem:[%s195 + $0xd8] sm:$0xf]
        %v5405 = vld [vmem:[%s195 + $0xdc] sm:$0xf]
        %v5406 = vld [vmem:[%s195 + $0xe0] sm:$0xf]
        %v5407 = vld [vmem:[%s195 + $0xe4] sm:$0xf]
        %v5408 = vld [vmem:[%s195 + $0xe8] sm:$0xf]
        %v5409 = vld [vmem:[%s195 + $0xec] sm:$0xf]
        %v5410 = vld [vmem:[%s984] sm:$0xf]
        %v5411 = vld [vmem:[%s984 + $0x4] sm:$0xf]
        %v5412 = vld [vmem:[%s984 + $0x8] sm:$0xf]
        %v5413 = vld [vmem:[%s984 + $0xc] sm:$0xf]
        %v5414 = vld [vmem:[%s984 + $0x10] sm:$0xf]
        %v5415 = vld [vmem:[%s984 + $0x14] sm:$0xf]
        %v5416 = vld [vmem:[%s984 + $0x18] sm:$0xf]
        %v5417 = vld [vmem:[%s984 + $0x1c] sm:$0xf]
        %v5418 = vld [vmem:[%s984 + $0x20] sm:$0xf]
        %v5419 = vld [vmem:[%s984 + $0x24] sm:$0xf]
        %v5420 = vld [vmem:[%s984 + $0x28] sm:$0xf]
        %v5421 = vld [vmem:[%s984 + $0x2c] sm:$0xf]
        %v5422 = vld [vmem:[%s984 + $0x30] sm:$0xf]
        %v5423 = vld [vmem:[%s984 + $0x34] sm:$0xf]
        %v5424 = vld [vmem:[%s984 + $0x38] sm:$0xf]
        %v5425 = vld [vmem:[%s984 + $0x3c] sm:$0xf]
        %v5438 = vunpack.c.l.b16 %v5398
        %v5439 = vunpack.c.l.b16 %v5399
        %v5440 = vunpack.c.l.b16 %v5400
        %v5441 = vunpack.c.l.b16 %v5401
        %v5442 = vunpack.c.l.b16 %v5402
        %v5443 = vunpack.c.l.b16 %v5403
        %v5444 = vunpack.c.l.b16 %v5404
        %v5445 = vunpack.c.l.b16 %v5405
        %v5446 = vunpack.c.l.b16 %v5406
        %v5447 = vunpack.c.l.b16 %v5407
        %v5448 = vunpack.c.l.b16 %v5408
        %v5449 = vunpack.c.l.b16 %v5409
        %v5450 = vpack.c.b16 %v5439, %v5438
        %v5451 = vpack.c.b16 %v5441, %v5440
        %v5452 = vpack.c.b16 %v5443, %v5442
        %v5453 = vpack.c.b16 %v5445, %v5444
        %v5454 = vpack.c.b16 %v5447, %v5446
        %v5455 = vpack.c.b16 %v5449, %v5448
        %v5478 = vunpack.c.l.b16 %v5410
        %v5479 = vunpack.c.l.b16 %v5411
        %v5480 = vunpack.c.l.b16 %v5412
        %v5481 = vunpack.c.l.b16 %v5413
        %v5482 = vunpack.c.l.b16 %v5414
        %v5483 = vunpack.c.l.b16 %v5415
        %v5484 = vunpack.c.l.b16 %v5416
        %v5485 = vunpack.c.l.b16 %v5417
        %v5486 = vunpack.c.l.b16 %v5418
        %v5487 = vunpack.c.l.b16 %v5419
        %v5488 = vunpack.c.l.b16 %v5420
        %v5489 = vunpack.c.l.b16 %v5421
        %v5490 = vunpack.c.l.b16 %v5422
        %v5491 = vunpack.c.l.b16 %v5423
        %v5492 = vunpack.c.l.b16 %v5424
        %v5493 = vunpack.c.l.b16 %v5425
        %v5494 = vpack.c.b16 %v5479, %v5478
        %v5495 = vpack.c.b16 %v5481, %v5480
        %v5496 = vpack.c.b16 %v5483, %v5482
        %v5497 = vpack.c.b16 %v5485, %v5484
        %v5498 = vpack.c.b16 %v5487, %v5486
        %v5499 = vpack.c.b16 %v5489, %v5488
        %v5500 = vpack.c.b16 %v5491, %v5490
        %v5501 = vpack.c.b16 %v5493, %v5492
        %5510 = vmatprep.subr.bf16.mxu0 0
        %5511 = vmatpush1.bf16.msra.mxu0 %v5494
        %5512 = vmatprep.subr.bf16.mxu0 0
        %5513 = vmatpush1.bf16.msra.mxu0 %v5495
        %5514 = vmatprep.subr.bf16.mxu0 0
        %5515 = vmatpush1.bf16.msra.mxu0 %v5496
        %5516 = vmatprep.subr.bf16.mxu0 0
        %5517 = vmatpush1.bf16.msra.mxu0 %v5497
        %5518 = vmatprep.subr.bf16.mxu0 0
        %5519 = vmatpush1.bf16.msra.mxu0 %v5498
        %5520 = vmatprep.subr.bf16.mxu0 0
        %5521 = vmatpush1.bf16.msra.mxu0 %v5499
        %5522 = vmatprep.subr.bf16.mxu0 0
        %5523 = vmatpush1.bf16.msra.mxu0 %v5500
        %5524 = vmatprep.subr.bf16.mxu0 0
        %5525 = vmatpush1.bf16.msra.mxu0 %v5501
        %5526 = vmatprep.subr.bf16.mxu0 0
        %5527 = vmatpush1.bf16.msra.mxu0 0
        %5528 = vmatprep.subr.bf16.mxu0 0
        %5529 = vmatpush1.bf16.msra.mxu0 0
        %5530 = vmatprep.subr.bf16.mxu0 0
        %5531 = vmatpush1.bf16.msra.mxu0 0
        %5532 = vmatprep.subr.bf16.mxu0 0
        %5533 = vmatpush1.bf16.msra.mxu0 0
        %5534 = vmatprep.subr.bf16.mxu0 0
        %5535 = vmatpush1.bf16.msra.mxu0 0
        %5536 = vmatprep.subr.bf16.mxu0 0
        %5537 = vmatpush1.bf16.msra.mxu0 0
        %5538 = vmatprep.subr.bf16.mxu0 0
        %5539 = vmatpush1.bf16.msra.mxu0 0
        %5540 = vmatprep.subr.bf16.mxu0 0
        %5541 = vmatpush1.bf16.msra.mxu0 0
        %5542 = vmatprep.mubr.bf16.mxu0 0
        %5543 = vmatmul.mubr.bf16.gmra.mrb[0].mxu0 %v5450
        %v5544 = vpop.f32.mrb[0].mxu0
        %v5545 = vadd.f32 0.0, %v5544
        %v5546 = vpop.f32.mrb[0].mxu0
        %v5547 = vpop.f32.mrb[0].mxu0
        %v5548 = vadd.f32 0.0, %v5547
        %v5549 = vpop.f32.mrb[0].mxu0
        %5550 = vmatprep.mubr.bf16.mxu0 0
        %5551 = vmatmul.mubr.bf16.gmra.mrb[0].mxu0 %v5451
        %v5552 = vpop.f32.mrb[0].mxu0
        %v5553 = vpop.f32.mrb[0].mxu0
        %v5554 = vpop.f32.mrb[0].mxu0
        %v5555 = vadd.f32 0.0, %v5554
        %v5556 = vpop.f32.mrb[0].mxu0
        %5557 = vmatprep.mubr.bf16.mxu0 0
        %5558 = vmatmul.mubr.bf16.gmra.mrb[0].mxu0 %v5452
        %v5559 = vpop.f32.mrb[0].mxu0
        %v5560 = vadd.f32 0.0, %v5559
        %v5561 = vpop.f32.mrb[0].mxu0
        %v5562 = vpop.f32.mrb[0].mxu0
        %v5563 = vpop.f32.mrb[0].mxu0
        %5564 = vmatprep.mubr.bf16.mxu0 0
        %5565 = vmatmul.mubr.bf16.gmra.mrb[0].mxu0 %v5453
        %v5566 = vpop.f32.mrb[0].mxu0
        %v5567 = vadd.f32 0.0, %v5566
        %v5568 = vpop.f32.mrb[0].mxu0
        %v5569 = vpop.f32.mrb[0].mxu0
        %v5570 = vadd.f32 0.0, %v5569
        %v5571 = vpop.f32.mrb[0].mxu0
        %5572 = vmatprep.mubr.bf16.mxu0 0
        %5573 = vmatmul.mubr.bf16.gmra.mrb[0].mxu0 %v5454
        %v5574 = vpop.f32.mrb[0].mxu0
        %v5575 = vpop.f32.mrb[0].mxu0
        %v5576 = vpop.f32.mrb[0].mxu0
        %v5577 = vadd.f32 0.0, %v5576
        %v5578 = vpop.f32.mrb[0].mxu0
        %5579 = vmatprep.mubr.bf16.mxu0 0
        %5580 = vmatmul.mubr.bf16.gmra.mrb[0].mxu0 %v5455
        %v5581 = vpop.f32.mrb[0].mxu0
        %v5582 = vadd.f32 0.0, %v5581
        %v5583 = vpop.f32.mrb[0].mxu0
        %v5584 = vpop.f32.mrb[0].mxu0
        %v5585 = vpop.f32.mrb[0].mxu0
        %5586 = vdwg.mxu0
        %v5587 = vadd.f32 %v5390, %v5545
        %v5588 = vadd.f32 %v5391, %v5548
        %v5589 = vadd.f32 %v5392, %v5555
        %v5590 = vadd.f32 %v5393, %v5560
        %v5591 = vadd.f32 %v5394, %v5567
        %v5592 = vadd.f32 %v5395, %v5570
        %v5593 = vadd.f32 %v5396, %v5577
        %v5594 = vadd.f32 %v5397, %v5582
        %v5595 = vld [vmem:[%s195 + $0xcc] sm:$0xf]
        %v5596 = vld [vmem:[%s195 + $0xd0] sm:$0xf]
        %v5597 = vld [vmem:[%s195 + $0xd4] sm:$0xf]
        %v5598 = vld [vmem:[%s195 + $0xd8] sm:$0xf]
        %v5599 = vld [vmem:[%s195 + $0xdc] sm:$0xf]
        %v5600 = vld [vmem:[%s195 + $0xe0] sm:$0xf]
        %v5601 = vld [vmem:[%s195 + $0xe4] sm:$0xf]
        %v5602 = vld [vmem:[%s195 + $0xe8] sm:$0xf]
        %v5603 = vld [vmem:[%s195 + $0xec] sm:$0xf]
        %v5604 = vld [vmem:[%s195 + $0xf0] sm:$0xf]
        %v5605 = vld [vmem:[%s195 + $0xf4] sm:$0xf]
        %v5606 = vld [vmem:[%s195 + $0xf8] sm:$0xf]
        %v5607 = vld [vmem:[%s1182] sm:$0xf]
        %v5608 = vld [vmem:[%s1182 + $0x4] sm:$0xf]
        %v5609 = vld [vmem:[%s1182 + $0x8] sm:$0xf]
        %v5610 = vld [vmem:[%s1182 + $0xc] sm:$0xf]
        %v5611 = vld [vmem:[%s1182 + $0x10] sm:$0xf]
        %v5612 = vld [vmem:[%s1182 + $0x14] sm:$0xf]
        %v5613 = vld [vmem:[%s1182 + $0x18] sm:$0xf]
        %v5614 = vld [vmem:[%s1182 + $0x1c] sm:$0xf]
        %v5615 = vld [vmem:[%s1182 + $0x20] sm:$0xf]
        %v5616 = vld [vmem:[%s1182 + $0x24] sm:$0xf]
        %v5617 = vld [vmem:[%s1182 + $0x28] sm:$0xf]
        %v5618 = vld [vmem:[%s1182 + $0x2c] sm:$0xf]
        %v5619 = vld [vmem:[%s1182 + $0x30] sm:$0xf]
        %v5620 = vld [vmem:[%s1182 + $0x34] sm:$0xf]
        %v5621 = vld [vmem:[%s1182 + $0x38] sm:$0xf]
        %v5622 = vld [vmem:[%s1182 + $0x3c] sm:$0xf]
        %v5635 = vunpack.c.l.b16 %v5595
        %v5636 = vunpack.c.l.b16 %v5596
        %v5637 = vunpack.c.l.b16 %v5597
        %v5638 = vunpack.c.l.b16 %v5598
        %v5639 = vunpack.c.l.b16 %v5599
        %v5640 = vunpack.c.l.b16 %v5600
        %v5641 = vunpack.c.l.b16 %v5601
        %v5642 = vunpack.c.l.b16 %v5602
        %v5643 = vunpack.c.l.b16 %v5603
        %v5644 = vunpack.c.l.b16 %v5604
        %v5645 = vunpack.c.l.b16 %v5605
        %v5646 = vunpack.c.l.b16 %v5606
        %v5647 = vpack.c.b16 %v5636, %v5635
        %v5648 = vpack.c.b16 %v5638, %v5637
        %v5649 = vpack.c.b16 %v5640, %v5639
        %v5650 = vpack.c.b16 %v5642, %v5641
        %v5651 = vpack.c.b16 %v5644, %v5643
        %v5652 = vpack.c.b16 %v5646, %v5645
        %v5675 = vunpack.c.l.b16 %v5607
        %v5676 = vunpack.c.l.b16 %v5608
        %v5677 = vunpack.c.l.b16 %v5609
        %v5678 = vunpack.c.l.b16 %v5610
        %v5679 = vunpack.c.l.b16 %v5611
        %v5680 = vunpack.c.l.b16 %v5612
        %v5681 = vunpack.c.l.b16 %v5613
        %v5682 = vunpack.c.l.b16 %v5614
        %v5683 = vunpack.c.l.b16 %v5615
        %v5684 = vunpack.c.l.b16 %v5616
        %v5685 = vunpack.c.l.b16 %v5617
        %v5686 = vunpack.c.l.b16 %v5618
        %v5687 = vunpack.c.l.b16 %v5619
        %v5688 = vunpack.c.l.b16 %v5620
        %v5689 = vunpack.c.l.b16 %v5621
        %v5690 = vunpack.c.l.b16 %v5622
        %v5691 = vpack.c.b16 %v5676, %v5675
        %v5692 = vpack.c.b16 %v5678, %v5677
        %v5693 = vpack.c.b16 %v5680, %v5679
        %v5694 = vpack.c.b16 %v5682, %v5681
        %v5695 = vpack.c.b16 %v5684, %v5683
        %v5696 = vpack.c.b16 %v5686, %v5685
        %v5697 = vpack.c.b16 %v5688, %v5687
        %v5698 = vpack.c.b16 %v5690, %v5689
        %5707 = vmatprep.subr.bf16.mxu0 0
        %5708 = vmatpush1.bf16.msra.mxu0 %v5691
        %5709 = vmatprep.subr.bf16.mxu0 0
        %5710 = vmatpush1.bf16.msra.mxu0 %v5692
        %5711 = vmatprep.subr.bf16.mxu0 0
        %5712 = vmatpush1.bf16.msra.mxu0 %v5693
        %5713 = vmatprep.subr.bf16.mxu0 0
        %5714 = vmatpush1.bf16.msra.mxu0 %v5694
        %5715 = vmatprep.subr.bf16.mxu0 0
        %5716 = vmatpush1.bf16.msra.mxu0 %v5695
        %5717 = vmatprep.subr.bf16.mxu0 0
        %5718 = vmatpush1.bf16.msra.mxu0 %v5696
        %5719 = vmatprep.subr.bf16.mxu0 0
        %5720 = vmatpush1.bf16.msra.mxu0 %v5697
        %5721 = vmatprep.subr.bf16.mxu0 0
        %5722 = vmatpush1.bf16.msra.mxu0 %v5698
        %5723 = vmatprep.subr.bf16.mxu0 0
        %5724 = vmatpush1.bf16.msra.mxu0 0
        %5725 = vmatprep.subr.bf16.mxu0 0
        %5726 = vmatpush1.bf16.msra.mxu0 0
        %5727 = vmatprep.subr.bf16.mxu0 0
        %5728 = vmatpush1.bf16.msra.mxu0 0
        %5729 = vmatprep.subr.bf16.mxu0 0
        %5730 = vmatpush1.bf16.msra.mxu0 0
        %5731 = vmatprep.subr.bf16.mxu0 0
        %5732 = vmatpush1.bf16.msra.mxu0 0
        %5733 = vmatprep.subr.bf16.mxu0 0
        %5734 = vmatpush1.bf16.msra.mxu0 0
        %5735 = vmatprep.subr.bf16.mxu0 0
        %5736 = vmatpush1.bf16.msra.mxu0 0
        %5737 = vmatprep.subr.bf16.mxu0 0
        %5738 = vmatpush1.bf16.msra.mxu0 0
        %5739 = vmatprep.mubr.bf16.mxu0 0
        %5740 = vmatmul.mubr.bf16.gmra.mrb[0].mxu0 %v5647
        %v5741 = vpop.f32.mrb[0].mxu0
        %v5742 = vadd.f32 0.0, %v5741
        %v5743 = vpop.f32.mrb[0].mxu0
        %v5744 = vpop.f32.mrb[0].mxu0
        %v5745 = vadd.f32 0.0, %v5744
        %v5746 = vpop.f32.mrb[0].mxu0
        %5747 = vmatprep.mubr.bf16.mxu0 0
        %5748 = vmatmul.mubr.bf16.gmra.mrb[0].mxu0 %v5648
        %v5749 = vpop.f32.mrb[0].mxu0
        %v5750 = vpop.f32.mrb[0].mxu0
        %v5751 = vpop.f32.mrb[0].mxu0
        %v5752 = vadd.f32 0.0, %v5751
        %v5753 = vpop.f32.mrb[0].mxu0
        %5754 = vmatprep.mubr.bf16.mxu0 0
        %5755 = vmatmul.mubr.bf16.gmra.mrb[0].mxu0 %v5649
        %v5756 = vpop.f32.mrb[0].mxu0
        %v5757 = vadd.f32 0.0, %v5756
        %v5758 = vpop.f32.mrb[0].mxu0
        %v5759 = vpop.f32.mrb[0].mxu0
        %v5760 = vpop.f32.mrb[0].mxu0
        %5761 = vmatprep.mubr.bf16.mxu0 0
        %5762 = vmatmul.mubr.bf16.gmra.mrb[0].mxu0 %v5650
        %v5763 = vpop.f32.mrb[0].mxu0
        %v5764 = vadd.f32 0.0, %v5763
        %v5765 = vpop.f32.mrb[0].mxu0
        %v5766 = vpop.f32.mrb[0].mxu0
        %v5767 = vadd.f32 0.0, %v5766
        %v5768 = vpop.f32.mrb[0].mxu0
        %5769 = vmatprep.mubr.bf16.mxu0 0
        %5770 = vmatmul.mubr.bf16.gmra.mrb[0].mxu0 %v5651
        %v5771 = vpop.f32.mrb[0].mxu0
        %v5772 = vpop.f32.mrb[0].mxu0
        %v5773 = vpop.f32.mrb[0].mxu0
        %v5774 = vadd.f32 0.0, %v5773
        %v5775 = vpop.f32.mrb[0].mxu0
        %5776 = vmatprep.mubr.bf16.mxu0 0
        %5777 = vmatmul.mubr.bf16.gmra.mrb[0].mxu0 %v5652
        %v5778 = vpop.f32.mrb[0].mxu0
        %v5779 = vadd.f32 0.0, %v5778
        %v5780 = vpop.f32.mrb[0].mxu0
        %v5781 = vpop.f32.mrb[0].mxu0
        %v5782 = vpop.f32.mrb[0].mxu0
        %5783 = vdwg.mxu0
        %v5784 = vadd.f32 %v5587, %v5742
        %v5785 = vadd.f32 %v5588, %v5745
        %v5786 = vadd.f32 %v5589, %v5752
        %v5787 = vadd.f32 %v5590, %v5757
        %v5788 = vadd.f32 %v5591, %v5764
        %v5789 = vadd.f32 %v5592, %v5767
        %v5790 = vadd.f32 %v5593, %v5774
        %v5791 = vadd.f32 %v5594, %v5779
        %v5792 = vld [vmem:[%s195 + $0xd8] sm:$0xf]
        %v5793 = vld [vmem:[%s195 + $0xdc] sm:$0xf]
        %v5794 = vld [vmem:[%s195 + $0xe0] sm:$0xf]
        %v5795 = vld [vmem:[%s195 + $0xe4] sm:$0xf]
        %v5796 = vld [vmem:[%s195 + $0xe8] sm:$0xf]
        %v5797 = vld [vmem:[%s195 + $0xec] sm:$0xf]
        %v5798 = vld [vmem:[%s195 + $0xf0] sm:$0xf]
        %v5799 = vld [vmem:[%s195 + $0xf4] sm:$0xf]
        %v5800 = vld [vmem:[%s195 + $0xf8] sm:$0xf]
        %v5801 = vld [vmem:[%s195 + $0xfc] sm:$0xf]
        %v5802 = vld [vmem:[%s195 + $0x100] sm:$0xf]
        %v5803 = vld [vmem:[%s195 + $0x104] sm:$0xf]
        %v5804 = vld [vmem:[%s1380] sm:$0xf]
        %v5805 = vld [vmem:[%s1380 + $0x4] sm:$0xf]
        %v5806 = vld [vmem:[%s1380 + $0x8] sm:$0xf]
        %v5807 = vld [vmem:[%s1380 + $0xc] sm:$0xf]
        %v5808 = vld [vmem:[%s1380 + $0x10] sm:$0xf]
        %v5809 = vld [vmem:[%s1380 + $0x14] sm:$0xf]
        %v5810 = vld [vmem:[%s1380 + $0x18] sm:$0xf]
        %v5811 = vld [vmem:[%s1380 + $0x1c] sm:$0xf]
        %v5812 = vld [vmem:[%s1380 + $0x20] sm:$0xf]
        %v5813 = vld [vmem:[%s1380 + $0x24] sm:$0xf]
        %v5814 = vld [vmem:[%s1380 + $0x28] sm:$0xf]
        %v5815 = vld [vmem:[%s1380 + $0x2c] sm:$0xf]
        %v5816 = vld [vmem:[%s1380 + $0x30] sm:$0xf]
        %v5817 = vld [vmem:[%s1380 + $0x34] sm:$0xf]
        %v5818 = vld [vmem:[%s1380 + $0x38] sm:$0xf]
        %v5819 = vld [vmem:[%s1380 + $0x3c] sm:$0xf]
        %v5832 = vunpack.c.l.b16 %v5792
        %v5833 = vunpack.c.l.b16 %v5793
        %v5834 = vunpack.c.l.b16 %v5794
        %v5835 = vunpack.c.l.b16 %v5795
        %v5836 = vunpack.c.l.b16 %v5796
        %v5837 = vunpack.c.l.b16 %v5797
        %v5838 = vunpack.c.l.b16 %v5798
        %v5839 = vunpack.c.l.b16 %v5799
        %v5840 = vunpack.c.l.b16 %v5800
        %v5841 = vunpack.c.l.b16 %v5801
        %v5842 = vunpack.c.l.b16 %v5802
        %v5843 = vunpack.c.l.b16 %v5803
        %v5844 = vpack.c.b16 %v5833, %v5832
        %v5845 = vpack.c.b16 %v5835, %v5834
        %v5846 = vpack.c.b16 %v5837, %v5836
        %v5847 = vpack.c.b16 %v5839, %v5838
        %v5848 = vpack.c.b16 %v5841, %v5840
        %v5849 = vpack.c.b16 %v5843, %v5842
        %v5872 = vunpack.c.l.b16 %v5804
        %v5873 = vunpack.c.l.b16 %v5805
        %v5874 = vunpack.c.l.b16 %v5806
        %v5875 = vunpack.c.l.b16 %v5807
        %v5876 = vunpack.c.l.b16 %v5808
        %v5877 = vunpack.c.l.b16 %v5809
        %v5878 = vunpack.c.l.b16 %v5810
        %v5879 = vunpack.c.l.b16 %v5811
        %v5880 = vunpack.c.l.b16 %v5812
        %v5881 = vunpack.c.l.b16 %v5813
        %v5882 = vunpack.c.l.b16 %v5814
        %v5883 = vunpack.c.l.b16 %v5815
        %v5884 = vunpack.c.l.b16 %v5816
        %v5885 = vunpack.c.l.b16 %v5817
        %v5886 = vunpack.c.l.b16 %v5818
        %v5887 = vunpack.c.l.b16 %v5819
        %v5888 = vpack.c.b16 %v5873, %v5872
        %v5889 = vpack.c.b16 %v5875, %v5874
        %v5890 = vpack.c.b16 %v5877, %v5876
        %v5891 = vpack.c.b16 %v5879, %v5878
        %v5892 = vpack.c.b16 %v5881, %v5880
        %v5893 = vpack.c.b16 %v5883, %v5882
        %v5894 = vpack.c.b16 %v5885, %v5884
        %v5895 = vpack.c.b16 %v5887, %v5886
        %5904 = vmatprep.subr.bf16.mxu0 0
        %5905 = vmatpush1.bf16.msra.mxu0 %v5888
        %5906 = vmatprep.subr.bf16.mxu0 0
        %5907 = vmatpush1.bf16.msra.mxu0 %v5889
        %5908 = vmatprep.subr.bf16.mxu0 0
        %5909 = vmatpush1.bf16.msra.mxu0 %v5890
        %5910 = vmatprep.subr.bf16.mxu0 0
        %5911 = vmatpush1.bf16.msra.mxu0 %v5891
        %5912 = vmatprep.subr.bf16.mxu0 0
        %5913 = vmatpush1.bf16.msra.mxu0 %v5892
        %5914 = vmatprep.subr.bf16.mxu0 0
        %5915 = vmatpush1.bf16.msra.mxu0 %v5893
        %5916 = vmatprep.subr.bf16.mxu0 0
        %5917 = vmatpush1.bf16.msra.mxu0 %v5894
        %5918 = vmatprep.subr.bf16.mxu0 0
        %5919 = vmatpush1.bf16.msra.mxu0 %v5895
        %5920 = vmatprep.subr.bf16.mxu0 0
        %5921 = vmatpush1.bf16.msra.mxu0 0
        %5922 = vmatprep.subr.bf16.mxu0 0
        %5923 = vmatpush1.bf16.msra.mxu0 0
        %5924 = vmatprep.subr.bf16.mxu0 0
        %5925 = vmatpush1.bf16.msra.mxu0 0
        %5926 = vmatprep.subr.bf16.mxu0 0
        %5927 = vmatpush1.bf16.msra.mxu0 0
        %5928 = vmatprep.subr.bf16.mxu0 0
        %5929 = vmatpush1.bf16.msra.mxu0 0
        %5930 = vmatprep.subr.bf16.mxu0 0
        %5931 = vmatpush1.bf16.msra.mxu0 0
        %5932 = vmatprep.subr.bf16.mxu0 0
        %5933 = vmatpush1.bf16.msra.mxu0 0
        %5934 = vmatprep.subr.bf16.mxu0 0
        %5935 = vmatpush1.bf16.msra.mxu0 0
        %5936 = vmatprep.mubr.bf16.mxu0 0
        %5937 = vmatmul.mubr.bf16.gmra.mrb[0].mxu0 %v5844
        %v5938 = vpop.f32.mrb[0].mxu0
        %v5939 = vadd.f32 0.0, %v5938
        %v5940 = vpop.f32.mrb[0].mxu0
        %v5941 = vpop.f32.mrb[0].mxu0
        %v5942 = vadd.f32 0.0, %v5941
        %v5943 = vpop.f32.mrb[0].mxu0
        %5944 = vmatprep.mubr.bf16.mxu0 0
        %5945 = vmatmul.mubr.bf16.gmra.mrb[0].mxu0 %v5845
        %v5946 = vpop.f32.mrb[0].mxu0
        %v5947 = vpop.f32.mrb[0].mxu0
        %v5948 = vpop.f32.mrb[0].mxu0
        %v5949 = vadd.f32 0.0, %v5948
        %v5950 = vpop.f32.mrb[0].mxu0
        %5951 = vmatprep.mubr.bf16.mxu0 0
        %5952 = vmatmul.mubr.bf16.gmra.mrb[0].mxu0 %v5846
        %v5953 = vpop.f32.mrb[0].mxu0
        %v5954 = vadd.f32 0.0, %v5953
        %v5955 = vpop.f32.mrb[0].mxu0
        %v5956 = vpop.f32.mrb[0].mxu0
        %v5957 = vpop.f32.mrb[0].mxu0
        %5958 = vmatprep.mubr.bf16.mxu0 0
        %5959 = vmatmul.mubr.bf16.gmra.mrb[0].mxu0 %v5847
        %v5960 = vpop.f32.mrb[0].mxu0
        %v5961 = vadd.f32 0.0, %v5960
        %v5962 = vpop.f32.mrb[0].mxu0
        %v5963 = vpop.f32.mrb[0].mxu0
        %v5964 = vadd.f32 0.0, %v5963
        %v5965 = vpop.f32.mrb[0].mxu0
        %5966 = vmatprep.mubr.bf16.mxu0 0
        %5967 = vmatmul.mubr.bf16.gmra.mrb[0].mxu0 %v5848
        %v5968 = vpop.f32.mrb[0].mxu0
        %v5969 = vpop.f32.mrb[0].mxu0
        %v5970 = vpop.f32.mrb[0].mxu0
        %v5971 = vadd.f32 0.0, %v5970
        %v5972 = vpop.f32.mrb[0].mxu0
        %5973 = vmatprep.mubr.bf16.mxu0 0
        %5974 = vmatmul.mubr.bf16.gmra.mrb[0].mxu0 %v5849
        %v5975 = vpop.f32.mrb[0].mxu0
        %v5976 = vadd.f32 0.0, %v5975
        %v5977 = vpop.f32.mrb[0].mxu0
        %v5978 = vpop.f32.mrb[0].mxu0
        %v5979 = vpop.f32.mrb[0].mxu0
        %5980 = vdwg.mxu0
        %v5981 = vadd.f32 %v5784, %v5939
        %v5982 = vadd.f32 %v5785, %v5942
        %v5983 = vadd.f32 %v5786, %v5949
        %v5984 = vadd.f32 %v5787, %v5954
        %v5985 = vadd.f32 %v5788, %v5961
        %v5986 = vadd.f32 %v5789, %v5964
        %v5987 = vadd.f32 %v5790, %v5971
        %v5988 = vadd.f32 %v5791, %v5976
        %v5989 = vld [vmem:[%s2] sm:$0x1]
        %v5990 = vlaneseq
        %v5991 = vshrl.u32 %v5990, 7
        %v5992 = vsub.s32 0, %v5991
        %v5993 = vrot.slane %v5989, %v5992
        %v5994 = vmul.f32 %v5981, %v5993
        %v5995 = vmul.f32 %v5982, %v5993
        %v5996 = vmul.f32 %v5983, %v5993
        %v5997 = vmul.f32 %v5984, %v5993
        %v5998 = vmul.f32 %v5985, %v5993
        %v5999 = vmul.f32 %v5986, %v5993
        %v6000 = vmul.f32 %v5987, %v5993
        %v6001 = vmul.f32 %v5988, %v5993
        %v6002 = vld [vmem:[%s3] sm:$0x1]
        %v6003 = vlaneseq
        %v6004 = vshrl.u32 %v6003, 7
        %v6005 = vsub.s32 0, %v6004
        %v6006 = vrot.slane %v6002, %v6005
        %v6007 = vadd.f32 %v5994, %v6006
        %v6008 = vadd.f32 %v5995, %v6006
        %v6009 = vadd.f32 %v5996, %v6006
        %v6010 = vadd.f32 %v5997, %v6006
        %v6011 = vadd.f32 %v5998, %v6006
        %v6012 = vadd.f32 %v5999, %v6006
        %v6013 = vadd.f32 %v6000, %v6006
        %v6014 = vadd.f32 %v6001, %v6006
        %v6015 = vmax.f32 %v6007, 0.0
        %v6016 = vmax.f32 %v6008, 0.0
        %v6017 = vmax.f32 %v6009, 0.0
        %v6018 = vmax.f32 %v6010, 0.0
        %v6019 = vmax.f32 %v6011, 0.0
        %v6020 = vmax.f32 %v6012, 0.0
        %v6021 = vmax.f32 %v6013, 0.0
        %v6022 = vmax.f32 %v6014, 0.0
        %v6025 = vrot.slane %v6015, 4
        %v6026 = vrot.slane %v6016, 4
        %v6027 = vsel %vm1602, %v6025, %v6026
        %v6031 = vsel %vm1602, 0.0, %v6025
        %v6032 = vsel %vm1602, %v6026, 0.0
        %v6033 = vpack.c.bf16 %v6027, %v6031
        %v6034 = vpack.c.bf16 %v6032, %v6032
        %v6037 = vunpack.c.l.b16 %v6033
        %v6038 = vunpack.c.h.b16 %v6033
        %v6039 = vunpack.c.l.b16 %v6034
        %v6040 = vpack.c.b16 %v6037, %v6037
        %v6041 = vpack.c.b16 %v6038, %v6038
        %v6042 = vpack.c.b16 %v6039, %v6039
        %6046 = vst [vmem:[#allocation2 + $0xc0] sm:$0xf] %v6040
        %6047 = vst [vmem:[#allocation2 + $0xc4] sm:$0xf] %v6041
        %6048 = vst [vmem:[#allocation2 + $0xc8] sm:$0xf] %v6042
        %v6051 = vrot.slane %v6017, 4
        %v6052 = vrot.slane %v6018, 4
        %v6053 = vsel %vm1602, %v6051, %v6052
        %v6057 = vsel %vm1602, 0.0, %v6051
        %v6058 = vsel %vm1602, %v6052, 0.0
        %v6059 = vpack.c.bf16 %v6053, %v6057
        %v6060 = vpack.c.bf16 %v6058, %v6058
        %v6063 = vunpack.c.l.b16 %v6059
        %v6064 = vunpack.c.h.b16 %v6059
        %v6065 = vunpack.c.l.b16 %v6060
        %v6066 = vpack.c.b16 %v6063, %v6063
        %v6067 = vpack.c.b16 %v6064, %v6064
        %v6068 = vpack.c.b16 %v6065, %v6065
        %6072 = vst [vmem:[#allocation2 + $0xcc] sm:$0xf] %v6066
        %6073 = vst [vmem:[#allocation2 + $0xd0] sm:$0xf] %v6067
        %6074 = vst [vmem:[#allocation2 + $0xd4] sm:$0xf] %v6068
        %v6077 = vrot.slane %v6019, 4
        %v6078 = vrot.slane %v6020, 4
        %v6079 = vsel %vm1602, %v6077, %v6078
        %v6083 = vsel %vm1602, 0.0, %v6077
        %v6084 = vsel %vm1602, %v6078, 0.0
        %v6085 = vpack.c.bf16 %v6079, %v6083
        %v6086 = vpack.c.bf16 %v6084, %v6084
        %v6089 = vunpack.c.l.b16 %v6085
        %v6090 = vunpack.c.h.b16 %v6085
        %v6091 = vunpack.c.l.b16 %v6086
        %v6092 = vpack.c.b16 %v6089, %v6089
        %v6093 = vpack.c.b16 %v6090, %v6090
        %v6094 = vpack.c.b16 %v6091, %v6091
        %6098 = vst [vmem:[#allocation2 + $0xd8] sm:$0xf] %v6092
        %6099 = vst [vmem:[#allocation2 + $0xdc] sm:$0xf] %v6093
        %6100 = vst [vmem:[#allocation2 + $0xe0] sm:$0xf] %v6094
        %v6103 = vrot.slane %v6021, 4
        %v6104 = vrot.slane %v6022, 4
        %v6105 = vsel %vm1602, %v6103, %v6104
        %v6109 = vsel %vm1602, 0.0, %v6103
        %v6110 = vsel %vm1602, %v6104, 0.0
        %v6111 = vpack.c.bf16 %v6105, %v6109
        %v6112 = vpack.c.bf16 %v6110, %v6110
        %v6115 = vunpack.c.l.b16 %v6111
        %v6116 = vunpack.c.h.b16 %v6111
        %v6117 = vunpack.c.l.b16 %v6112
        %v6118 = vpack.c.b16 %v6115, %v6115
        %v6119 = vpack.c.b16 %v6116, %v6116
        %v6120 = vpack.c.b16 %v6117, %v6117
        %6124 = vst [vmem:[#allocation2 + $0xe4] sm:$0xf] %v6118
        %6125 = vst [vmem:[#allocation2 + $0xe8] sm:$0xf] %v6119
        %6126 = vst [vmem:[#allocation2 + $0xec] sm:$0xf] %v6120
        %v6127 = vld [vmem:[#allocation2] sm:$0xf]
        %v6128 = vld [vmem:[#allocation2 + $0x4] sm:$0xf]
        %v6129 = vld [vmem:[#allocation2] sm:$0xe]
        %v6130 = vld [vmem:[#allocation2 + $0x8] sm:$0x1]
        %v6131 = vld [vmem:[#allocation2] sm:$0xc]
        %v6132 = vld [vmem:[#allocation2 + $0x8] sm:$0x3]
        %v6133 = vld [vmem:[#allocation2] sm:$0x8]
        %v6134 = vld [vmem:[#allocation2 + $0x8] sm:$0x7]
        %v6135 = vld [vmem:[#allocation2 + $0x8] sm:$0xf]
        %v6138 = vunpack.c.l.b16 %v6127
        %v6139 = vunpack.c.l.b16 %v6128
        %v6140 = vpack.c.b16 %v6139, %v6138
        %v6143 = vunpack.c.l.b16 %v6129
        %v6144 = vunpack.c.l.b16 %v6130
        %v6145 = vpack.c.b16 %v6139, %v6143
        %v6146 = vpack.c.b16 %v6144, %v6144
        %vm6147 = vcmask 1046528
        %v6148 = vrot.slane %v6145, 1
        %v6149 = vrot.slane %v6146, 1
        %v6150 = vsel %vm6147, %v6148, %v6149
        %6151 = vrot.lane.b32.xlu0 %v6150, 16
        %v6152 = vpop.permute.xlu0 %6151
        %v6155 = vunpack.c.l.b16 %v6131
        %v6156 = vunpack.c.l.b16 %v6132
        %v6157 = vpack.c.b16 %v6139, %v6155
        %v6158 = vpack.c.b16 %v6156, %v6156
        %vm6159 = vcmask 1045504
        %v6160 = vrot.slane %v6157, 2
        %v6161 = vrot.slane %v6158, 2
        %v6162 = vsel %vm6159, %v6160, %v6161
        %6163 = vrot.lane.b32.xlu0 %v6162, 32
        %v6164 = vpop.permute.xlu0 %6163
        %v6167 = vunpack.c.l.b16 %v6133
        %v6168 = vunpack.c.l.b16 %v6134
        %v6169 = vpack.c.b16 %v6139, %v6167
        %v6170 = vpack.c.b16 %v6168, %v6168
        %vm6171 = vcmask 1044480
        %v6172 = vrot.slane %v6169, 3
        %v6173 = vrot.slane %v6170, 3
        %v6174 = vsel %vm6171, %v6172, %v6173
        %6175 = vrot.lane.b32.xlu0 %v6174, 48
        %v6176 = vpop.permute.xlu0 %6175
        %v6178 = vunpack.c.l.b16 %v6135
        %v6179 = vpack.c.b16 %v6178, %v6139
        %6180 = vrot.lane.b32.xlu0 %v6179, 64
        %v6181 = vpop.permute.xlu0 %6180
        %vm6182 = vcmask 130048
        %v6185 = vsel %vm6182, %v6140, %v6152
        %vm6186 = vcmask 261120
        %v6188 = vsel %vm6186, %v6185, %v6164
        %vm6189 = vcmask 392192
        %v6191 = vsel %vm6189, %v6188, %v6176
        %vm6192 = vcmask 523264
        %v6194 = vsel %vm6192, %v6191, %v6181
        %vm6195 = vcmask 654336
        %v6197 = vsel %vm6195, %v6194, 0
        %s6199 = scalar_lea.vmem %s1, 448
        %v6200 = vld [vmem:[%s6199] sm:$0xf]
        %v6201 = vld [vmem:[%s6199 + $0x4] sm:$0xf]
        %v6202 = vld [vmem:[%s6199 + $0x8] sm:$0xf]
        %v6203 = vld [vmem:[%s6199 + $0xc] sm:$0xf]
        %v6204 = vld [vmem:[%s6199 + $0x10] sm:$0xf]
        %v6205 = vld [vmem:[%s6199 + $0x14] sm:$0xf]
        %v6206 = vld [vmem:[%s6199 + $0x18] sm:$0xf]
        %v6207 = vld [vmem:[%s6199 + $0x1c] sm:$0xf]
        %v6208 = vld [vmem:[%s6199 + $0x20] sm:$0xf]
        %v6209 = vld [vmem:[%s6199 + $0x24] sm:$0xf]
        %v6210 = vld [vmem:[%s6199 + $0x28] sm:$0xf]
        %v6211 = vld [vmem:[%s6199 + $0x2c] sm:$0xf]
        %v6212 = vld [vmem:[%s6199 + $0x30] sm:$0xf]
        %v6213 = vld [vmem:[%s6199 + $0x34] sm:$0xf]
        %v6214 = vld [vmem:[%s6199 + $0x38] sm:$0xf]
        %v6215 = vld [vmem:[%s6199 + $0x3c] sm:$0xf]
        %v6216 = vld [vmem:[#allocation2 + $0x18] sm:$0xf]
        %v6217 = vld [vmem:[#allocation2 + $0x1c] sm:$0xf]
        %v6218 = vld [vmem:[#allocation2 + $0x18] sm:$0xe]
        %v6219 = vld [vmem:[#allocation2 + $0x20] sm:$0x1]
        %v6220 = vld [vmem:[#allocation2 + $0x18] sm:$0xc]
        %v6221 = vld [vmem:[#allocation2 + $0x20] sm:$0x3]
        %v6222 = vld [vmem:[#allocation2 + $0x18] sm:$0x8]
        %v6223 = vld [vmem:[#allocation2 + $0x20] sm:$0x7]
        %v6224 = vld [vmem:[#allocation2 + $0x20] sm:$0xf]
        %v6227 = vunpack.c.l.b16 %v6216
        %v6228 = vunpack.c.l.b16 %v6217
        %v6229 = vpack.c.b16 %v6228, %v6227
        %v6232 = vunpack.c.l.b16 %v6218
        %v6233 = vunpack.c.l.b16 %v6219
        %v6234 = vpack.c.b16 %v6228, %v6232
        %v6235 = vpack.c.b16 %v6233, %v6233
        %v6236 = vrot.slane %v6234, 1
        %v6237 = vrot.slane %v6235, 1
        %v6238 = vsel %vm6147, %v6236, %v6237
        %6239 = vrot.lane.b32.xlu0 %v6238, 16
        %v6240 = vpop.permute.xlu0 %6239
        %v6243 = vunpack.c.l.b16 %v6220
        %v6244 = vunpack.c.l.b16 %v6221
        %v6245 = vpack.c.b16 %v6228, %v6243
        %v6246 = vpack.c.b16 %v6244, %v6244
        %v6247 = vrot.slane %v6245, 2
        %v6248 = vrot.slane %v6246, 2
        %v6249 = vsel %vm6159, %v6247, %v6248
        %6250 = vrot.lane.b32.xlu0 %v6249, 32
        %v6251 = vpop.permute.xlu0 %6250
        %v6254 = vunpack.c.l.b16 %v6222
        %v6255 = vunpack.c.l.b16 %v6223
        %v6256 = vpack.c.b16 %v6228, %v6254
        %v6257 = vpack.c.b16 %v6255, %v6255
        %v6258 = vrot.slane %v6256, 3
        %v6259 = vrot.slane %v6257, 3
        %v6260 = vsel %vm6171, %v6258, %v6259
        %6261 = vrot.lane.b32.xlu0 %v6260, 48
        %v6262 = vpop.permute.xlu0 %6261
        %v6264 = vunpack.c.l.b16 %v6224
        %v6265 = vpack.c.b16 %v6264, %v6228
        %6266 = vrot.lane.b32.xlu0 %v6265, 64
        %v6267 = vpop.permute.xlu0 %6266
        %v6270 = vsel %vm6182, %v6229, %v6240
        %v6272 = vsel %vm6186, %v6270, %v6251
        %v6274 = vsel %vm6189, %v6272, %v6262
        %v6276 = vsel %vm6192, %v6274, %v6267
        %v6277 = vsel %vm6195, %v6276, 0
        %s6279 = scalar_lea.vmem %s1, 512
        %v6280 = vld [vmem:[%s6279] sm:$0xf]
        %v6281 = vld [vmem:[%s6279 + $0x4] sm:$0xf]
        %v6282 = vld [vmem:[%s6279 + $0x8] sm:$0xf]
        %v6283 = vld [vmem:[%s6279 + $0xc] sm:$0xf]
        %v6284 = vld [vmem:[%s6279 + $0x10] sm:$0xf]
        %v6285 = vld [vmem:[%s6279 + $0x14] sm:$0xf]
        %v6286 = vld [vmem:[%s6279 + $0x18] sm:$0xf]
        %v6287 = vld [vmem:[%s6279 + $0x1c] sm:$0xf]
        %v6288 = vld [vmem:[%s6279 + $0x20] sm:$0xf]
        %v6289 = vld [vmem:[%s6279 + $0x24] sm:$0xf]
        %v6290 = vld [vmem:[%s6279 + $0x28] sm:$0xf]
        %v6291 = vld [vmem:[%s6279 + $0x2c] sm:$0xf]
        %v6292 = vld [vmem:[%s6279 + $0x30] sm:$0xf]
        %v6293 = vld [vmem:[%s6279 + $0x34] sm:$0xf]
        %v6294 = vld [vmem:[%s6279 + $0x38] sm:$0xf]
        %v6295 = vld [vmem:[%s6279 + $0x3c] sm:$0xf]
        %v6312 = vunpack.c.l.b16 %v6280
        %v6313 = vunpack.c.l.b16 %v6281
        %v6314 = vunpack.c.l.b16 %v6282
        %v6315 = vunpack.c.l.b16 %v6283
        %v6316 = vunpack.c.l.b16 %v6284
        %v6317 = vunpack.c.l.b16 %v6285
        %v6318 = vunpack.c.l.b16 %v6286
        %v6319 = vunpack.c.l.b16 %v6287
        %v6320 = vunpack.c.l.b16 %v6288
        %v6321 = vunpack.c.l.b16 %v6289
        %v6322 = vunpack.c.l.b16 %v6290
        %v6323 = vunpack.c.l.b16 %v6291
        %v6324 = vunpack.c.l.b16 %v6292
        %v6325 = vunpack.c.l.b16 %v6293
        %v6326 = vunpack.c.l.b16 %v6294
        %v6327 = vunpack.c.l.b16 %v6295
        %v6328 = vpack.c.b16 %v6313, %v6312
        %v6329 = vpack.c.b16 %v6315, %v6314
        %v6330 = vpack.c.b16 %v6317, %v6316
        %v6331 = vpack.c.b16 %v6319, %v6318
        %v6332 = vpack.c.b16 %v6321, %v6320
        %v6333 = vpack.c.b16 %v6323, %v6322
        %v6334 = vpack.c.b16 %v6325, %v6324
        %v6335 = vpack.c.b16 %v6327, %v6326
        %6344 = vmatprep.subr.bf16.mxu0 0
        %6345 = vmatpush1.bf16.msra.mxu0 %v6328
        %6346 = vmatprep.subr.bf16.mxu0 0
        %6347 = vmatpush1.bf16.msra.mxu0 %v6329
        %6348 = vmatprep.subr.bf16.mxu0 0
        %6349 = vmatpush1.bf16.msra.mxu0 %v6330
        %6350 = vmatprep.subr.bf16.mxu0 0
        %6351 = vmatpush1.bf16.msra.mxu0 %v6331
        %6352 = vmatprep.subr.bf16.mxu0 0
        %6353 = vmatpush1.bf16.msra.mxu0 %v6332
        %6354 = vmatprep.subr.bf16.mxu0 0
        %6355 = vmatpush1.bf16.msra.mxu0 %v6333
        %6356 = vmatprep.subr.bf16.mxu0 0
        %6357 = vmatpush1.bf16.msra.mxu0 %v6334
        %6358 = vmatprep.subr.bf16.mxu0 0
        %6359 = vmatpush1.bf16.msra.mxu0 %v6335
        %6360 = vmatprep.subr.bf16.mxu0 0
        %6361 = vmatpush1.bf16.msra.mxu0 0
        %6362 = vmatprep.subr.bf16.mxu0 0
        %6363 = vmatpush1.bf16.msra.mxu0 0
        %6364 = vmatprep.subr.bf16.mxu0 0
        %6365 = vmatpush1.bf16.msra.mxu0 0
        %6366 = vmatprep.subr.bf16.mxu0 0
        %6367 = vmatpush1.bf16.msra.mxu0 0
        %6368 = vmatprep.subr.bf16.mxu0 0
        %6369 = vmatpush1.bf16.msra.mxu0 0
        %6370 = vmatprep.subr.bf16.mxu0 0
        %6371 = vmatpush1.bf16.msra.mxu0 0
        %6372 = vmatprep.subr.bf16.mxu0 0
        %6373 = vmatpush1.bf16.msra.mxu0 0
        %6374 = vmatprep.subr.bf16.mxu0 0
        %6375 = vmatpush1.bf16.msra.mxu0 0
        %6376 = vmatprep.mubr.bf16.mxu0 0
        %6377 = vmatmul.mubr.bf16.gmra.mrb[0].mxu0 %v6277
        %v6378 = vpop.f32.mrb[0].mxu0
        %v6379 = vadd.f32 0.0, %v6378
        %v6380 = vpop.f32.mrb[0].mxu0
        %v6381 = vpop.f32.mrb[0].mxu0
        %v6382 = vadd.f32 0.0, %v6381
        %v6383 = vpop.f32.mrb[0].mxu0
        %6384 = vdwg.mxu0
        %v6401 = vunpack.c.l.b16 %v6200
        %v6402 = vunpack.c.l.b16 %v6201
        %v6403 = vunpack.c.l.b16 %v6202
        %v6404 = vunpack.c.l.b16 %v6203
        %v6405 = vunpack.c.l.b16 %v6204
        %v6406 = vunpack.c.l.b16 %v6205
        %v6407 = vunpack.c.l.b16 %v6206
        %v6408 = vunpack.c.l.b16 %v6207
        %v6409 = vunpack.c.l.b16 %v6208
        %v6410 = vunpack.c.l.b16 %v6209
        %v6411 = vunpack.c.l.b16 %v6210
        %v6412 = vunpack.c.l.b16 %v6211
        %v6413 = vunpack.c.l.b16 %v6212
        %v6414 = vunpack.c.l.b16 %v6213
        %v6415 = vunpack.c.l.b16 %v6214
        %v6416 = vunpack.c.l.b16 %v6215
        %v6417 = vpack.c.b16 %v6402, %v6401
        %v6418 = vpack.c.b16 %v6404, %v6403
        %v6419 = vpack.c.b16 %v6406, %v6405
        %v6420 = vpack.c.b16 %v6408, %v6407
        %v6421 = vpack.c.b16 %v6410, %v6409
        %v6422 = vpack.c.b16 %v6412, %v6411
        %v6423 = vpack.c.b16 %v6414, %v6413
        %v6424 = vpack.c.b16 %v6416, %v6415
        %6433 = vmatprep.subr.bf16.mxu0 0
        %6434 = vmatpush1.bf16.msra.mxu0 %v6417
        %6435 = vmatprep.subr.bf16.mxu0 0
        %6436 = vmatpush1.bf16.msra.mxu0 %v6418
        %6437 = vmatprep.subr.bf16.mxu0 0
        %6438 = vmatpush1.bf16.msra.mxu0 %v6419
        %6439 = vmatprep.subr.bf16.mxu0 0
        %6440 = vmatpush1.bf16.msra.mxu0 %v6420
        %6441 = vmatprep.subr.bf16.mxu0 0
        %6442 = vmatpush1.bf16.msra.mxu0 %v6421
        %6443 = vmatprep.subr.bf16.mxu0 0
        %6444 = vmatpush1.bf16.msra.mxu0 %v6422
        %6445 = vmatprep.subr.bf16.mxu0 0
        %6446 = vmatpush1.bf16.msra.mxu0 %v6423
        %6447 = vmatprep.subr.bf16.mxu0 0
        %6448 = vmatpush1.bf16.msra.mxu0 %v6424
        %6449 = vmatprep.subr.bf16.mxu0 0
        %6450 = vmatpush1.bf16.msra.mxu0 0
        %6451 = vmatprep.subr.bf16.mxu0 0
        %6452 = vmatpush1.bf16.msra.mxu0 0
        %6453 = vmatprep.subr.bf16.mxu0 0
        %6454 = vmatpush1.bf16.msra.mxu0 0
        %6455 = vmatprep.subr.bf16.mxu0 0
        %6456 = vmatpush1.bf16.msra.mxu0 0
        %6457 = vmatprep.subr.bf16.mxu0 0
        %6458 = vmatpush1.bf16.msra.mxu0 0
        %6459 = vmatprep.subr.bf16.mxu0 0
        %6460 = vmatpush1.bf16.msra.mxu0 0
        %6461 = vmatprep.subr.bf16.mxu0 0
        %6462 = vmatpush1.bf16.msra.mxu0 0
        %6463 = vmatprep.subr.bf16.mxu0 0
        %6464 = vmatpush1.bf16.msra.mxu0 0
        %6465 = vmatprep.mubr.bf16.mxu0 0
        %6466 = vmatmul.mubr.bf16.gmra.mrb[0].mxu0 %v6197
        %v6467 = vpop.f32.mrb[0].mxu0
        %v6468 = vadd.f32 %v6379, %v6467
        %v6469 = vpop.f32.mrb[0].mxu0
        %v6470 = vpop.f32.mrb[0].mxu0
        %v6471 = vadd.f32 %v6382, %v6470
        %v6472 = vpop.f32.mrb[0].mxu0
        %6473 = vdwg.mxu0
        %v6474 = vld [vmem:[#allocation2 + $0x30] sm:$0xf]
        %v6475 = vld [vmem:[#allocation2 + $0x34] sm:$0xf]
        %v6476 = vld [vmem:[#allocation2 + $0x30] sm:$0xe]
        %v6477 = vld [vmem:[#allocation2 + $0x38] sm:$0x1]
        %v6478 = vld [vmem:[#allocation2 + $0x30] sm:$0xc]
        %v6479 = vld [vmem:[#allocation2 + $0x38] sm:$0x3]
        %v6480 = vld [vmem:[#allocation2 + $0x30] sm:$0x8]
        %v6481 = vld [vmem:[#allocation2 + $0x38] sm:$0x7]
        %v6482 = vld [vmem:[#allocation2 + $0x38] sm:$0xf]
        %v6485 = vunpack.c.l.b16 %v6474
        %v6486 = vunpack.c.l.b16 %v6475
        %v6487 = vpack.c.b16 %v6486, %v6485
        %v6490 = vunpack.c.l.b16 %v6476
        %v6491 = vunpack.c.l.b16 %v6477
        %v6492 = vpack.c.b16 %v6486, %v6490
        %v6493 = vpack.c.b16 %v6491, %v6491
        %v6494 = vrot.slane %v6492, 1
        %v6495 = vrot.slane %v6493, 1
        %v6496 = vsel %vm6147, %v6494, %v6495
        %6497 = vrot.lane.b32.xlu0 %v6496, 16
        %v6498 = vpop.permute.xlu0 %6497
        %v6501 = vunpack.c.l.b16 %v6478
        %v6502 = vunpack.c.l.b16 %v6479
        %v6503 = vpack.c.b16 %v6486, %v6501
        %v6504 = vpack.c.b16 %v6502, %v6502
        %v6505 = vrot.slane %v6503, 2
        %v6506 = vrot.slane %v6504, 2
        %v6507 = vsel %vm6159, %v6505, %v6506
        %6508 = vrot.lane.b32.xlu0 %v6507, 32
        %v6509 = vpop.permute.xlu0 %6508
        %v6512 = vunpack.c.l.b16 %v6480
        %v6513 = vunpack.c.l.b16 %v6481
        %v6514 = vpack.c.b16 %v6486, %v6512
        %v6515 = vpack.c.b16 %v6513, %v6513
        %v6516 = vrot.slane %v6514, 3
        %v6517 = vrot.slane %v6515, 3
        %v6518 = vsel %vm6171, %v6516, %v6517
        %6519 = vrot.lane.b32.xlu0 %v6518, 48
        %v6520 = vpop.permute.xlu0 %6519
        %v6522 = vunpack.c.l.b16 %v6482
        %v6523 = vpack.c.b16 %v6522, %v6486
        %6524 = vrot.lane.b32.xlu0 %v6523, 64
        %v6525 = vpop.permute.xlu0 %6524
        %v6528 = vsel %vm6182, %v6487, %v6498
        %v6530 = vsel %vm6186, %v6528, %v6509
        %v6532 = vsel %vm6189, %v6530, %v6520
        %v6534 = vsel %vm6192, %v6532, %v6525
        %v6535 = vsel %vm6195, %v6534, 0
        %s6537 = scalar_lea.vmem %s1, 576
        %v6538 = vld [vmem:[%s6537] sm:$0xf]
        %v6539 = vld [vmem:[%s6537 + $0x4] sm:$0xf]
        %v6540 = vld [vmem:[%s6537 + $0x8] sm:$0xf]
        %v6541 = vld [vmem:[%s6537 + $0xc] sm:$0xf]
        %v6542 = vld [vmem:[%s6537 + $0x10] sm:$0xf]
        %v6543 = vld [vmem:[%s6537 + $0x14] sm:$0xf]
        %v6544 = vld [vmem:[%s6537 + $0x18] sm:$0xf]
        %v6545 = vld [vmem:[%s6537 + $0x1c] sm:$0xf]
        %v6546 = vld [vmem:[%s6537 + $0x20] sm:$0xf]
        %v6547 = vld [vmem:[%s6537 + $0x24] sm:$0xf]
        %v6548 = vld [vmem:[%s6537 + $0x28] sm:$0xf]
        %v6549 = vld [vmem:[%s6537 + $0x2c] sm:$0xf]
        %v6550 = vld [vmem:[%s6537 + $0x30] sm:$0xf]
        %v6551 = vld [vmem:[%s6537 + $0x34] sm:$0xf]
        %v6552 = vld [vmem:[%s6537 + $0x38] sm:$0xf]
        %v6553 = vld [vmem:[%s6537 + $0x3c] sm:$0xf]
        %v6570 = vunpack.c.l.b16 %v6538
        %v6571 = vunpack.c.l.b16 %v6539
        %v6572 = vunpack.c.l.b16 %v6540
        %v6573 = vunpack.c.l.b16 %v6541
        %v6574 = vunpack.c.l.b16 %v6542
        %v6575 = vunpack.c.l.b16 %v6543
        %v6576 = vunpack.c.l.b16 %v6544
        %v6577 = vunpack.c.l.b16 %v6545
        %v6578 = vunpack.c.l.b16 %v6546
        %v6579 = vunpack.c.l.b16 %v6547
        %v6580 = vunpack.c.l.b16 %v6548
        %v6581 = vunpack.c.l.b16 %v6549
        %v6582 = vunpack.c.l.b16 %v6550
        %v6583 = vunpack.c.l.b16 %v6551
        %v6584 = vunpack.c.l.b16 %v6552
        %v6585 = vunpack.c.l.b16 %v6553
        %v6586 = vpack.c.b16 %v6571, %v6570
        %v6587 = vpack.c.b16 %v6573, %v6572
        %v6588 = vpack.c.b16 %v6575, %v6574
        %v6589 = vpack.c.b16 %v6577, %v6576
        %v6590 = vpack.c.b16 %v6579, %v6578
        %v6591 = vpack.c.b16 %v6581, %v6580
        %v6592 = vpack.c.b16 %v6583, %v6582
        %v6593 = vpack.c.b16 %v6585, %v6584
        %6602 = vmatprep.subr.bf16.mxu0 0
        %6603 = vmatpush1.bf16.msra.mxu0 %v6586
        %6604 = vmatprep.subr.bf16.mxu0 0
        %6605 = vmatpush1.bf16.msra.mxu0 %v6587
        %6606 = vmatprep.subr.bf16.mxu0 0
        %6607 = vmatpush1.bf16.msra.mxu0 %v6588
        %6608 = vmatprep.subr.bf16.mxu0 0
        %6609 = vmatpush1.bf16.msra.mxu0 %v6589
        %6610 = vmatprep.subr.bf16.mxu0 0
        %6611 = vmatpush1.bf16.msra.mxu0 %v6590
        %6612 = vmatprep.subr.bf16.mxu0 0
        %6613 = vmatpush1.bf16.msra.mxu0 %v6591
        %6614 = vmatprep.subr.bf16.mxu0 0
        %6615 = vmatpush1.bf16.msra.mxu0 %v6592
        %6616 = vmatprep.subr.bf16.mxu0 0
        %6617 = vmatpush1.bf16.msra.mxu0 %v6593
        %6618 = vmatprep.subr.bf16.mxu0 0
        %6619 = vmatpush1.bf16.msra.mxu0 0
        %6620 = vmatprep.subr.bf16.mxu0 0
        %6621 = vmatpush1.bf16.msra.mxu0 0
        %6622 = vmatprep.subr.bf16.mxu0 0
        %6623 = vmatpush1.bf16.msra.mxu0 0
        %6624 = vmatprep.subr.bf16.mxu0 0
        %6625 = vmatpush1.bf16.msra.mxu0 0
        %6626 = vmatprep.subr.bf16.mxu0 0
        %6627 = vmatpush1.bf16.msra.mxu0 0
        %6628 = vmatprep.subr.bf16.mxu0 0
        %6629 = vmatpush1.bf16.msra.mxu0 0
        %6630 = vmatprep.subr.bf16.mxu0 0
        %6631 = vmatpush1.bf16.msra.mxu0 0
        %6632 = vmatprep.subr.bf16.mxu0 0
        %6633 = vmatpush1.bf16.msra.mxu0 0
        %6634 = vmatprep.mubr.bf16.mxu0 0
        %6635 = vmatmul.mubr.bf16.gmra.mrb[0].mxu0 %v6535
        %v6636 = vpop.f32.mrb[0].mxu0
        %v6637 = vadd.f32 0.0, %v6636
        %v6638 = vpop.f32.mrb[0].mxu0
        %v6639 = vpop.f32.mrb[0].mxu0
        %v6640 = vadd.f32 0.0, %v6639
        %v6641 = vpop.f32.mrb[0].mxu0
        %6642 = vdwg.mxu0
        %v6643 = vadd.f32 %v6468, %v6637
        %v6644 = vadd.f32 %v6471, %v6640
        %v6645 = vld [vmem:[#allocation2 + $0x48] sm:$0xf]
        %v6646 = vld [vmem:[#allocation2 + $0x4c] sm:$0xf]
        %v6647 = vld [vmem:[#allocation2 + $0x48] sm:$0xe]
        %v6648 = vld [vmem:[#allocation2 + $0x50] sm:$0x1]
        %v6649 = vld [vmem:[#allocation2 + $0x48] sm:$0xc]
        %v6650 = vld [vmem:[#allocation2 + $0x50] sm:$0x3]
        %v6651 = vld [vmem:[#allocation2 + $0x48] sm:$0x8]
        %v6652 = vld [vmem:[#allocation2 + $0x50] sm:$0x7]
        %v6653 = vld [vmem:[#allocation2 + $0x50] sm:$0xf]
        %v6656 = vunpack.c.l.b16 %v6645
        %v6657 = vunpack.c.l.b16 %v6646
        %v6658 = vpack.c.b16 %v6657, %v6656
        %v6661 = vunpack.c.l.b16 %v6647
        %v6662 = vunpack.c.l.b16 %v6648
        %v6663 = vpack.c.b16 %v6657, %v6661
        %v6664 = vpack.c.b16 %v6662, %v6662
        %v6665 = vrot.slane %v6663, 1
        %v6666 = vrot.slane %v6664, 1
        %v6667 = vsel %vm6147, %v6665, %v6666
        %6668 = vrot.lane.b32.xlu0 %v6667, 16
        %v6669 = vpop.permute.xlu0 %6668
        %v6672 = vunpack.c.l.b16 %v6649
        %v6673 = vunpack.c.l.b16 %v6650
        %v6674 = vpack.c.b16 %v6657, %v6672
        %v6675 = vpack.c.b16 %v6673, %v6673
        %v6676 = vrot.slane %v6674, 2
        %v6677 = vrot.slane %v6675, 2
        %v6678 = vsel %vm6159, %v6676, %v6677
        %6679 = vrot.lane.b32.xlu0 %v6678, 32
        %v6680 = vpop.permute.xlu0 %6679
        %v6683 = vunpack.c.l.b16 %v6651
        %v6684 = vunpack.c.l.b16 %v6652
        %v6685 = vpack.c.b16 %v6657, %v6683
        %v6686 = vpack.c.b16 %v6684, %v6684
        %v6687 = vrot.slane %v6685, 3
        %v6688 = vrot.slane %v6686, 3
        %v6689 = vsel %vm6171, %v6687, %v6688
        %6690 = vrot.lane.b32.xlu0 %v6689, 48
        %v6691 = vpop.permute.xlu0 %6690
        %v6693 = vunpack.c.l.b16 %v6653
        %v6694 = vpack.c.b16 %v6693, %v6657
        %6695 = vrot.lane.b32.xlu0 %v6694, 64
        %v6696 = vpop.permute.xlu0 %6695
        %v6699 = vsel %vm6182, %v6658, %v6669
        %v6701 = vsel %vm6186, %v6699, %v6680
        %v6703 = vsel %vm6189, %v6701, %v6691
        %v6705 = vsel %vm6192, %v6703, %v6696
        %v6706 = vsel %vm6195, %v6705, 0
        %s6708 = scalar_lea.vmem %s1, 640
        %v6709 = vld [vmem:[%s6708] sm:$0xf]
        %v6710 = vld [vmem:[%s6708 + $0x4] sm:$0xf]
        %v6711 = vld [vmem:[%s6708 + $0x8] sm:$0xf]
        %v6712 = vld [vmem:[%s6708 + $0xc] sm:$0xf]
        %v6713 = vld [vmem:[%s6708 + $0x10] sm:$0xf]
        %v6714 = vld [vmem:[%s6708 + $0x14] sm:$0xf]
        %v6715 = vld [vmem:[%s6708 + $0x18] sm:$0xf]
        %v6716 = vld [vmem:[%s6708 + $0x1c] sm:$0xf]
        %v6717 = vld [vmem:[%s6708 + $0x20] sm:$0xf]
        %v6718 = vld [vmem:[%s6708 + $0x24] sm:$0xf]
        %v6719 = vld [vmem:[%s6708 + $0x28] sm:$0xf]
        %v6720 = vld [vmem:[%s6708 + $0x2c] sm:$0xf]
        %v6721 = vld [vmem:[%s6708 + $0x30] sm:$0xf]
        %v6722 = vld [vmem:[%s6708 + $0x34] sm:$0xf]
        %v6723 = vld [vmem:[%s6708 + $0x38] sm:$0xf]
        %v6724 = vld [vmem:[%s6708 + $0x3c] sm:$0xf]
        %v6741 = vunpack.c.l.b16 %v6709
        %v6742 = vunpack.c.l.b16 %v6710
        %v6743 = vunpack.c.l.b16 %v6711
        %v6744 = vunpack.c.l.b16 %v6712
        %v6745 = vunpack.c.l.b16 %v6713
        %v6746 = vunpack.c.l.b16 %v6714
        %v6747 = vunpack.c.l.b16 %v6715
        %v6748 = vunpack.c.l.b16 %v6716
        %v6749 = vunpack.c.l.b16 %v6717
        %v6750 = vunpack.c.l.b16 %v6718
        %v6751 = vunpack.c.l.b16 %v6719
        %v6752 = vunpack.c.l.b16 %v6720
        %v6753 = vunpack.c.l.b16 %v6721
        %v6754 = vunpack.c.l.b16 %v6722
        %v6755 = vunpack.c.l.b16 %v6723
        %v6756 = vunpack.c.l.b16 %v6724
        %v6757 = vpack.c.b16 %v6742, %v6741
        %v6758 = vpack.c.b16 %v6744, %v6743
        %v6759 = vpack.c.b16 %v6746, %v6745
        %v6760 = vpack.c.b16 %v6748, %v6747
        %v6761 = vpack.c.b16 %v6750, %v6749
        %v6762 = vpack.c.b16 %v6752, %v6751
        %v6763 = vpack.c.b16 %v6754, %v6753
        %v6764 = vpack.c.b16 %v6756, %v6755
        %6773 = vmatprep.subr.bf16.mxu0 0
        %6774 = vmatpush1.bf16.msra.mxu0 %v6757
        %6775 = vmatprep.subr.bf16.mxu0 0
        %6776 = vmatpush1.bf16.msra.mxu0 %v6758
        %6777 = vmatprep.subr.bf16.mxu0 0
        %6778 = vmatpush1.bf16.msra.mxu0 %v6759
        %6779 = vmatprep.subr.bf16.mxu0 0
        %6780 = vmatpush1.bf16.msra.mxu0 %v6760
        %6781 = vmatprep.subr.bf16.mxu0 0
        %6782 = vmatpush1.bf16.msra.mxu0 %v6761
        %6783 = vmatprep.subr.bf16.mxu0 0
        %6784 = vmatpush1.bf16.msra.mxu0 %v6762
        %6785 = vmatprep.subr.bf16.mxu0 0
        %6786 = vmatpush1.bf16.msra.mxu0 %v6763
        %6787 = vmatprep.subr.bf16.mxu0 0
        %6788 = vmatpush1.bf16.msra.mxu0 %v6764
        %6789 = vmatprep.subr.bf16.mxu0 0
        %6790 = vmatpush1.bf16.msra.mxu0 0
        %6791 = vmatprep.subr.bf16.mxu0 0
        %6792 = vmatpush1.bf16.msra.mxu0 0
        %6793 = vmatprep.subr.bf16.mxu0 0
        %6794 = vmatpush1.bf16.msra.mxu0 0
        %6795 = vmatprep.subr.bf16.mxu0 0
        %6796 = vmatpush1.bf16.msra.mxu0 0
        %6797 = vmatprep.subr.bf16.mxu0 0
        %6798 = vmatpush1.bf16.msra.mxu0 0
        %6799 = vmatprep.subr.bf16.mxu0 0
        %6800 = vmatpush1.bf16.msra.mxu0 0
        %6801 = vmatprep.subr.bf16.mxu0 0
        %6802 = vmatpush1.bf16.msra.mxu0 0
        %6803 = vmatprep.subr.bf16.mxu0 0
        %6804 = vmatpush1.bf16.msra.mxu0 0
        %6805 = vmatprep.mubr.bf16.mxu0 0
        %6806 = vmatmul.mubr.bf16.gmra.mrb[0].mxu0 %v6706
        %v6807 = vpop.f32.mrb[0].mxu0
        %v6808 = vadd.f32 0.0, %v6807
        %v6809 = vpop.f32.mrb[0].mxu0
        %v6810 = vpop.f32.mrb[0].mxu0
        %v6811 = vadd.f32 0.0, %v6810
        %v6812 = vpop.f32.mrb[0].mxu0
        %6813 = vdwg.mxu0
        %v6814 = vadd.f32 %v6643, %v6808
        %v6815 = vadd.f32 %v6644, %v6811
        %v6816 = vld [vmem:[#allocation2 + $0x60] sm:$0xf]
        %v6817 = vld [vmem:[#allocation2 + $0x64] sm:$0xf]
        %v6818 = vld [vmem:[#allocation2 + $0x60] sm:$0xe]
        %v6819 = vld [vmem:[#allocation2 + $0x68] sm:$0x1]
        %v6820 = vld [vmem:[#allocation2 + $0x60] sm:$0xc]
        %v6821 = vld [vmem:[#allocation2 + $0x68] sm:$0x3]
        %v6822 = vld [vmem:[#allocation2 + $0x60] sm:$0x8]
        %v6823 = vld [vmem:[#allocation2 + $0x68] sm:$0x7]
        %v6824 = vld [vmem:[#allocation2 + $0x68] sm:$0xf]
        %v6827 = vunpack.c.l.b16 %v6816
        %v6828 = vunpack.c.l.b16 %v6817
        %v6829 = vpack.c.b16 %v6828, %v6827
        %v6832 = vunpack.c.l.b16 %v6818
        %v6833 = vunpack.c.l.b16 %v6819
        %v6834 = vpack.c.b16 %v6828, %v6832
        %v6835 = vpack.c.b16 %v6833, %v6833
        %v6836 = vrot.slane %v6834, 1
        %v6837 = vrot.slane %v6835, 1
        %v6838 = vsel %vm6147, %v6836, %v6837
        %6839 = vrot.lane.b32.xlu0 %v6838, 16
        %v6840 = vpop.permute.xlu0 %6839
        %v6843 = vunpack.c.l.b16 %v6820
        %v6844 = vunpack.c.l.b16 %v6821
        %v6845 = vpack.c.b16 %v6828, %v6843
        %v6846 = vpack.c.b16 %v6844, %v6844
        %v6847 = vrot.slane %v6845, 2
        %v6848 = vrot.slane %v6846, 2
        %v6849 = vsel %vm6159, %v6847, %v6848
        %6850 = vrot.lane.b32.xlu0 %v6849, 32
        %v6851 = vpop.permute.xlu0 %6850
        %v6854 = vunpack.c.l.b16 %v6822
        %v6855 = vunpack.c.l.b16 %v6823
        %v6856 = vpack.c.b16 %v6828, %v6854
        %v6857 = vpack.c.b16 %v6855, %v6855
        %v6858 = vrot.slane %v6856, 3
        %v6859 = vrot.slane %v6857, 3
        %v6860 = vsel %vm6171, %v6858, %v6859
        %6861 = vrot.lane.b32.xlu0 %v6860, 48
        %v6862 = vpop.permute.xlu0 %6861
        %v6864 = vunpack.c.l.b16 %v6824
        %v6865 = vpack.c.b16 %v6864, %v6828
        %6866 = vrot.lane.b32.xlu0 %v6865, 64
        %v6867 = vpop.permute.xlu0 %6866
        %v6870 = vsel %vm6182, %v6829, %v6840
        %v6872 = vsel %vm6186, %v6870, %v6851
        %v6874 = vsel %vm6189, %v6872, %v6862
        %v6876 = vsel %vm6192, %v6874, %v6867
        %v6877 = vsel %vm6195, %v6876, 0
        %s6879 = scalar_lea.vmem %s1, 704
        %v6880 = vld [vmem:[%s6879] sm:$0xf]
        %v6881 = vld [vmem:[%s6879 + $0x4] sm:$0xf]
        %v6882 = vld [vmem:[%s6879 + $0x8] sm:$0xf]
        %v6883 = vld [vmem:[%s6879 + $0xc] sm:$0xf]
        %v6884 = vld [vmem:[%s6879 + $0x10] sm:$0xf]
        %v6885 = vld [vmem:[%s6879 + $0x14] sm:$0xf]
        %v6886 = vld [vmem:[%s6879 + $0x18] sm:$0xf]
        %v6887 = vld [vmem:[%s6879 + $0x1c] sm:$0xf]
        %v6888 = vld [vmem:[%s6879 + $0x20] sm:$0xf]
        %v6889 = vld [vmem:[%s6879 + $0x24] sm:$0xf]
        %v6890 = vld [vmem:[%s6879 + $0x28] sm:$0xf]
        %v6891 = vld [vmem:[%s6879 + $0x2c] sm:$0xf]
        %v6892 = vld [vmem:[%s6879 + $0x30] sm:$0xf]
        %v6893 = vld [vmem:[%s6879 + $0x34] sm:$0xf]
        %v6894 = vld [vmem:[%s6879 + $0x38] sm:$0xf]
        %v6895 = vld [vmem:[%s6879 + $0x3c] sm:$0xf]
        %v6912 = vunpack.c.l.b16 %v6880
        %v6913 = vunpack.c.l.b16 %v6881
        %v6914 = vunpack.c.l.b16 %v6882
        %v6915 = vunpack.c.l.b16 %v6883
        %v6916 = vunpack.c.l.b16 %v6884
        %v6917 = vunpack.c.l.b16 %v6885
        %v6918 = vunpack.c.l.b16 %v6886
        %v6919 = vunpack.c.l.b16 %v6887
        %v6920 = vunpack.c.l.b16 %v6888
        %v6921 = vunpack.c.l.b16 %v6889
        %v6922 = vunpack.c.l.b16 %v6890
        %v6923 = vunpack.c.l.b16 %v6891
        %v6924 = vunpack.c.l.b16 %v6892
        %v6925 = vunpack.c.l.b16 %v6893
        %v6926 = vunpack.c.l.b16 %v6894
        %v6927 = vunpack.c.l.b16 %v6895
        %v6928 = vpack.c.b16 %v6913, %v6912
        %v6929 = vpack.c.b16 %v6915, %v6914
        %v6930 = vpack.c.b16 %v6917, %v6916
        %v6931 = vpack.c.b16 %v6919, %v6918
        %v6932 = vpack.c.b16 %v6921, %v6920
        %v6933 = vpack.c.b16 %v6923, %v6922
        %v6934 = vpack.c.b16 %v6925, %v6924
        %v6935 = vpack.c.b16 %v6927, %v6926
        %6944 = vmatprep.subr.bf16.mxu0 0
        %6945 = vmatpush1.bf16.msra.mxu0 %v6928
        %6946 = vmatprep.subr.bf16.mxu0 0
        %6947 = vmatpush1.bf16.msra.mxu0 %v6929
        %6948 = vmatprep.subr.bf16.mxu0 0
        %6949 = vmatpush1.bf16.msra.mxu0 %v6930
        %6950 = vmatprep.subr.bf16.mxu0 0
        %6951 = vmatpush1.bf16.msra.mxu0 %v6931
        %6952 = vmatprep.subr.bf16.mxu0 0
        %6953 = vmatpush1.bf16.msra.mxu0 %v6932
        %6954 = vmatprep.subr.bf16.mxu0 0
        %6955 = vmatpush1.bf16.msra.mxu0 %v6933
        %6956 = vmatprep.subr.bf16.mxu0 0
        %6957 = vmatpush1.bf16.msra.mxu0 %v6934
        %6958 = vmatprep.subr.bf16.mxu0 0
        %6959 = vmatpush1.bf16.msra.mxu0 %v6935
        %6960 = vmatprep.subr.bf16.mxu0 0
        %6961 = vmatpush1.bf16.msra.mxu0 0
        %6962 = vmatprep.subr.bf16.mxu0 0
        %6963 = vmatpush1.bf16.msra.mxu0 0
        %6964 = vmatprep.subr.bf16.mxu0 0
        %6965 = vmatpush1.bf16.msra.mxu0 0
        %6966 = vmatprep.subr.bf16.mxu0 0
        %6967 = vmatpush1.bf16.msra.mxu0 0
        %6968 = vmatprep.subr.bf16.mxu0 0
        %6969 = vmatpush1.bf16.msra.mxu0 0
        %6970 = vmatprep.subr.bf16.mxu0 0
        %6971 = vmatpush1.bf16.msra.mxu0 0
        %6972 = vmatprep.subr.bf16.mxu0 0
        %6973 = vmatpush1.bf16.msra.mxu0 0
        %6974 = vmatprep.subr.bf16.mxu0 0
        %6975 = vmatpush1.bf16.msra.mxu0 0
        %6976 = vmatprep.mubr.bf16.mxu0 0
        %6977 = vmatmul.mubr.bf16.gmra.mrb[0].mxu0 %v6877
        %v6978 = vpop.f32.mrb[0].mxu0
        %v6979 = vadd.f32 0.0, %v6978
        %v6980 = vpop.f32.mrb[0].mxu0
        %v6981 = vpop.f32.mrb[0].mxu0
        %v6982 = vadd.f32 0.0, %v6981
        %v6983 = vpop.f32.mrb[0].mxu0
        %6984 = vdwg.mxu0
        %v6985 = vadd.f32 %v6814, %v6979
        %v6986 = vadd.f32 %v6815, %v6982
        %v6987 = vld [vmem:[%s2 + $0x1] sm:$0x1]
        %v6988 = vlaneseq
        %v6989 = vshrl.u32 %v6988, 7
        %v6990 = vsub.s32 0, %v6989
        %v6991 = vrot.slane %v6987, %v6990
        %v6992 = vmul.f32 %v6985, %v6991
        %v6993 = vmul.f32 %v6986, %v6991
        %v6994 = vld [vmem:[%s3 + $0x1] sm:$0x1]
        %v6995 = vlaneseq
        %v6996 = vshrl.u32 %v6995, 7
        %v6997 = vsub.s32 0, %v6996
        %v6998 = vrot.slane %v6994, %v6997
        %v6999 = vadd.f32 %v6992, %v6998
        %v7000 = vadd.f32 %v6993, %v6998
        %v7001 = vmax.f32 %v6999, 0.0
        %v7002 = vmax.f32 %v7000, 0.0
        %v7005 = vrot.slane %v7001, 4
        %v7006 = vrot.slane %v7002, 4
        %v7007 = vsel %vm1602, %v7005, %v7006
        %v7011 = vsel %vm1602, 0.0, %v7005
        %v7012 = vsel %vm1602, %v7006, 0.0
        %v7013 = vpack.c.bf16 %v7007, %v7011
        %v7014 = vpack.c.bf16 %v7012, %v7012
        %v7017 = vunpack.c.l.b16 %v7013
        %v7018 = vunpack.c.h.b16 %v7013
        %v7019 = vunpack.c.l.b16 %v7014
        %v7020 = vpack.c.b16 %v7017, %v7017
        %v7021 = vpack.c.b16 %v7018, %v7018
        %v7022 = vpack.c.b16 %v7019, %v7019
        %7026 = vst [vmem:[#allocation3 + $0x30] sm:$0xf] %v7020
        %7027 = vst [vmem:[#allocation3 + $0x34] sm:$0xf] %v7021
        %7028 = vst [vmem:[#allocation3 + $0x38] sm:$0xf] %v7022
        %v7029 = vld [vmem:[#allocation2 + $0x30] sm:$0xf]
        %v7030 = vld [vmem:[#allocation2 + $0x34] sm:$0xf]
        %v7031 = vld [vmem:[#allocation2 + $0x30] sm:$0xe]
        %v7032 = vld [vmem:[#allocation2 + $0x38] sm:$0x1]
        %v7033 = vld [vmem:[#allocation2 + $0x30] sm:$0xc]
        %v7034 = vld [vmem:[#allocation2 + $0x38] sm:$0x3]
        %v7035 = vld [vmem:[#allocation2 + $0x30] sm:$0x8]
        %v7036 = vld [vmem:[#allocation2 + $0x38] sm:$0x7]
        %v7037 = vld [vmem:[#allocation2 + $0x38] sm:$0xf]
        %v7040 = vunpack.c.l.b16 %v7029
        %v7041 = vunpack.c.l.b16 %v7030
        %v7042 = vpack.c.b16 %v7041, %v7040
        %v7045 = vunpack.c.l.b16 %v7031
        %v7046 = vunpack.c.l.b16 %v7032
        %v7047 = vpack.c.b16 %v7041, %v7045
        %v7048 = vpack.c.b16 %v7046, %v7046
        %v7049 = vrot.slane %v7047, 1
        %v7050 = vrot.slane %v7048, 1
        %v7051 = vsel %vm6147, %v7049, %v7050
        %7052 = vrot.lane.b32.xlu0 %v7051, 16
        %v7053 = vpop.permute.xlu0 %7052
        %v7056 = vunpack.c.l.b16 %v7033
        %v7057 = vunpack.c.l.b16 %v7034
        %v7058 = vpack.c.b16 %v7041, %v7056
        %v7059 = vpack.c.b16 %v7057, %v7057
        %v7060 = vrot.slane %v7058, 2
        %v7061 = vrot.slane %v7059, 2
        %v7062 = vsel %vm6159, %v7060, %v7061
        %7063 = vrot.lane.b32.xlu0 %v7062, 32
        %v7064 = vpop.permute.xlu0 %7063
        %v7067 = vunpack.c.l.b16 %v7035
        %v7068 = vunpack.c.l.b16 %v7036
        %v7069 = vpack.c.b16 %v7041, %v7067
        %v7070 = vpack.c.b16 %v7068, %v7068
        %v7071 = vrot.slane %v7069, 3
        %v7072 = vrot.slane %v7070, 3
        %v7073 = vsel %vm6171, %v7071, %v7072
        %7074 = vrot.lane.b32.xlu0 %v7073, 48
        %v7075 = vpop.permute.xlu0 %7074
        %v7077 = vunpack.c.l.b16 %v7037
        %v7078 = vpack.c.b16 %v7077, %v7041
        %7079 = vrot.lane.b32.xlu0 %v7078, 64
        %v7080 = vpop.permute.xlu0 %7079
        %v7083 = vsel %vm6182, %v7042, %v7053
        %v7085 = vsel %vm6186, %v7083, %v7064
        %v7087 = vsel %vm6189, %v7085, %v7075
        %v7089 = vsel %vm6192, %v7087, %v7080
        %v7090 = vsel %vm6195, %v7089, 0
        %v7092 = vld [vmem:[%s6199] sm:$0xf]
        %v7093 = vld [vmem:[%s6199 + $0x4] sm:$0xf]
        %v7094 = vld [vmem:[%s6199 + $0x8] sm:$0xf]
        %v7095 = vld [vmem:[%s6199 + $0xc] sm:$0xf]
        %v7096 = vld [vmem:[%s6199 + $0x10] sm:$0xf]
        %v7097 = vld [vmem:[%s6199 + $0x14] sm:$0xf]
        %v7098 = vld [vmem:[%s6199 + $0x18] sm:$0xf]
        %v7099 = vld [vmem:[%s6199 + $0x1c] sm:$0xf]
        %v7100 = vld [vmem:[%s6199 + $0x20] sm:$0xf]
        %v7101 = vld [vmem:[%s6199 + $0x24] sm:$0xf]
        %v7102 = vld [vmem:[%s6199 + $0x28] sm:$0xf]
        %v7103 = vld [vmem:[%s6199 + $0x2c] sm:$0xf]
        %v7104 = vld [vmem:[%s6199 + $0x30] sm:$0xf]
        %v7105 = vld [vmem:[%s6199 + $0x34] sm:$0xf]
        %v7106 = vld [vmem:[%s6199 + $0x38] sm:$0xf]
        %v7107 = vld [vmem:[%s6199 + $0x3c] sm:$0xf]
        %v7108 = vld [vmem:[#allocation2 + $0x48] sm:$0xf]
        %v7109 = vld [vmem:[#allocation2 + $0x4c] sm:$0xf]
        %v7110 = vld [vmem:[#allocation2 + $0x48] sm:$0xe]
        %v7111 = vld [vmem:[#allocation2 + $0x50] sm:$0x1]
        %v7112 = vld [vmem:[#allocation2 + $0x48] sm:$0xc]
        %v7113 = vld [vmem:[#allocation2 + $0x50] sm:$0x3]
        %v7114 = vld [vmem:[#allocation2 + $0x48] sm:$0x8]
        %v7115 = vld [vmem:[#allocation2 + $0x50] sm:$0x7]
        %v7116 = vld [vmem:[#allocation2 + $0x50] sm:$0xf]
        %v7119 = vunpack.c.l.b16 %v7108
        %v7120 = vunpack.c.l.b16 %v7109
        %v7121 = vpack.c.b16 %v7120, %v7119
        %v7124 = vunpack.c.l.b16 %v7110
        %v7125 = vunpack.c.l.b16 %v7111
        %v7126 = vpack.c.b16 %v7120, %v7124
        %v7127 = vpack.c.b16 %v7125, %v7125
        %v7128 = vrot.slane %v7126, 1
        %v7129 = vrot.slane %v7127, 1
        %v7130 = vsel %vm6147, %v7128, %v7129
        %7131 = vrot.lane.b32.xlu0 %v7130, 16
        %v7132 = vpop.permute.xlu0 %7131
        %v7135 = vunpack.c.l.b16 %v7112
        %v7136 = vunpack.c.l.b16 %v7113
        %v7137 = vpack.c.b16 %v7120, %v7135
        %v7138 = vpack.c.b16 %v7136, %v7136
        %v7139 = vrot.slane %v7137, 2
        %v7140 = vrot.slane %v7138, 2
        %v7141 = vsel %vm6159, %v7139, %v7140
        %7142 = vrot.lane.b32.xlu0 %v7141, 32
        %v7143 = vpop.permute.xlu0 %7142
        %v7146 = vunpack.c.l.b16 %v7114
        %v7147 = vunpack.c.l.b16 %v7115
        %v7148 = vpack.c.b16 %v7120, %v7146
        %v7149 = vpack.c.b16 %v7147, %v7147
        %v7150 = vrot.slane %v7148, 3
        %v7151 = vrot.slane %v7149, 3
        %v7152 = vsel %vm6171, %v7150, %v7151
        %7153 = vrot.lane.b32.xlu0 %v7152, 48
        %v7154 = vpop.permute.xlu0 %7153
        %v7156 = vunpack.c.l.b16 %v7116
        %v7157 = vpack.c.b16 %v7156, %v7120
        %7158 = vrot.lane.b32.xlu0 %v7157, 64
        %v7159 = vpop.permute.xlu0 %7158
        %v7162 = vsel %vm6182, %v7121, %v7132
        %v7164 = vsel %vm6186, %v7162, %v7143
        %v7166 = vsel %vm6189, %v7164, %v7154
        %v7168 = vsel %vm6192, %v7166, %v7159
        %v7169 = vsel %vm6195, %v7168, 0
        %v7171 = vld [vmem:[%s6279] sm:$0xf]
        %v7172 = vld [vmem:[%s6279 + $0x4] sm:$0xf]
        %v7173 = vld [vmem:[%s6279 + $0x8] sm:$0xf]
        %v7174 = vld [vmem:[%s6279 + $0xc] sm:$0xf]
        %v7175 = vld [vmem:[%s6279 + $0x10] sm:$0xf]
        %v7176 = vld [vmem:[%s6279 + $0x14] sm:$0xf]
        %v7177 = vld [vmem:[%s6279 + $0x18] sm:$0xf]
        %v7178 = vld [vmem:[%s6279 + $0x1c] sm:$0xf]
        %v7179 = vld [vmem:[%s6279 + $0x20] sm:$0xf]
        %v7180 = vld [vmem:[%s6279 + $0x24] sm:$0xf]
        %v7181 = vld [vmem:[%s6279 + $0x28] sm:$0xf]
        %v7182 = vld [vmem:[%s6279 + $0x2c] sm:$0xf]
        %v7183 = vld [vmem:[%s6279 + $0x30] sm:$0xf]
        %v7184 = vld [vmem:[%s6279 + $0x34] sm:$0xf]
        %v7185 = vld [vmem:[%s6279 + $0x38] sm:$0xf]
        %v7186 = vld [vmem:[%s6279 + $0x3c] sm:$0xf]
        %v7203 = vunpack.c.l.b16 %v7171
        %v7204 = vunpack.c.l.b16 %v7172
        %v7205 = vunpack.c.l.b16 %v7173
        %v7206 = vunpack.c.l.b16 %v7174
        %v7207 = vunpack.c.l.b16 %v7175
        %v7208 = vunpack.c.l.b16 %v7176
        %v7209 = vunpack.c.l.b16 %v7177
        %v7210 = vunpack.c.l.b16 %v7178
        %v7211 = vunpack.c.l.b16 %v7179
        %v7212 = vunpack.c.l.b16 %v7180
        %v7213 = vunpack.c.l.b16 %v7181
        %v7214 = vunpack.c.l.b16 %v7182
        %v7215 = vunpack.c.l.b16 %v7183
        %v7216 = vunpack.c.l.b16 %v7184
        %v7217 = vunpack.c.l.b16 %v7185
        %v7218 = vunpack.c.l.b16 %v7186
        %v7219 = vpack.c.b16 %v7204, %v7203
        %v7220 = vpack.c.b16 %v7206, %v7205
        %v7221 = vpack.c.b16 %v7208, %v7207
        %v7222 = vpack.c.b16 %v7210, %v7209
        %v7223 = vpack.c.b16 %v7212, %v7211
        %v7224 = vpack.c.b16 %v7214, %v7213
        %v7225 = vpack.c.b16 %v7216, %v7215
        %v7226 = vpack.c.b16 %v7218, %v7217
        %7235 = vmatprep.subr.bf16.mxu0 0
        %7236 = vmatpush1.bf16.msra.mxu0 %v7219
        %7237 = vmatprep.subr.bf16.mxu0 0
        %7238 = vmatpush1.bf16.msra.mxu0 %v7220
        %7239 = vmatprep.subr.bf16.mxu0 0
        %7240 = vmatpush1.bf16.msra.mxu0 %v7221
        %7241 = vmatprep.subr.bf16.mxu0 0
        %7242 = vmatpush1.bf16.msra.mxu0 %v7222
        %7243 = vmatprep.subr.bf16.mxu0 0
        %7244 = vmatpush1.bf16.msra.mxu0 %v7223
        %7245 = vmatprep.subr.bf16.mxu0 0
        %7246 = vmatpush1.bf16.msra.mxu0 %v7224
        %7247 = vmatprep.subr.bf16.mxu0 0
        %7248 = vmatpush1.bf16.msra.mxu0 %v7225
        %7249 = vmatprep.subr.bf16.mxu0 0
        %7250 = vmatpush1.bf16.msra.mxu0 %v7226
        %7251 = vmatprep.subr.bf16.mxu0 0
        %7252 = vmatpush1.bf16.msra.mxu0 0
        %7253 = vmatprep.subr.bf16.mxu0 0
        %7254 = vmatpush1.bf16.msra.mxu0 0
        %7255 = vmatprep.subr.bf16.mxu0 0
        %7256 = vmatpush1.bf16.msra.mxu0 0
        %7257 = vmatprep.subr.bf16.mxu0 0
        %7258 = vmatpush1.bf16.msra.mxu0 0
        %7259 = vmatprep.subr.bf16.mxu0 0
        %7260 = vmatpush1.bf16.msra.mxu0 0
        %7261 = vmatprep.subr.bf16.mxu0 0
        %7262 = vmatpush1.bf16.msra.mxu0 0
        %7263 = vmatprep.subr.bf16.mxu0 0
        %7264 = vmatpush1.bf16.msra.mxu0 0
        %7265 = vmatprep.subr.bf16.mxu0 0
        %7266 = vmatpush1.bf16.msra.mxu0 0
        %7267 = vmatprep.mubr.bf16.mxu0 0
        %7268 = vmatmul.mubr.bf16.gmra.mrb[0].mxu0 %v7169
        %v7269 = vpop.f32.mrb[0].mxu0
        %v7270 = vadd.f32 0.0, %v7269
        %v7271 = vpop.f32.mrb[0].mxu0
        %v7272 = vpop.f32.mrb[0].mxu0
        %v7273 = vadd.f32 0.0, %v7272
        %v7274 = vpop.f32.mrb[0].mxu0
        %7275 = vdwg.mxu0
        %v7292 = vunpack.c.l.b16 %v7092
        %v7293 = vunpack.c.l.b16 %v7093
        %v7294 = vunpack.c.l.b16 %v7094
        %v7295 = vunpack.c.l.b16 %v7095
        %v7296 = vunpack.c.l.b16 %v7096
        %v7297 = vunpack.c.l.b16 %v7097
        %v7298 = vunpack.c.l.b16 %v7098
        %v7299 = vunpack.c.l.b16 %v7099
        %v7300 = vunpack.c.l.b16 %v7100
        %v7301 = vunpack.c.l.b16 %v7101
        %v7302 = vunpack.c.l.b16 %v7102
        %v7303 = vunpack.c.l.b16 %v7103
        %v7304 = vunpack.c.l.b16 %v7104
        %v7305 = vunpack.c.l.b16 %v7105
        %v7306 = vunpack.c.l.b16 %v7106
        %v7307 = vunpack.c.l.b16 %v7107
        %v7308 = vpack.c.b16 %v7293, %v7292
        %v7309 = vpack.c.b16 %v7295, %v7294
        %v7310 = vpack.c.b16 %v7297, %v7296
        %v7311 = vpack.c.b16 %v7299, %v7298
        %v7312 = vpack.c.b16 %v7301, %v7300
        %v7313 = vpack.c.b16 %v7303, %v7302
        %v7314 = vpack.c.b16 %v7305, %v7304
        %v7315 = vpack.c.b16 %v7307, %v7306
        %7324 = vmatprep.subr.bf16.mxu0 0
        %7325 = vmatpush1.bf16.msra.mxu0 %v7308
        %7326 = vmatprep.subr.bf16.mxu0 0
        %7327 = vmatpush1.bf16.msra.mxu0 %v7309
        %7328 = vmatprep.subr.bf16.mxu0 0
        %7329 = vmatpush1.bf16.msra.mxu0 %v7310
        %7330 = vmatprep.subr.bf16.mxu0 0
        %7331 = vmatpush1.bf16.msra.mxu0 %v7311
        %7332 = vmatprep.subr.bf16.mxu0 0
        %7333 = vmatpush1.bf16.msra.mxu0 %v7312
        %7334 = vmatprep.subr.bf16.mxu0 0
        %7335 = vmatpush1.bf16.msra.mxu0 %v7313
        %7336 = vmatprep.subr.bf16.mxu0 0
        %7337 = vmatpush1.bf16.msra.mxu0 %v7314
        %7338 = vmatprep.subr.bf16.mxu0 0
        %7339 = vmatpush1.bf16.msra.mxu0 %v7315
        %7340 = vmatprep.subr.bf16.mxu0 0
        %7341 = vmatpush1.bf16.msra.mxu0 0
        %7342 = vmatprep.subr.bf16.mxu0 0
        %7343 = vmatpush1.bf16.msra.mxu0 0
        %7344 = vmatprep.subr.bf16.mxu0 0
        %7345 = vmatpush1.bf16.msra.mxu0 0
        %7346 = vmatprep.subr.bf16.mxu0 0
        %7347 = vmatpush1.bf16.msra.mxu0 0
        %7348 = vmatprep.subr.bf16.mxu0 0
        %7349 = vmatpush1.bf16.msra.mxu0 0
        %7350 = vmatprep.subr.bf16.mxu0 0
        %7351 = vmatpush1.bf16.msra.mxu0 0
        %7352 = vmatprep.subr.bf16.mxu0 0
        %7353 = vmatpush1.bf16.msra.mxu0 0
        %7354 = vmatprep.subr.bf16.mxu0 0
        %7355 = vmatpush1.bf16.msra.mxu0 0
        %7356 = vmatprep.mubr.bf16.mxu0 0
        %7357 = vmatmul.mubr.bf16.gmra.mrb[0].mxu0 %v7090
        %v7358 = vpop.f32.mrb[0].mxu0
        %v7359 = vadd.f32 %v7270, %v7358
        %v7360 = vpop.f32.mrb[0].mxu0
        %v7361 = vpop.f32.mrb[0].mxu0
        %v7362 = vadd.f32 %v7273, %v7361
        %v7363 = vpop.f32.mrb[0].mxu0
        %7364 = vdwg.mxu0
        %v7365 = vld [vmem:[#allocation2 + $0x60] sm:$0xf]
        %v7366 = vld [vmem:[#allocation2 + $0x64] sm:$0xf]
        %v7367 = vld [vmem:[#allocation2 + $0x60] sm:$0xe]
        %v7368 = vld [vmem:[#allocation2 + $0x68] sm:$0x1]
        %v7369 = vld [vmem:[#allocation2 + $0x60] sm:$0xc]
        %v7370 = vld [vmem:[#allocation2 + $0x68] sm:$0x3]
        %v7371 = vld [vmem:[#allocation2 + $0x60] sm:$0x8]
        %v7372 = vld [vmem:[#allocation2 + $0x68] sm:$0x7]
        %v7373 = vld [vmem:[#allocation2 + $0x68] sm:$0xf]
        %v7376 = vunpack.c.l.b16 %v7365
        %v7377 = vunpack.c.l.b16 %v7366
        %v7378 = vpack.c.b16 %v7377, %v7376
        %v7381 = vunpack.c.l.b16 %v7367
        %v7382 = vunpack.c.l.b16 %v7368
        %v7383 = vpack.c.b16 %v7377, %v7381
        %v7384 = vpack.c.b16 %v7382, %v7382
        %v7385 = vrot.slane %v7383, 1
        %v7386 = vrot.slane %v7384, 1
        %v7387 = vsel %vm6147, %v7385, %v7386
        %7388 = vrot.lane.b32.xlu0 %v7387, 16
        %v7389 = vpop.permute.xlu0 %7388
        %v7392 = vunpack.c.l.b16 %v7369
        %v7393 = vunpack.c.l.b16 %v7370
        %v7394 = vpack.c.b16 %v7377, %v7392
        %v7395 = vpack.c.b16 %v7393, %v7393
        %v7396 = vrot.slane %v7394, 2
        %v7397 = vrot.slane %v7395, 2
        %v7398 = vsel %vm6159, %v7396, %v7397
        %7399 = vrot.lane.b32.xlu0 %v7398, 32
        %v7400 = vpop.permute.xlu0 %7399
        %v7403 = vunpack.c.l.b16 %v7371
        %v7404 = vunpack.c.l.b16 %v7372
        %v7405 = vpack.c.b16 %v7377, %v7403
        %v7406 = vpack.c.b16 %v7404, %v7404
        %v7407 = vrot.slane %v7405, 3
        %v7408 = vrot.slane %v7406, 3
        %v7409 = vsel %vm6171, %v7407, %v7408
        %7410 = vrot.lane.b32.xlu0 %v7409, 48
        %v7411 = vpop.permute.xlu0 %7410
        %v7413 = vunpack.c.l.b16 %v7373
        %v7414 = vpack.c.b16 %v7413, %v7377
        %7415 = vrot.lane.b32.xlu0 %v7414, 64
        %v7416 = vpop.permute.xlu0 %7415
        %v7419 = vsel %vm6182, %v7378, %v7389
        %v7421 = vsel %vm6186, %v7419, %v7400
        %v7423 = vsel %vm6189, %v7421, %v7411
        %v7425 = vsel %vm6192, %v7423, %v7416
        %v7426 = vsel %vm6195, %v7425, 0
        %v7428 = vld [vmem:[%s6537] sm:$0xf]
        %v7429 = vld [vmem:[%s6537 + $0x4] sm:$0xf]
        %v7430 = vld [vmem:[%s6537 + $0x8] sm:$0xf]
        %v7431 = vld [vmem:[%s6537 + $0xc] sm:$0xf]
        %v7432 = vld [vmem:[%s6537 + $0x10] sm:$0xf]
        %v7433 = vld [vmem:[%s6537 + $0x14] sm:$0xf]
        %v7434 = vld [vmem:[%s6537 + $0x18] sm:$0xf]
        %v7435 = vld [vmem:[%s6537 + $0x1c] sm:$0xf]
        %v7436 = vld [vmem:[%s6537 + $0x20] sm:$0xf]
        %v7437 = vld [vmem:[%s6537 + $0x24] sm:$0xf]
        %v7438 = vld [vmem:[%s6537 + $0x28] sm:$0xf]
        %v7439 = vld [vmem:[%s6537 + $0x2c] sm:$0xf]
        %v7440 = vld [vmem:[%s6537 + $0x30] sm:$0xf]
        %v7441 = vld [vmem:[%s6537 + $0x34] sm:$0xf]
        %v7442 = vld [vmem:[%s6537 + $0x38] sm:$0xf]
        %v7443 = vld [vmem:[%s6537 + $0x3c] sm:$0xf]
        %v7460 = vunpack.c.l.b16 %v7428
        %v7461 = vunpack.c.l.b16 %v7429
        %v7462 = vunpack.c.l.b16 %v7430
        %v7463 = vunpack.c.l.b16 %v7431
        %v7464 = vunpack.c.l.b16 %v7432
        %v7465 = vunpack.c.l.b16 %v7433
        %v7466 = vunpack.c.l.b16 %v7434
        %v7467 = vunpack.c.l.b16 %v7435
        %v7468 = vunpack.c.l.b16 %v7436
        %v7469 = vunpack.c.l.b16 %v7437
        %v7470 = vunpack.c.l.b16 %v7438
        %v7471 = vunpack.c.l.b16 %v7439
        %v7472 = vunpack.c.l.b16 %v7440
        %v7473 = vunpack.c.l.b16 %v7441
        %v7474 = vunpack.c.l.b16 %v7442
        %v7475 = vunpack.c.l.b16 %v7443
        %v7476 = vpack.c.b16 %v7461, %v7460
        %v7477 = vpack.c.b16 %v7463, %v7462
        %v7478 = vpack.c.b16 %v7465, %v7464
        %v7479 = vpack.c.b16 %v7467, %v7466
        %v7480 = vpack.c.b16 %v7469, %v7468
        %v7481 = vpack.c.b16 %v7471, %v7470
        %v7482 = vpack.c.b16 %v7473, %v7472
        %v7483 = vpack.c.b16 %v7475, %v7474
        %7492 = vmatprep.subr.bf16.mxu0 0
        %7493 = vmatpush1.bf16.msra.mxu0 %v7476
        %7494 = vmatprep.subr.bf16.mxu0 0
        %7495 = vmatpush1.bf16.msra.mxu0 %v7477
        %7496 = vmatprep.subr.bf16.mxu0 0
        %7497 = vmatpush1.bf16.msra.mxu0 %v7478
        %7498 = vmatprep.subr.bf16.mxu0 0
        %7499 = vmatpush1.bf16.msra.mxu0 %v7479
        %7500 = vmatprep.subr.bf16.mxu0 0
        %7501 = vmatpush1.bf16.msra.mxu0 %v7480
        %7502 = vmatprep.subr.bf16.mxu0 0
        %7503 = vmatpush1.bf16.msra.mxu0 %v7481
        %7504 = vmatprep.subr.bf16.mxu0 0
        %7505 = vmatpush1.bf16.msra.mxu0 %v7482
        %7506 = vmatprep.subr.bf16.mxu0 0
        %7507 = vmatpush1.bf16.msra.mxu0 %v7483
        %7508 = vmatprep.subr.bf16.mxu0 0
        %7509 = vmatpush1.bf16.msra.mxu0 0
        %7510 = vmatprep.subr.bf16.mxu0 0
        %7511 = vmatpush1.bf16.msra.mxu0 0
        %7512 = vmatprep.subr.bf16.mxu0 0
        %7513 = vmatpush1.bf16.msra.mxu0 0
        %7514 = vmatprep.subr.bf16.mxu0 0
        %7515 = vmatpush1.bf16.msra.mxu0 0
        %7516 = vmatprep.subr.bf16.mxu0 0
        %7517 = vmatpush1.bf16.msra.mxu0 0
        %7518 = vmatprep.subr.bf16.mxu0 0
        %7519 = vmatpush1.bf16.msra.mxu0 0
        %7520 = vmatprep.subr.bf16.mxu0 0
        %7521 = vmatpush1.bf16.msra.mxu0 0
        %7522 = vmatprep.subr.bf16.mxu0 0
        %7523 = vmatpush1.bf16.msra.mxu0 0
        %7524 = vmatprep.mubr.bf16.mxu0 0
        %7525 = vmatmul.mubr.bf16.gmra.mrb[0].mxu0 %v7426
        %v7526 = vpop.f32.mrb[0].mxu0
        %v7527 = vadd.f32 0.0, %v7526
        %v7528 = vpop.f32.mrb[0].mxu0
        %v7529 = vpop.f32.mrb[0].mxu0
        %v7530 = vadd.f32 0.0, %v7529
        %v7531 = vpop.f32.mrb[0].mxu0
        %7532 = vdwg.mxu0
        %v7533 = vadd.f32 %v7359, %v7527
        %v7534 = vadd.f32 %v7362, %v7530
        %v7535 = vld [vmem:[#allocation2 + $0x78] sm:$0xf]
        %v7536 = vld [vmem:[#allocation2 + $0x7c] sm:$0xf]
        %v7537 = vld [vmem:[#allocation2 + $0x78] sm:$0xe]
        %v7538 = vld [vmem:[#allocation2 + $0x80] sm:$0x1]
        %v7539 = vld [vmem:[#allocation2 + $0x78] sm:$0xc]
        %v7540 = vld [vmem:[#allocation2 + $0x80] sm:$0x3]
        %v7541 = vld [vmem:[#allocation2 + $0x78] sm:$0x8]
        %v7542 = vld [vmem:[#allocation2 + $0x80] sm:$0x7]
        %v7543 = vld [vmem:[#allocation2 + $0x80] sm:$0xf]
        %v7546 = vunpack.c.l.b16 %v7535
        %v7547 = vunpack.c.l.b16 %v7536
        %v7548 = vpack.c.b16 %v7547, %v7546
        %v7551 = vunpack.c.l.b16 %v7537
        %v7552 = vunpack.c.l.b16 %v7538
        %v7553 = vpack.c.b16 %v7547, %v7551
        %v7554 = vpack.c.b16 %v7552, %v7552
        %v7555 = vrot.slane %v7553, 1
        %v7556 = vrot.slane %v7554, 1
        %v7557 = vsel %vm6147, %v7555, %v7556
        %7558 = vrot.lane.b32.xlu0 %v7557, 16
        %v7559 = vpop.permute.xlu0 %7558
        %v7562 = vunpack.c.l.b16 %v7539
        %v7563 = vunpack.c.l.b16 %v7540
        %v7564 = vpack.c.b16 %v7547, %v7562
        %v7565 = vpack.c.b16 %v7563, %v7563
        %v7566 = vrot.slane %v7564, 2
        %v7567 = vrot.slane %v7565, 2
        %v7568 = vsel %vm6159, %v7566, %v7567
        %7569 = vrot.lane.b32.xlu0 %v7568, 32
        %v7570 = vpop.permute.xlu0 %7569
        %v7573 = vunpack.c.l.b16 %v7541
        %v7574 = vunpack.c.l.b16 %v7542
        %v7575 = vpack.c.b16 %v7547, %v7573
        %v7576 = vpack.c.b16 %v7574, %v7574
        %v7577 = vrot.slane %v7575, 3
        %v7578 = vrot.slane %v7576, 3
        %v7579 = vsel %vm6171, %v7577, %v7578
        %7580 = vrot.lane.b32.xlu0 %v7579, 48
        %v7581 = vpop.permute.xlu0 %7580
        %v7583 = vunpack.c.l.b16 %v7543
        %v7584 = vpack.c.b16 %v7583, %v7547
        %7585 = vrot.lane.b32.xlu0 %v7584, 64
        %v7586 = vpop.permute.xlu0 %7585
        %v7589 = vsel %vm6182, %v7548, %v7559
        %v7591 = vsel %vm6186, %v7589, %v7570
        %v7593 = vsel %vm6189, %v7591, %v7581
        %v7595 = vsel %vm6192, %v7593, %v7586
        %v7596 = vsel %vm6195, %v7595, 0
        %v7598 = vld [vmem:[%s6708] sm:$0xf]
        %v7599 = vld [vmem:[%s6708 + $0x4] sm:$0xf]
        %v7600 = vld [vmem:[%s6708 + $0x8] sm:$0xf]
        %v7601 = vld [vmem:[%s6708 + $0xc] sm:$0xf]
        %v7602 = vld [vmem:[%s6708 + $0x10] sm:$0xf]
        %v7603 = vld [vmem:[%s6708 + $0x14] sm:$0xf]
        %v7604 = vld [vmem:[%s6708 + $0x18] sm:$0xf]
        %v7605 = vld [vmem:[%s6708 + $0x1c] sm:$0xf]
        %v7606 = vld [vmem:[%s6708 + $0x20] sm:$0xf]
        %v7607 = vld [vmem:[%s6708 + $0x24] sm:$0xf]
        %v7608 = vld [vmem:[%s6708 + $0x28] sm:$0xf]
        %v7609 = vld [vmem:[%s6708 + $0x2c] sm:$0xf]
        %v7610 = vld [vmem:[%s6708 + $0x30] sm:$0xf]
        %v7611 = vld [vmem:[%s6708 + $0x34] sm:$0xf]
        %v7612 = vld [vmem:[%s6708 + $0x38] sm:$0xf]
        %v7613 = vld [vmem:[%s6708 + $0x3c] sm:$0xf]
        %v7630 = vunpack.c.l.b16 %v7598
        %v7631 = vunpack.c.l.b16 %v7599
        %v7632 = vunpack.c.l.b16 %v7600
        %v7633 = vunpack.c.l.b16 %v7601
        %v7634 = vunpack.c.l.b16 %v7602
        %v7635 = vunpack.c.l.b16 %v7603
        %v7636 = vunpack.c.l.b16 %v7604
        %v7637 = vunpack.c.l.b16 %v7605
        %v7638 = vunpack.c.l.b16 %v7606
        %v7639 = vunpack.c.l.b16 %v7607
        %v7640 = vunpack.c.l.b16 %v7608
        %v7641 = vunpack.c.l.b16 %v7609
        %v7642 = vunpack.c.l.b16 %v7610
        %v7643 = vunpack.c.l.b16 %v7611
        %v7644 = vunpack.c.l.b16 %v7612
        %v7645 = vunpack.c.l.b16 %v7613
        %v7646 = vpack.c.b16 %v7631, %v7630
        %v7647 = vpack.c.b16 %v7633, %v7632
        %v7648 = vpack.c.b16 %v7635, %v7634
        %v7649 = vpack.c.b16 %v7637, %v7636
        %v7650 = vpack.c.b16 %v7639, %v7638
        %v7651 = vpack.c.b16 %v7641, %v7640
        %v7652 = vpack.c.b16 %v7643, %v7642
        %v7653 = vpack.c.b16 %v7645, %v7644
        %7662 = vmatprep.subr.bf16.mxu0 0
        %7663 = vmatpush1.bf16.msra.mxu0 %v7646
        %7664 = vmatprep.subr.bf16.mxu0 0
        %7665 = vmatpush1.bf16.msra.mxu0 %v7647
        %7666 = vmatprep.subr.bf16.mxu0 0
        %7667 = vmatpush1.bf16.msra.mxu0 %v7648
        %7668 = vmatprep.subr.bf16.mxu0 0
        %7669 = vmatpush1.bf16.msra.mxu0 %v7649
        %7670 = vmatprep.subr.bf16.mxu0 0
        %7671 = vmatpush1.bf16.msra.mxu0 %v7650
        %7672 = vmatprep.subr.bf16.mxu0 0
        %7673 = vmatpush1.bf16.msra.mxu0 %v7651
        %7674 = vmatprep.subr.bf16.mxu0 0
        %7675 = vmatpush1.bf16.msra.mxu0 %v7652
        %7676 = vmatprep.subr.bf16.mxu0 0
        %7677 = vmatpush1.bf16.msra.mxu0 %v7653
        %7678 = vmatprep.subr.bf16.mxu0 0
        %7679 = vmatpush1.bf16.msra.mxu0 0
        %7680 = vmatprep.subr.bf16.mxu0 0
        %7681 = vmatpush1.bf16.msra.mxu0 0
        %7682 = vmatprep.subr.bf16.mxu0 0
        %7683 = vmatpush1.bf16.msra.mxu0 0
        %7684 = vmatprep.subr.bf16.mxu0 0
        %7685 = vmatpush1.bf16.msra.mxu0 0
        %7686 = vmatprep.subr.bf16.mxu0 0
        %7687 = vmatpush1.bf16.msra.mxu0 0
        %7688 = vmatprep.subr.bf16.mxu0 0
        %7689 = vmatpush1.bf16.msra.mxu0 0
        %7690 = vmatprep.subr.bf16.mxu0 0
        %7691 = vmatpush1.bf16.msra.mxu0 0
        %7692 = vmatprep.subr.bf16.mxu0 0
        %7693 = vmatpush1.bf16.msra.mxu0 0
        %7694 = vmatprep.mubr.bf16.mxu0 0
        %7695 = vmatmul.mubr.bf16.gmra.mrb[0].mxu0 %v7596
        %v7696 = vpop.f32.mrb[0].mxu0
        %v7697 = vadd.f32 0.0, %v7696
        %v7698 = vpop.f32.mrb[0].mxu0
        %v7699 = vpop.f32.mrb[0].mxu0
        %v7700 = vadd.f32 0.0, %v7699
        %v7701 = vpop.f32.mrb[0].mxu0
        %7702 = vdwg.mxu0
        %v7703 = vadd.f32 %v7533, %v7697
        %v7704 = vadd.f32 %v7534, %v7700
        %v7705 = vld [vmem:[#allocation2 + $0x90] sm:$0xf]
        %v7706 = vld [vmem:[#allocation2 + $0x94] sm:$0xf]
        %v7707 = vld [vmem:[#allocation2 + $0x90] sm:$0xe]
        %v7708 = vld [vmem:[#allocation2 + $0x98] sm:$0x1]
        %v7709 = vld [vmem:[#allocation2 + $0x90] sm:$0xc]
        %v7710 = vld [vmem:[#allocation2 + $0x98] sm:$0x3]
        %v7711 = vld [vmem:[#allocation2 + $0x90] sm:$0x8]
        %v7712 = vld [vmem:[#allocation2 + $0x98] sm:$0x7]
        %v7713 = vld [vmem:[#allocation2 + $0x98] sm:$0xf]
        %v7716 = vunpack.c.l.b16 %v7705
        %v7717 = vunpack.c.l.b16 %v7706
        %v7718 = vpack.c.b16 %v7717, %v7716
        %v7721 = vunpack.c.l.b16 %v7707
        %v7722 = vunpack.c.l.b16 %v7708
        %v7723 = vpack.c.b16 %v7717, %v7721
        %v7724 = vpack.c.b16 %v7722, %v7722
        %v7725 = vrot.slane %v7723, 1
        %v7726 = vrot.slane %v7724, 1
        %v7727 = vsel %vm6147, %v7725, %v7726
        %7728 = vrot.lane.b32.xlu0 %v7727, 16
        %v7729 = vpop.permute.xlu0 %7728
        %v7732 = vunpack.c.l.b16 %v7709
        %v7733 = vunpack.c.l.b16 %v7710
        %v7734 = vpack.c.b16 %v7717, %v7732
        %v7735 = vpack.c.b16 %v7733, %v7733
        %v7736 = vrot.slane %v7734, 2
        %v7737 = vrot.slane %v7735, 2
        %v7738 = vsel %vm6159, %v7736, %v7737
        %7739 = vrot.lane.b32.xlu0 %v7738, 32
        %v7740 = vpop.permute.xlu0 %7739
        %v7743 = vunpack.c.l.b16 %v7711
        %v7744 = vunpack.c.l.b16 %v7712
        %v7745 = vpack.c.b16 %v7717, %v7743
        %v7746 = vpack.c.b16 %v7744, %v7744
        %v7747 = vrot.slane %v7745, 3
        %v7748 = vrot.slane %v7746, 3
        %v7749 = vsel %vm6171, %v7747, %v7748
        %7750 = vrot.lane.b32.xlu0 %v7749, 48
        %v7751 = vpop.permute.xlu0 %7750
        %v7753 = vunpack.c.l.b16 %v7713
        %v7754 = vpack.c.b16 %v7753, %v7717
        %7755 = vrot.lane.b32.xlu0 %v7754, 64
        %v7756 = vpop.permute.xlu0 %7755
        %v7759 = vsel %vm6182, %v7718, %v7729
        %v7761 = vsel %vm6186, %v7759, %v7740
        %v7763 = vsel %vm6189, %v7761, %v7751
        %v7765 = vsel %vm6192, %v7763, %v7756
        %v7766 = vsel %vm6195, %v7765, 0
        %v7768 = vld [vmem:[%s6879] sm:$0xf]
        %v7769 = vld [vmem:[%s6879 + $0x4] sm:$0xf]
        %v7770 = vld [vmem:[%s6879 + $0x8] sm:$0xf]
        %v7771 = vld [vmem:[%s6879 + $0xc] sm:$0xf]
        %v7772 = vld [vmem:[%s6879 + $0x10] sm:$0xf]
        %v7773 = vld [vmem:[%s6879 + $0x14] sm:$0xf]
        %v7774 = vld [vmem:[%s6879 + $0x18] sm:$0xf]
        %v7775 = vld [vmem:[%s6879 + $0x1c] sm:$0xf]
        %v7776 = vld [vmem:[%s6879 + $0x20] sm:$0xf]
        %v7777 = vld [vmem:[%s6879 + $0x24] sm:$0xf]
        %v7778 = vld [vmem:[%s6879 + $0x28] sm:$0xf]
        %v7779 = vld [vmem:[%s6879 + $0x2c] sm:$0xf]
        %v7780 = vld [vmem:[%s6879 + $0x30] sm:$0xf]
        %v7781 = vld [vmem:[%s6879 + $0x34] sm:$0xf]
        %v7782 = vld [vmem:[%s6879 + $0x38] sm:$0xf]
        %v7783 = vld [vmem:[%s6879 + $0x3c] sm:$0xf]
        %v7800 = vunpack.c.l.b16 %v7768
        %v7801 = vunpack.c.l.b16 %v7769
        %v7802 = vunpack.c.l.b16 %v7770
        %v7803 = vunpack.c.l.b16 %v7771
        %v7804 = vunpack.c.l.b16 %v7772
        %v7805 = vunpack.c.l.b16 %v7773
        %v7806 = vunpack.c.l.b16 %v7774
        %v7807 = vunpack.c.l.b16 %v7775
        %v7808 = vunpack.c.l.b16 %v7776
        %v7809 = vunpack.c.l.b16 %v7777
        %v7810 = vunpack.c.l.b16 %v7778
        %v7811 = vunpack.c.l.b16 %v7779
        %v7812 = vunpack.c.l.b16 %v7780
        %v7813 = vunpack.c.l.b16 %v7781
        %v7814 = vunpack.c.l.b16 %v7782
        %v7815 = vunpack.c.l.b16 %v7783
        %v7816 = vpack.c.b16 %v7801, %v7800
        %v7817 = vpack.c.b16 %v7803, %v7802
        %v7818 = vpack.c.b16 %v7805, %v7804
        %v7819 = vpack.c.b16 %v7807, %v7806
        %v7820 = vpack.c.b16 %v7809, %v7808
        %v7821 = vpack.c.b16 %v7811, %v7810
        %v7822 = vpack.c.b16 %v7813, %v7812
        %v7823 = vpack.c.b16 %v7815, %v7814
        %7832 = vmatprep.subr.bf16.mxu0 0
        %7833 = vmatpush1.bf16.msra.mxu0 %v7816
        %7834 = vmatprep.subr.bf16.mxu0 0
        %7835 = vmatpush1.bf16.msra.mxu0 %v7817
        %7836 = vmatprep.subr.bf16.mxu0 0
        %7837 = vmatpush1.bf16.msra.mxu0 %v7818
        %7838 = vmatprep.subr.bf16.mxu0 0
        %7839 = vmatpush1.bf16.msra.mxu0 %v7819
        %7840 = vmatprep.subr.bf16.mxu0 0
        %7841 = vmatpush1.bf16.msra.mxu0 %v7820
        %7842 = vmatprep.subr.bf16.mxu0 0
        %7843 = vmatpush1.bf16.msra.mxu0 %v7821
        %7844 = vmatprep.subr.bf16.mxu0 0
        %7845 = vmatpush1.bf16.msra.mxu0 %v7822
        %7846 = vmatprep.subr.bf16.mxu0 0
        %7847 = vmatpush1.bf16.msra.mxu0 %v7823
        %7848 = vmatprep.subr.bf16.mxu0 0
        %7849 = vmatpush1.bf16.msra.mxu0 0
        %7850 = vmatprep.subr.bf16.mxu0 0
        %7851 = vmatpush1.bf16.msra.mxu0 0
        %7852 = vmatprep.subr.bf16.mxu0 0
        %7853 = vmatpush1.bf16.msra.mxu0 0
        %7854 = vmatprep.subr.bf16.mxu0 0
        %7855 = vmatpush1.bf16.msra.mxu0 0
        %7856 = vmatprep.subr.bf16.mxu0 0
        %7857 = vmatpush1.bf16.msra.mxu0 0
        %7858 = vmatprep.subr.bf16.mxu0 0
        %7859 = vmatpush1.bf16.msra.mxu0 0
        %7860 = vmatprep.subr.bf16.mxu0 0
        %7861 = vmatpush1.bf16.msra.mxu0 0
        %7862 = vmatprep.subr.bf16.mxu0 0
        %7863 = vmatpush1.bf16.msra.mxu0 0
        %7864 = vmatprep.mubr.bf16.mxu0 0
        %7865 = vmatmul.mubr.bf16.gmra.mrb[0].mxu0 %v7766
        %v7866 = vpop.f32.mrb[0].mxu0
        %v7867 = vadd.f32 0.0, %v7866
        %v7868 = vpop.f32.mrb[0].mxu0
        %v7869 = vpop.f32.mrb[0].mxu0
        %v7870 = vadd.f32 0.0, %v7869
        %v7871 = vpop.f32.mrb[0].mxu0
        %7872 = vdwg.mxu0
        %v7873 = vadd.f32 %v7703, %v7867
        %v7874 = vadd.f32 %v7704, %v7870
        %v7875 = vld [vmem:[%s2 + $0x1] sm:$0x1]
        %v7876 = vlaneseq
        %v7877 = vshrl.u32 %v7876, 7
        %v7878 = vsub.s32 0, %v7877
        %v7879 = vrot.slane %v7875, %v7878
        %v7880 = vmul.f32 %v7873, %v7879
        %v7881 = vmul.f32 %v7874, %v7879
        %v7882 = vld [vmem:[%s3 + $0x1] sm:$0x1]
        %v7883 = vlaneseq
        %v7884 = vshrl.u32 %v7883, 7
        %v7885 = vsub.s32 0, %v7884
        %v7886 = vrot.slane %v7882, %v7885
        %v7887 = vadd.f32 %v7880, %v7886
        %v7888 = vadd.f32 %v7881, %v7886
        %v7889 = vmax.f32 %v7887, 0.0
        %v7890 = vmax.f32 %v7888, 0.0
        %v7893 = vrot.slane %v7889, 4
        %v7894 = vrot.slane %v7890, 4
        %v7895 = vsel %vm1602, %v7893, %v7894
        %v7899 = vsel %vm1602, 0.0, %v7893
        %v7900 = vsel %vm1602, %v7894, 0.0
        %v7901 = vpack.c.bf16 %v7895, %v7899
        %v7902 = vpack.c.bf16 %v7900, %v7900
        %v7905 = vunpack.c.l.b16 %v7901
        %v7906 = vunpack.c.h.b16 %v7901
        %v7907 = vunpack.c.l.b16 %v7902
        %v7908 = vpack.c.b16 %v7905, %v7905
        %v7909 = vpack.c.b16 %v7906, %v7906
        %v7910 = vpack.c.b16 %v7907, %v7907
        %7914 = vst [vmem:[#allocation3 + $0x60] sm:$0xf] %v7908
        %7915 = vst [vmem:[#allocation3 + $0x64] sm:$0xf] %v7909
        %7916 = vst [vmem:[#allocation3 + $0x68] sm:$0xf] %v7910
        %v7917 = vld [vmem:[#allocation2 + $0x60] sm:$0xf]
        %v7918 = vld [vmem:[#allocation2 + $0x64] sm:$0xf]
        %v7919 = vld [vmem:[#allocation2 + $0x60] sm:$0xe]
        %v7920 = vld [vmem:[#allocation2 + $0x68] sm:$0x1]
        %v7921 = vld [vmem:[#allocation2 + $0x60] sm:$0xc]
        %v7922 = vld [vmem:[#allocation2 + $0x68] sm:$0x3]
        %v7923 = vld [vmem:[#allocation2 + $0x60] sm:$0x8]
        %v7924 = vld [vmem:[#allocation2 + $0x68] sm:$0x7]
        %v7925 = vld [vmem:[#allocation2 + $0x68] sm:$0xf]
        %v7928 = vunpack.c.l.b16 %v7917
        %v7929 = vunpack.c.l.b16 %v7918
        %v7930 = vpack.c.b16 %v7929, %v7928
        %v7933 = vunpack.c.l.b16 %v7919
        %v7934 = vunpack.c.l.b16 %v7920
        %v7935 = vpack.c.b16 %v7929, %v7933
        %v7936 = vpack.c.b16 %v7934, %v7934
        %v7937 = vrot.slane %v7935, 1
        %v7938 = vrot.slane %v7936, 1
        %v7939 = vsel %vm6147, %v7937, %v7938
        %7940 = vrot.lane.b32.xlu0 %v7939, 16
        %v7941 = vpop.permute.xlu0 %7940
        %v7944 = vunpack.c.l.b16 %v7921
        %v7945 = vunpack.c.l.b16 %v7922
        %v7946 = vpack.c.b16 %v7929, %v7944
        %v7947 = vpack.c.b16 %v7945, %v7945
        %v7948 = vrot.slane %v7946, 2
        %v7949 = vrot.slane %v7947, 2
        %v7950 = vsel %vm6159, %v7948, %v7949
        %7951 = vrot.lane.b32.xlu0 %v7950, 32
        %v7952 = vpop.permute.xlu0 %7951
        %v7955 = vunpack.c.l.b16 %v7923
        %v7956 = vunpack.c.l.b16 %v7924
        %v7957 = vpack.c.b16 %v7929, %v7955
        %v7958 = vpack.c.b16 %v7956, %v7956
        %v7959 = vrot.slane %v7957, 3
        %v7960 = vrot.slane %v7958, 3
        %v7961 = vsel %vm6171, %v7959, %v7960
        %7962 = vrot.lane.b32.xlu0 %v7961, 48
        %v7963 = vpop.permute.xlu0 %7962
        %v7965 = vunpack.c.l.b16 %v7925
        %v7966 = vpack.c.b16 %v7965, %v7929
        %7967 = vrot.lane.b32.xlu0 %v7966, 64
        %v7968 = vpop.permute.xlu0 %7967
        %v7971 = vsel %vm6182, %v7930, %v7941
        %v7973 = vsel %vm6186, %v7971, %v7952
        %v7975 = vsel %vm6189, %v7973, %v7963
        %v7977 = vsel %vm6192, %v7975, %v7968
        %v7978 = vsel %vm6195, %v7977, 0
        %v7980 = vld [vmem:[%s6199] sm:$0xf]
        %v7981 = vld [vmem:[%s6199 + $0x4] sm:$0xf]
        %v7982 = vld [vmem:[%s6199 + $0x8] sm:$0xf]
        %v7983 = vld [vmem:[%s6199 + $0xc] sm:$0xf]
        %v7984 = vld [vmem:[%s6199 + $0x10] sm:$0xf]
        %v7985 = vld [vmem:[%s6199 + $0x14] sm:$0xf]
        %v7986 = vld [vmem:[%s6199 + $0x18] sm:$0xf]
        %v7987 = vld [vmem:[%s6199 + $0x1c] sm:$0xf]
        %v7988 = vld [vmem:[%s6199 + $0x20] sm:$0xf]
        %v7989 = vld [vmem:[%s6199 + $0x24] sm:$0xf]
        %v7990 = vld [vmem:[%s6199 + $0x28] sm:$0xf]
        %v7991 = vld [vmem:[%s6199 + $0x2c] sm:$0xf]
        %v7992 = vld [vmem:[%s6199 + $0x30] sm:$0xf]
        %v7993 = vld [vmem:[%s6199 + $0x34] sm:$0xf]
        %v7994 = vld [vmem:[%s6199 + $0x38] sm:$0xf]
        %v7995 = vld [vmem:[%s6199 + $0x3c] sm:$0xf]
        %v7996 = vld [vmem:[#allocation2 + $0x78] sm:$0xf]
        %v7997 = vld [vmem:[#allocation2 + $0x7c] sm:$0xf]
        %v7998 = vld [vmem:[#allocation2 + $0x78] sm:$0xe]
        %v7999 = vld [vmem:[#allocation2 + $0x80] sm:$0x1]
        %v8000 = vld [vmem:[#allocation2 + $0x78] sm:$0xc]
        %v8001 = vld [vmem:[#allocation2 + $0x80] sm:$0x3]
        %v8002 = vld [vmem:[#allocation2 + $0x78] sm:$0x8]
        %v8003 = vld [vmem:[#allocation2 + $0x80] sm:$0x7]
        %v8004 = vld [vmem:[#allocation2 + $0x80] sm:$0xf]
        %v8007 = vunpack.c.l.b16 %v7996
        %v8008 = vunpack.c.l.b16 %v7997
        %v8009 = vpack.c.b16 %v8008, %v8007
        %v8012 = vunpack.c.l.b16 %v7998
        %v8013 = vunpack.c.l.b16 %v7999
        %v8014 = vpack.c.b16 %v8008, %v8012
        %v8015 = vpack.c.b16 %v8013, %v8013
        %v8016 = vrot.slane %v8014, 1
        %v8017 = vrot.slane %v8015, 1
        %v8018 = vsel %vm6147, %v8016, %v8017
        %8019 = vrot.lane.b32.xlu0 %v8018, 16
        %v8020 = vpop.permute.xlu0 %8019
        %v8023 = vunpack.c.l.b16 %v8000
        %v8024 = vunpack.c.l.b16 %v8001
        %v8025 = vpack.c.b16 %v8008, %v8023
        %v8026 = vpack.c.b16 %v8024, %v8024
        %v8027 = vrot.slane %v8025, 2
        %v8028 = vrot.slane %v8026, 2
        %v8029 = vsel %vm6159, %v8027, %v8028
        %8030 = vrot.lane.b32.xlu0 %v8029, 32
        %v8031 = vpop.permute.xlu0 %8030
        %v8034 = vunpack.c.l.b16 %v8002
        %v8035 = vunpack.c.l.b16 %v8003
        %v8036 = vpack.c.b16 %v8008, %v8034
        %v8037 = vpack.c.b16 %v8035, %v8035
        %v8038 = vrot.slane %v8036, 3
        %v8039 = vrot.slane %v8037, 3
        %v8040 = vsel %vm6171, %v8038, %v8039
        %8041 = vrot.lane.b32.xlu0 %v8040, 48
        %v8042 = vpop.permute.xlu0 %8041
        %v8044 = vunpack.c.l.b16 %v8004
        %v8045 = vpack.c.b16 %v8044, %v8008
        %8046 = vrot.lane.b32.xlu0 %v8045, 64
        %v8047 = vpop.permute.xlu0 %8046
        %v8050 = vsel %vm6182, %v8009, %v8020
        %v8052 = vsel %vm6186, %v8050, %v8031
        %v8054 = vsel %vm6189, %v8052, %v8042
        %v8056 = vsel %vm6192, %v8054, %v8047
        %v8057 = vsel %vm6195, %v8056, 0
        %v8059 = vld [vmem:[%s6279] sm:$0xf]
        %v8060 = vld [vmem:[%s6279 + $0x4] sm:$0xf]
        %v8061 = vld [vmem:[%s6279 + $0x8] sm:$0xf]
        %v8062 = vld [vmem:[%s6279 + $0xc] sm:$0xf]
        %v8063 = vld [vmem:[%s6279 + $0x10] sm:$0xf]
        %v8064 = vld [vmem:[%s6279 + $0x14] sm:$0xf]
        %v8065 = vld [vmem:[%s6279 + $0x18] sm:$0xf]
        %v8066 = vld [vmem:[%s6279 + $0x1c] sm:$0xf]
        %v8067 = vld [vmem:[%s6279 + $0x20] sm:$0xf]
        %v8068 = vld [vmem:[%s6279 + $0x24] sm:$0xf]
        %v8069 = vld [vmem:[%s6279 + $0x28] sm:$0xf]
        %v8070 = vld [vmem:[%s6279 + $0x2c] sm:$0xf]
        %v8071 = vld [vmem:[%s6279 + $0x30] sm:$0xf]
        %v8072 = vld [vmem:[%s6279 + $0x34] sm:$0xf]
        %v8073 = vld [vmem:[%s6279 + $0x38] sm:$0xf]
        %v8074 = vld [vmem:[%s6279 + $0x3c] sm:$0xf]
        %v8091 = vunpack.c.l.b16 %v8059
        %v8092 = vunpack.c.l.b16 %v8060
        %v8093 = vunpack.c.l.b16 %v8061
        %v8094 = vunpack.c.l.b16 %v8062
        %v8095 = vunpack.c.l.b16 %v8063
        %v8096 = vunpack.c.l.b16 %v8064
        %v8097 = vunpack.c.l.b16 %v8065
        %v8098 = vunpack.c.l.b16 %v8066
        %v8099 = vunpack.c.l.b16 %v8067
        %v8100 = vunpack.c.l.b16 %v8068
        %v8101 = vunpack.c.l.b16 %v8069
        %v8102 = vunpack.c.l.b16 %v8070
        %v8103 = vunpack.c.l.b16 %v8071
        %v8104 = vunpack.c.l.b16 %v8072
        %v8105 = vunpack.c.l.b16 %v8073
        %v8106 = vunpack.c.l.b16 %v8074
        %v8107 = vpack.c.b16 %v8092, %v8091
        %v8108 = vpack.c.b16 %v8094, %v8093
        %v8109 = vpack.c.b16 %v8096, %v8095
        %v8110 = vpack.c.b16 %v8098, %v8097
        %v8111 = vpack.c.b16 %v8100, %v8099
        %v8112 = vpack.c.b16 %v8102, %v8101
        %v8113 = vpack.c.b16 %v8104, %v8103
        %v8114 = vpack.c.b16 %v8106, %v8105
        %8123 = vmatprep.subr.bf16.mxu0 0
        %8124 = vmatpush1.bf16.msra.mxu0 %v8107
        %8125 = vmatprep.subr.bf16.mxu0 0
        %8126 = vmatpush1.bf16.msra.mxu0 %v8108
        %8127 = vmatprep.subr.bf16.mxu0 0
        %8128 = vmatpush1.bf16.msra.mxu0 %v8109
        %8129 = vmatprep.subr.bf16.mxu0 0
        %8130 = vmatpush1.bf16.msra.mxu0 %v8110
        %8131 = vmatprep.subr.bf16.mxu0 0
        %8132 = vmatpush1.bf16.msra.mxu0 %v8111
        %8133 = vmatprep.subr.bf16.mxu0 0
        %8134 = vmatpush1.bf16.msra.mxu0 %v8112
        %8135 = vmatprep.subr.bf16.mxu0 0
        %8136 = vmatpush1.bf16.msra.mxu0 %v8113
        %8137 = vmatprep.subr.bf16.mxu0 0
        %8138 = vmatpush1.bf16.msra.mxu0 %v8114
        %8139 = vmatprep.subr.bf16.mxu0 0
        %8140 = vmatpush1.bf16.msra.mxu0 0
        %8141 = vmatprep.subr.bf16.mxu0 0
        %8142 = vmatpush1.bf16.msra.mxu0 0
        %8143 = vmatprep.subr.bf16.mxu0 0
        %8144 = vmatpush1.bf16.msra.mxu0 0
        %8145 = vmatprep.subr.bf16.mxu0 0
        %8146 = vmatpush1.bf16.msra.mxu0 0
        %8147 = vmatprep.subr.bf16.mxu0 0
        %8148 = vmatpush1.bf16.msra.mxu0 0
        %8149 = vmatprep.subr.bf16.mxu0 0
        %8150 = vmatpush1.bf16.msra.mxu0 0
        %8151 = vmatprep.subr.bf16.mxu0 0
        %8152 = vmatpush1.bf16.msra.mxu0 0
        %8153 = vmatprep.subr.bf16.mxu0 0
        %8154 = vmatpush1.bf16.msra.mxu0 0
        %8155 = vmatprep.mubr.bf16.mxu0 0
        %8156 = vmatmul.mubr.bf16.gmra.mrb[0].mxu0 %v8057
        %v8157 = vpop.f32.mrb[0].mxu0
        %v8158 = vadd.f32 0.0, %v8157
        %v8159 = vpop.f32.mrb[0].mxu0
        %v8160 = vpop.f32.mrb[0].mxu0
        %v8161 = vadd.f32 0.0, %v8160
        %v8162 = vpop.f32.mrb[0].mxu0
        %8163 = vdwg.mxu0
        %v8180 = vunpack.c.l.b16 %v7980
        %v8181 = vunpack.c.l.b16 %v7981
        %v8182 = vunpack.c.l.b16 %v7982
        %v8183 = vunpack.c.l.b16 %v7983
        %v8184 = vunpack.c.l.b16 %v7984
        %v8185 = vunpack.c.l.b16 %v7985
        %v8186 = vunpack.c.l.b16 %v7986
        %v8187 = vunpack.c.l.b16 %v7987
        %v8188 = vunpack.c.l.b16 %v7988
        %v8189 = vunpack.c.l.b16 %v7989
        %v8190 = vunpack.c.l.b16 %v7990
        %v8191 = vunpack.c.l.b16 %v7991
        %v8192 = vunpack.c.l.b16 %v7992
        %v8193 = vunpack.c.l.b16 %v7993
        %v8194 = vunpack.c.l.b16 %v7994
        %v8195 = vunpack.c.l.b16 %v7995
        %v8196 = vpack.c.b16 %v8181, %v8180
        %v8197 = vpack.c.b16 %v8183, %v8182
        %v8198 = vpack.c.b16 %v8185, %v8184
        %v8199 = vpack.c.b16 %v8187, %v8186
        %v8200 = vpack.c.b16 %v8189, %v8188
        %v8201 = vpack.c.b16 %v8191, %v8190
        %v8202 = vpack.c.b16 %v8193, %v8192
        %v8203 = vpack.c.b16 %v8195, %v8194
        %8212 = vmatprep.subr.bf16.mxu0 0
        %8213 = vmatpush1.bf16.msra.mxu0 %v8196
        %8214 = vmatprep.subr.bf16.mxu0 0
        %8215 = vmatpush1.bf16.msra.mxu0 %v8197
        %8216 = vmatprep.subr.bf16.mxu0 0
        %8217 = vmatpush1.bf16.msra.mxu0 %v8198
        %8218 = vmatprep.subr.bf16.mxu0 0
        %8219 = vmatpush1.bf16.msra.mxu0 %v8199
        %8220 = vmatprep.subr.bf16.mxu0 0
        %8221 = vmatpush1.bf16.msra.mxu0 %v8200
        %8222 = vmatprep.subr.bf16.mxu0 0
        %8223 = vmatpush1.bf16.msra.mxu0 %v8201
        %8224 = vmatprep.subr.bf16.mxu0 0
        %8225 = vmatpush1.bf16.msra.mxu0 %v8202
        %8226 = vmatprep.subr.bf16.mxu0 0
        %8227 = vmatpush1.bf16.msra.mxu0 %v8203
        %8228 = vmatprep.subr.bf16.mxu0 0
        %8229 = vmatpush1.bf16.msra.mxu0 0
        %8230 = vmatprep.subr.bf16.mxu0 0
        %8231 = vmatpush1.bf16.msra.mxu0 0
        %8232 = vmatprep.subr.bf16.mxu0 0
        %8233 = vmatpush1.bf16.msra.mxu0 0
        %8234 = vmatprep.subr.bf16.mxu0 0
        %8235 = vmatpush1.bf16.msra.mxu0 0
        %8236 = vmatprep.subr.bf16.mxu0 0
        %8237 = vmatpush1.bf16.msra.mxu0 0
        %8238 = vmatprep.subr.bf16.mxu0 0
        %8239 = vmatpush1.bf16.msra.mxu0 0
        %8240 = vmatprep.subr.bf16.mxu0 0
        %8241 = vmatpush1.bf16.msra.mxu0 0
        %8242 = vmatprep.subr.bf16.mxu0 0
        %8243 = vmatpush1.bf16.msra.mxu0 0
        %8244 = vmatprep.mubr.bf16.mxu0 0
        %8245 = vmatmul.mubr.bf16.gmra.mrb[0].mxu0 %v7978
        %v8246 = vpop.f32.mrb[0].mxu0
        %v8247 = vadd.f32 %v8158, %v8246
        %v8248 = vpop.f32.mrb[0].mxu0
        %v8249 = vpop.f32.mrb[0].mxu0
        %v8250 = vadd.f32 %v8161, %v8249
        %v8251 = vpop.f32.mrb[0].mxu0
        %8252 = vdwg.mxu0
        %v8253 = vld [vmem:[#allocation2 + $0x90] sm:$0xf]
        %v8254 = vld [vmem:[#allocation2 + $0x94] sm:$0xf]
        %v8255 = vld [vmem:[#allocation2 + $0x90] sm:$0xe]
        %v8256 = vld [vmem:[#allocation2 + $0x98] sm:$0x1]
        %v8257 = vld [vmem:[#allocation2 + $0x90] sm:$0xc]
        %v8258 = vld [vmem:[#allocation2 + $0x98] sm:$0x3]
        %v8259 = vld [vmem:[#allocation2 + $0x90] sm:$0x8]
        %v8260 = vld [vmem:[#allocation2 + $0x98] sm:$0x7]
        %v8261 = vld [vmem:[#allocation2 + $0x98] sm:$0xf]
        %v8264 = vunpack.c.l.b16 %v8253
        %v8265 = vunpack.c.l.b16 %v8254
        %v8266 = vpack.c.b16 %v8265, %v8264
        %v8269 = vunpack.c.l.b16 %v8255
        %v8270 = vunpack.c.l.b16 %v8256
        %v8271 = vpack.c.b16 %v8265, %v8269
        %v8272 = vpack.c.b16 %v8270, %v8270
        %v8273 = vrot.slane %v8271, 1
        %v8274 = vrot.slane %v8272, 1
        %v8275 = vsel %vm6147, %v8273, %v8274
        %8276 = vrot.lane.b32.xlu0 %v8275, 16
        %v8277 = vpop.permute.xlu0 %8276
        %v8280 = vunpack.c.l.b16 %v8257
        %v8281 = vunpack.c.l.b16 %v8258
        %v8282 = vpack.c.b16 %v8265, %v8280
        %v8283 = vpack.c.b16 %v8281, %v8281
        %v8284 = vrot.slane %v8282, 2
        %v8285 = vrot.slane %v8283, 2
        %v8286 = vsel %vm6159, %v8284, %v8285
        %8287 = vrot.lane.b32.xlu0 %v8286, 32
        %v8288 = vpop.permute.xlu0 %8287
        %v8291 = vunpack.c.l.b16 %v8259
        %v8292 = vunpack.c.l.b16 %v8260
        %v8293 = vpack.c.b16 %v8265, %v8291
        %v8294 = vpack.c.b16 %v8292, %v8292
        %v8295 = vrot.slane %v8293, 3
        %v8296 = vrot.slane %v8294, 3
        %v8297 = vsel %vm6171, %v8295, %v8296
        %8298 = vrot.lane.b32.xlu0 %v8297, 48
        %v8299 = vpop.permute.xlu0 %8298
        %v8301 = vunpack.c.l.b16 %v8261
        %v8302 = vpack.c.b16 %v8301, %v8265
        %8303 = vrot.lane.b32.xlu0 %v8302, 64
        %v8304 = vpop.permute.xlu0 %8303
        %v8307 = vsel %vm6182, %v8266, %v8277
        %v8309 = vsel %vm6186, %v8307, %v8288
        %v8311 = vsel %vm6189, %v8309, %v8299
        %v8313 = vsel %vm6192, %v8311, %v8304
        %v8314 = vsel %vm6195, %v8313, 0
        %v8316 = vld [vmem:[%s6537] sm:$0xf]
        %v8317 = vld [vmem:[%s6537 + $0x4] sm:$0xf]
        %v8318 = vld [vmem:[%s6537 + $0x8] sm:$0xf]
        %v8319 = vld [vmem:[%s6537 + $0xc] sm:$0xf]
        %v8320 = vld [vmem:[%s6537 + $0x10] sm:$0xf]
        %v8321 = vld [vmem:[%s6537 + $0x14] sm:$0xf]
        %v8322 = vld [vmem:[%s6537 + $0x18] sm:$0xf]
        %v8323 = vld [vmem:[%s6537 + $0x1c] sm:$0xf]
        %v8324 = vld [vmem:[%s6537 + $0x20] sm:$0xf]
        %v8325 = vld [vmem:[%s6537 + $0x24] sm:$0xf]
        %v8326 = vld [vmem:[%s6537 + $0x28] sm:$0xf]
        %v8327 = vld [vmem:[%s6537 + $0x2c] sm:$0xf]
        %v8328 = vld [vmem:[%s6537 + $0x30] sm:$0xf]
        %v8329 = vld [vmem:[%s6537 + $0x34] sm:$0xf]
        %v8330 = vld [vmem:[%s6537 + $0x38] sm:$0xf]
        %v8331 = vld [vmem:[%s6537 + $0x3c] sm:$0xf]
        %v8348 = vunpack.c.l.b16 %v8316
        %v8349 = vunpack.c.l.b16 %v8317
        %v8350 = vunpack.c.l.b16 %v8318
        %v8351 = vunpack.c.l.b16 %v8319
        %v8352 = vunpack.c.l.b16 %v8320
        %v8353 = vunpack.c.l.b16 %v8321
        %v8354 = vunpack.c.l.b16 %v8322
        %v8355 = vunpack.c.l.b16 %v8323
        %v8356 = vunpack.c.l.b16 %v8324
        %v8357 = vunpack.c.l.b16 %v8325
        %v8358 = vunpack.c.l.b16 %v8326
        %v8359 = vunpack.c.l.b16 %v8327
        %v8360 = vunpack.c.l.b16 %v8328
        %v8361 = vunpack.c.l.b16 %v8329
        %v8362 = vunpack.c.l.b16 %v8330
        %v8363 = vunpack.c.l.b16 %v8331
        %v8364 = vpack.c.b16 %v8349, %v8348
        %v8365 = vpack.c.b16 %v8351, %v8350
        %v8366 = vpack.c.b16 %v8353, %v8352
        %v8367 = vpack.c.b16 %v8355, %v8354
        %v8368 = vpack.c.b16 %v8357, %v8356
        %v8369 = vpack.c.b16 %v8359, %v8358
        %v8370 = vpack.c.b16 %v8361, %v8360
        %v8371 = vpack.c.b16 %v8363, %v8362
        %8380 = vmatprep.subr.bf16.mxu0 0
        %8381 = vmatpush1.bf16.msra.mxu0 %v8364
        %8382 = vmatprep.subr.bf16.mxu0 0
        %8383 = vmatpush1.bf16.msra.mxu0 %v8365
        %8384 = vmatprep.subr.bf16.mxu0 0
        %8385 = vmatpush1.bf16.msra.mxu0 %v8366
        %8386 = vmatprep.subr.bf16.mxu0 0
        %8387 = vmatpush1.bf16.msra.mxu0 %v8367
        %8388 = vmatprep.subr.bf16.mxu0 0
        %8389 = vmatpush1.bf16.msra.mxu0 %v8368
        %8390 = vmatprep.subr.bf16.mxu0 0
        %8391 = vmatpush1.bf16.msra.mxu0 %v8369
        %8392 = vmatprep.subr.bf16.mxu0 0
        %8393 = vmatpush1.bf16.msra.mxu0 %v8370
        %8394 = vmatprep.subr.bf16.mxu0 0
        %8395 = vmatpush1.bf16.msra.mxu0 %v8371
        %8396 = vmatprep.subr.bf16.mxu0 0
        %8397 = vmatpush1.bf16.msra.mxu0 0
        %8398 = vmatprep.subr.bf16.mxu0 0
        %8399 = vmatpush1.bf16.msra.mxu0 0
        %8400 = vmatprep.subr.bf16.mxu0 0
        %8401 = vmatpush1.bf16.msra.mxu0 0
        %8402 = vmatprep.subr.bf16.mxu0 0
        %8403 = vmatpush1.bf16.msra.mxu0 0
        %8404 = vmatprep.subr.bf16.mxu0 0
        %8405 = vmatpush1.bf16.msra.mxu0 0
        %8406 = vmatprep.subr.bf16.mxu0 0
        %8407 = vmatpush1.bf16.msra.mxu0 0
        %8408 = vmatprep.subr.bf16.mxu0 0
        %8409 = vmatpush1.bf16.msra.mxu0 0
        %8410 = vmatprep.subr.bf16.mxu0 0
        %8411 = vmatpush1.bf16.msra.mxu0 0
        %8412 = vmatprep.mubr.bf16.mxu0 0
        %8413 = vmatmul.mubr.bf16.gmra.mrb[0].mxu0 %v8314
        %v8414 = vpop.f32.mrb[0].mxu0
        %v8415 = vadd.f32 0.0, %v8414
        %v8416 = vpop.f32.mrb[0].mxu0
        %v8417 = vpop.f32.mrb[0].mxu0
        %v8418 = vadd.f32 0.0, %v8417
        %v8419 = vpop.f32.mrb[0].mxu0
        %8420 = vdwg.mxu0
        %v8421 = vadd.f32 %v8247, %v8415
        %v8422 = vadd.f32 %v8250, %v8418
        %v8423 = vld [vmem:[#allocation2 + $0xa8] sm:$0xf]
        %v8424 = vld [vmem:[#allocation2 + $0xac] sm:$0xf]
        %v8425 = vld [vmem:[#allocation2 + $0xa8] sm:$0xe]
        %v8426 = vld [vmem:[#allocation2 + $0xb0] sm:$0x1]
        %v8427 = vld [vmem:[#allocation2 + $0xa8] sm:$0xc]
        %v8428 = vld [vmem:[#allocation2 + $0xb0] sm:$0x3]
        %v8429 = vld [vmem:[#allocation2 + $0xa8] sm:$0x8]
        %v8430 = vld [vmem:[#allocation2 + $0xb0] sm:$0x7]
        %v8431 = vld [vmem:[#allocation2 + $0xb0] sm:$0xf]
        %v8434 = vunpack.c.l.b16 %v8423
        %v8435 = vunpack.c.l.b16 %v8424
        %v8436 = vpack.c.b16 %v8435, %v8434
        %v8439 = vunpack.c.l.b16 %v8425
        %v8440 = vunpack.c.l.b16 %v8426
        %v8441 = vpack.c.b16 %v8435, %v8439
        %v8442 = vpack.c.b16 %v8440, %v8440
        %v8443 = vrot.slane %v8441, 1
        %v8444 = vrot.slane %v8442, 1
        %v8445 = vsel %vm6147, %v8443, %v8444
        %8446 = vrot.lane.b32.xlu0 %v8445, 16
        %v8447 = vpop.permute.xlu0 %8446
        %v8450 = vunpack.c.l.b16 %v8427
        %v8451 = vunpack.c.l.b16 %v8428
        %v8452 = vpack.c.b16 %v8435, %v8450
        %v8453 = vpack.c.b16 %v8451, %v8451
        %v8454 = vrot.slane %v8452, 2
        %v8455 = vrot.slane %v8453, 2
        %v8456 = vsel %vm6159, %v8454, %v8455
        %8457 = vrot.lane.b32.xlu0 %v8456, 32
        %v8458 = vpop.permute.xlu0 %8457
        %v8461 = vunpack.c.l.b16 %v8429
        %v8462 = vunpack.c.l.b16 %v8430
        %v8463 = vpack.c.b16 %v8435, %v8461
        %v8464 = vpack.c.b16 %v8462, %v8462
        %v8465 = vrot.slane %v8463, 3
        %v8466 = vrot.slane %v8464, 3
        %v8467 = vsel %vm6171, %v8465, %v8466
        %8468 = vrot.lane.b32.xlu0 %v8467, 48
        %v8469 = vpop.permute.xlu0 %8468
        %v8471 = vunpack.c.l.b16 %v8431
        %v8472 = vpack.c.b16 %v8471, %v8435
        %8473 = vrot.lane.b32.xlu0 %v8472, 64
        %v8474 = vpop.permute.xlu0 %8473
        %v8477 = vsel %vm6182, %v8436, %v8447
        %v8479 = vsel %vm6186, %v8477, %v8458
        %v8481 = vsel %vm6189, %v8479, %v8469
        %v8483 = vsel %vm6192, %v8481, %v8474
        %v8484 = vsel %vm6195, %v8483, 0
        %v8486 = vld [vmem:[%s6708] sm:$0xf]
        %v8487 = vld [vmem:[%s6708 + $0x4] sm:$0xf]
        %v8488 = vld [vmem:[%s6708 + $0x8] sm:$0xf]
        %v8489 = vld [vmem:[%s6708 + $0xc] sm:$0xf]
        %v8490 = vld [vmem:[%s6708 + $0x10] sm:$0xf]
        %v8491 = vld [vmem:[%s6708 + $0x14] sm:$0xf]
        %v8492 = vld [vmem:[%s6708 + $0x18] sm:$0xf]
        %v8493 = vld [vmem:[%s6708 + $0x1c] sm:$0xf]
        %v8494 = vld [vmem:[%s6708 + $0x20] sm:$0xf]
        %v8495 = vld [vmem:[%s6708 + $0x24] sm:$0xf]
        %v8496 = vld [vmem:[%s6708 + $0x28] sm:$0xf]
        %v8497 = vld [vmem:[%s6708 + $0x2c] sm:$0xf]
        %v8498 = vld [vmem:[%s6708 + $0x30] sm:$0xf]
        %v8499 = vld [vmem:[%s6708 + $0x34] sm:$0xf]
        %v8500 = vld [vmem:[%s6708 + $0x38] sm:$0xf]
        %v8501 = vld [vmem:[%s6708 + $0x3c] sm:$0xf]
        %v8518 = vunpack.c.l.b16 %v8486
        %v8519 = vunpack.c.l.b16 %v8487
        %v8520 = vunpack.c.l.b16 %v8488
        %v8521 = vunpack.c.l.b16 %v8489
        %v8522 = vunpack.c.l.b16 %v8490
        %v8523 = vunpack.c.l.b16 %v8491
        %v8524 = vunpack.c.l.b16 %v8492
        %v8525 = vunpack.c.l.b16 %v8493
        %v8526 = vunpack.c.l.b16 %v8494
        %v8527 = vunpack.c.l.b16 %v8495
        %v8528 = vunpack.c.l.b16 %v8496
        %v8529 = vunpack.c.l.b16 %v8497
        %v8530 = vunpack.c.l.b16 %v8498
        %v8531 = vunpack.c.l.b16 %v8499
        %v8532 = vunpack.c.l.b16 %v8500
        %v8533 = vunpack.c.l.b16 %v8501
        %v8534 = vpack.c.b16 %v8519, %v8518
        %v8535 = vpack.c.b16 %v8521, %v8520
        %v8536 = vpack.c.b16 %v8523, %v8522
        %v8537 = vpack.c.b16 %v8525, %v8524
        %v8538 = vpack.c.b16 %v8527, %v8526
        %v8539 = vpack.c.b16 %v8529, %v8528
        %v8540 = vpack.c.b16 %v8531, %v8530
        %v8541 = vpack.c.b16 %v8533, %v8532
        %8550 = vmatprep.subr.bf16.mxu0 0
        %8551 = vmatpush1.bf16.msra.mxu0 %v8534
        %8552 = vmatprep.subr.bf16.mxu0 0
        %8553 = vmatpush1.bf16.msra.mxu0 %v8535
        %8554 = vmatprep.subr.bf16.mxu0 0
        %8555 = vmatpush1.bf16.msra.mxu0 %v8536
        %8556 = vmatprep.subr.bf16.mxu0 0
        %8557 = vmatpush1.bf16.msra.mxu0 %v8537
        %8558 = vmatprep.subr.bf16.mxu0 0
        %8559 = vmatpush1.bf16.msra.mxu0 %v8538
        %8560 = vmatprep.subr.bf16.mxu0 0
        %8561 = vmatpush1.bf16.msra.mxu0 %v8539
        %8562 = vmatprep.subr.bf16.mxu0 0
        %8563 = vmatpush1.bf16.msra.mxu0 %v8540
        %8564 = vmatprep.subr.bf16.mxu0 0
        %8565 = vmatpush1.bf16.msra.mxu0 %v8541
        %8566 = vmatprep.subr.bf16.mxu0 0
        %8567 = vmatpush1.bf16.msra.mxu0 0
        %8568 = vmatprep.subr.bf16.mxu0 0
        %8569 = vmatpush1.bf16.msra.mxu0 0
        %8570 = vmatprep.subr.bf16.mxu0 0
        %8571 = vmatpush1.bf16.msra.mxu0 0
        %8572 = vmatprep.subr.bf16.mxu0 0
        %8573 = vmatpush1.bf16.msra.mxu0 0
        %8574 = vmatprep.subr.bf16.mxu0 0
        %8575 = vmatpush1.bf16.msra.mxu0 0
        %8576 = vmatprep.subr.bf16.mxu0 0
        %8577 = vmatpush1.bf16.msra.mxu0 0
        %8578 = vmatprep.subr.bf16.mxu0 0
        %8579 = vmatpush1.bf16.msra.mxu0 0
        %8580 = vmatprep.subr.bf16.mxu0 0
        %8581 = vmatpush1.bf16.msra.mxu0 0
        %8582 = vmatprep.mubr.bf16.mxu0 0
        %8583 = vmatmul.mubr.bf16.gmra.mrb[0].mxu0 %v8484
        %v8584 = vpop.f32.mrb[0].mxu0
        %v8585 = vadd.f32 0.0, %v8584
        %v8586 = vpop.f32.mrb[0].mxu0
        %v8587 = vpop.f32.mrb[0].mxu0
        %v8588 = vadd.f32 0.0, %v8587
        %v8589 = vpop.f32.mrb[0].mxu0
        %8590 = vdwg.mxu0
        %v8591 = vadd.f32 %v8421, %v8585
        %v8592 = vadd.f32 %v8422, %v8588
        %v8593 = vld [vmem:[#allocation2 + $0xc0] sm:$0xf]
        %v8594 = vld [vmem:[#allocation2 + $0xc4] sm:$0xf]
        %v8595 = vld [vmem:[#allocation2 + $0xc0] sm:$0xe]
        %v8596 = vld [vmem:[#allocation2 + $0xc8] sm:$0x1]
        %v8597 = vld [vmem:[#allocation2 + $0xc0] sm:$0xc]
        %v8598 = vld [vmem:[#allocation2 + $0xc8] sm:$0x3]
        %v8599 = vld [vmem:[#allocation2 + $0xc0] sm:$0x8]
        %v8600 = vld [vmem:[#allocation2 + $0xc8] sm:$0x7]
        %v8601 = vld [vmem:[#allocation2 + $0xc8] sm:$0xf]
        %v8604 = vunpack.c.l.b16 %v8593
        %v8605 = vunpack.c.l.b16 %v8594
        %v8606 = vpack.c.b16 %v8605, %v8604
        %v8609 = vunpack.c.l.b16 %v8595
        %v8610 = vunpack.c.l.b16 %v8596
        %v8611 = vpack.c.b16 %v8605, %v8609
        %v8612 = vpack.c.b16 %v8610, %v8610
        %v8613 = vrot.slane %v8611, 1
        %v8614 = vrot.slane %v8612, 1
        %v8615 = vsel %vm6147, %v8613, %v8614
        %8616 = vrot.lane.b32.xlu0 %v8615, 16
        %v8617 = vpop.permute.xlu0 %8616
        %v8620 = vunpack.c.l.b16 %v8597
        %v8621 = vunpack.c.l.b16 %v8598
        %v8622 = vpack.c.b16 %v8605, %v8620
        %v8623 = vpack.c.b16 %v8621, %v8621
        %v8624 = vrot.slane %v8622, 2
        %v8625 = vrot.slane %v8623, 2
        %v8626 = vsel %vm6159, %v8624, %v8625
        %8627 = vrot.lane.b32.xlu0 %v8626, 32
        %v8628 = vpop.permute.xlu0 %8627
        %v8631 = vunpack.c.l.b16 %v8599
        %v8632 = vunpack.c.l.b16 %v8600
        %v8633 = vpack.c.b16 %v8605, %v8631
        %v8634 = vpack.c.b16 %v8632, %v8632
        %v8635 = vrot.slane %v8633, 3
        %v8636 = vrot.slane %v8634, 3
        %v8637 = vsel %vm6171, %v8635, %v8636
        %8638 = vrot.lane.b32.xlu0 %v8637, 48
        %v8639 = vpop.permute.xlu0 %8638
        %v8641 = vunpack.c.l.b16 %v8601
        %v8642 = vpack.c.b16 %v8641, %v8605
        %8643 = vrot.lane.b32.xlu0 %v8642, 64
        %v8644 = vpop.permute.xlu0 %8643
        %v8647 = vsel %vm6182, %v8606, %v8617
        %v8649 = vsel %vm6186, %v8647, %v8628
        %v8651 = vsel %vm6189, %v8649, %v8639
        %v8653 = vsel %vm6192, %v8651, %v8644
        %v8654 = vsel %vm6195, %v8653, 0
        %v8656 = vld [vmem:[%s6879] sm:$0xf]
        %v8657 = vld [vmem:[%s6879 + $0x4] sm:$0xf]
        %v8658 = vld [vmem:[%s6879 + $0x8] sm:$0xf]
        %v8659 = vld [vmem:[%s6879 + $0xc] sm:$0xf]
        %v8660 = vld [vmem:[%s6879 + $0x10] sm:$0xf]
        %v8661 = vld [vmem:[%s6879 + $0x14] sm:$0xf]
        %v8662 = vld [vmem:[%s6879 + $0x18] sm:$0xf]
        %v8663 = vld [vmem:[%s6879 + $0x1c] sm:$0xf]
        %v8664 = vld [vmem:[%s6879 + $0x20] sm:$0xf]
        %v8665 = vld [vmem:[%s6879 + $0x24] sm:$0xf]
        %v8666 = vld [vmem:[%s6879 + $0x28] sm:$0xf]
        %v8667 = vld [vmem:[%s6879 + $0x2c] sm:$0xf]
        %v8668 = vld [vmem:[%s6879 + $0x30] sm:$0xf]
        %v8669 = vld [vmem:[%s6879 + $0x34] sm:$0xf]
        %v8670 = vld [vmem:[%s6879 + $0x38] sm:$0xf]
        %v8671 = vld [vmem:[%s6879 + $0x3c] sm:$0xf]
        %v8688 = vunpack.c.l.b16 %v8656
        %v8689 = vunpack.c.l.b16 %v8657
        %v8690 = vunpack.c.l.b16 %v8658
        %v8691 = vunpack.c.l.b16 %v8659
        %v8692 = vunpack.c.l.b16 %v8660
        %v8693 = vunpack.c.l.b16 %v8661
        %v8694 = vunpack.c.l.b16 %v8662
        %v8695 = vunpack.c.l.b16 %v8663
        %v8696 = vunpack.c.l.b16 %v8664
        %v8697 = vunpack.c.l.b16 %v8665
        %v8698 = vunpack.c.l.b16 %v8666
        %v8699 = vunpack.c.l.b16 %v8667
        %v8700 = vunpack.c.l.b16 %v8668
        %v8701 = vunpack.c.l.b16 %v8669
        %v8702 = vunpack.c.l.b16 %v8670
        %v8703 = vunpack.c.l.b16 %v8671
        %v8704 = vpack.c.b16 %v8689, %v8688
        %v8705 = vpack.c.b16 %v8691, %v8690
        %v8706 = vpack.c.b16 %v8693, %v8692
        %v8707 = vpack.c.b16 %v8695, %v8694
        %v8708 = vpack.c.b16 %v8697, %v8696
        %v8709 = vpack.c.b16 %v8699, %v8698
        %v8710 = vpack.c.b16 %v8701, %v8700
        %v8711 = vpack.c.b16 %v8703, %v8702
        %8720 = vmatprep.subr.bf16.mxu0 0
        %8721 = vmatpush1.bf16.msra.mxu0 %v8704
        %8722 = vmatprep.subr.bf16.mxu0 0
        %8723 = vmatpush1.bf16.msra.mxu0 %v8705
        %8724 = vmatprep.subr.bf16.mxu0 0
        %8725 = vmatpush1.bf16.msra.mxu0 %v8706
        %8726 = vmatprep.subr.bf16.mxu0 0
        %8727 = vmatpush1.bf16.msra.mxu0 %v8707
        %8728 = vmatprep.subr.bf16.mxu0 0
        %8729 = vmatpush1.bf16.msra.mxu0 %v8708
        %8730 = vmatprep.subr.bf16.mxu0 0
        %8731 = vmatpush1.bf16.msra.mxu0 %v8709
        %8732 = vmatprep.subr.bf16.mxu0 0
        %8733 = vmatpush1.bf16.msra.mxu0 %v8710
        %8734 = vmatprep.subr.bf16.mxu0 0
        %8735 = vmatpush1.bf16.msra.mxu0 %v8711
        %8736 = vmatprep.subr.bf16.mxu0 0
        %8737 = vmatpush1.bf16.msra.mxu0 0
        %8738 = vmatprep.subr.bf16.mxu0 0
        %8739 = vmatpush1.bf16.msra.mxu0 0
        %8740 = vmatprep.subr.bf16.mxu0 0
        %8741 = vmatpush1.bf16.msra.mxu0 0
        %8742 = vmatprep.subr.bf16.mxu0 0
        %8743 = vmatpush1.bf16.msra.mxu0 0
        %8744 = vmatprep.subr.bf16.mxu0 0
        %8745 = vmatpush1.bf16.msra.mxu0 0
        %8746 = vmatprep.subr.bf16.mxu0 0
        %8747 = vmatpush1.bf16.msra.mxu0 0
        %8748 = vmatprep.subr.bf16.mxu0 0
        %8749 = vmatpush1.bf16.msra.mxu0 0
        %8750 = vmatprep.subr.bf16.mxu0 0
        %8751 = vmatpush1.bf16.msra.mxu0 0
        %8752 = vmatprep.mubr.bf16.mxu0 0
        %8753 = vmatmul.mubr.bf16.gmra.mrb[0].mxu0 %v8654
        %v8754 = vpop.f32.mrb[0].mxu0
        %v8755 = vadd.f32 0.0, %v8754
        %v8756 = vpop.f32.mrb[0].mxu0
        %v8757 = vpop.f32.mrb[0].mxu0
        %v8758 = vadd.f32 0.0, %v8757
        %v8759 = vpop.f32.mrb[0].mxu0
        %8760 = vdwg.mxu0
        %v8761 = vadd.f32 %v8591, %v8755
        %v8762 = vadd.f32 %v8592, %v8758
        %v8763 = vld [vmem:[%s2 + $0x1] sm:$0x1]
        %v8764 = vlaneseq
        %v8765 = vshrl.u32 %v8764, 7
        %v8766 = vsub.s32 0, %v8765
        %v8767 = vrot.slane %v8763, %v8766
        %v8768 = vmul.f32 %v8761, %v8767
        %v8769 = vmul.f32 %v8762, %v8767
        %v8770 = vld [vmem:[%s3 + $0x1] sm:$0x1]
        %v8771 = vlaneseq
        %v8772 = vshrl.u32 %v8771, 7
        %v8773 = vsub.s32 0, %v8772
        %v8774 = vrot.slane %v8770, %v8773
        %v8775 = vadd.f32 %v8768, %v8774
        %v8776 = vadd.f32 %v8769, %v8774
        %v8777 = vmax.f32 %v8775, 0.0
        %v8778 = vmax.f32 %v8776, 0.0
        %v8781 = vrot.slane %v8777, 4
        %v8782 = vrot.slane %v8778, 4
        %v8783 = vsel %vm1602, %v8781, %v8782
        %v8787 = vsel %vm1602, 0.0, %v8781
        %v8788 = vsel %vm1602, %v8782, 0.0
        %v8789 = vpack.c.bf16 %v8783, %v8787
        %v8790 = vpack.c.bf16 %v8788, %v8788
        %v8793 = vunpack.c.l.b16 %v8789
        %v8794 = vunpack.c.h.b16 %v8789
        %v8795 = vunpack.c.l.b16 %v8790
        %v8796 = vpack.c.b16 %v8793, %v8793
        %v8797 = vpack.c.b16 %v8794, %v8794
        %v8798 = vpack.c.b16 %v8795, %v8795
        %8802 = vst [vmem:[#allocation3 + $0x90] sm:$0xf] %v8796
        %8803 = vst [vmem:[#allocation3 + $0x94] sm:$0xf] %v8797
        %8804 = vst [vmem:[#allocation3 + $0x98] sm:$0xf] %v8798
        %v8805 = vld [vmem:[#allocation2 + $0x90] sm:$0xf]
        %v8806 = vld [vmem:[#allocation2 + $0x94] sm:$0xf]
        %v8807 = vld [vmem:[#allocation2 + $0x90] sm:$0xe]
        %v8808 = vld [vmem:[#allocation2 + $0x98] sm:$0x1]
        %v8809 = vld [vmem:[#allocation2 + $0x90] sm:$0xc]
        %v8810 = vld [vmem:[#allocation2 + $0x98] sm:$0x3]
        %v8811 = vld [vmem:[#allocation2 + $0x90] sm:$0x8]
        %v8812 = vld [vmem:[#allocation2 + $0x98] sm:$0x7]
        %v8813 = vld [vmem:[#allocation2 + $0x98] sm:$0xf]
        %v8816 = vunpack.c.l.b16 %v8805
        %v8817 = vunpack.c.l.b16 %v8806
        %v8818 = vpack.c.b16 %v8817, %v8816
        %v8821 = vunpack.c.l.b16 %v8807
        %v8822 = vunpack.c.l.b16 %v8808
        %v8823 = vpack.c.b16 %v8817, %v8821
        %v8824 = vpack.c.b16 %v8822, %v8822
        %v8825 = vrot.slane %v8823, 1
        %v8826 = vrot.slane %v8824, 1
        %v8827 = vsel %vm6147, %v8825, %v8826
        %8828 = vrot.lane.b32.xlu0 %v8827, 16
        %v8829 = vpop.permute.xlu0 %8828
        %v8832 = vunpack.c.l.b16 %v8809
        %v8833 = vunpack.c.l.b16 %v8810
        %v8834 = vpack.c.b16 %v8817, %v8832
        %v8835 = vpack.c.b16 %v8833, %v8833
        %v8836 = vrot.slane %v8834, 2
        %v8837 = vrot.slane %v8835, 2
        %v8838 = vsel %vm6159, %v8836, %v8837
        %8839 = vrot.lane.b32.xlu0 %v8838, 32
        %v8840 = vpop.permute.xlu0 %8839
        %v8843 = vunpack.c.l.b16 %v8811
        %v8844 = vunpack.c.l.b16 %v8812
        %v8845 = vpack.c.b16 %v8817, %v8843
        %v8846 = vpack.c.b16 %v8844, %v8844
        %v8847 = vrot.slane %v8845, 3
        %v8848 = vrot.slane %v8846, 3
        %v8849 = vsel %vm6171, %v8847, %v8848
        %8850 = vrot.lane.b32.xlu0 %v8849, 48
        %v8851 = vpop.permute.xlu0 %8850
        %v8853 = vunpack.c.l.b16 %v8813
        %v8854 = vpack.c.b16 %v8853, %v8817
        %8855 = vrot.lane.b32.xlu0 %v8854, 64
        %v8856 = vpop.permute.xlu0 %8855
        %v8859 = vsel %vm6182, %v8818, %v8829
        %v8861 = vsel %vm6186, %v8859, %v8840
        %v8863 = vsel %vm6189, %v8861, %v8851
        %v8865 = vsel %vm6192, %v8863, %v8856
        %v8866 = vsel %vm6195, %v8865, 0
        %v8868 = vld [vmem:[%s6199] sm:$0xf]
        %v8869 = vld [vmem:[%s6199 + $0x4] sm:$0xf]
        %v8870 = vld [vmem:[%s6199 + $0x8] sm:$0xf]
        %v8871 = vld [vmem:[%s6199 + $0xc] sm:$0xf]
        %v8872 = vld [vmem:[%s6199 + $0x10] sm:$0xf]
        %v8873 = vld [vmem:[%s6199 + $0x14] sm:$0xf]
        %v8874 = vld [vmem:[%s6199 + $0x18] sm:$0xf]
        %v8875 = vld [vmem:[%s6199 + $0x1c] sm:$0xf]
        %v8876 = vld [vmem:[%s6199 + $0x20] sm:$0xf]
        %v8877 = vld [vmem:[%s6199 + $0x24] sm:$0xf]
        %v8878 = vld [vmem:[%s6199 + $0x28] sm:$0xf]
        %v8879 = vld [vmem:[%s6199 + $0x2c] sm:$0xf]
        %v8880 = vld [vmem:[%s6199 + $0x30] sm:$0xf]
        %v8881 = vld [vmem:[%s6199 + $0x34] sm:$0xf]
        %v8882 = vld [vmem:[%s6199 + $0x38] sm:$0xf]
        %v8883 = vld [vmem:[%s6199 + $0x3c] sm:$0xf]
        %v8884 = vld [vmem:[#allocation2 + $0xa8] sm:$0xf]
        %v8885 = vld [vmem:[#allocation2 + $0xac] sm:$0xf]
        %v8886 = vld [vmem:[#allocation2 + $0xa8] sm:$0xe]
        %v8887 = vld [vmem:[#allocation2 + $0xb0] sm:$0x1]
        %v8888 = vld [vmem:[#allocation2 + $0xa8] sm:$0xc]
        %v8889 = vld [vmem:[#allocation2 + $0xb0] sm:$0x3]
        %v8890 = vld [vmem:[#allocation2 + $0xa8] sm:$0x8]
        %v8891 = vld [vmem:[#allocation2 + $0xb0] sm:$0x7]
        %v8892 = vld [vmem:[#allocation2 + $0xb0] sm:$0xf]
        %v8895 = vunpack.c.l.b16 %v8884
        %v8896 = vunpack.c.l.b16 %v8885
        %v8897 = vpack.c.b16 %v8896, %v8895
        %v8900 = vunpack.c.l.b16 %v8886
        %v8901 = vunpack.c.l.b16 %v8887
        %v8902 = vpack.c.b16 %v8896, %v8900
        %v8903 = vpack.c.b16 %v8901, %v8901
        %v8904 = vrot.slane %v8902, 1
        %v8905 = vrot.slane %v8903, 1
        %v8906 = vsel %vm6147, %v8904, %v8905
        %8907 = vrot.lane.b32.xlu0 %v8906, 16
        %v8908 = vpop.permute.xlu0 %8907
        %v8911 = vunpack.c.l.b16 %v8888
        %v8912 = vunpack.c.l.b16 %v8889
        %v8913 = vpack.c.b16 %v8896, %v8911
        %v8914 = vpack.c.b16 %v8912, %v8912
        %v8915 = vrot.slane %v8913, 2
        %v8916 = vrot.slane %v8914, 2
        %v8917 = vsel %vm6159, %v8915, %v8916
        %8918 = vrot.lane.b32.xlu0 %v8917, 32
        %v8919 = vpop.permute.xlu0 %8918
        %v8922 = vunpack.c.l.b16 %v8890
        %v8923 = vunpack.c.l.b16 %v8891
        %v8924 = vpack.c.b16 %v8896, %v8922
        %v8925 = vpack.c.b16 %v8923, %v8923
        %v8926 = vrot.slane %v8924, 3
        %v8927 = vrot.slane %v8925, 3
        %v8928 = vsel %vm6171, %v8926, %v8927
        %8929 = vrot.lane.b32.xlu0 %v8928, 48
        %v8930 = vpop.permute.xlu0 %8929
        %v8932 = vunpack.c.l.b16 %v8892
        %v8933 = vpack.c.b16 %v8932, %v8896
        %8934 = vrot.lane.b32.xlu0 %v8933, 64
        %v8935 = vpop.permute.xlu0 %8934
        %v8938 = vsel %vm6182, %v8897, %v8908
        %v8940 = vsel %vm6186, %v8938, %v8919
        %v8942 = vsel %vm6189, %v8940, %v8930
        %v8944 = vsel %vm6192, %v8942, %v8935
        %v8945 = vsel %vm6195, %v8944, 0
        %v8947 = vld [vmem:[%s6279] sm:$0xf]
        %v8948 = vld [vmem:[%s6279 + $0x4] sm:$0xf]
        %v8949 = vld [vmem:[%s6279 + $0x8] sm:$0xf]
        %v8950 = vld [vmem:[%s6279 + $0xc] sm:$0xf]
        %v8951 = vld [vmem:[%s6279 + $0x10] sm:$0xf]
        %v8952 = vld [vmem:[%s6279 + $0x14] sm:$0xf]
        %v8953 = vld [vmem:[%s6279 + $0x18] sm:$0xf]
        %v8954 = vld [vmem:[%s6279 + $0x1c] sm:$0xf]
        %v8955 = vld [vmem:[%s6279 + $0x20] sm:$0xf]
        %v8956 = vld [vmem:[%s6279 + $0x24] sm:$0xf]
        %v8957 = vld [vmem:[%s6279 + $0x28] sm:$0xf]
        %v8958 = vld [vmem:[%s6279 + $0x2c] sm:$0xf]
        %v8959 = vld [vmem:[%s6279 + $0x30] sm:$0xf]
        %v8960 = vld [vmem:[%s6279 + $0x34] sm:$0xf]
        %v8961 = vld [vmem:[%s6279 + $0x38] sm:$0xf]
        %v8962 = vld [vmem:[%s6279 + $0x3c] sm:$0xf]
        %v8979 = vunpack.c.l.b16 %v8947
        %v8980 = vunpack.c.l.b16 %v8948
        %v8981 = vunpack.c.l.b16 %v8949
        %v8982 = vunpack.c.l.b16 %v8950
        %v8983 = vunpack.c.l.b16 %v8951
        %v8984 = vunpack.c.l.b16 %v8952
        %v8985 = vunpack.c.l.b16 %v8953
        %v8986 = vunpack.c.l.b16 %v8954
        %v8987 = vunpack.c.l.b16 %v8955
        %v8988 = vunpack.c.l.b16 %v8956
        %v8989 = vunpack.c.l.b16 %v8957
        %v8990 = vunpack.c.l.b16 %v8958
        %v8991 = vunpack.c.l.b16 %v8959
        %v8992 = vunpack.c.l.b16 %v8960
        %v8993 = vunpack.c.l.b16 %v8961
        %v8994 = vunpack.c.l.b16 %v8962
        %v8995 = vpack.c.b16 %v8980, %v8979
        %v8996 = vpack.c.b16 %v8982, %v8981
        %v8997 = vpack.c.b16 %v8984, %v8983
        %v8998 = vpack.c.b16 %v8986, %v8985
        %v8999 = vpack.c.b16 %v8988, %v8987
        %v9000 = vpack.c.b16 %v8990, %v8989
        %v9001 = vpack.c.b16 %v8992, %v8991
        %v9002 = vpack.c.b16 %v8994, %v8993
        %9011 = vmatprep.subr.bf16.mxu0 0
        %9012 = vmatpush1.bf16.msra.mxu0 %v8995
        %9013 = vmatprep.subr.bf16.mxu0 0
        %9014 = vmatpush1.bf16.msra.mxu0 %v8996
        %9015 = vmatprep.subr.bf16.mxu0 0
        %9016 = vmatpush1.bf16.msra.mxu0 %v8997
        %9017 = vmatprep.subr.bf16.mxu0 0
        %9018 = vmatpush1.bf16.msra.mxu0 %v8998
        %9019 = vmatprep.subr.bf16.mxu0 0
        %9020 = vmatpush1.bf16.msra.mxu0 %v8999
        %9021 = vmatprep.subr.bf16.mxu0 0
        %9022 = vmatpush1.bf16.msra.mxu0 %v9000
        %9023 = vmatprep.subr.bf16.mxu0 0
        %9024 = vmatpush1.bf16.msra.mxu0 %v9001
        %9025 = vmatprep.subr.bf16.mxu0 0
        %9026 = vmatpush1.bf16.msra.mxu0 %v9002
        %9027 = vmatprep.subr.bf16.mxu0 0
        %9028 = vmatpush1.bf16.msra.mxu0 0
        %9029 = vmatprep.subr.bf16.mxu0 0
        %9030 = vmatpush1.bf16.msra.mxu0 0
        %9031 = vmatprep.subr.bf16.mxu0 0
        %9032 = vmatpush1.bf16.msra.mxu0 0
        %9033 = vmatprep.subr.bf16.mxu0 0
        %9034 = vmatpush1.bf16.msra.mxu0 0
        %9035 = vmatprep.subr.bf16.mxu0 0
        %9036 = vmatpush1.bf16.msra.mxu0 0
        %9037 = vmatprep.subr.bf16.mxu0 0
        %9038 = vmatpush1.bf16.msra.mxu0 0
        %9039 = vmatprep.subr.bf16.mxu0 0
        %9040 = vmatpush1.bf16.msra.mxu0 0
        %9041 = vmatprep.subr.bf16.mxu0 0
        %9042 = vmatpush1.bf16.msra.mxu0 0
        %9043 = vmatprep.mubr.bf16.mxu0 0
        %9044 = vmatmul.mubr.bf16.gmra.mrb[0].mxu0 %v8945
        %v9045 = vpop.f32.mrb[0].mxu0
        %v9046 = vadd.f32 0.0, %v9045
        %v9047 = vpop.f32.mrb[0].mxu0
        %v9048 = vpop.f32.mrb[0].mxu0
        %v9049 = vadd.f32 0.0, %v9048
        %v9050 = vpop.f32.mrb[0].mxu0
        %9051 = vdwg.mxu0
        %v9068 = vunpack.c.l.b16 %v8868
        %v9069 = vunpack.c.l.b16 %v8869
        %v9070 = vunpack.c.l.b16 %v8870
        %v9071 = vunpack.c.l.b16 %v8871
        %v9072 = vunpack.c.l.b16 %v8872
        %v9073 = vunpack.c.l.b16 %v8873
        %v9074 = vunpack.c.l.b16 %v8874
        %v9075 = vunpack.c.l.b16 %v8875
        %v9076 = vunpack.c.l.b16 %v8876
        %v9077 = vunpack.c.l.b16 %v8877
        %v9078 = vunpack.c.l.b16 %v8878
        %v9079 = vunpack.c.l.b16 %v8879
        %v9080 = vunpack.c.l.b16 %v8880
        %v9081 = vunpack.c.l.b16 %v8881
        %v9082 = vunpack.c.l.b16 %v8882
        %v9083 = vunpack.c.l.b16 %v8883
        %v9084 = vpack.c.b16 %v9069, %v9068
        %v9085 = vpack.c.b16 %v9071, %v9070
        %v9086 = vpack.c.b16 %v9073, %v9072
        %v9087 = vpack.c.b16 %v9075, %v9074
        %v9088 = vpack.c.b16 %v9077, %v9076
        %v9089 = vpack.c.b16 %v9079, %v9078
        %v9090 = vpack.c.b16 %v9081, %v9080
        %v9091 = vpack.c.b16 %v9083, %v9082
        %9100 = vmatprep.subr.bf16.mxu0 0
        %9101 = vmatpush1.bf16.msra.mxu0 %v9084
        %9102 = vmatprep.subr.bf16.mxu0 0
        %9103 = vmatpush1.bf16.msra.mxu0 %v9085
        %9104 = vmatprep.subr.bf16.mxu0 0
        %9105 = vmatpush1.bf16.msra.mxu0 %v9086
        %9106 = vmatprep.subr.bf16.mxu0 0
        %9107 = vmatpush1.bf16.msra.mxu0 %v9087
        %9108 = vmatprep.subr.bf16.mxu0 0
        %9109 = vmatpush1.bf16.msra.mxu0 %v9088
        %9110 = vmatprep.subr.bf16.mxu0 0
        %9111 = vmatpush1.bf16.msra.mxu0 %v9089
        %9112 = vmatprep.subr.bf16.mxu0 0
        %9113 = vmatpush1.bf16.msra.mxu0 %v9090
        %9114 = vmatprep.subr.bf16.mxu0 0
        %9115 = vmatpush1.bf16.msra.mxu0 %v9091
        %9116 = vmatprep.subr.bf16.mxu0 0
        %9117 = vmatpush1.bf16.msra.mxu0 0
        %9118 = vmatprep.subr.bf16.mxu0 0
        %9119 = vmatpush1.bf16.msra.mxu0 0
        %9120 = vmatprep.subr.bf16.mxu0 0
        %9121 = vmatpush1.bf16.msra.mxu0 0
        %9122 = vmatprep.subr.bf16.mxu0 0
        %9123 = vmatpush1.bf16.msra.mxu0 0
        %9124 = vmatprep.subr.bf16.mxu0 0
        %9125 = vmatpush1.bf16.msra.mxu0 0
        %9126 = vmatprep.subr.bf16.mxu0 0
        %9127 = vmatpush1.bf16.msra.mxu0 0
        %9128 = vmatprep.subr.bf16.mxu0 0
        %9129 = vmatpush1.bf16.msra.mxu0 0
        %9130 = vmatprep.subr.bf16.mxu0 0
        %9131 = vmatpush1.bf16.msra.mxu0 0
        %9132 = vmatprep.mubr.bf16.mxu0 0
        %9133 = vmatmul.mubr.bf16.gmra.mrb[0].mxu0 %v8866
        %v9134 = vpop.f32.mrb[0].mxu0
        %v9135 = vadd.f32 %v9046, %v9134
        %v9136 = vpop.f32.mrb[0].mxu0
        %v9137 = vpop.f32.mrb[0].mxu0
        %v9138 = vadd.f32 %v9049, %v9137
        %v9139 = vpop.f32.mrb[0].mxu0
        %9140 = vdwg.mxu0
        %v9141 = vld [vmem:[#allocation2 + $0xc0] sm:$0xf]
        %v9142 = vld [vmem:[#allocation2 + $0xc4] sm:$0xf]
        %v9143 = vld [vmem:[#allocation2 + $0xc0] sm:$0xe]
        %v9144 = vld [vmem:[#allocation2 + $0xc8] sm:$0x1]
        %v9145 = vld [vmem:[#allocation2 + $0xc0] sm:$0xc]
        %v9146 = vld [vmem:[#allocation2 + $0xc8] sm:$0x3]
        %v9147 = vld [vmem:[#allocation2 + $0xc0] sm:$0x8]
        %v9148 = vld [vmem:[#allocation2 + $0xc8] sm:$0x7]
        %v9149 = vld [vmem:[#allocation2 + $0xc8] sm:$0xf]
        %v9152 = vunpack.c.l.b16 %v9141
        %v9153 = vunpack.c.l.b16 %v9142
        %v9154 = vpack.c.b16 %v9153, %v9152
        %v9157 = vunpack.c.l.b16 %v9143
        %v9158 = vunpack.c.l.b16 %v9144
        %v9159 = vpack.c.b16 %v9153, %v9157
        %v9160 = vpack.c.b16 %v9158, %v9158
        %v9161 = vrot.slane %v9159, 1
        %v9162 = vrot.slane %v9160, 1
        %v9163 = vsel %vm6147, %v9161, %v9162
        %9164 = vrot.lane.b32.xlu0 %v9163, 16
        %v9165 = vpop.permute.xlu0 %9164
        %v9168 = vunpack.c.l.b16 %v9145
        %v9169 = vunpack.c.l.b16 %v9146
        %v9170 = vpack.c.b16 %v9153, %v9168
        %v9171 = vpack.c.b16 %v9169, %v9169
        %v9172 = vrot.slane %v9170, 2
        %v9173 = vrot.slane %v9171, 2
        %v9174 = vsel %vm6159, %v9172, %v9173
        %9175 = vrot.lane.b32.xlu0 %v9174, 32
        %v9176 = vpop.permute.xlu0 %9175
        %v9179 = vunpack.c.l.b16 %v9147
        %v9180 = vunpack.c.l.b16 %v9148
        %v9181 = vpack.c.b16 %v9153, %v9179
        %v9182 = vpack.c.b16 %v9180, %v9180
        %v9183 = vrot.slane %v9181, 3
        %v9184 = vrot.slane %v9182, 3
        %v9185 = vsel %vm6171, %v9183, %v9184
        %9186 = vrot.lane.b32.xlu0 %v9185, 48
        %v9187 = vpop.permute.xlu0 %9186
        %v9189 = vunpack.c.l.b16 %v9149
        %v9190 = vpack.c.b16 %v9189, %v9153
        %9191 = vrot.lane.b32.xlu0 %v9190, 64
        %v9192 = vpop.permute.xlu0 %9191
        %v9195 = vsel %vm6182, %v9154, %v9165
        %v9197 = vsel %vm6186, %v9195, %v9176
        %v9199 = vsel %vm6189, %v9197, %v9187
        %v9201 = vsel %vm6192, %v9199, %v9192
        %v9202 = vsel %vm6195, %v9201, 0
        %v9204 = vld [vmem:[%s6537] sm:$0xf]
        %v9205 = vld [vmem:[%s6537 + $0x4] sm:$0xf]
        %v9206 = vld [vmem:[%s6537 + $0x8] sm:$0xf]
        %v9207 = vld [vmem:[%s6537 + $0xc] sm:$0xf]
        %v9208 = vld [vmem:[%s6537 + $0x10] sm:$0xf]
        %v9209 = vld [vmem:[%s6537 + $0x14] sm:$0xf]
        %v9210 = vld [vmem:[%s6537 + $0x18] sm:$0xf]
        %v9211 = vld [vmem:[%s6537 + $0x1c] sm:$0xf]
        %v9212 = vld [vmem:[%s6537 + $0x20] sm:$0xf]
        %v9213 = vld [vmem:[%s6537 + $0x24] sm:$0xf]
        %v9214 = vld [vmem:[%s6537 + $0x28] sm:$0xf]
        %v9215 = vld [vmem:[%s6537 + $0x2c] sm:$0xf]
        %v9216 = vld [vmem:[%s6537 + $0x30] sm:$0xf]
        %v9217 = vld [vmem:[%s6537 + $0x34] sm:$0xf]
        %v9218 = vld [vmem:[%s6537 + $0x38] sm:$0xf]
        %v9219 = vld [vmem:[%s6537 + $0x3c] sm:$0xf]
        %v9236 = vunpack.c.l.b16 %v9204
        %v9237 = vunpack.c.l.b16 %v9205
        %v9238 = vunpack.c.l.b16 %v9206
        %v9239 = vunpack.c.l.b16 %v9207
        %v9240 = vunpack.c.l.b16 %v9208
        %v9241 = vunpack.c.l.b16 %v9209
        %v9242 = vunpack.c.l.b16 %v9210
        %v9243 = vunpack.c.l.b16 %v9211
        %v9244 = vunpack.c.l.b16 %v9212
        %v9245 = vunpack.c.l.b16 %v9213
        %v9246 = vunpack.c.l.b16 %v9214
        %v9247 = vunpack.c.l.b16 %v9215
        %v9248 = vunpack.c.l.b16 %v9216
        %v9249 = vunpack.c.l.b16 %v9217
        %v9250 = vunpack.c.l.b16 %v9218
        %v9251 = vunpack.c.l.b16 %v9219
        %v9252 = vpack.c.b16 %v9237, %v9236
        %v9253 = vpack.c.b16 %v9239, %v9238
        %v9254 = vpack.c.b16 %v9241, %v9240
        %v9255 = vpack.c.b16 %v9243, %v9242
        %v9256 = vpack.c.b16 %v9245, %v9244
        %v9257 = vpack.c.b16 %v9247, %v9246
        %v9258 = vpack.c.b16 %v9249, %v9248
        %v9259 = vpack.c.b16 %v9251, %v9250
        %9268 = vmatprep.subr.bf16.mxu0 0
        %9269 = vmatpush1.bf16.msra.mxu0 %v9252
        %9270 = vmatprep.subr.bf16.mxu0 0
        %9271 = vmatpush1.bf16.msra.mxu0 %v9253
        %9272 = vmatprep.subr.bf16.mxu0 0
        %9273 = vmatpush1.bf16.msra.mxu0 %v9254
        %9274 = vmatprep.subr.bf16.mxu0 0
        %9275 = vmatpush1.bf16.msra.mxu0 %v9255
        %9276 = vmatprep.subr.bf16.mxu0 0
        %9277 = vmatpush1.bf16.msra.mxu0 %v9256
        %9278 = vmatprep.subr.bf16.mxu0 0
        %9279 = vmatpush1.bf16.msra.mxu0 %v9257
        %9280 = vmatprep.subr.bf16.mxu0 0
        %9281 = vmatpush1.bf16.msra.mxu0 %v9258
        %9282 = vmatprep.subr.bf16.mxu0 0
        %9283 = vmatpush1.bf16.msra.mxu0 %v9259
        %9284 = vmatprep.subr.bf16.mxu0 0
        %9285 = vmatpush1.bf16.msra.mxu0 0
        %9286 = vmatprep.subr.bf16.mxu0 0
        %9287 = vmatpush1.bf16.msra.mxu0 0
        %9288 = vmatprep.subr.bf16.mxu0 0
        %9289 = vmatpush1.bf16.msra.mxu0 0
        %9290 = vmatprep.subr.bf16.mxu0 0
        %9291 = vmatpush1.bf16.msra.mxu0 0
        %9292 = vmatprep.subr.bf16.mxu0 0
        %9293 = vmatpush1.bf16.msra.mxu0 0
        %9294 = vmatprep.subr.bf16.mxu0 0
        %9295 = vmatpush1.bf16.msra.mxu0 0
        %9296 = vmatprep.subr.bf16.mxu0 0
        %9297 = vmatpush1.bf16.msra.mxu0 0
        %9298 = vmatprep.subr.bf16.mxu0 0
        %9299 = vmatpush1.bf16.msra.mxu0 0
        %9300 = vmatprep.mubr.bf16.mxu0 0
        %9301 = vmatmul.mubr.bf16.gmra.mrb[0].mxu0 %v9202
        %v9302 = vpop.f32.mrb[0].mxu0
        %v9303 = vadd.f32 0.0, %v9302
        %v9304 = vpop.f32.mrb[0].mxu0
        %v9305 = vpop.f32.mrb[0].mxu0
        %v9306 = vadd.f32 0.0, %v9305
        %v9307 = vpop.f32.mrb[0].mxu0
        %9308 = vdwg.mxu0
        %v9309 = vadd.f32 %v9135, %v9303
        %v9310 = vadd.f32 %v9138, %v9306
        %v9311 = vld [vmem:[#allocation2 + $0xd8] sm:$0xf]
        %v9312 = vld [vmem:[#allocation2 + $0xdc] sm:$0xf]
        %v9313 = vld [vmem:[#allocation2 + $0xd8] sm:$0xe]
        %v9314 = vld [vmem:[#allocation2 + $0xe0] sm:$0x1]
        %v9315 = vld [vmem:[#allocation2 + $0xd8] sm:$0xc]
        %v9316 = vld [vmem:[#allocation2 + $0xe0] sm:$0x3]
        %v9317 = vld [vmem:[#allocation2 + $0xd8] sm:$0x8]
        %v9318 = vld [vmem:[#allocation2 + $0xe0] sm:$0x7]
        %v9319 = vld [vmem:[#allocation2 + $0xe0] sm:$0xf]
        %v9322 = vunpack.c.l.b16 %v9311
        %v9323 = vunpack.c.l.b16 %v9312
        %v9324 = vpack.c.b16 %v9323, %v9322
        %v9327 = vunpack.c.l.b16 %v9313
        %v9328 = vunpack.c.l.b16 %v9314
        %v9329 = vpack.c.b16 %v9323, %v9327
        %v9330 = vpack.c.b16 %v9328, %v9328
        %v9331 = vrot.slane %v9329, 1
        %v9332 = vrot.slane %v9330, 1
        %v9333 = vsel %vm6147, %v9331, %v9332
        %9334 = vrot.lane.b32.xlu0 %v9333, 16
        %v9335 = vpop.permute.xlu0 %9334
        %v9338 = vunpack.c.l.b16 %v9315
        %v9339 = vunpack.c.l.b16 %v9316
        %v9340 = vpack.c.b16 %v9323, %v9338
        %v9341 = vpack.c.b16 %v9339, %v9339
        %v9342 = vrot.slane %v9340, 2
        %v9343 = vrot.slane %v9341, 2
        %v9344 = vsel %vm6159, %v9342, %v9343
        %9345 = vrot.lane.b32.xlu0 %v9344, 32
        %v9346 = vpop.permute.xlu0 %9345
        %v9349 = vunpack.c.l.b16 %v9317
        %v9350 = vunpack.c.l.b16 %v9318
        %v9351 = vpack.c.b16 %v9323, %v9349
        %v9352 = vpack.c.b16 %v9350, %v9350
        %v9353 = vrot.slane %v9351, 3
        %v9354 = vrot.slane %v9352, 3
        %v9355 = vsel %vm6171, %v9353, %v9354
        %9356 = vrot.lane.b32.xlu0 %v9355, 48
        %v9357 = vpop.permute.xlu0 %9356
        %v9359 = vunpack.c.l.b16 %v9319
        %v9360 = vpack.c.b16 %v9359, %v9323
        %9361 = vrot.lane.b32.xlu0 %v9360, 64
        %v9362 = vpop.permute.xlu0 %9361
        %v9365 = vsel %vm6182, %v9324, %v9335
        %v9367 = vsel %vm6186, %v9365, %v9346
        %v9369 = vsel %vm6189, %v9367, %v9357
        %v9371 = vsel %vm6192, %v9369, %v9362
        %v9372 = vsel %vm6195, %v9371, 0
        %v9374 = vld [vmem:[%s6708] sm:$0xf]
        %v9375 = vld [vmem:[%s6708 + $0x4] sm:$0xf]
        %v9376 = vld [vmem:[%s6708 + $0x8] sm:$0xf]
        %v9377 = vld [vmem:[%s6708 + $0xc] sm:$0xf]
        %v9378 = vld [vmem:[%s6708 + $0x10] sm:$0xf]
        %v9379 = vld [vmem:[%s6708 + $0x14] sm:$0xf]
        %v9380 = vld [vmem:[%s6708 + $0x18] sm:$0xf]
        %v9381 = vld [vmem:[%s6708 + $0x1c] sm:$0xf]
        %v9382 = vld [vmem:[%s6708 + $0x20] sm:$0xf]
        %v9383 = vld [vmem:[%s6708 + $0x24] sm:$0xf]
        %v9384 = vld [vmem:[%s6708 + $0x28] sm:$0xf]
        %v9385 = vld [vmem:[%s6708 + $0x2c] sm:$0xf]
        %v9386 = vld [vmem:[%s6708 + $0x30] sm:$0xf]
        %v9387 = vld [vmem:[%s6708 + $0x34] sm:$0xf]
        %v9388 = vld [vmem:[%s6708 + $0x38] sm:$0xf]
        %v9389 = vld [vmem:[%s6708 + $0x3c] sm:$0xf]
        %v9406 = vunpack.c.l.b16 %v9374
        %v9407 = vunpack.c.l.b16 %v9375
        %v9408 = vunpack.c.l.b16 %v9376
        %v9409 = vunpack.c.l.b16 %v9377
        %v9410 = vunpack.c.l.b16 %v9378
        %v9411 = vunpack.c.l.b16 %v9379
        %v9412 = vunpack.c.l.b16 %v9380
        %v9413 = vunpack.c.l.b16 %v9381
        %v9414 = vunpack.c.l.b16 %v9382
        %v9415 = vunpack.c.l.b16 %v9383
        %v9416 = vunpack.c.l.b16 %v9384
        %v9417 = vunpack.c.l.b16 %v9385
        %v9418 = vunpack.c.l.b16 %v9386
        %v9419 = vunpack.c.l.b16 %v9387
        %v9420 = vunpack.c.l.b16 %v9388
        %v9421 = vunpack.c.l.b16 %v9389
        %v9422 = vpack.c.b16 %v9407, %v9406
        %v9423 = vpack.c.b16 %v9409, %v9408
        %v9424 = vpack.c.b16 %v9411, %v9410
        %v9425 = vpack.c.b16 %v9413, %v9412
        %v9426 = vpack.c.b16 %v9415, %v9414
        %v9427 = vpack.c.b16 %v9417, %v9416
        %v9428 = vpack.c.b16 %v9419, %v9418
        %v9429 = vpack.c.b16 %v9421, %v9420
        %9438 = vmatprep.subr.bf16.mxu0 0
        %9439 = vmatpush1.bf16.msra.mxu0 %v9422
        %9440 = vmatprep.subr.bf16.mxu0 0
        %9441 = vmatpush1.bf16.msra.mxu0 %v9423
        %9442 = vmatprep.subr.bf16.mxu0 0
        %9443 = vmatpush1.bf16.msra.mxu0 %v9424
        %9444 = vmatprep.subr.bf16.mxu0 0
        %9445 = vmatpush1.bf16.msra.mxu0 %v9425
        %9446 = vmatprep.subr.bf16.mxu0 0
        %9447 = vmatpush1.bf16.msra.mxu0 %v9426
        %9448 = vmatprep.subr.bf16.mxu0 0
        %9449 = vmatpush1.bf16.msra.mxu0 %v9427
        %9450 = vmatprep.subr.bf16.mxu0 0
        %9451 = vmatpush1.bf16.msra.mxu0 %v9428
        %9452 = vmatprep.subr.bf16.mxu0 0
        %9453 = vmatpush1.bf16.msra.mxu0 %v9429
        %9454 = vmatprep.subr.bf16.mxu0 0
        %9455 = vmatpush1.bf16.msra.mxu0 0
        %9456 = vmatprep.subr.bf16.mxu0 0
        %9457 = vmatpush1.bf16.msra.mxu0 0
        %9458 = vmatprep.subr.bf16.mxu0 0
        %9459 = vmatpush1.bf16.msra.mxu0 0
        %9460 = vmatprep.subr.bf16.mxu0 0
        %9461 = vmatpush1.bf16.msra.mxu0 0
        %9462 = vmatprep.subr.bf16.mxu0 0
        %9463 = vmatpush1.bf16.msra.mxu0 0
        %9464 = vmatprep.subr.bf16.mxu0 0
        %9465 = vmatpush1.bf16.msra.mxu0 0
        %9466 = vmatprep.subr.bf16.mxu0 0
        %9467 = vmatpush1.bf16.msra.mxu0 0
        %9468 = vmatprep.subr.bf16.mxu0 0
        %9469 = vmatpush1.bf16.msra.mxu0 0
        %9470 = vmatprep.mubr.bf16.mxu0 0
        %9471 = vmatmul.mubr.bf16.gmra.mrb[0].mxu0 %v9372
        %v9472 = vpop.f32.mrb[0].mxu0
        %v9473 = vadd.f32 0.0, %v9472
        %v9474 = vpop.f32.mrb[0].mxu0
        %v9475 = vpop.f32.mrb[0].mxu0
        %v9476 = vadd.f32 0.0, %v9475
        %v9477 = vpop.f32.mrb[0].mxu0
        %9478 = vdwg.mxu0
        %v9479 = vadd.f32 %v9309, %v9473
        %v9480 = vadd.f32 %v9310, %v9476
        %v9481 = vld [vmem:[#allocation2 + $0xf0] sm:$0xf]
        %v9482 = vld [vmem:[#allocation2 + $0xf4] sm:$0xf]
        %v9483 = vld [vmem:[#allocation2 + $0xf0] sm:$0xe]
        %v9484 = vld [vmem:[#allocation2 + $0xf4] sm:$0xf]
        %v9485 = vld [vmem:[#allocation2 + $0xf8] sm:$0x1]
        %v9486 = vld [vmem:[#allocation2 + $0xf0] sm:$0xc]
        %v9487 = vld [vmem:[#allocation2 + $0xf8] sm:$0x3]
        %v9488 = vld [vmem:[#allocation2 + $0xf0] sm:$0x8]
        %v9489 = vld [vmem:[#allocation2 + $0xf8] sm:$0x7]
        %v9490 = vld [vmem:[#allocation2 + $0xf8] sm:$0xf]
        %v9493 = vunpack.c.l.b16 %v9481
        %v9494 = vunpack.c.l.b16 %v9482
        %v9495 = vpack.c.b16 %v9494, %v9493
        %v9499 = vunpack.c.l.b16 %v9483
        %v9500 = vunpack.c.l.b16 %v9484
        %v9501 = vunpack.c.l.b16 %v9485
        %v9502 = vpack.c.b16 %v9500, %v9499
        %v9503 = vpack.c.b16 %v9501, %v9501
        %v9504 = vrot.slane %v9502, 1
        %v9505 = vrot.slane %v9503, 1
        %v9506 = vsel %vm6147, %v9504, %v9505
        %9507 = vrot.lane.b32.xlu0 %v9506, 16
        %v9508 = vpop.permute.xlu0 %9507
        %v9511 = vunpack.c.l.b16 %v9486
        %v9512 = vunpack.c.l.b16 %v9487
        %v9513 = vpack.c.b16 %v9500, %v9511
        %v9514 = vpack.c.b16 %v9512, %v9512
        %v9515 = vrot.slane %v9513, 2
        %v9516 = vrot.slane %v9514, 2
        %v9517 = vsel %vm6159, %v9515, %v9516
        %9518 = vrot.lane.b32.xlu0 %v9517, 32
        %v9519 = vpop.permute.xlu0 %9518
        %v9522 = vunpack.c.l.b16 %v9488
        %v9523 = vunpack.c.l.b16 %v9489
        %v9524 = vpack.c.b16 %v9500, %v9522
        %v9525 = vpack.c.b16 %v9523, %v9523
        %v9526 = vrot.slane %v9524, 3
        %v9527 = vrot.slane %v9525, 3
        %v9528 = vsel %vm6171, %v9526, %v9527
        %9529 = vrot.lane.b32.xlu0 %v9528, 48
        %v9530 = vpop.permute.xlu0 %9529
        %v9532 = vunpack.c.l.b16 %v9490
        %v9533 = vpack.c.b16 %v9532, %v9500
        %9534 = vrot.lane.b32.xlu0 %v9533, 64
        %v9535 = vpop.permute.xlu0 %9534
        %v9538 = vsel %vm6182, %v9495, %v9508
        %v9540 = vsel %vm6186, %v9538, %v9519
        %v9542 = vsel %vm6189, %v9540, %v9530
        %v9544 = vsel %vm6192, %v9542, %v9535
        %v9545 = vsel %vm6195, %v9544, 0
        %v9547 = vld [vmem:[%s6879] sm:$0xf]
        %v9548 = vld [vmem:[%s6879 + $0x4] sm:$0xf]
        %v9549 = vld [vmem:[%s6879 + $0x8] sm:$0xf]
        %v9550 = vld [vmem:[%s6879 + $0xc] sm:$0xf]
        %v9551 = vld [vmem:[%s6879 + $0x10] sm:$0xf]
        %v9552 = vld [vmem:[%s6879 + $0x14] sm:$0xf]
        %v9553 = vld [vmem:[%s6879 + $0x18] sm:$0xf]
        %v9554 = vld [vmem:[%s6879 + $0x1c] sm:$0xf]
        %v9555 = vld [vmem:[%s6879 + $0x20] sm:$0xf]
        %v9556 = vld [vmem:[%s6879 + $0x24] sm:$0xf]
        %v9557 = vld [vmem:[%s6879 + $0x28] sm:$0xf]
        %v9558 = vld [vmem:[%s6879 + $0x2c] sm:$0xf]
        %v9559 = vld [vmem:[%s6879 + $0x30] sm:$0xf]
        %v9560 = vld [vmem:[%s6879 + $0x34] sm:$0xf]
        %v9561 = vld [vmem:[%s6879 + $0x38] sm:$0xf]
        %v9562 = vld [vmem:[%s6879 + $0x3c] sm:$0xf]
        %v9579 = vunpack.c.l.b16 %v9547
        %v9580 = vunpack.c.l.b16 %v9548
        %v9581 = vunpack.c.l.b16 %v9549
        %v9582 = vunpack.c.l.b16 %v9550
        %v9583 = vunpack.c.l.b16 %v9551
        %v9584 = vunpack.c.l.b16 %v9552
        %v9585 = vunpack.c.l.b16 %v9553
        %v9586 = vunpack.c.l.b16 %v9554
        %v9587 = vunpack.c.l.b16 %v9555
        %v9588 = vunpack.c.l.b16 %v9556
        %v9589 = vunpack.c.l.b16 %v9557
        %v9590 = vunpack.c.l.b16 %v9558
        %v9591 = vunpack.c.l.b16 %v9559
        %v9592 = vunpack.c.l.b16 %v9560
        %v9593 = vunpack.c.l.b16 %v9561
        %v9594 = vunpack.c.l.b16 %v9562
        %v9595 = vpack.c.b16 %v9580, %v9579
        %v9596 = vpack.c.b16 %v9582, %v9581
        %v9597 = vpack.c.b16 %v9584, %v9583
        %v9598 = vpack.c.b16 %v9586, %v9585
        %v9599 = vpack.c.b16 %v9588, %v9587
        %v9600 = vpack.c.b16 %v9590, %v9589
        %v9601 = vpack.c.b16 %v9592, %v9591
        %v9602 = vpack.c.b16 %v9594, %v9593
        %9611 = vmatprep.subr.bf16.mxu0 0
        %9612 = vmatpush1.bf16.msra.mxu0 %v9595
        %9613 = vmatprep.subr.bf16.mxu0 0
        %9614 = vmatpush1.bf16.msra.mxu0 %v9596
        %9615 = vmatprep.subr.bf16.mxu0 0
        %9616 = vmatpush1.bf16.msra.mxu0 %v9597
        %9617 = vmatprep.subr.bf16.mxu0 0
        %9618 = vmatpush1.bf16.msra.mxu0 %v9598
        %9619 = vmatprep.subr.bf16.mxu0 0
        %9620 = vmatpush1.bf16.msra.mxu0 %v9599
        %9621 = vmatprep.subr.bf16.mxu0 0
        %9622 = vmatpush1.bf16.msra.mxu0 %v9600
        %9623 = vmatprep.subr.bf16.mxu0 0
        %9624 = vmatpush1.bf16.msra.mxu0 %v9601
        %9625 = vmatprep.subr.bf16.mxu0 0
        %9626 = vmatpush1.bf16.msra.mxu0 %v9602
        %9627 = vmatprep.subr.bf16.mxu0 0
        %9628 = vmatpush1.bf16.msra.mxu0 0
        %9629 = vmatprep.subr.bf16.mxu0 0
        %9630 = vmatpush1.bf16.msra.mxu0 0
        %9631 = vmatprep.subr.bf16.mxu0 0
        %9632 = vmatpush1.bf16.msra.mxu0 0
        %9633 = vmatprep.subr.bf16.mxu0 0
        %9634 = vmatpush1.bf16.msra.mxu0 0
        %9635 = vmatprep.subr.bf16.mxu0 0
        %9636 = vmatpush1.bf16.msra.mxu0 0
        %9637 = vmatprep.subr.bf16.mxu0 0
        %9638 = vmatpush1.bf16.msra.mxu0 0
        %9639 = vmatprep.subr.bf16.mxu0 0
        %9640 = vmatpush1.bf16.msra.mxu0 0
        %9641 = vmatprep.subr.bf16.mxu0 0
        %9642 = vmatpush1.bf16.msra.mxu0 0
        %9643 = vmatprep.mubr.bf16.mxu0 0
        %9644 = vmatmul.mubr.bf16.gmra.mrb[0].mxu0 %v9545
        %v9645 = vpop.f32.mrb[0].mxu0
        %v9646 = vadd.f32 0.0, %v9645
        %v9647 = vpop.f32.mrb[0].mxu0
        %v9648 = vpop.f32.mrb[0].mxu0
        %v9649 = vadd.f32 0.0, %v9648
        %v9650 = vpop.f32.mrb[0].mxu0
        %9651 = vdwg.mxu0
        %v9652 = vadd.f32 %v9479, %v9646
        %v9653 = vadd.f32 %v9480, %v9649
        %v9654 = vld [vmem:[%s2 + $0x1] sm:$0x1]
        %v9655 = vlaneseq
        %v9656 = vshrl.u32 %v9655, 7
        %v9657 = vsub.s32 0, %v9656
        %v9658 = vrot.slane %v9654, %v9657
        %v9659 = vmul.f32 %v9652, %v9658
        %v9660 = vmul.f32 %v9653, %v9658
        %v9661 = vld [vmem:[%s3 + $0x1] sm:$0x1]
        %v9662 = vlaneseq
        %v9663 = vshrl.u32 %v9662, 7
        %v9664 = vsub.s32 0, %v9663
        %v9665 = vrot.slane %v9661, %v9664
        %v9666 = vadd.f32 %v9659, %v9665
        %v9667 = vadd.f32 %v9660, %v9665
        %v9668 = vmax.f32 %v9666, 0.0
        %v9669 = vmax.f32 %v9667, 0.0
        %v9672 = vrot.slane %v9668, 4
        %v9673 = vrot.slane %v9669, 4
        %v9674 = vsel %vm1602, %v9672, %v9673
        %v9678 = vsel %vm1602, 0.0, %v9672
        %v9679 = vsel %vm1602, %v9673, 0.0
        %v9680 = vpack.c.bf16 %v9674, %v9678
        %v9681 = vpack.c.bf16 %v9679, %v9679
        %v9684 = vunpack.c.l.b16 %v9680
        %v9685 = vunpack.c.h.b16 %v9680
        %v9686 = vunpack.c.l.b16 %v9681
        %v9687 = vpack.c.b16 %v9684, %v9684
        %v9688 = vpack.c.b16 %v9685, %v9685
        %v9689 = vpack.c.b16 %v9686, %v9686
        %9693 = vst [vmem:[#allocation3 + $0xc0] sm:$0xf] %v9687
        %9694 = vst [vmem:[#allocation3 + $0xc4] sm:$0xf] %v9688
        %9695 = vst [vmem:[#allocation3 + $0xc8] sm:$0xf] %v9689
        %v9696 = vld [vmem:[#allocation3] sm:$0xf]
        %v9697 = vld [vmem:[#allocation3 + $0x4] sm:$0xf]
        %v9698 = vld [vmem:[#allocation3] sm:$0xc]
        %v9699 = vld [vmem:[#allocation3 + $0x8] sm:$0x3]
        %v9700 = vld [vmem:[#allocation3 + $0x8] sm:$0xf]
        %v9703 = vunpack.c.l.b16 %v9696
        %v9704 = vunpack.c.l.b16 %v9697
        %v9705 = vpack.c.b16 %v9704, %v9703
        %v9708 = vunpack.c.l.b16 %v9698
        %v9709 = vunpack.c.l.b16 %v9699
        %v9710 = vpack.c.b16 %v9704, %v9708
        %v9711 = vpack.c.b16 %v9709, %v9709
        %v9712 = vrot.slane %v9710, 2
        %v9713 = vrot.slane %v9711, 2
        %v9714 = vsel %vm6159, %v9712, %v9713
        %9715 = vrot.lane.b32.xlu0 %v9714, 32
        %v9716 = vpop.permute.xlu0 %9715
        %v9718 = vunpack.c.l.b16 %v9700
        %v9719 = vpack.c.b16 %v9718, %v9704
        %9720 = vrot.lane.b32.xlu0 %v9719, 64
        %v9721 = vpop.permute.xlu0 %9720
        %v9724 = vsel %vm6186, %v9705, %v9716
        %v9726 = vsel %vm6192, %v9724, %v9721
        %vm9727 = vcmask 785408
        %v9728 = vsel %vm9727, %v9726, 0
        %s9730 = scalar_lea.vmem %s1, 768
        %v9731 = vld [vmem:[%s9730] sm:$0xf]
        %v9732 = vld [vmem:[%s9730 + $0x4] sm:$0xf]
        %v9733 = vld [vmem:[%s9730 + $0x8] sm:$0xf]
        %v9734 = vld [vmem:[%s9730 + $0xc] sm:$0xf]
        %v9735 = vld [vmem:[%s9730 + $0x10] sm:$0xf]
        %v9736 = vld [vmem:[%s9730 + $0x14] sm:$0xf]
        %v9737 = vld [vmem:[%s9730 + $0x18] sm:$0xf]
        %v9738 = vld [vmem:[%s9730 + $0x1c] sm:$0xf]
        %v9739 = vld [vmem:[%s9730 + $0x20] sm:$0xf]
        %v9740 = vld [vmem:[%s9730 + $0x24] sm:$0xf]
        %v9741 = vld [vmem:[%s9730 + $0x28] sm:$0xf]
        %v9742 = vld [vmem:[%s9730 + $0x2c] sm:$0xf]
        %v9743 = vld [vmem:[%s9730 + $0x30] sm:$0xf]
        %v9744 = vld [vmem:[%s9730 + $0x34] sm:$0xf]
        %v9745 = vld [vmem:[%s9730 + $0x38] sm:$0xf]
        %v9746 = vld [vmem:[%s9730 + $0x3c] sm:$0xf]
        %v9747 = vld [vmem:[#allocation3 + $0x30] sm:$0xf]
        %v9748 = vld [vmem:[#allocation3 + $0x34] sm:$0xf]
        %v9749 = vld [vmem:[#allocation3 + $0x30] sm:$0xc]
        %v9750 = vld [vmem:[#allocation3 + $0x38] sm:$0x3]
        %v9751 = vld [vmem:[#allocation3 + $0x38] sm:$0xf]
        %v9754 = vunpack.c.l.b16 %v9747
        %v9755 = vunpack.c.l.b16 %v9748
        %v9756 = vpack.c.b16 %v9755, %v9754
        %v9759 = vunpack.c.l.b16 %v9749
        %v9760 = vunpack.c.l.b16 %v9750
        %v9761 = vpack.c.b16 %v9755, %v9759
        %v9762 = vpack.c.b16 %v9760, %v9760
        %v9763 = vrot.slane %v9761, 2
        %v9764 = vrot.slane %v9762, 2
        %v9765 = vsel %vm6159, %v9763, %v9764
        %9766 = vrot.lane.b32.xlu0 %v9765, 32
        %v9767 = vpop.permute.xlu0 %9766
        %v9769 = vunpack.c.l.b16 %v9751
        %v9770 = vpack.c.b16 %v9769, %v9755
        %9771 = vrot.lane.b32.xlu0 %v9770, 64
        %v9772 = vpop.permute.xlu0 %9771
        %v9775 = vsel %vm6186, %v9756, %v9767
        %v9777 = vsel %vm6192, %v9775, %v9772
        %v9778 = vsel %vm9727, %v9777, 0
        %s9780 = scalar_lea.vmem %s1, 832
        %v9781 = vld [vmem:[%s9780] sm:$0xf]
        %v9782 = vld [vmem:[%s9780 + $0x4] sm:$0xf]
        %v9783 = vld [vmem:[%s9780 + $0x8] sm:$0xf]
        %v9784 = vld [vmem:[%s9780 + $0xc] sm:$0xf]
        %v9785 = vld [vmem:[%s9780 + $0x10] sm:$0xf]
        %v9786 = vld [vmem:[%s9780 + $0x14] sm:$0xf]
        %v9787 = vld [vmem:[%s9780 + $0x18] sm:$0xf]
        %v9788 = vld [vmem:[%s9780 + $0x1c] sm:$0xf]
        %v9789 = vld [vmem:[%s9780 + $0x20] sm:$0xf]
        %v9790 = vld [vmem:[%s9780 + $0x24] sm:$0xf]
        %v9791 = vld [vmem:[%s9780 + $0x28] sm:$0xf]
        %v9792 = vld [vmem:[%s9780 + $0x2c] sm:$0xf]
        %v9793 = vld [vmem:[%s9780 + $0x30] sm:$0xf]
        %v9794 = vld [vmem:[%s9780 + $0x34] sm:$0xf]
        %v9795 = vld [vmem:[%s9780 + $0x38] sm:$0xf]
        %v9796 = vld [vmem:[%s9780 + $0x3c] sm:$0xf]
        %v9813 = vunpack.c.l.b16 %v9781
        %v9814 = vunpack.c.l.b16 %v9782
        %v9815 = vunpack.c.l.b16 %v9783
        %v9816 = vunpack.c.l.b16 %v9784
        %v9817 = vunpack.c.l.b16 %v9785
        %v9818 = vunpack.c.l.b16 %v9786
        %v9819 = vunpack.c.l.b16 %v9787
        %v9820 = vunpack.c.l.b16 %v9788
        %v9821 = vunpack.c.l.b16 %v9789
        %v9822 = vunpack.c.l.b16 %v9790
        %v9823 = vunpack.c.l.b16 %v9791
        %v9824 = vunpack.c.l.b16 %v9792
        %v9825 = vunpack.c.l.b16 %v9793
        %v9826 = vunpack.c.l.b16 %v9794
        %v9827 = vunpack.c.l.b16 %v9795
        %v9828 = vunpack.c.l.b16 %v9796
        %v9829 = vpack.c.b16 %v9814, %v9813
        %v9830 = vpack.c.b16 %v9816, %v9815
        %v9831 = vpack.c.b16 %v9818, %v9817
        %v9832 = vpack.c.b16 %v9820, %v9819
        %v9833 = vpack.c.b16 %v9822, %v9821
        %v9834 = vpack.c.b16 %v9824, %v9823
        %v9835 = vpack.c.b16 %v9826, %v9825
        %v9836 = vpack.c.b16 %v9828, %v9827
        %9845 = vmatprep.subr.bf16.mxu0 0
        %9846 = vmatpush1.bf16.msra.mxu0 %v9829
        %9847 = vmatprep.subr.bf16.mxu0 0
        %9848 = vmatpush1.bf16.msra.mxu0 %v9830
        %9849 = vmatprep.subr.bf16.mxu0 0
        %9850 = vmatpush1.bf16.msra.mxu0 %v9831
        %9851 = vmatprep.subr.bf16.mxu0 0
        %9852 = vmatpush1.bf16.msra.mxu0 %v9832
        %9853 = vmatprep.subr.bf16.mxu0 0
        %9854 = vmatpush1.bf16.msra.mxu0 %v9833
        %9855 = vmatprep.subr.bf16.mxu0 0
        %9856 = vmatpush1.bf16.msra.mxu0 %v9834
        %9857 = vmatprep.subr.bf16.mxu0 0
        %9858 = vmatpush1.bf16.msra.mxu0 %v9835
        %9859 = vmatprep.subr.bf16.mxu0 0
        %9860 = vmatpush1.bf16.msra.mxu0 %v9836
        %9861 = vmatprep.subr.bf16.mxu0 0
        %9862 = vmatpush1.bf16.msra.mxu0 0
        %9863 = vmatprep.subr.bf16.mxu0 0
        %9864 = vmatpush1.bf16.msra.mxu0 0
        %9865 = vmatprep.subr.bf16.mxu0 0
        %9866 = vmatpush1.bf16.msra.mxu0 0
        %9867 = vmatprep.subr.bf16.mxu0 0
        %9868 = vmatpush1.bf16.msra.mxu0 0
        %9869 = vmatprep.subr.bf16.mxu0 0
        %9870 = vmatpush1.bf16.msra.mxu0 0
        %9871 = vmatprep.subr.bf16.mxu0 0
        %9872 = vmatpush1.bf16.msra.mxu0 0
        %9873 = vmatprep.subr.bf16.mxu0 0
        %9874 = vmatpush1.bf16.msra.mxu0 0
        %9875 = vmatprep.subr.bf16.mxu0 0
        %9876 = vmatpush1.bf16.msra.mxu0 0
        %9877 = vmatprep.mubr.bf16.mxu0 0
        %9878 = vmatmul.mubr.bf16.gmra.mrb[0].mxu0 %v9778
        %v9879 = vpop.f32.mrb[0].mxu0
        %v9880 = vadd.f32 0.0, %v9879
        %v9881 = vpop.f32.mrb[0].mxu0
        %v9882 = vpop.f32.mrb[0].mxu0
        %v9883 = vadd.f32 0.0, %v9882
        %v9884 = vpop.f32.mrb[0].mxu0
        %9885 = vdwg.mxu0
        %v9902 = vunpack.c.l.b16 %v9731
        %v9903 = vunpack.c.l.b16 %v9732
        %v9904 = vunpack.c.l.b16 %v9733
        %v9905 = vunpack.c.l.b16 %v9734
        %v9906 = vunpack.c.l.b16 %v9735
        %v9907 = vunpack.c.l.b16 %v9736
        %v9908 = vunpack.c.l.b16 %v9737
        %v9909 = vunpack.c.l.b16 %v9738
        %v9910 = vunpack.c.l.b16 %v9739
        %v9911 = vunpack.c.l.b16 %v9740
        %v9912 = vunpack.c.l.b16 %v9741
        %v9913 = vunpack.c.l.b16 %v9742
        %v9914 = vunpack.c.l.b16 %v9743
        %v9915 = vunpack.c.l.b16 %v9744
        %v9916 = vunpack.c.l.b16 %v9745
        %v9917 = vunpack.c.l.b16 %v9746
        %v9918 = vpack.c.b16 %v9903, %v9902
        %v9919 = vpack.c.b16 %v9905, %v9904
        %v9920 = vpack.c.b16 %v9907, %v9906
        %v9921 = vpack.c.b16 %v9909, %v9908
        %v9922 = vpack.c.b16 %v9911, %v9910
        %v9923 = vpack.c.b16 %v9913, %v9912
        %v9924 = vpack.c.b16 %v9915, %v9914
        %v9925 = vpack.c.b16 %v9917, %v9916
        %9934 = vmatprep.subr.bf16.mxu0 0
        %9935 = vmatpush1.bf16.msra.mxu0 %v9918
        %9936 = vmatprep.subr.bf16.mxu0 0
        %9937 = vmatpush1.bf16.msra.mxu0 %v9919
        %9938 = vmatprep.subr.bf16.mxu0 0
        %9939 = vmatpush1.bf16.msra.mxu0 %v9920
        %9940 = vmatprep.subr.bf16.mxu0 0
        %9941 = vmatpush1.bf16.msra.mxu0 %v9921
        %9942 = vmatprep.subr.bf16.mxu0 0
        %9943 = vmatpush1.bf16.msra.mxu0 %v9922
        %9944 = vmatprep.subr.bf16.mxu0 0
        %9945 = vmatpush1.bf16.msra.mxu0 %v9923
        %9946 = vmatprep.subr.bf16.mxu0 0
        %9947 = vmatpush1.bf16.msra.mxu0 %v9924
        %9948 = vmatprep.subr.bf16.mxu0 0
        %9949 = vmatpush1.bf16.msra.mxu0 %v9925
        %9950 = vmatprep.subr.bf16.mxu0 0
        %9951 = vmatpush1.bf16.msra.mxu0 0
        %9952 = vmatprep.subr.bf16.mxu0 0
        %9953 = vmatpush1.bf16.msra.mxu0 0
        %9954 = vmatprep.subr.bf16.mxu0 0
        %9955 = vmatpush1.bf16.msra.mxu0 0
        %9956 = vmatprep.subr.bf16.mxu0 0
        %9957 = vmatpush1.bf16.msra.mxu0 0
        %9958 = vmatprep.subr.bf16.mxu0 0
        %9959 = vmatpush1.bf16.msra.mxu0 0
        %9960 = vmatprep.subr.bf16.mxu0 0
        %9961 = vmatpush1.bf16.msra.mxu0 0
        %9962 = vmatprep.subr.bf16.mxu0 0
        %9963 = vmatpush1.bf16.msra.mxu0 0
        %9964 = vmatprep.subr.bf16.mxu0 0
        %9965 = vmatpush1.bf16.msra.mxu0 0
        %9966 = vmatprep.mubr.bf16.mxu0 0
        %9967 = vmatmul.mubr.bf16.gmra.mrb[0].mxu0 %v9728
        %v9968 = vpop.f32.mrb[0].mxu0
        %v9969 = vadd.f32 %v9880, %v9968
        %v9970 = vpop.f32.mrb[0].mxu0
        %v9971 = vpop.f32.mrb[0].mxu0
        %v9972 = vadd.f32 %v9883, %v9971
        %v9973 = vpop.f32.mrb[0].mxu0
        %9974 = vdwg.mxu0
        %v9975 = vld [vmem:[#allocation3 + $0x60] sm:$0xf]
        %v9976 = vld [vmem:[#allocation3 + $0x64] sm:$0xf]
        %v9977 = vld [vmem:[#allocation3 + $0x60] sm:$0xc]
        %v9978 = vld [vmem:[#allocation3 + $0x68] sm:$0x3]
        %v9979 = vld [vmem:[#allocation3 + $0x68] sm:$0xf]
        %v9982 = vunpack.c.l.b16 %v9975
        %v9983 = vunpack.c.l.b16 %v9976
        %v9984 = vpack.c.b16 %v9983, %v9982
        %v9987 = vunpack.c.l.b16 %v9977
        %v9988 = vunpack.c.l.b16 %v9978
        %v9989 = vpack.c.b16 %v9983, %v9987
        %v9990 = vpack.c.b16 %v9988, %v9988
        %v9991 = vrot.slane %v9989, 2
        %v9992 = vrot.slane %v9990, 2
        %v9993 = vsel %vm6159, %v9991, %v9992
        %9994 = vrot.lane.b32.xlu0 %v9993, 32
        %v9995 = vpop.permute.xlu0 %9994
        %v9997 = vunpack.c.l.b16 %v9979
        %v9998 = vpack.c.b16 %v9997, %v9983
        %9999 = vrot.lane.b32.xlu0 %v9998, 64
        %v10000 = vpop.permute.xlu0 %9999
        %v10003 = vsel %vm6186, %v9984, %v9995
        %v10005 = vsel %vm6192, %v10003, %v10000
        %v10006 = vsel %vm9727, %v10005, 0
        %s10008 = scalar_lea.vmem %s1, 896
        %v10009 = vld [vmem:[%s10008] sm:$0xf]
        %v10010 = vld [vmem:[%s10008 + $0x4] sm:$0xf]
        %v10011 = vld [vmem:[%s10008 + $0x8] sm:$0xf]
        %v10012 = vld [vmem:[%s10008 + $0xc] sm:$0xf]
        %v10013 = vld [vmem:[%s10008 + $0x10] sm:$0xf]
        %v10014 = vld [vmem:[%s10008 + $0x14] sm:$0xf]
        %v10015 = vld [vmem:[%s10008 + $0x18] sm:$0xf]
        %v10016 = vld [vmem:[%s10008 + $0x1c] sm:$0xf]
        %v10017 = vld [vmem:[%s10008 + $0x20] sm:$0xf]
        %v10018 = vld [vmem:[%s10008 + $0x24] sm:$0xf]
        %v10019 = vld [vmem:[%s10008 + $0x28] sm:$0xf]
        %v10020 = vld [vmem:[%s10008 + $0x2c] sm:$0xf]
        %v10021 = vld [vmem:[%s10008 + $0x30] sm:$0xf]
        %v10022 = vld [vmem:[%s10008 + $0x34] sm:$0xf]
        %v10023 = vld [vmem:[%s10008 + $0x38] sm:$0xf]
        %v10024 = vld [vmem:[%s10008 + $0x3c] sm:$0xf]
        %v10041 = vunpack.c.l.b16 %v10009
        %v10042 = vunpack.c.l.b16 %v10010
        %v10043 = vunpack.c.l.b16 %v10011
        %v10044 = vunpack.c.l.b16 %v10012
        %v10045 = vunpack.c.l.b16 %v10013
        %v10046 = vunpack.c.l.b16 %v10014
        %v10047 = vunpack.c.l.b16 %v10015
        %v10048 = vunpack.c.l.b16 %v10016
        %v10049 = vunpack.c.l.b16 %v10017
        %v10050 = vunpack.c.l.b16 %v10018
        %v10051 = vunpack.c.l.b16 %v10019
        %v10052 = vunpack.c.l.b16 %v10020
        %v10053 = vunpack.c.l.b16 %v10021
        %v10054 = vunpack.c.l.b16 %v10022
        %v10055 = vunpack.c.l.b16 %v10023
        %v10056 = vunpack.c.l.b16 %v10024
        %v10057 = vpack.c.b16 %v10042, %v10041
        %v10058 = vpack.c.b16 %v10044, %v10043
        %v10059 = vpack.c.b16 %v10046, %v10045
        %v10060 = vpack.c.b16 %v10048, %v10047
        %v10061 = vpack.c.b16 %v10050, %v10049
        %v10062 = vpack.c.b16 %v10052, %v10051
        %v10063 = vpack.c.b16 %v10054, %v10053
        %v10064 = vpack.c.b16 %v10056, %v10055
        %10073 = vmatprep.subr.bf16.mxu0 0
        %10074 = vmatpush1.bf16.msra.mxu0 %v10057
        %10075 = vmatprep.subr.bf16.mxu0 0
        %10076 = vmatpush1.bf16.msra.mxu0 %v10058
        %10077 = vmatprep.subr.bf16.mxu0 0
        %10078 = vmatpush1.bf16.msra.mxu0 %v10059
        %10079 = vmatprep.subr.bf16.mxu0 0
        %10080 = vmatpush1.bf16.msra.mxu0 %v10060
        %10081 = vmatprep.subr.bf16.mxu0 0
        %10082 = vmatpush1.bf16.msra.mxu0 %v10061
        %10083 = vmatprep.subr.bf16.mxu0 0
        %10084 = vmatpush1.bf16.msra.mxu0 %v10062
        %10085 = vmatprep.subr.bf16.mxu0 0
        %10086 = vmatpush1.bf16.msra.mxu0 %v10063
        %10087 = vmatprep.subr.bf16.mxu0 0
        %10088 = vmatpush1.bf16.msra.mxu0 %v10064
        %10089 = vmatprep.subr.bf16.mxu0 0
        %10090 = vmatpush1.bf16.msra.mxu0 0
        %10091 = vmatprep.subr.bf16.mxu0 0
        %10092 = vmatpush1.bf16.msra.mxu0 0
        %10093 = vmatprep.subr.bf16.mxu0 0
        %10094 = vmatpush1.bf16.msra.mxu0 0
        %10095 = vmatprep.subr.bf16.mxu0 0
        %10096 = vmatpush1.bf16.msra.mxu0 0
        %10097 = vmatprep.subr.bf16.mxu0 0
        %10098 = vmatpush1.bf16.msra.mxu0 0
        %10099 = vmatprep.subr.bf16.mxu0 0
        %10100 = vmatpush1.bf16.msra.mxu0 0
        %10101 = vmatprep.subr.bf16.mxu0 0
        %10102 = vmatpush1.bf16.msra.mxu0 0
        %10103 = vmatprep.subr.bf16.mxu0 0
        %10104 = vmatpush1.bf16.msra.mxu0 0
        %10105 = vmatprep.mubr.bf16.mxu0 0
        %10106 = vmatmul.mubr.bf16.gmra.mrb[0].mxu0 %v10006
        %v10107 = vpop.f32.mrb[0].mxu0
        %v10108 = vadd.f32 0.0, %v10107
        %v10109 = vpop.f32.mrb[0].mxu0
        %v10110 = vpop.f32.mrb[0].mxu0
        %v10111 = vadd.f32 0.0, %v10110
        %v10112 = vpop.f32.mrb[0].mxu0
        %10113 = vdwg.mxu0
        %v10114 = vadd.f32 %v9969, %v10108
        %v10115 = vadd.f32 %v9972, %v10111
        %v10116 = vld [vmem:[%s2 + $0x2] sm:$0x1]
        %v10117 = vlaneseq
        %v10118 = vshrl.u32 %v10117, 7
        %v10119 = vsub.s32 0, %v10118
        %v10120 = vrot.slane %v10116, %v10119
        %v10121 = vmul.f32 %v10114, %v10120
        %v10122 = vmul.f32 %v10115, %v10120
        %v10123 = vld [vmem:[%s3 + $0x2] sm:$0x1]
        %v10124 = vlaneseq
        %v10125 = vshrl.u32 %v10124, 7
        %v10126 = vsub.s32 0, %v10125
        %v10127 = vrot.slane %v10123, %v10126
        %v10128 = vadd.f32 %v10121, %v10127
        %v10129 = vadd.f32 %v10122, %v10127
        %v10130 = vmax.f32 %v10128, 0.0
        %v10131 = vmax.f32 %v10129, 0.0
        %v10132 = vld [vmem:[#allocation3 + $0x90] sm:$0xf]
        %v10133 = vld [vmem:[#allocation3 + $0x94] sm:$0xf]
        %v10134 = vld [vmem:[#allocation3 + $0x90] sm:$0xc]
        %v10135 = vld [vmem:[#allocation3 + $0x98] sm:$0x3]
        %v10136 = vld [vmem:[#allocation3 + $0x98] sm:$0xf]
        %v10139 = vunpack.c.l.b16 %v10132
        %v10140 = vunpack.c.l.b16 %v10133
        %v10141 = vpack.c.b16 %v10140, %v10139
        %v10144 = vunpack.c.l.b16 %v10134
        %v10145 = vunpack.c.l.b16 %v10135
        %v10146 = vpack.c.b16 %v10140, %v10144
        %v10147 = vpack.c.b16 %v10145, %v10145
        %v10148 = vrot.slane %v10146, 2
        %v10149 = vrot.slane %v10147, 2
        %v10150 = vsel %vm6159, %v10148, %v10149
        %10151 = vrot.lane.b32.xlu0 %v10150, 32
        %v10152 = vpop.permute.xlu0 %10151
        %v10154 = vunpack.c.l.b16 %v10136
        %v10155 = vpack.c.b16 %v10154, %v10140
        %10156 = vrot.lane.b32.xlu0 %v10155, 64
        %v10157 = vpop.permute.xlu0 %10156
        %v10160 = vsel %vm6186, %v10141, %v10152
        %v10162 = vsel %vm6192, %v10160, %v10157
        %v10163 = vsel %vm9727, %v10162, 0
        %10165 = vmatprep.subr.bf16.mxu0 0
        %10166 = vmatpush1.bf16.msra.mxu0 %v9829
        %10167 = vmatprep.subr.bf16.mxu0 0
        %10168 = vmatpush1.bf16.msra.mxu0 %v9830
        %10169 = vmatprep.subr.bf16.mxu0 0
        %10170 = vmatpush1.bf16.msra.mxu0 %v9831
        %10171 = vmatprep.subr.bf16.mxu0 0
        %10172 = vmatpush1.bf16.msra.mxu0 %v9832
        %10173 = vmatprep.subr.bf16.mxu0 0
        %10174 = vmatpush1.bf16.msra.mxu0 %v9833
        %10175 = vmatprep.subr.bf16.mxu0 0
        %10176 = vmatpush1.bf16.msra.mxu0 %v9834
        %10177 = vmatprep.subr.bf16.mxu0 0
        %10178 = vmatpush1.bf16.msra.mxu0 %v9835
        %10179 = vmatprep.subr.bf16.mxu0 0
        %10180 = vmatpush1.bf16.msra.mxu0 %v9836
        %10181 = vmatprep.subr.bf16.mxu0 0
        %10182 = vmatpush1.bf16.msra.mxu0 0
        %10183 = vmatprep.subr.bf16.mxu0 0
        %10184 = vmatpush1.bf16.msra.mxu0 0
        %10185 = vmatprep.subr.bf16.mxu0 0
        %10186 = vmatpush1.bf16.msra.mxu0 0
        %10187 = vmatprep.subr.bf16.mxu0 0
        %10188 = vmatpush1.bf16.msra.mxu0 0
        %10189 = vmatprep.subr.bf16.mxu0 0
        %10190 = vmatpush1.bf16.msra.mxu0 0
        %10191 = vmatprep.subr.bf16.mxu0 0
        %10192 = vmatpush1.bf16.msra.mxu0 0
        %10193 = vmatprep.subr.bf16.mxu0 0
        %10194 = vmatpush1.bf16.msra.mxu0 0
        %10195 = vmatprep.subr.bf16.mxu0 0
        %10196 = vmatpush1.bf16.msra.mxu0 0
        %10197 = vmatprep.mubr.bf16.mxu0 0
        %10198 = vmatmul.mubr.bf16.gmra.mrb[0].mxu0 %v10163
        %v10199 = vpop.f32.mrb[0].mxu0
        %v10200 = vadd.f32 0.0, %v10199
        %v10201 = vpop.f32.mrb[0].mxu0
        %v10202 = vpop.f32.mrb[0].mxu0
        %v10203 = vadd.f32 0.0, %v10202
        %v10204 = vpop.f32.mrb[0].mxu0
        %10205 = vdwg.mxu0
        %10206 = vmatprep.subr.bf16.mxu0 0
        %10207 = vmatpush1.bf16.msra.mxu0 %v9918
        %10208 = vmatprep.subr.bf16.mxu0 0
        %10209 = vmatpush1.bf16.msra.mxu0 %v9919
        %10210 = vmatprep.subr.bf16.mxu0 0
        %10211 = vmatpush1.bf16.msra.mxu0 %v9920
        %10212 = vmatprep.subr.bf16.mxu0 0
        %10213 = vmatpush1.bf16.msra.mxu0 %v9921
        %10214 = vmatprep.subr.bf16.mxu0 0
        %10215 = vmatpush1.bf16.msra.mxu0 %v9922
        %10216 = vmatprep.subr.bf16.mxu0 0
        %10217 = vmatpush1.bf16.msra.mxu0 %v9923
        %10218 = vmatprep.subr.bf16.mxu0 0
        %10219 = vmatpush1.bf16.msra.mxu0 %v9924
        %10220 = vmatprep.subr.bf16.mxu0 0
        %10221 = vmatpush1.bf16.msra.mxu0 %v9925
        %10222 = vmatprep.subr.bf16.mxu0 0
        %10223 = vmatpush1.bf16.msra.mxu0 0
        %10224 = vmatprep.subr.bf16.mxu0 0
        %10225 = vmatpush1.bf16.msra.mxu0 0
        %10226 = vmatprep.subr.bf16.mxu0 0
        %10227 = vmatpush1.bf16.msra.mxu0 0
        %10228 = vmatprep.subr.bf16.mxu0 0
        %10229 = vmatpush1.bf16.msra.mxu0 0
        %10230 = vmatprep.subr.bf16.mxu0 0
        %10231 = vmatpush1.bf16.msra.mxu0 0
        %10232 = vmatprep.subr.bf16.mxu0 0
        %10233 = vmatpush1.bf16.msra.mxu0 0
        %10234 = vmatprep.subr.bf16.mxu0 0
        %10235 = vmatpush1.bf16.msra.mxu0 0
        %10236 = vmatprep.subr.bf16.mxu0 0
        %10237 = vmatpush1.bf16.msra.mxu0 0
        %10238 = vmatprep.mubr.bf16.mxu0 0
        %10239 = vmatmul.mubr.bf16.gmra.mrb[0].mxu0 %v10006
        %v10240 = vpop.f32.mrb[0].mxu0
        %v10241 = vadd.f32 %v10200, %v10240
        %v10242 = vpop.f32.mrb[0].mxu0
        %v10243 = vpop.f32.mrb[0].mxu0
        %v10244 = vadd.f32 %v10203, %v10243
        %v10245 = vpop.f32.mrb[0].mxu0
        %10246 = vdwg.mxu0
        %v10247 = vld [vmem:[#allocation3 + $0xc0] sm:$0xf]
        %v10248 = vld [vmem:[#allocation3 + $0xc4] sm:$0xf]
        %v10249 = vld [vmem:[#allocation3 + $0xc0] sm:$0xc]
        %v10250 = vld [vmem:[#allocation3 + $0xc4] sm:$0xf]
        %v10251 = vld [vmem:[#allocation3 + $0xc8] sm:$0x3]
        %v10252 = vld [vmem:[#allocation3 + $0xc8] sm:$0xf]
        %v10255 = vunpack.c.l.b16 %v10247
        %v10256 = vunpack.c.l.b16 %v10248
        %v10257 = vpack.c.b16 %v10256, %v10255
        %v10261 = vunpack.c.l.b16 %v10249
        %v10262 = vunpack.c.l.b16 %v10250
        %v10263 = vunpack.c.l.b16 %v10251
        %v10264 = vpack.c.b16 %v10262, %v10261
        %v10265 = vpack.c.b16 %v10263, %v10263
        %v10266 = vrot.slane %v10264, 2
        %v10267 = vrot.slane %v10265, 2
        %v10268 = vsel %vm6159, %v10266, %v10267
        %10269 = vrot.lane.b32.xlu0 %v10268, 32
        %v10270 = vpop.permute.xlu0 %10269
        %v10272 = vunpack.c.l.b16 %v10252
        %v10273 = vpack.c.b16 %v10272, %v10262
        %10274 = vrot.lane.b32.xlu0 %v10273, 64
        %v10275 = vpop.permute.xlu0 %10274
        %v10278 = vsel %vm6186, %v10257, %v10270
        %v10280 = vsel %vm6192, %v10278, %v10275
        %v10281 = vsel %vm9727, %v10280, 0
        %10283 = vmatprep.subr.bf16.mxu0 0
        %10284 = vmatpush1.bf16.msra.mxu0 %v10057
        %10285 = vmatprep.subr.bf16.mxu0 0
        %10286 = vmatpush1.bf16.msra.mxu0 %v10058
        %10287 = vmatprep.subr.bf16.mxu0 0
        %10288 = vmatpush1.bf16.msra.mxu0 %v10059
        %10289 = vmatprep.subr.bf16.mxu0 0
        %10290 = vmatpush1.bf16.msra.mxu0 %v10060
        %10291 = vmatprep.subr.bf16.mxu0 0
        %10292 = vmatpush1.bf16.msra.mxu0 %v10061
        %10293 = vmatprep.subr.bf16.mxu0 0
        %10294 = vmatpush1.bf16.msra.mxu0 %v10062
        %10295 = vmatprep.subr.bf16.mxu0 0
        %10296 = vmatpush1.bf16.msra.mxu0 %v10063
        %10297 = vmatprep.subr.bf16.mxu0 0
        %10298 = vmatpush1.bf16.msra.mxu0 %v10064
        %10299 = vmatprep.subr.bf16.mxu0 0
        %10300 = vmatpush1.bf16.msra.mxu0 0
        %10301 = vmatprep.subr.bf16.mxu0 0
        %10302 = vmatpush1.bf16.msra.mxu0 0
        %10303 = vmatprep.subr.bf16.mxu0 0
        %10304 = vmatpush1.bf16.msra.mxu0 0
        %10305 = vmatprep.subr.bf16.mxu0 0
        %10306 = vmatpush1.bf16.msra.mxu0 0
        %10307 = vmatprep.subr.bf16.mxu0 0
        %10308 = vmatpush1.bf16.msra.mxu0 0
        %10309 = vmatprep.subr.bf16.mxu0 0
        %10310 = vmatpush1.bf16.msra.mxu0 0
        %10311 = vmatprep.subr.bf16.mxu0 0
        %10312 = vmatpush1.bf16.msra.mxu0 0
        %10313 = vmatprep.subr.bf16.mxu0 0
        %10314 = vmatpush1.bf16.msra.mxu0 0
        %10315 = vmatprep.mubr.bf16.mxu0 0
        %10316 = vmatmul.mubr.bf16.gmra.mrb[0].mxu0 %v10281
        %v10317 = vpop.f32.mrb[0].mxu0
        %v10318 = vadd.f32 0.0, %v10317
        %v10319 = vpop.f32.mrb[0].mxu0
        %v10320 = vpop.f32.mrb[0].mxu0
        %v10321 = vadd.f32 0.0, %v10320
        %v10322 = vpop.f32.mrb[0].mxu0
        %10323 = vdwg.mxu0
        %v10324 = vadd.f32 %v10241, %v10318
        %v10325 = vadd.f32 %v10244, %v10321
        %v10326 = vmul.f32 %v10324, %v10120
        %v10327 = vmul.f32 %v10325, %v10120
        %v10328 = vadd.f32 %v10326, %v10127
        %v10329 = vadd.f32 %v10327, %v10127
        %v10330 = vmax.f32 %v10328, 0.0
        %v10331 = vmax.f32 %v10329, 0.0
        %v10333 = vrot.slane %v10131, 7
        %v10336 = vrot.slane %v10330, 6
        %v10339 = vrot.slane %v10331, 5
        %vm10341 = vcmask 1040384
        %v10342 = vsel %vm10341, %v10130, %v10333
        %vm10343 = vcmask 1041408
        %v10344 = vsel %vm10343, %v10342, %v10336
        %vm10345 = vcmask 1042432
        %v10346 = vsel %vm10345, %v10344, %v10339
        %10347 = vst [vmem:[%s190] sm:$0xf] %v10346
        %s10348 = sand.u32 %s115, 1
        %s10349 = scalar_lea.sflag [#allocation5], %s10348
        %s10350 = sand.u32 %s115, 1
        %s10351 = smul.addr %s10350, 4
        %s10352 = scalar_lea.vmem [#allocation4], %s10351
        // Predicated region
        $region37: #{rt_head_large_kernel.1} parent=35 // pred_check
          %p10353 = pneg %p125
        $region38: #{rt_head_large_kernel.1} parent=35 // pred_check_branch
          %10355 = sbr.rel (%p10353) target = $region40
        $region39: #{rt_head_large_kernel.1} parent=35 // pred_region
          %s10357 = ssub.s32 64, 64
          %10358 = vsyncadd %s10349, %s10357
          %s10359 = smul.addr %s18, 64
          %s10360 = scalar_lea.hbm %s4, %s10359
          %s10362 = sshll.u32 %s10352, 4
          %s10363 = int_to_ptr.vmem [resolvable:$true] %s10362
          %10365 = dma.vmem_to_hbm [thread:$0]  %s10363, 64, %s10360, %s10349
        $region40: #{rt_head_large_kernel.1} parent=35 // pred_fallthru
          _
      $region36: #{rt_head_large_kernel.1} parent=5 // pred_fallthru
        _
      %p10366 = scmp.le.s32.totalorder 2, %s13
      // Predicated region
      $region41: #{rt_head_large_kernel.1} parent=5 // pred_check
        %p10367 = pneg %p10366
      $region42: #{rt_head_large_kernel.1} parent=5 // pred_check_branch
        %10369 = sbr.rel (%p10367) target = $region44
      $region43: #{rt_head_large_kernel.1} parent=5 // pred_region
        %s10370 = ssub.s32 %s13, 2
        // Predicated region
        $region45: #{rt_head_large_kernel.1} parent=43 // pred_check
          %p10371 = pneg %p131
        $region46: #{rt_head_large_kernel.1} parent=43 // pred_check_branch
          %10373 = sbr.rel (%p10371) target = $region48
        $region47: #{rt_head_large_kernel.1} parent=43 // pred_region
          %s10374 = sand.u32 %s116, 1
          %s10375 = scalar_lea.sflag [#allocation5], %s10374
          %s10376 = sand.u32 %s116, 1
          %s10377 = smul.addr %s10376, 4
          %s10378 = scalar_lea.vmem [#allocation4], %s10377
          %10379 = dma.done %s10375, 64
        $region48: #{rt_head_large_kernel.1} parent=43 // pred_fallthru
          _
      $region44: #{rt_head_large_kernel.1} parent=5 // pred_fallthru
        _
    $region6: #{rt_head_large_kernel.1} parent=1 // loop_footer
      %s17 = sadd.s32 1, %s13
    $region7: #{rt_head_large_kernel.1} parent=1 // loop_footer_branch
      %12 = sbr.rel target = $region3
    $region8: #{rt_head_large_kernel.1} parent=1 // loop_exit
      _
    %10380 = vsyncpa [#allocation5], 1
    %s10381 = scalar_lea.sflag [#allocation5], 1
    %10382 = vsyncpa %s10381, 1

</llo_original>
